<compile_context>
chip_gen: v7x
topology: tpu7x:2x2x1
jax: 0.10.0
libtpu: 0.0.40
codegen_flags: <defaults>
</compile_context>

<pallas_src>
import numpy as np
import jax
import jax.numpy as jnp
from jax.experimental import pallas as pl
from jax.experimental.pallas import tpu as pltpu

SAMPLE_RATE = 16000
N_FFT = 1024
HOP = N_FFT // 2            # torchaudio default: win_length // 2
N_MELS = 64
N_FREQS = N_FFT // 2 + 1    # 513 (onesided)
N_COS_PAD = 640             # cos block padded to 5*128 lanes (513 real columns)
N_SIN = 512                 # sin block: Nyquist sin column is exactly 0 -> dropped
N_COSSIN = N_COS_PAD + N_SIN   # 1152
N_MEL_PAD = 128             # mel axis padded to full lane width
BN_EPS = 1e-5

# Conv / pool static config (from the PyTorch module)
KH = KW = 5
STRIDE = 3
PAD = 2
C_OUT = 8
POOL = 4
HS = STRIDE * POOL          # 12: pooled-position stride in the padded conv input


def _round_up(x, m):
    return ((x + m - 1) // m) * m


# ----------------------------------------------------------------------------
# Deterministic constants (Hann window, fused cos|sin DFT matrix, HTK mel fbanks)
# ----------------------------------------------------------------------------
def _hann_window(n):
    i = np.arange(n)
    return 0.5 - 0.5 * np.cos(2.0 * np.pi * i / n)  # periodic (torch default)


def _hz_to_mel(f):
    return 2595.0 * np.log10(1.0 + f / 700.0)


def _mel_to_hz(m):
    return 700.0 * (10.0 ** (m / 2595.0) - 1.0)


def _melscale_fbanks(n_freqs, f_min, f_max, n_mels, sr):
    all_freqs = np.linspace(0.0, sr / 2.0, n_freqs)
    m_pts = np.linspace(_hz_to_mel(f_min), _hz_to_mel(f_max), n_mels + 2)
    f_pts = _mel_to_hz(m_pts)
    f_diff = f_pts[1:] - f_pts[:-1]
    slopes = f_pts[None, :] - all_freqs[:, None]          # (n_freqs, n_mels + 2)
    down = -slopes[:, :-2] / f_diff[:-1]
    up = slopes[:, 2:] / f_diff[1:]
    fb = np.maximum(0.0, np.minimum(down, up))            # (n_freqs, n_mels)
    return fb.astype(np.float32)


def _dft_cossin():
    """Windowed DFT (cos | sin) fused into one [N_FFT, 1152] matrix.

    cos occupies columns [0, 640) (513 real + zero pad); sin occupies [640, 1152)
    (only k=0..511 -- the Nyquist sin column is identically zero and dropped).
    """
    n = np.arange(N_FFT)[:, None].astype(np.float64)
    k = np.arange(N_FREQS)[None, :].astype(np.float64)
    ang = 2.0 * np.pi * n * k / N_FFT
    w = _hann_window(N_FFT)[:, None]
    m = np.zeros((N_FFT, N_COSSIN), np.float32)
    m[:, :N_FREQS] = w * np.cos(ang)
    m[:, N_COS_PAD:N_COS_PAD + N_SIN] = (w * np.sin(ang))[:, :N_SIN]
    return m


# ----------------------------------------------------------------------------
# Kernel 1: mel-spectrogram (fused cos|sin DFT matmul -> power -> mel fbanks)
# ----------------------------------------------------------------------------
def melspec_kernel(frames_ref, cossin_ref, fb_ref, out_ref):
    f = frames_ref[...]                                                 # [tm, 1024] bf16
    spec = jnp.dot(f, cossin_ref[...],
                   preferred_element_type=jnp.float32)                  # [tm, 1152] f32
    re = spec[:, :N_COS_PAD]                                            # [tm, 640]
    im = spec[:, N_COS_PAD:]                                            # [tm, 512]
    re2 = re * re                                                       # f32 VPU
    power = jnp.concatenate([re2[:, :N_SIN] + im * im, re2[:, N_SIN:]], axis=1)
    # bf16 operands for the fbank matmul (no native f32 MXU path), f32 accumulation.
    out_ref[...] = jnp.dot(power.astype(jnp.bfloat16), fb_ref[...],
                           preferred_element_type=jnp.float32)


def melspec_pallas(frames, cossin, fb, tm):
    nf, nfft = frames.shape
    return pl.pallas_call(
        melspec_kernel,
        out_shape=jax.ShapeDtypeStruct((nf, N_MEL_PAD), jnp.float32),
        grid=(nf // tm,),
        in_specs=[
            pl.BlockSpec((tm, nfft), lambda i: (i, 0)),
            pl.BlockSpec((nfft, N_COSSIN), lambda i: (0, 0)),
            pl.BlockSpec((N_COS_PAD, N_MEL_PAD), lambda i: (0, 0)),
        ],
        out_specs=pl.BlockSpec((tm, N_MEL_PAD), lambda i: (i, 0)),
        compiler_params=pltpu.CompilerParams(
            dimension_semantics=("parallel",),
            vmem_limit_bytes=24 * 1024 * 1024),   # safe on v7x (64 MiB VMEM)
    )(frames, cossin, fb)


# ----------------------------------------------------------------------------
# Kernel 2: fused Conv2d(1->8, 5x5, stride 3) + bias + ReLU + BatchNorm(eval) + MaxPool(4,4)
#   taps_ref : [25, 16, tl] bf16  -- tap values per (kernel tap, pool-window slot, lane)
#              where the lane axis packs (batch, hp, wp) pooled positions (lane-dense).
#   par_ref  : SMEM [8, 28] f32 -> [:, :25]=conv w, [:,25]=bias, [:,26]=bn scale, [:,27]=bn shift
#   o_ref    : [8, tl] f32 lane-dense pooled output tile
# ----------------------------------------------------------------------------
def conv_bn_pool_kernel(taps_ref, par_ref, o_ref):
    accs = [None] * C_OUT
    for k in range(KH * KW):                         # 25 VPU shifted-MAC taps
        tk = taps_ref[k].astype(jnp.float32)         # [16, tl] f32
        for c in range(C_OUT):
            term = par_ref[c, k] * tk
            accs[c] = term if accs[c] is None else accs[c] + term
    rows = []
    for c in range(C_OUT):
        y = accs[c] + par_ref[c, 25]                 # conv bias
        y = jnp.maximum(y, 0.0)                      # ReLU
        y = y * par_ref[c, 26] + par_ref[c, 27]      # eval-mode BatchNorm
        rows.append(jnp.max(y, axis=0, keepdims=True))   # 4x4 max pool (16 window slots)
    o_ref[...] = jnp.concatenate(rows, axis=0)       # [8, tl] single lane-dense store


def conv_bn_pool_pallas(taps, par, tl):
    nk, nm, n_pad = taps.shape
    return pl.pallas_call(
        conv_bn_pool_kernel,
        out_shape=jax.ShapeDtypeStruct((C_OUT, n_pad), jnp.float32),
        grid=(n_pad // tl,),
        in_specs=[
            pl.BlockSpec((nk, nm, tl), lambda i: (0, 0, i)),
            pl.BlockSpec(memory_space=pltpu.MemorySpace.SMEM),
        ],
        out_specs=pl.BlockSpec((C_OUT, tl), lambda i: (0, i)),
        compiler_params=pltpu.CompilerParams(dimension_semantics=("parallel",)),
    )(taps, par)


# ----------------------------------------------------------------------------
# Forward pass (eval mode)
# ----------------------------------------------------------------------------
def cnn_classifier_forward(audio, params):
    B, L = audio.shape

    # --- MelSpectrogram: center reflect pad (pad == HOP only because HOP == N_FFT//2)
    padded = jnp.pad(audio, ((0, 0), (HOP, HOP)), mode="reflect")
    n_halves = padded.shape[1] // HOP
    halves = padded[:, : n_halves * HOP].reshape(B, n_halves, HOP)
    # frame t = halves[t] ++ halves[t+1]  (no gather needed since HOP == N_FFT//2)
    frames = jnp.concatenate([halves[:, :-1, :], halves[:, 1:, :]], axis=-1)  # [B, T, 1024]
    T = n_halves - 1
    nf = B * T
    frames = frames.reshape(nf, N_FFT).astype(jnp.bfloat16)

    # Row tile: <=256, multiple of 8, and >=2 grid steps when possible (v7x megacore).
    tm = min(256, max(8, _round_up((nf + 1) // 2, 8)))
    nf_pad = _round_up(nf, tm)
    frames = jnp.pad(frames, ((0, nf_pad - nf), (0, 0)))

    mel = melspec_pallas(frames, params["cossin"], params["fb"], tm)   # [nf_pad, 128]
    mel = mel[:nf, :N_MELS].reshape(B, T, N_MELS).transpose(0, 2, 1)   # [B, 64, T]
    # TODO(synk): training-mode spectrogram_augment (AudioTransformations) is undefined
    #             upstream; this implements the eval-mode forward (no augmentation).

    # --- fused conv/relu/bn/pool tail
    H, W = N_MELS, T
    Ho = (H + 2 * PAD - KH) // STRIDE + 1
    Wo = (W + 2 * PAD - KW) // STRIDE + 1
    Hp, Wp = Ho // POOL, Wo // POOL
    assert Hp >= 1 and Wp >= 1, "audio too short: pooled output would be empty"
    P = Hp * Wp
    N = B * P

    # im2col taps built directly in the final [25, 16, (b, hp, wp)] order -- one strided
    # slice per (kh, kw, ph, pw), no 6-D relayout -- and shipped as bf16.
    xp = jnp.pad(mel, ((0, 0), (PAD, PAD), (PAD, PAD))).astype(jnp.bfloat16)  # [B,68,W+4]
    slices = []
    for kh in range(KH):
        for kw in range(KW):
            for ph in range(POOL):
                for pw in range(POOL):
                    h0 = kh + STRIDE * ph
                    w0 = kw + STRIDE * pw
                    s = xp[:, h0:h0 + HS * (Hp - 1) + 1:HS,
                              w0:w0 + HS * (Wp - 1) + 1:HS]            # [B, Hp, Wp]
                    slices.append(s.reshape(N))
    taps = jnp.stack(slices, axis=0).reshape(KH * KW, POOL * POOL, N)  # [25, 16, N]

    tl = min(256, _round_up(N, 128))   # lane tile: 8 f32 accs @ 256 lanes = 32 vregs
    n_pad = _round_up(N, tl)
    taps = jnp.pad(taps, ((0, 0), (0, 0), (0, n_pad - N)))             # [25, 16, n_pad]

    scale = params["gamma"] / jnp.sqrt(params["run_var"] + BN_EPS)
    shift = params["beta"] - params["run_mean"] * scale
    par = jnp.concatenate(
        [params["conv_w"].reshape(C_OUT, KH * KW),
         params["conv_b"][:, None], scale[:, None], shift[:, None]], axis=1)  # [8, 28]

    out = conv_bn_pool_pallas(taps, par, tl)                           # [8, n_pad]
    # flatten matches x.view(B, -1) over NCHW: per-batch order (c, hp, wp)
    return out[:, :N].reshape(C_OUT, B, P).transpose(1, 0, 2).reshape(B, C_OUT * P)


# ----------------------------------------------------------------------------
if __name__ == "__main__":
    key = jax.random.PRNGKey(0)
    k_audio, k_w, k_b, k_g, k_be = jax.random.split(key, 5)

    # small, deterministic example: batch=2, 8192 samples -> 17 spectrogram frames
    audio = jax.random.normal(k_audio, (2, 8192), dtype=jnp.float32)

    cossin = _dft_cossin()                                             # [1024, 1152]
    fb = _melscale_fbanks(N_FREQS, 0.0, SAMPLE_RATE / 2.0, N_MELS, SAMPLE_RATE)
    fb_pad = np.zeros((N_COS_PAD, N_MEL_PAD), np.float32)
    fb_pad[:N_FREQS, :N_MELS] = fb

    params = {
        "cossin": jnp.asarray(cossin, dtype=jnp.bfloat16),  # bf16 MXU operands, f32 accum
        "fb": jnp.asarray(fb_pad, dtype=jnp.bfloat16),      # bf16 fbank matmul, f32 accum
        "conv_w": 0.1 * jax.random.normal(k_w, (8, 1, 5, 5), dtype=jnp.float32),
        "conv_b": 0.1 * jax.random.normal(k_b, (8,), dtype=jnp.float32),
        "gamma": 1.0 + 0.1 * jax.random.normal(k_g, (8,), dtype=jnp.float32),
        "beta": 0.1 * jax.random.normal(k_be, (8,), dtype=jnp.float32),
        "run_mean": jnp.zeros((8,), dtype=jnp.float32),
        "run_var": jnp.ones((8,), dtype=jnp.float32),
    }

    out = jax.jit(cnn_classifier_forward)(audio, params)
    out = jax.block_until_ready(out)
    assert out.shape == (2, 8 * 5 * 1), out.shape
    print("KERNEL_OK")
</pallas_src>

<mosaic_0001>
module attributes {stable_mosaic.version = 11 : i64} {
  func.func @melspec_kernel(%arg0: i32, %arg1: memref<24x1024xbf16, #tpu.memory_space<vmem>>, %arg2: memref<1024x1152xbf16, #tpu.memory_space<vmem>>, %arg3: memref<640x128xbf16, #tpu.memory_space<vmem>>, %arg4: memref<24x128xf32, #tpu.memory_space<vmem>>) attributes {dimension_semantics = [#tpu.dimension_semantics<parallel>], iteration_bounds = array<i64: 2>, scalar_prefetch = 0 : i64, scratch_operands = 0 : i64, tpu.core_type = #tpu.core_type<tc>, window_params = [{transform_indices = @transform_0, window_bounds = array<i64: 24, 1024>}, {pipeline_mode = #tpu.pipeline_mode<synchronous>, transform_indices = @transform_1, window_bounds = array<i64: 1024, 1152>}, {pipeline_mode = #tpu.pipeline_mode<synchronous>, transform_indices = @transform_2, window_bounds = array<i64: 640, 128>}, {transform_indices = @transform_3, window_bounds = array<i64: 24, 128>}]} {
    %c0 = arith.constant 0 : index
    %c0_0 = arith.constant 0 : index
    %0 = vector.load %arg1[%c0, %c0_0] : memref<24x1024xbf16, #tpu.memory_space<vmem>>, vector<24x1024xbf16>
    %c0_1 = arith.constant 0 : index
    %c0_2 = arith.constant 0 : index
    %1 = vector.load %arg2[%c0_1, %c0_2] : memref<1024x1152xbf16, #tpu.memory_space<vmem>>, vector<1024x1152xbf16>
    %cst = arith.constant dense<0.000000e+00> : vector<24x1152xf32>
    %2 = tpu.matmul %0, %1, %cst {dimension_numbers = #tpu.dot_dimension_numbers<[1], [0], [0], [1], [0, 0, 1, 1], [], []>} : vector<24x1024xbf16>, vector<1024x1152xbf16>, vector<24x1152xf32> -> vector<24x1152xf32>
    %3 = vector.extract_strided_slice %2 {offsets = [0, 0], sizes = [24, 640], strides = [1, 1]} : vector<24x1152xf32> to vector<24x640xf32>
    %4 = vector.extract_strided_slice %2 {offsets = [0, 640], sizes = [24, 512], strides = [1, 1]} : vector<24x1152xf32> to vector<24x512xf32>
    %5 = arith.mulf %3, %3 : vector<24x640xf32>
    %6 = vector.extract_strided_slice %5 {offsets = [0, 0], sizes = [24, 512], strides = [1, 1]} : vector<24x640xf32> to vector<24x512xf32>
    %7 = arith.mulf %4, %4 : vector<24x512xf32>
    %8 = arith.addf %6, %7 : vector<24x512xf32>
    %9 = vector.extract_strided_slice %5 {offsets = [0, 512], sizes = [24, 128], strides = [1, 1]} : vector<24x640xf32> to vector<24x128xf32>
    %10 = tpu.concatenate %8, %9 in 1 : vector<24x512xf32>, vector<24x128xf32> -> vector<24x640xf32>
    %11 = arith.truncf %10 : vector<24x640xf32> to vector<24x640xbf16>
    %c0_3 = arith.constant 0 : index
    %c0_4 = arith.constant 0 : index
    %12 = vector.load %arg3[%c0_3, %c0_4] : memref<640x128xbf16, #tpu.memory_space<vmem>>, vector<640x128xbf16>
    %cst_5 = arith.constant dense<0.000000e+00> : vector<24x128xf32>
    %13 = tpu.matmul %11, %12, %cst_5 {dimension_numbers = #tpu.dot_dimension_numbers<[1], [0], [0], [1], [0, 0, 1, 1], [], []>} : vector<24x640xbf16>, vector<640x128xbf16>, vector<24x128xf32> -> vector<24x128xf32>
    %c0_6 = arith.constant 0 : index
    %c0_7 = arith.constant 0 : index
    %14 = vector.load %arg4[%c0_6, %c0_7] : memref<24x128xf32, #tpu.memory_space<vmem>>, vector<24x128xf32>
    tpu.vector_store %arg4[%c0_6, %c0_7], %13 {strides = array<i32>} : memref<24x128xf32, #tpu.memory_space<vmem>>, vector<24x128xf32>,
    return
  }
  func.func @transform_0(%arg0: i32) -> (i32, i32) {
    %c0_i32 = arith.constant 0 : i32
    %c0_i32_0 = arith.constant 0 : i32
    return %arg0, %c0_i32 : i32, i32
  }
  func.func @transform_1(%arg0: i32) -> (i32, i32) {
    %c0_i32 = arith.constant 0 : i32
    %c0_i32_0 = arith.constant 0 : i32
    %c0_i32_1 = arith.constant 0 : i32
    return %c0_i32, %c0_i32_0 : i32, i32
  }
  func.func @transform_2(%arg0: i32) -> (i32, i32) {
    %c0_i32 = arith.constant 0 : i32
    %c0_i32_0 = arith.constant 0 : i32
    %c0_i32_1 = arith.constant 0 : i32
    return %c0_i32, %c0_i32_0 : i32, i32
  }
  func.func @transform_3(%arg0: i32) -> (i32, i32) {
    %c0_i32 = arith.constant 0 : i32
    %c0_i32_0 = arith.constant 0 : i32
    return %arg0, %c0_i32 : i32, i32
  }
}

module attributes {stable_mosaic.version = 11 : i64} {
  func.func @conv_bn_pool_kernel(%arg0: i32, %arg1: memref<25x16x128xbf16, #tpu.memory_space<vmem>>, %arg2: memref<8x28xf32, #tpu.memory_space<smem>>, %arg3: memref<8x128xf32, #tpu.memory_space<vmem>>) attributes {dimension_semantics = [#tpu.dimension_semantics<parallel>], iteration_bounds = array<i64: 1>, scalar_prefetch = 0 : i64, scratch_operands = 0 : i64, tpu.core_type = #tpu.core_type<tc>, window_params = [{transform_indices = @transform_0, window_bounds = array<i64: 25, 16, 128>}, {transform_indices = @transform_1, window_bounds = array<i64: 8, 28>}, {transform_indices = @transform_2, window_bounds = array<i64: 8, 128>}]} {
    %c0 = arith.constant 0 : index
    %c0_0 = arith.constant 0 : index
    %c0_1 = arith.constant 0 : index
    %0 = vector.load %arg1[%c0, %c0_0, %c0_1] : memref<25x16x128xbf16, #tpu.memory_space<vmem>>, vector<1x16x128xbf16>
    %1 = vector.shape_cast %0 : vector<1x16x128xbf16> to vector<16x128xbf16>
    %2 = arith.extf %1 : vector<16x128xbf16> to vector<16x128xf32>
    %c0_2 = arith.constant 0 : index
    %c0_3 = arith.constant 0 : index
    %3 = memref.load %arg2[%c0_2, %c0_3] : memref<8x28xf32, #tpu.memory_space<smem>>
    %4 = vector.broadcast %3 : f32 to vector<16x128xf32>
    %5 = arith.mulf %4, %2 : vector<16x128xf32>
    %c1 = arith.constant 1 : index
    %c0_4 = arith.constant 0 : index
    %6 = memref.load %arg2[%c1, %c0_4] : memref<8x28xf32, #tpu.memory_space<smem>>
    %7 = vector.broadcast %6 : f32 to vector<16x128xf32>
    %8 = arith.mulf %7, %2 : vector<16x128xf32>
    %c2 = arith.constant 2 : index
    %c0_5 = arith.constant 0 : index
    %9 = memref.load %arg2[%c2, %c0_5] : memref<8x28xf32, #tpu.memory_space<smem>>
    %10 = vector.broadcast %9 : f32 to vector<16x128xf32>
    %11 = arith.mulf %10, %2 : vector<16x128xf32>
    %c3 = arith.constant 3 : index
    %c0_6 = arith.constant 0 : index
    %12 = memref.load %arg2[%c3, %c0_6] : memref<8x28xf32, #tpu.memory_space<smem>>
    %13 = vector.broadcast %12 : f32 to vector<16x128xf32>
    %14 = arith.mulf %13, %2 : vector<16x128xf32>
    %c4 = arith.constant 4 : index
    %c0_7 = arith.constant 0 : index
    %15 = memref.load %arg2[%c4, %c0_7] : memref<8x28xf32, #tpu.memory_space<smem>>
    %16 = vector.broadcast %15 : f32 to vector<16x128xf32>
    %17 = arith.mulf %16, %2 : vector<16x128xf32>
    %c5 = arith.constant 5 : index
    %c0_8 = arith.constant 0 : index
    %18 = memref.load %arg2[%c5, %c0_8] : memref<8x28xf32, #tpu.memory_space<smem>>
    %19 = vector.broadcast %18 : f32 to vector<16x128xf32>
    %20 = arith.mulf %19, %2 : vector<16x128xf32>
    %c6 = arith.constant 6 : index
    %c0_9 = arith.constant 0 : index
    %21 = memref.load %arg2[%c6, %c0_9] : memref<8x28xf32, #tpu.memory_space<smem>>
    %22 = vector.broadcast %21 : f32 to vector<16x128xf32>
    %23 = arith.mulf %22, %2 : vector<16x128xf32>
    %c7 = arith.constant 7 : index
    %c0_10 = arith.constant 0 : index
    %24 = memref.load %arg2[%c7, %c0_10] : memref<8x28xf32, #tpu.memory_space<smem>>
    %25 = vector.broadcast %24 : f32 to vector<16x128xf32>
    %26 = arith.mulf %25, %2 : vector<16x128xf32>
    %c1_11 = arith.constant 1 : index
    %c0_12 = arith.constant 0 : index
    %c0_13 = arith.constant 0 : index
    %27 = vector.load %arg1[%c1_11, %c0_12, %c0_13] : memref<25x16x128xbf16, #tpu.memory_space<vmem>>, vector<1x16x128xbf16>
    %28 = vector.shape_cast %27 : vector<1x16x128xbf16> to vector<16x128xbf16>
    %29 = arith.extf %28 : vector<16x128xbf16> to vector<16x128xf32>
    %c0_14 = arith.constant 0 : index
    %c1_15 = arith.constant 1 : index
    %30 = memref.load %arg2[%c0_14, %c1_15] : memref<8x28xf32, #tpu.memory_space<smem>>
    %31 = vector.broadcast %30 : f32 to vector<16x128xf32>
    %32 = arith.mulf %31, %29 : vector<16x128xf32>
    %33 = arith.addf %5, %32 : vector<16x128xf32>
    %c1_16 = arith.constant 1 : index
    %c1_17 = arith.constant 1 : index
    %34 = memref.load %arg2[%c1_16, %c1_17] : memref<8x28xf32, #tpu.memory_space<smem>>
    %35 = vector.broadcast %34 : f32 to vector<16x128xf32>
    %36 = arith.mulf %35, %29 : vector<16x128xf32>
    %37 = arith.addf %8, %36 : vector<16x128xf32>
    %c2_18 = arith.constant 2 : index
    %c1_19 = arith.constant 1 : index
    %38 = memref.load %arg2[%c2_18, %c1_19] : memref<8x28xf32, #tpu.memory_space<smem>>
    %39 = vector.broadcast %38 : f32 to vector<16x128xf32>
    %40 = arith.mulf %39, %29 : vector<16x128xf32>
    %41 = arith.addf %11, %40 : vector<16x128xf32>
    %c3_20 = arith.constant 3 : index
    %c1_21 = arith.constant 1 : index
    %42 = memref.load %arg2[%c3_20, %c1_21] : memref<8x28xf32, #tpu.memory_space<smem>>
    %43 = vector.broadcast %42 : f32 to vector<16x128xf32>
    %44 = arith.mulf %43, %29 : vector<16x128xf32>
    %45 = arith.addf %14, %44 : vector<16x128xf32>
    %c4_22 = arith.constant 4 : index
    %c1_23 = arith.constant 1 : index
    %46 = memref.load %arg2[%c4_22, %c1_23] : memref<8x28xf32, #tpu.memory_space<smem>>
    %47 = vector.broadcast %46 : f32 to vector<16x128xf32>
    %48 = arith.mulf %47, %29 : vector<16x128xf32>
    %49 = arith.addf %17, %48 : vector<16x128xf32>
    %c5_24 = arith.constant 5 : index
    %c1_25 = arith.constant 1 : index
    %50 = memref.load %arg2[%c5_24, %c1_25] : memref<8x28xf32, #tpu.memory_space<smem>>
    %51 = vector.broadcast %50 : f32 to vector<16x128xf32>
    %52 = arith.mulf %51, %29 : vector<16x128xf32>
    %53 = arith.addf %20, %52 : vector<16x128xf32>
    %c6_26 = arith.constant 6 : index
    %c1_27 = arith.constant 1 : index
    %54 = memref.load %arg2[%c6_26, %c1_27] : memref<8x28xf32, #tpu.memory_space<smem>>
    %55 = vector.broadcast %54 : f32 to vector<16x128xf32>
    %56 = arith.mulf %55, %29 : vector<16x128xf32>
    %57 = arith.addf %23, %56 : vector<16x128xf32>
    %c7_28 = arith.constant 7 : index
    %c1_29 = arith.constant 1 : index
    %58 = memref.load %arg2[%c7_28, %c1_29] : memref<8x28xf32, #tpu.memory_space<smem>>
    %59 = vector.broadcast %58 : f32 to vector<16x128xf32>
    %60 = arith.mulf %59, %29 : vector<16x128xf32>
    %61 = arith.addf %26, %60 : vector<16x128xf32>
    %c2_30 = arith.constant 2 : index
    %c0_31 = arith.constant 0 : index
    %c0_32 = arith.constant 0 : index
    %62 = vector.load %arg1[%c2_30, %c0_31, %c0_32] : memref<25x16x128xbf16, #tpu.memory_space<vmem>>, vector<1x16x128xbf16>
    %63 = vector.shape_cast %62 : vector<1x16x128xbf16> to vector<16x128xbf16>
    %64 = arith.extf %63 : vector<16x128xbf16> to vector<16x128xf32>
    %c0_33 = arith.constant 0 : index
    %c2_34 = arith.constant 2 : index
    %65 = memref.load %arg2[%c0_33, %c2_34] : memref<8x28xf32, #tpu.memory_space<smem>>
    %66 = vector.broadcast %65 : f32 to vector<16x128xf32>
    %67 = arith.mulf %66, %64 : vector<16x128xf32>
    %68 = arith.addf %33, %67 : vector<16x128xf32>
    %c1_35 = arith.constant 1 : index
    %c2_36 = arith.constant 2 : index
    %69 = memref.load %arg2[%c1_35, %c2_36] : memref<8x28xf32, #tpu.memory_space<smem>>
    %70 = vector.broadcast %69 : f32 to vector<16x128xf32>
    %71 = arith.mulf %70, %64 : vector<16x128xf32>
    %72 = arith.addf %37, %71 : vector<16x128xf32>
    %c2_37 = arith.constant 2 : index
    %c2_38 = arith.constant 2 : index
    %73 = memref.load %arg2[%c2_37, %c2_38] : memref<8x28xf32, #tpu.memory_space<smem>>
    %74 = vector.broadcast %73 : f32 to vector<16x128xf32>
    %75 = arith.mulf %74, %64 : vector<16x128xf32>
    %76 = arith.addf %41, %75 : vector<16x128xf32>
    %c3_39 = arith.constant 3 : index
    %c2_40 = arith.constant 2 : index
    %77 = memref.load %arg2[%c3_39, %c2_40] : memref<8x28xf32, #tpu.memory_space<smem>>
    %78 = vector.broadcast %77 : f32 to vector<16x128xf32>
    %79 = arith.mulf %78, %64 : vector<16x128xf32>
    %80 = arith.addf %45, %79 : vector<16x128xf32>
    %c4_41 = arith.constant 4 : index
    %c2_42 = arith.constant 2 : index
    %81 = memref.load %arg2[%c4_41, %c2_42] : memref<8x28xf32, #tpu.memory_space<smem>>
    %82 = vector.broadcast %81 : f32 to vector<16x128xf32>
    %83 = arith.mulf %82, %64 : vector<16x128xf32>
    %84 = arith.addf %49, %83 : vector<16x128xf32>
    %c5_43 = arith.constant 5 : index
    %c2_44 = arith.constant 2 : index
    %85 = memref.load %arg2[%c5_43, %c2_44] : memref<8x28xf32, #tpu.memory_space<smem>>
    %86 = vector.broadcast %85 : f32 to vector<16x128xf32>
    %87 = arith.mulf %86, %64 : vector<16x128xf32>
    %88 = arith.addf %53, %87 : vector<16x128xf32>
    %c6_45 = arith.constant 6 : index
    %c2_46 = arith.constant 2 : index
    %89 = memref.load %arg2[%c6_45, %c2_46] : memref<8x28xf32, #tpu.memory_space<smem>>
    %90 = vector.broadcast %89 : f32 to vector<16x128xf32>
    %91 = arith.mulf %90, %64 : vector<16x128xf32>
    %92 = arith.addf %57, %91 : vector<16x128xf32>
    %c7_47 = arith.constant 7 : index
    %c2_48 = arith.constant 2 : index
    %93 = memref.load %arg2[%c7_47, %c2_48] : memref<8x28xf32, #tpu.memory_space<smem>>
    %94 = vector.broadcast %93 : f32 to vector<16x128xf32>
    %95 = arith.mulf %94, %64 : vector<16x128xf32>
    %96 = arith.addf %61, %95 : vector<16x128xf32>
    %c3_49 = arith.constant 3 : index
    %c0_50 = arith.constant 0 : index
    %c0_51 = arith.constant 0 : index
    %97 = vector.load %arg1[%c3_49, %c0_50, %c0_51] : memref<25x16x128xbf16, #tpu.memory_space<vmem>>, vector<1x16x128xbf16>
    %98 = vector.shape_cast %97 : vector<1x16x128xbf16> to vector<16x128xbf16>
    %99 = arith.extf %98 : vector<16x128xbf16> to vector<16x128xf32>
    %c0_52 = arith.constant 0 : index
    %c3_53 = arith.constant 3 : index
    %100 = memref.load %arg2[%c0_52, %c3_53] : memref<8x28xf32, #tpu.memory_space<smem>>
    %101 = vector.broadcast %100 : f32 to vector<16x128xf32>
    %102 = arith.mulf %101, %99 : vector<16x128xf32>
    %103 = arith.addf %68, %102 : vector<16x128xf32>
    %c1_54 = arith.constant 1 : index
    %c3_55 = arith.constant 3 : index
    %104 = memref.load %arg2[%c1_54, %c3_55] : memref<8x28xf32, #tpu.memory_space<smem>>
    %105 = vector.broadcast %104 : f32 to vector<16x128xf32>
    %106 = arith.mulf %105, %99 : vector<16x128xf32>
    %107 = arith.addf %72, %106 : vector<16x128xf32>
    %c2_56 = arith.constant 2 : index
    %c3_57 = arith.constant 3 : index
    %108 = memref.load %arg2[%c2_56, %c3_57] : memref<8x28xf32, #tpu.memory_space<smem>>
    %109 = vector.broadcast %108 : f32 to vector<16x128xf32>
    %110 = arith.mulf %109, %99 : vector<16x128xf32>
    %111 = arith.addf %76, %110 : vector<16x128xf32>
    %c3_58 = arith.constant 3 : index
    %c3_59 = arith.constant 3 : index
    %112 = memref.load %arg2[%c3_58, %c3_59] : memref<8x28xf32, #tpu.memory_space<smem>>
    %113 = vector.broadcast %112 : f32 to vector<16x128xf32>
    %114 = arith.mulf %113, %99 : vector<16x128xf32>
    %115 = arith.addf %80, %114 : vector<16x128xf32>
    %c4_60 = arith.constant 4 : index
    %c3_61 = arith.constant 3 : index
    %116 = memref.load %arg2[%c4_60, %c3_61] : memref<8x28xf32, #tpu.memory_space<smem>>
    %117 = vector.broadcast %116 : f32 to vector<16x128xf32>
    %118 = arith.mulf %117, %99 : vector<16x128xf32>
    %119 = arith.addf %84, %118 : vector<16x128xf32>
    %c5_62 = arith.constant 5 : index
    %c3_63 = arith.constant 3 : index
    %120 = memref.load %arg2[%c5_62, %c3_63] : memref<8x28xf32, #tpu.memory_space<smem>>
    %121 = vector.broadcast %120 : f32 to vector<16x128xf32>
    %122 = arith.mulf %121, %99 : vector<16x128xf32>
    %123 = arith.addf %88, %122 : vector<16x128xf32>
    %c6_64 = arith.constant 6 : index
    %c3_65 = arith.constant 3 : index
    %124 = memref.load %arg2[%c6_64, %c3_65] : memref<8x28xf32, #tpu.memory_space<smem>>
    %125 = vector.broadcast %124 : f32 to vector<16x128xf32>
    %126 = arith.mulf %125, %99 : vector<16x128xf32>
    %127 = arith.addf %92, %126 : vector<16x128xf32>
    %c7_66 = arith.constant 7 : index
    %c3_67 = arith.constant 3 : index
    %128 = memref.load %arg2[%c7_66, %c3_67] : memref<8x28xf32, #tpu.memory_space<smem>>
    %129 = vector.broadcast %128 : f32 to vector<16x128xf32>
    %130 = arith.mulf %129, %99 : vector<16x128xf32>
    %131 = arith.addf %96, %130 : vector<16x128xf32>
    %c4_68 = arith.constant 4 : index
    %c0_69 = arith.constant 0 : index
    %c0_70 = arith.constant 0 : index
    %132 = vector.load %arg1[%c4_68, %c0_69, %c0_70] : memref<25x16x128xbf16, #tpu.memory_space<vmem>>, vector<1x16x128xbf16>
    %133 = vector.shape_cast %132 : vector<1x16x128xbf16> to vector<16x128xbf16>
    %134 = arith.extf %133 : vector<16x128xbf16> to vector<16x128xf32>
    %c0_71 = arith.constant 0 : index
    %c4_72 = arith.constant 4 : index
    %135 = memref.load %arg2[%c0_71, %c4_72] : memref<8x28xf32, #tpu.memory_space<smem>>
    %136 = vector.broadcast %135 : f32 to vector<16x128xf32>
    %137 = arith.mulf %136, %134 : vector<16x128xf32>
    %138 = arith.addf %103, %137 : vector<16x128xf32>
    %c1_73 = arith.constant 1 : index
    %c4_74 = arith.constant 4 : index
    %139 = memref.load %arg2[%c1_73, %c4_74] : memref<8x28xf32, #tpu.memory_space<smem>>
    %140 = vector.broadcast %139 : f32 to vector<16x128xf32>
    %141 = arith.mulf %140, %134 : vector<16x128xf32>
    %142 = arith.addf %107, %141 : vector<16x128xf32>
    %c2_75 = arith.constant 2 : index
    %c4_76 = arith.constant 4 : index
    %143 = memref.load %arg2[%c2_75, %c4_76] : memref<8x28xf32, #tpu.memory_space<smem>>
    %144 = vector.broadcast %143 : f32 to vector<16x128xf32>
    %145 = arith.mulf %144, %134 : vector<16x128xf32>
    %146 = arith.addf %111, %145 : vector<16x128xf32>
    %c3_77 = arith.constant 3 : index
    %c4_78 = arith.constant 4 : index
    %147 = memref.load %arg2[%c3_77, %c4_78] : memref<8x28xf32, #tpu.memory_space<smem>>
    %148 = vector.broadcast %147 : f32 to vector<16x128xf32>
    %149 = arith.mulf %148, %134 : vector<16x128xf32>
    %150 = arith.addf %115, %149 : vector<16x128xf32>
    %c4_79 = arith.constant 4 : index
    %c4_80 = arith.constant 4 : index
    %151 = memref.load %arg2[%c4_79, %c4_80] : memref<8x28xf32, #tpu.memory_space<smem>>
    %152 = vector.broadcast %151 : f32 to vector<16x128xf32>
    %153 = arith.mulf %152, %134 : vector<16x128xf32>
    %154 = arith.addf %119, %153 : vector<16x128xf32>
    %c5_81 = arith.constant 5 : index
    %c4_82 = arith.constant 4 : index
    %155 = memref.load %arg2[%c5_81, %c4_82] : memref<8x28xf32, #tpu.memory_space<smem>>
    %156 = vector.broadcast %155 : f32 to vector<16x128xf32>
    %157 = arith.mulf %156, %134 : vector<16x128xf32>
    %158 = arith.addf %123, %157 : vector<16x128xf32>
    %c6_83 = arith.constant 6 : index
    %c4_84 = arith.constant 4 : index
    %159 = memref.load %arg2[%c6_83, %c4_84] : memref<8x28xf32, #tpu.memory_space<smem>>
    %160 = vector.broadcast %159 : f32 to vector<16x128xf32>
    %161 = arith.mulf %160, %134 : vector<16x128xf32>
    %162 = arith.addf %127, %161 : vector<16x128xf32>
    %c7_85 = arith.constant 7 : index
    %c4_86 = arith.constant 4 : index
    %163 = memref.load %arg2[%c7_85, %c4_86] : memref<8x28xf32, #tpu.memory_space<smem>>
    %164 = vector.broadcast %163 : f32 to vector<16x128xf32>
    %165 = arith.mulf %164, %134 : vector<16x128xf32>
    %166 = arith.addf %131, %165 : vector<16x128xf32>
    %c5_87 = arith.constant 5 : index
    %c0_88 = arith.constant 0 : index
    %c0_89 = arith.constant 0 : index
    %167 = vector.load %arg1[%c5_87, %c0_88, %c0_89] : memref<25x16x128xbf16, #tpu.memory_space<vmem>>, vector<1x16x128xbf16>
    %168 = vector.shape_cast %167 : vector<1x16x128xbf16> to vector<16x128xbf16>
    %169 = arith.extf %168 : vector<16x128xbf16> to vector<16x128xf32>
    %c0_90 = arith.constant 0 : index
    %c5_91 = arith.constant 5 : index
    %170 = memref.load %arg2[%c0_90, %c5_91] : memref<8x28xf32, #tpu.memory_space<smem>>
    %171 = vector.broadcast %170 : f32 to vector<16x128xf32>
    %172 = arith.mulf %171, %169 : vector<16x128xf32>
    %173 = arith.addf %138, %172 : vector<16x128xf32>
    %c1_92 = arith.constant 1 : index
    %c5_93 = arith.constant 5 : index
    %174 = memref.load %arg2[%c1_92, %c5_93] : memref<8x28xf32, #tpu.memory_space<smem>>
    %175 = vector.broadcast %174 : f32 to vector<16x128xf32>
    %176 = arith.mulf %175, %169 : vector<16x128xf32>
    %177 = arith.addf %142, %176 : vector<16x128xf32>
    %c2_94 = arith.constant 2 : index
    %c5_95 = arith.constant 5 : index
    %178 = memref.load %arg2[%c2_94, %c5_95] : memref<8x28xf32, #tpu.memory_space<smem>>
    %179 = vector.broadcast %178 : f32 to vector<16x128xf32>
    %180 = arith.mulf %179, %169 : vector<16x128xf32>
    %181 = arith.addf %146, %180 : vector<16x128xf32>
    %c3_96 = arith.constant 3 : index
    %c5_97 = arith.constant 5 : index
    %182 = memref.load %arg2[%c3_96, %c5_97] : memref<8x28xf32, #tpu.memory_space<smem>>
    %183 = vector.broadcast %182 : f32 to vector<16x128xf32>
    %184 = arith.mulf %183, %169 : vector<16x128xf32>
    %185 = arith.addf %150, %184 : vector<16x128xf32>
    %c4_98 = arith.constant 4 : index
    %c5_99 = arith.constant 5 : index
    %186 = memref.load %arg2[%c4_98, %c5_99] : memref<8x28xf32, #tpu.memory_space<smem>>
    %187 = vector.broadcast %186 : f32 to vector<16x128xf32>
    %188 = arith.mulf %187, %169 : vector<16x128xf32>
    %189 = arith.addf %154, %188 : vector<16x128xf32>
    %c5_100 = arith.constant 5 : index
    %c5_101 = arith.constant 5 : index
    %190 = memref.load %arg2[%c5_100, %c5_101] : memref<8x28xf32, #tpu.memory_space<smem>>
    %191 = vector.broadcast %190 : f32 to vector<16x128xf32>
    %192 = arith.mulf %191, %169 : vector<16x128xf32>
    %193 = arith.addf %158, %192 : vector<16x128xf32>
    %c6_102 = arith.constant 6 : index
    %c5_103 = arith.constant 5 : index
    %194 = memref.load %arg2[%c6_102, %c5_103] : memref<8x28xf32, #tpu.memory_space<smem>>
    %195 = vector.broadcast %194 : f32 to vector<16x128xf32>
    %196 = arith.mulf %195, %169 : vector<16x128xf32>
    %197 = arith.addf %162, %196 : vector<16x128xf32>
    %c7_104 = arith.constant 7 : index
    %c5_105 = arith.constant 5 : index
    %198 = memref.load %arg2[%c7_104, %c5_105] : memref<8x28xf32, #tpu.memory_space<smem>>
    %199 = vector.broadcast %198 : f32 to vector<16x128xf32>
    %200 = arith.mulf %199, %169 : vector<16x128xf32>
    %201 = arith.addf %166, %200 : vector<16x128xf32>
    %c6_106 = arith.constant 6 : index
    %c0_107 = arith.constant 0 : index
    %c0_108 = arith.constant 0 : index
    %202 = vector.load %arg1[%c6_106, %c0_107, %c0_108] : memref<25x16x128xbf16, #tpu.memory_space<vmem>>, vector<1x16x128xbf16>
    %203 = vector.shape_cast %202 : vector<1x16x128xbf16> to vector<16x128xbf16>
    %204 = arith.extf %203 : vector<16x128xbf16> to vector<16x128xf32>
    %c0_109 = arith.constant 0 : index
    %c6_110 = arith.constant 6 : index
    %205 = memref.load %arg2[%c0_109, %c6_110] : memref<8x28xf32, #tpu.memory_space<smem>>
    %206 = vector.broadcast %205 : f32 to vector<16x128xf32>
    %207 = arith.mulf %206, %204 : vector<16x128xf32>
    %208 = arith.addf %173, %207 : vector<16x128xf32>
    %c1_111 = arith.constant 1 : index
    %c6_112 = arith.constant 6 : index
    %209 = memref.load %arg2[%c1_111, %c6_112] : memref<8x28xf32, #tpu.memory_space<smem>>
    %210 = vector.broadcast %209 : f32 to vector<16x128xf32>
    %211 = arith.mulf %210, %204 : vector<16x128xf32>
    %212 = arith.addf %177, %211 : vector<16x128xf32>
    %c2_113 = arith.constant 2 : index
    %c6_114 = arith.constant 6 : index
    %213 = memref.load %arg2[%c2_113, %c6_114] : memref<8x28xf32, #tpu.memory_space<smem>>
    %214 = vector.broadcast %213 : f32 to vector<16x128xf32>
    %215 = arith.mulf %214, %204 : vector<16x128xf32>
    %216 = arith.addf %181, %215 : vector<16x128xf32>
    %c3_115 = arith.constant 3 : index
    %c6_116 = arith.constant 6 : index
    %217 = memref.load %arg2[%c3_115, %c6_116] : memref<8x28xf32, #tpu.memory_space<smem>>
    %218 = vector.broadcast %217 : f32 to vector<16x128xf32>
    %219 = arith.mulf %218, %204 : vector<16x128xf32>
    %220 = arith.addf %185, %219 : vector<16x128xf32>
    %c4_117 = arith.constant 4 : index
    %c6_118 = arith.constant 6 : index
    %221 = memref.load %arg2[%c4_117, %c6_118] : memref<8x28xf32, #tpu.memory_space<smem>>
    %222 = vector.broadcast %221 : f32 to vector<16x128xf32>
    %223 = arith.mulf %222, %204 : vector<16x128xf32>
    %224 = arith.addf %189, %223 : vector<16x128xf32>
    %c5_119 = arith.constant 5 : index
    %c6_120 = arith.constant 6 : index
    %225 = memref.load %arg2[%c5_119, %c6_120] : memref<8x28xf32, #tpu.memory_space<smem>>
    %226 = vector.broadcast %225 : f32 to vector<16x128xf32>
    %227 = arith.mulf %226, %204 : vector<16x128xf32>
    %228 = arith.addf %193, %227 : vector<16x128xf32>
    %c6_121 = arith.constant 6 : index
    %c6_122 = arith.constant 6 : index
    %229 = memref.load %arg2[%c6_121, %c6_122] : memref<8x28xf32, #tpu.memory_space<smem>>
    %230 = vector.broadcast %229 : f32 to vector<16x128xf32>
    %231 = arith.mulf %230, %204 : vector<16x128xf32>
    %232 = arith.addf %197, %231 : vector<16x128xf32>
    %c7_123 = arith.constant 7 : index
    %c6_124 = arith.constant 6 : index
    %233 = memref.load %arg2[%c7_123, %c6_124] : memref<8x28xf32, #tpu.memory_space<smem>>
    %234 = vector.broadcast %233 : f32 to vector<16x128xf32>
    %235 = arith.mulf %234, %204 : vector<16x128xf32>
    %236 = arith.addf %201, %235 : vector<16x128xf32>
    %c7_125 = arith.constant 7 : index
    %c0_126 = arith.constant 0 : index
    %c0_127 = arith.constant 0 : index
    %237 = vector.load %arg1[%c7_125, %c0_126, %c0_127] : memref<25x16x128xbf16, #tpu.memory_space<vmem>>, vector<1x16x128xbf16>
    %238 = vector.shape_cast %237 : vector<1x16x128xbf16> to vector<16x128xbf16>
    %239 = arith.extf %238 : vector<16x128xbf16> to vector<16x128xf32>
    %c0_128 = arith.constant 0 : index
    %c7_129 = arith.constant 7 : index
    %240 = memref.load %arg2[%c0_128, %c7_129] : memref<8x28xf32, #tpu.memory_space<smem>>
    %241 = vector.broadcast %240 : f32 to vector<16x128xf32>
    %242 = arith.mulf %241, %239 : vector<16x128xf32>
    %243 = arith.addf %208, %242 : vector<16x128xf32>
    %c1_130 = arith.constant 1 : index
    %c7_131 = arith.constant 7 : index
    %244 = memref.load %arg2[%c1_130, %c7_131] : memref<8x28xf32, #tpu.memory_space<smem>>
    %245 = vector.broadcast %244 : f32 to vector<16x128xf32>
    %246 = arith.mulf %245, %239 : vector<16x128xf32>
    %247 = arith.addf %212, %246 : vector<16x128xf32>
    %c2_132 = arith.constant 2 : index
    %c7_133 = arith.constant 7 : index
    %248 = memref.load %arg2[%c2_132, %c7_133] : memref<8x28xf32, #tpu.memory_space<smem>>
    %249 = vector.broadcast %248 : f32 to vector<16x128xf32>
    %250 = arith.mulf %249, %239 : vector<16x128xf32>
    %251 = arith.addf %216, %250 : vector<16x128xf32>
    %c3_134 = arith.constant 3 : index
    %c7_135 = arith.constant 7 : index
    %252 = memref.load %arg2[%c3_134, %c7_135] : memref<8x28xf32, #tpu.memory_space<smem>>
    %253 = vector.broadcast %252 : f32 to vector<16x128xf32>
    %254 = arith.mulf %253, %239 : vector<16x128xf32>
    %255 = arith.addf %220, %254 : vector<16x128xf32>
    %c4_136 = arith.constant 4 : index
    %c7_137 = arith.constant 7 : index
    %256 = memref.load %arg2[%c4_136, %c7_137] : memref<8x28xf32, #tpu.memory_space<smem>>
    %257 = vector.broadcast %256 : f32 to vector<16x128xf32>
    %258 = arith.mulf %257, %239 : vector<16x128xf32>
    %259 = arith.addf %224, %258 : vector<16x128xf32>
    %c5_138 = arith.constant 5 : index
    %c7_139 = arith.constant 7 : index
    %260 = memref.load %arg2[%c5_138, %c7_139] : memref<8x28xf32, #tpu.memory_space<smem>>
    %261 = vector.broadcast %260 : f32 to vector<16x128xf32>
    %262 = arith.mulf %261, %239 : vector<16x128xf32>
    %263 = arith.addf %228, %262 : vector<16x128xf32>
    %c6_140 = arith.constant 6 : index
    %c7_141 = arith.constant 7 : index
    %264 = memref.load %arg2[%c6_140, %c7_141] : memref<8x28xf32, #tpu.memory_space<smem>>
    %265 = vector.broadcast %264 : f32 to vector<16x128xf32>
    %266 = arith.mulf %265, %239 : vector<16x128xf32>
    %267 = arith.addf %232, %266 : vector<16x128xf32>
    %c7_142 = arith.constant 7 : index
    %c7_143 = arith.constant 7 : index
    %268 = memref.load %arg2[%c7_142, %c7_143] : memref<8x28xf32, #tpu.memory_space<smem>>
    %269 = vector.broadcast %268 : f32 to vector<16x128xf32>
    %270 = arith.mulf %269, %239 : vector<16x128xf32>
    %271 = arith.addf %236, %270 : vector<16x128xf32>
    %c8 = arith.constant 8 : index
    %c0_144 = arith.constant 0 : index
    %c0_145 = arith.constant 0 : index
    %272 = vector.load %arg1[%c8, %c0_144, %c0_145] : memref<25x16x128xbf16, #tpu.memory_space<vmem>>, vector<1x16x128xbf16>
    %273 = vector.shape_cast %272 : vector<1x16x128xbf16> to vector<16x128xbf16>
    %274 = arith.extf %273 : vector<16x128xbf16> to vector<16x128xf32>
    %c0_146 = arith.constant 0 : index
    %c8_147 = arith.constant 8 : index
    %275 = memref.load %arg2[%c0_146, %c8_147] : memref<8x28xf32, #tpu.memory_space<smem>>
    %276 = vector.broadcast %275 : f32 to vector<16x128xf32>
    %277 = arith.mulf %276, %274 : vector<16x128xf32>
    %278 = arith.addf %243, %277 : vector<16x128xf32>
    %c1_148 = arith.constant 1 : index
    %c8_149 = arith.constant 8 : index
    %279 = memref.load %arg2[%c1_148, %c8_149] : memref<8x28xf32, #tpu.memory_space<smem>>
    %280 = vector.broadcast %279 : f32 to vector<16x128xf32>
    %281 = arith.mulf %280, %274 : vector<16x128xf32>
    %282 = arith.addf %247, %281 : vector<16x128xf32>
    %c2_150 = arith.constant 2 : index
    %c8_151 = arith.constant 8 : index
    %283 = memref.load %arg2[%c2_150, %c8_151] : memref<8x28xf32, #tpu.memory_space<smem>>
    %284 = vector.broadcast %283 : f32 to vector<16x128xf32>
    %285 = arith.mulf %284, %274 : vector<16x128xf32>
    %286 = arith.addf %251, %285 : vector<16x128xf32>
    %c3_152 = arith.constant 3 : index
    %c8_153 = arith.constant 8 : index
    %287 = memref.load %arg2[%c3_152, %c8_153] : memref<8x28xf32, #tpu.memory_space<smem>>
    %288 = vector.broadcast %287 : f32 to vector<16x128xf32>
    %289 = arith.mulf %288, %274 : vector<16x128xf32>
    %290 = arith.addf %255, %289 : vector<16x128xf32>
    %c4_154 = arith.constant 4 : index
    %c8_155 = arith.constant 8 : index
    %291 = memref.load %arg2[%c4_154, %c8_155] : memref<8x28xf32, #tpu.memory_space<smem>>
    %292 = vector.broadcast %291 : f32 to vector<16x128xf32>
    %293 = arith.mulf %292, %274 : vector<16x128xf32>
    %294 = arith.addf %259, %293 : vector<16x128xf32>
    %c5_156 = arith.constant 5 : index
    %c8_157 = arith.constant 8 : index
    %295 = memref.load %arg2[%c5_156, %c8_157] : memref<8x28xf32, #tpu.memory_space<smem>>
    %296 = vector.broadcast %295 : f32 to vector<16x128xf32>
    %297 = arith.mulf %296, %274 : vector<16x128xf32>
    %298 = arith.addf %263, %297 : vector<16x128xf32>
    %c6_158 = arith.constant 6 : index
    %c8_159 = arith.constant 8 : index
    %299 = memref.load %arg2[%c6_158, %c8_159] : memref<8x28xf32, #tpu.memory_space<smem>>
    %300 = vector.broadcast %299 : f32 to vector<16x128xf32>
    %301 = arith.mulf %300, %274 : vector<16x128xf32>
    %302 = arith.addf %267, %301 : vector<16x128xf32>
    %c7_160 = arith.constant 7 : index
    %c8_161 = arith.constant 8 : index
    %303 = memref.load %arg2[%c7_160, %c8_161] : memref<8x28xf32, #tpu.memory_space<smem>>
    %304 = vector.broadcast %303 : f32 to vector<16x128xf32>
    %305 = arith.mulf %304, %274 : vector<16x128xf32>
    %306 = arith.addf %271, %305 : vector<16x128xf32>
    %c9 = arith.constant 9 : index
    %c0_162 = arith.constant 0 : index
    %c0_163 = arith.constant 0 : index
    %307 = vector.load %arg1[%c9, %c0_162, %c0_163] : memref<25x16x128xbf16, #tpu.memory_space<vmem>>, vector<1x16x128xbf16>
    %308 = vector.shape_cast %307 : vector<1x16x128xbf16> to vector<16x128xbf16>
    %309 = arith.extf %308 : vector<16x128xbf16> to vector<16x128xf32>
    %c0_164 = arith.constant 0 : index
    %c9_165 = arith.constant 9 : index
    %310 = memref.load %arg2[%c0_164, %c9_165] : memref<8x28xf32, #tpu.memory_space<smem>>
    %311 = vector.broadcast %310 : f32 to vector<16x128xf32>
    %312 = arith.mulf %311, %309 : vector<16x128xf32>
    %313 = arith.addf %278, %312 : vector<16x128xf32>
    %c1_166 = arith.constant 1 : index
    %c9_167 = arith.constant 9 : index
    %314 = memref.load %arg2[%c1_166, %c9_167] : memref<8x28xf32, #tpu.memory_space<smem>>
    %315 = vector.broadcast %314 : f32 to vector<16x128xf32>
    %316 = arith.mulf %315, %309 : vector<16x128xf32>
    %317 = arith.addf %282, %316 : vector<16x128xf32>
    %c2_168 = arith.constant 2 : index
    %c9_169 = arith.constant 9 : index
    %318 = memref.load %arg2[%c2_168, %c9_169] : memref<8x28xf32, #tpu.memory_space<smem>>
    %319 = vector.broadcast %318 : f32 to vector<16x128xf32>
    %320 = arith.mulf %319, %309 : vector<16x128xf32>
    %321 = arith.addf %286, %320 : vector<16x128xf32>
    %c3_170 = arith.constant 3 : index
    %c9_171 = arith.constant 9 : index
    %322 = memref.load %arg2[%c3_170, %c9_171] : memref<8x28xf32, #tpu.memory_space<smem>>
    %323 = vector.broadcast %322 : f32 to vector<16x128xf32>
    %324 = arith.mulf %323, %309 : vector<16x128xf32>
    %325 = arith.addf %290, %324 : vector<16x128xf32>
    %c4_172 = arith.constant 4 : index
    %c9_173 = arith.constant 9 : index
    %326 = memref.load %arg2[%c4_172, %c9_173] : memref<8x28xf32, #tpu.memory_space<smem>>
    %327 = vector.broadcast %326 : f32 to vector<16x128xf32>
    %328 = arith.mulf %327, %309 : vector<16x128xf32>
    %329 = arith.addf %294, %328 : vector<16x128xf32>
    %c5_174 = arith.constant 5 : index
    %c9_175 = arith.constant 9 : index
    %330 = memref.load %arg2[%c5_174, %c9_175] : memref<8x28xf32, #tpu.memory_space<smem>>
    %331 = vector.broadcast %330 : f32 to vector<16x128xf32>
    %332 = arith.mulf %331, %309 : vector<16x128xf32>
    %333 = arith.addf %298, %332 : vector<16x128xf32>
    %c6_176 = arith.constant 6 : index
    %c9_177 = arith.constant 9 : index
    %334 = memref.load %arg2[%c6_176, %c9_177] : memref<8x28xf32, #tpu.memory_space<smem>>
    %335 = vector.broadcast %334 : f32 to vector<16x128xf32>
    %336 = arith.mulf %335, %309 : vector<16x128xf32>
    %337 = arith.addf %302, %336 : vector<16x128xf32>
    %c7_178 = arith.constant 7 : index
    %c9_179 = arith.constant 9 : index
    %338 = memref.load %arg2[%c7_178, %c9_179] : memref<8x28xf32, #tpu.memory_space<smem>>
    %339 = vector.broadcast %338 : f32 to vector<16x128xf32>
    %340 = arith.mulf %339, %309 : vector<16x128xf32>
    %341 = arith.addf %306, %340 : vector<16x128xf32>
    %c10 = arith.constant 10 : index
    %c0_180 = arith.constant 0 : index
    %c0_181 = arith.constant 0 : index
    %342 = vector.load %arg1[%c10, %c0_180, %c0_181] : memref<25x16x128xbf16, #tpu.memory_space<vmem>>, vector<1x16x128xbf16>
    %343 = vector.shape_cast %342 : vector<1x16x128xbf16> to vector<16x128xbf16>
    %344 = arith.extf %343 : vector<16x128xbf16> to vector<16x128xf32>
    %c0_182 = arith.constant 0 : index
    %c10_183 = arith.constant 10 : index
    %345 = memref.load %arg2[%c0_182, %c10_183] : memref<8x28xf32, #tpu.memory_space<smem>>
    %346 = vector.broadcast %345 : f32 to vector<16x128xf32>
    %347 = arith.mulf %346, %344 : vector<16x128xf32>
    %348 = arith.addf %313, %347 : vector<16x128xf32>
    %c1_184 = arith.constant 1 : index
    %c10_185 = arith.constant 10 : index
    %349 = memref.load %arg2[%c1_184, %c10_185] : memref<8x28xf32, #tpu.memory_space<smem>>
    %350 = vector.broadcast %349 : f32 to vector<16x128xf32>
    %351 = arith.mulf %350, %344 : vector<16x128xf32>
    %352 = arith.addf %317, %351 : vector<16x128xf32>
    %c2_186 = arith.constant 2 : index
    %c10_187 = arith.constant 10 : index
    %353 = memref.load %arg2[%c2_186, %c10_187] : memref<8x28xf32, #tpu.memory_space<smem>>
    %354 = vector.broadcast %353 : f32 to vector<16x128xf32>
    %355 = arith.mulf %354, %344 : vector<16x128xf32>
    %356 = arith.addf %321, %355 : vector<16x128xf32>
    %c3_188 = arith.constant 3 : index
    %c10_189 = arith.constant 10 : index
    %357 = memref.load %arg2[%c3_188, %c10_189] : memref<8x28xf32, #tpu.memory_space<smem>>
    %358 = vector.broadcast %357 : f32 to vector<16x128xf32>
    %359 = arith.mulf %358, %344 : vector<16x128xf32>
    %360 = arith.addf %325, %359 : vector<16x128xf32>
    %c4_190 = arith.constant 4 : index
    %c10_191 = arith.constant 10 : index
    %361 = memref.load %arg2[%c4_190, %c10_191] : memref<8x28xf32, #tpu.memory_space<smem>>
    %362 = vector.broadcast %361 : f32 to vector<16x128xf32>
    %363 = arith.mulf %362, %344 : vector<16x128xf32>
    %364 = arith.addf %329, %363 : vector<16x128xf32>
    %c5_192 = arith.constant 5 : index
    %c10_193 = arith.constant 10 : index
    %365 = memref.load %arg2[%c5_192, %c10_193] : memref<8x28xf32, #tpu.memory_space<smem>>
    %366 = vector.broadcast %365 : f32 to vector<16x128xf32>
    %367 = arith.mulf %366, %344 : vector<16x128xf32>
    %368 = arith.addf %333, %367 : vector<16x128xf32>
    %c6_194 = arith.constant 6 : index
    %c10_195 = arith.constant 10 : index
    %369 = memref.load %arg2[%c6_194, %c10_195] : memref<8x28xf32, #tpu.memory_space<smem>>
    %370 = vector.broadcast %369 : f32 to vector<16x128xf32>
    %371 = arith.mulf %370, %344 : vector<16x128xf32>
    %372 = arith.addf %337, %371 : vector<16x128xf32>
    %c7_196 = arith.constant 7 : index
    %c10_197 = arith.constant 10 : index
    %373 = memref.load %arg2[%c7_196, %c10_197] : memref<8x28xf32, #tpu.memory_space<smem>>
    %374 = vector.broadcast %373 : f32 to vector<16x128xf32>
    %375 = arith.mulf %374, %344 : vector<16x128xf32>
    %376 = arith.addf %341, %375 : vector<16x128xf32>
    %c11 = arith.constant 11 : index
    %c0_198 = arith.constant 0 : index
    %c0_199 = arith.constant 0 : index
    %377 = vector.load %arg1[%c11, %c0_198, %c0_199] : memref<25x16x128xbf16, #tpu.memory_space<vmem>>, vector<1x16x128xbf16>
    %378 = vector.shape_cast %377 : vector<1x16x128xbf16> to vector<16x128xbf16>
    %379 = arith.extf %378 : vector<16x128xbf16> to vector<16x128xf32>
    %c0_200 = arith.constant 0 : index
    %c11_201 = arith.constant 11 : index
    %380 = memref.load %arg2[%c0_200, %c11_201] : memref<8x28xf32, #tpu.memory_space<smem>>
    %381 = vector.broadcast %380 : f32 to vector<16x128xf32>
    %382 = arith.mulf %381, %379 : vector<16x128xf32>
    %383 = arith.addf %348, %382 : vector<16x128xf32>
    %c1_202 = arith.constant 1 : index
    %c11_203 = arith.constant 11 : index
    %384 = memref.load %arg2[%c1_202, %c11_203] : memref<8x28xf32, #tpu.memory_space<smem>>
    %385 = vector.broadcast %384 : f32 to vector<16x128xf32>
    %386 = arith.mulf %385, %379 : vector<16x128xf32>
    %387 = arith.addf %352, %386 : vector<16x128xf32>
    %c2_204 = arith.constant 2 : index
    %c11_205 = arith.constant 11 : index
    %388 = memref.load %arg2[%c2_204, %c11_205] : memref<8x28xf32, #tpu.memory_space<smem>>
    %389 = vector.broadcast %388 : f32 to vector<16x128xf32>
    %390 = arith.mulf %389, %379 : vector<16x128xf32>
    %391 = arith.addf %356, %390 : vector<16x128xf32>
    %c3_206 = arith.constant 3 : index
    %c11_207 = arith.constant 11 : index
    %392 = memref.load %arg2[%c3_206, %c11_207] : memref<8x28xf32, #tpu.memory_space<smem>>
    %393 = vector.broadcast %392 : f32 to vector<16x128xf32>
    %394 = arith.mulf %393, %379 : vector<16x128xf32>
    %395 = arith.addf %360, %394 : vector<16x128xf32>
    %c4_208 = arith.constant 4 : index
    %c11_209 = arith.constant 11 : index
    %396 = memref.load %arg2[%c4_208, %c11_209] : memref<8x28xf32, #tpu.memory_space<smem>>
    %397 = vector.broadcast %396 : f32 to vector<16x128xf32>
    %398 = arith.mulf %397, %379 : vector<16x128xf32>
    %399 = arith.addf %364, %398 : vector<16x128xf32>
    %c5_210 = arith.constant 5 : index
    %c11_211 = arith.constant 11 : index
    %400 = memref.load %arg2[%c5_210, %c11_211] : memref<8x28xf32, #tpu.memory_space<smem>>
    %401 = vector.broadcast %400 : f32 to vector<16x128xf32>
    %402 = arith.mulf %401, %379 : vector<16x128xf32>
    %403 = arith.addf %368, %402 : vector<16x128xf32>
    %c6_212 = arith.constant 6 : index
    %c11_213 = arith.constant 11 : index
    %404 = memref.load %arg2[%c6_212, %c11_213] : memref<8x28xf32, #tpu.memory_space<smem>>
    %405 = vector.broadcast %404 : f32 to vector<16x128xf32>
    %406 = arith.mulf %405, %379 : vector<16x128xf32>
    %407 = arith.addf %372, %406 : vector<16x128xf32>
    %c7_214 = arith.constant 7 : index
    %c11_215 = arith.constant 11 : index
    %408 = memref.load %arg2[%c7_214, %c11_215] : memref<8x28xf32, #tpu.memory_space<smem>>
    %409 = vector.broadcast %408 : f32 to vector<16x128xf32>
    %410 = arith.mulf %409, %379 : vector<16x128xf32>
    %411 = arith.addf %376, %410 : vector<16x128xf32>
    %c12 = arith.constant 12 : index
    %c0_216 = arith.constant 0 : index
    %c0_217 = arith.constant 0 : index
    %412 = vector.load %arg1[%c12, %c0_216, %c0_217] : memref<25x16x128xbf16, #tpu.memory_space<vmem>>, vector<1x16x128xbf16>
    %413 = vector.shape_cast %412 : vector<1x16x128xbf16> to vector<16x128xbf16>
    %414 = arith.extf %413 : vector<16x128xbf16> to vector<16x128xf32>
    %c0_218 = arith.constant 0 : index
    %c12_219 = arith.constant 12 : index
    %415 = memref.load %arg2[%c0_218, %c12_219] : memref<8x28xf32, #tpu.memory_space<smem>>
    %416 = vector.broadcast %415 : f32 to vector<16x128xf32>
    %417 = arith.mulf %416, %414 : vector<16x128xf32>
    %418 = arith.addf %383, %417 : vector<16x128xf32>
    %c1_220 = arith.constant 1 : index
    %c12_221 = arith.constant 12 : index
    %419 = memref.load %arg2[%c1_220, %c12_221] : memref<8x28xf32, #tpu.memory_space<smem>>
    %420 = vector.broadcast %419 : f32 to vector<16x128xf32>
    %421 = arith.mulf %420, %414 : vector<16x128xf32>
    %422 = arith.addf %387, %421 : vector<16x128xf32>
    %c2_222 = arith.constant 2 : index
    %c12_223 = arith.constant 12 : index
    %423 = memref.load %arg2[%c2_222, %c12_223] : memref<8x28xf32, #tpu.memory_space<smem>>
    %424 = vector.broadcast %423 : f32 to vector<16x128xf32>
    %425 = arith.mulf %424, %414 : vector<16x128xf32>
    %426 = arith.addf %391, %425 : vector<16x128xf32>
    %c3_224 = arith.constant 3 : index
    %c12_225 = arith.constant 12 : index
    %427 = memref.load %arg2[%c3_224, %c12_225] : memref<8x28xf32, #tpu.memory_space<smem>>
    %428 = vector.broadcast %427 : f32 to vector<16x128xf32>
    %429 = arith.mulf %428, %414 : vector<16x128xf32>
    %430 = arith.addf %395, %429 : vector<16x128xf32>
    %c4_226 = arith.constant 4 : index
    %c12_227 = arith.constant 12 : index
    %431 = memref.load %arg2[%c4_226, %c12_227] : memref<8x28xf32, #tpu.memory_space<smem>>
    %432 = vector.broadcast %431 : f32 to vector<16x128xf32>
    %433 = arith.mulf %432, %414 : vector<16x128xf32>
    %434 = arith.addf %399, %433 : vector<16x128xf32>
    %c5_228 = arith.constant 5 : index
    %c12_229 = arith.constant 12 : index
    %435 = memref.load %arg2[%c5_228, %c12_229] : memref<8x28xf32, #tpu.memory_space<smem>>
    %436 = vector.broadcast %435 : f32 to vector<16x128xf32>
    %437 = arith.mulf %436, %414 : vector<16x128xf32>
    %438 = arith.addf %403, %437 : vector<16x128xf32>
    %c6_230 = arith.constant 6 : index
    %c12_231 = arith.constant 12 : index
    %439 = memref.load %arg2[%c6_230, %c12_231] : memref<8x28xf32, #tpu.memory_space<smem>>
    %440 = vector.broadcast %439 : f32 to vector<16x128xf32>
    %441 = arith.mulf %440, %414 : vector<16x128xf32>
    %442 = arith.addf %407, %441 : vector<16x128xf32>
    %c7_232 = arith.constant 7 : index
    %c12_233 = arith.constant 12 : index
    %443 = memref.load %arg2[%c7_232, %c12_233] : memref<8x28xf32, #tpu.memory_space<smem>>
    %444 = vector.broadcast %443 : f32 to vector<16x128xf32>
    %445 = arith.mulf %444, %414 : vector<16x128xf32>
    %446 = arith.addf %411, %445 : vector<16x128xf32>
    %c13 = arith.constant 13 : index
    %c0_234 = arith.constant 0 : index
    %c0_235 = arith.constant 0 : index
    %447 = vector.load %arg1[%c13, %c0_234, %c0_235] : memref<25x16x128xbf16, #tpu.memory_space<vmem>>, vector<1x16x128xbf16>
    %448 = vector.shape_cast %447 : vector<1x16x128xbf16> to vector<16x128xbf16>
    %449 = arith.extf %448 : vector<16x128xbf16> to vector<16x128xf32>
    %c0_236 = arith.constant 0 : index
    %c13_237 = arith.constant 13 : index
    %450 = memref.load %arg2[%c0_236, %c13_237] : memref<8x28xf32, #tpu.memory_space<smem>>
    %451 = vector.broadcast %450 : f32 to vector<16x128xf32>
    %452 = arith.mulf %451, %449 : vector<16x128xf32>
    %453 = arith.addf %418, %452 : vector<16x128xf32>
    %c1_238 = arith.constant 1 : index
    %c13_239 = arith.constant 13 : index
    %454 = memref.load %arg2[%c1_238, %c13_239] : memref<8x28xf32, #tpu.memory_space<smem>>
    %455 = vector.broadcast %454 : f32 to vector<16x128xf32>
    %456 = arith.mulf %455, %449 : vector<16x128xf32>
    %457 = arith.addf %422, %456 : vector<16x128xf32>
    %c2_240 = arith.constant 2 : index
    %c13_241 = arith.constant 13 : index
    %458 = memref.load %arg2[%c2_240, %c13_241] : memref<8x28xf32, #tpu.memory_space<smem>>
    %459 = vector.broadcast %458 : f32 to vector<16x128xf32>
    %460 = arith.mulf %459, %449 : vector<16x128xf32>
    %461 = arith.addf %426, %460 : vector<16x128xf32>
    %c3_242 = arith.constant 3 : index
    %c13_243 = arith.constant 13 : index
    %462 = memref.load %arg2[%c3_242, %c13_243] : memref<8x28xf32, #tpu.memory_space<smem>>
    %463 = vector.broadcast %462 : f32 to vector<16x128xf32>
    %464 = arith.mulf %463, %449 : vector<16x128xf32>
    %465 = arith.addf %430, %464 : vector<16x128xf32>
    %c4_244 = arith.constant 4 : index
    %c13_245 = arith.constant 13 : index
    %466 = memref.load %arg2[%c4_244, %c13_245] : memref<8x28xf32, #tpu.memory_space<smem>>
    %467 = vector.broadcast %466 : f32 to vector<16x128xf32>
    %468 = arith.mulf %467, %449 : vector<16x128xf32>
    %469 = arith.addf %434, %468 : vector<16x128xf32>
    %c5_246 = arith.constant 5 : index
    %c13_247 = arith.constant 13 : index
    %470 = memref.load %arg2[%c5_246, %c13_247] : memref<8x28xf32, #tpu.memory_space<smem>>
    %471 = vector.broadcast %470 : f32 to vector<16x128xf32>
    %472 = arith.mulf %471, %449 : vector<16x128xf32>
    %473 = arith.addf %438, %472 : vector<16x128xf32>
    %c6_248 = arith.constant 6 : index
    %c13_249 = arith.constant 13 : index
    %474 = memref.load %arg2[%c6_248, %c13_249] : memref<8x28xf32, #tpu.memory_space<smem>>
    %475 = vector.broadcast %474 : f32 to vector<16x128xf32>
    %476 = arith.mulf %475, %449 : vector<16x128xf32>
    %477 = arith.addf %442, %476 : vector<16x128xf32>
    %c7_250 = arith.constant 7 : index
    %c13_251 = arith.constant 13 : index
    %478 = memref.load %arg2[%c7_250, %c13_251] : memref<8x28xf32, #tpu.memory_space<smem>>
    %479 = vector.broadcast %478 : f32 to vector<16x128xf32>
    %480 = arith.mulf %479, %449 : vector<16x128xf32>
    %481 = arith.addf %446, %480 : vector<16x128xf32>
    %c14 = arith.constant 14 : index
    %c0_252 = arith.constant 0 : index
    %c0_253 = arith.constant 0 : index
    %482 = vector.load %arg1[%c14, %c0_252, %c0_253] : memref<25x16x128xbf16, #tpu.memory_space<vmem>>, vector<1x16x128xbf16>
    %483 = vector.shape_cast %482 : vector<1x16x128xbf16> to vector<16x128xbf16>
    %484 = arith.extf %483 : vector<16x128xbf16> to vector<16x128xf32>
    %c0_254 = arith.constant 0 : index
    %c14_255 = arith.constant 14 : index
    %485 = memref.load %arg2[%c0_254, %c14_255] : memref<8x28xf32, #tpu.memory_space<smem>>
    %486 = vector.broadcast %485 : f32 to vector<16x128xf32>
    %487 = arith.mulf %486, %484 : vector<16x128xf32>
    %488 = arith.addf %453, %487 : vector<16x128xf32>
    %c1_256 = arith.constant 1 : index
    %c14_257 = arith.constant 14 : index
    %489 = memref.load %arg2[%c1_256, %c14_257] : memref<8x28xf32, #tpu.memory_space<smem>>
    %490 = vector.broadcast %489 : f32 to vector<16x128xf32>
    %491 = arith.mulf %490, %484 : vector<16x128xf32>
    %492 = arith.addf %457, %491 : vector<16x128xf32>
    %c2_258 = arith.constant 2 : index
    %c14_259 = arith.constant 14 : index
    %493 = memref.load %arg2[%c2_258, %c14_259] : memref<8x28xf32, #tpu.memory_space<smem>>
    %494 = vector.broadcast %493 : f32 to vector<16x128xf32>
    %495 = arith.mulf %494, %484 : vector<16x128xf32>
    %496 = arith.addf %461, %495 : vector<16x128xf32>
    %c3_260 = arith.constant 3 : index
    %c14_261 = arith.constant 14 : index
    %497 = memref.load %arg2[%c3_260, %c14_261] : memref<8x28xf32, #tpu.memory_space<smem>>
    %498 = vector.broadcast %497 : f32 to vector<16x128xf32>
    %499 = arith.mulf %498, %484 : vector<16x128xf32>
    %500 = arith.addf %465, %499 : vector<16x128xf32>
    %c4_262 = arith.constant 4 : index
    %c14_263 = arith.constant 14 : index
    %501 = memref.load %arg2[%c4_262, %c14_263] : memref<8x28xf32, #tpu.memory_space<smem>>
    %502 = vector.broadcast %501 : f32 to vector<16x128xf32>
    %503 = arith.mulf %502, %484 : vector<16x128xf32>
    %504 = arith.addf %469, %503 : vector<16x128xf32>
    %c5_264 = arith.constant 5 : index
    %c14_265 = arith.constant 14 : index
    %505 = memref.load %arg2[%c5_264, %c14_265] : memref<8x28xf32, #tpu.memory_space<smem>>
    %506 = vector.broadcast %505 : f32 to vector<16x128xf32>
    %507 = arith.mulf %506, %484 : vector<16x128xf32>
    %508 = arith.addf %473, %507 : vector<16x128xf32>
    %c6_266 = arith.constant 6 : index
    %c14_267 = arith.constant 14 : index
    %509 = memref.load %arg2[%c6_266, %c14_267] : memref<8x28xf32, #tpu.memory_space<smem>>
    %510 = vector.broadcast %509 : f32 to vector<16x128xf32>
    %511 = arith.mulf %510, %484 : vector<16x128xf32>
    %512 = arith.addf %477, %511 : vector<16x128xf32>
    %c7_268 = arith.constant 7 : index
    %c14_269 = arith.constant 14 : index
    %513 = memref.load %arg2[%c7_268, %c14_269] : memref<8x28xf32, #tpu.memory_space<smem>>
    %514 = vector.broadcast %513 : f32 to vector<16x128xf32>
    %515 = arith.mulf %514, %484 : vector<16x128xf32>
    %516 = arith.addf %481, %515 : vector<16x128xf32>
    %c15 = arith.constant 15 : index
    %c0_270 = arith.constant 0 : index
    %c0_271 = arith.constant 0 : index
    %517 = vector.load %arg1[%c15, %c0_270, %c0_271] : memref<25x16x128xbf16, #tpu.memory_space<vmem>>, vector<1x16x128xbf16>
    %518 = vector.shape_cast %517 : vector<1x16x128xbf16> to vector<16x128xbf16>
    %519 = arith.extf %518 : vector<16x128xbf16> to vector<16x128xf32>
    %c0_272 = arith.constant 0 : index
    %c15_273 = arith.constant 15 : index
    %520 = memref.load %arg2[%c0_272, %c15_273] : memref<8x28xf32, #tpu.memory_space<smem>>
    %521 = vector.broadcast %520 : f32 to vector<16x128xf32>
    %522 = arith.mulf %521, %519 : vector<16x128xf32>
    %523 = arith.addf %488, %522 : vector<16x128xf32>
    %c1_274 = arith.constant 1 : index
    %c15_275 = arith.constant 15 : index
    %524 = memref.load %arg2[%c1_274, %c15_275] : memref<8x28xf32, #tpu.memory_space<smem>>
    %525 = vector.broadcast %524 : f32 to vector<16x128xf32>
    %526 = arith.mulf %525, %519 : vector<16x128xf32>
    %527 = arith.addf %492, %526 : vector<16x128xf32>
    %c2_276 = arith.constant 2 : index
    %c15_277 = arith.constant 15 : index
    %528 = memref.load %arg2[%c2_276, %c15_277] : memref<8x28xf32, #tpu.memory_space<smem>>
    %529 = vector.broadcast %528 : f32 to vector<16x128xf32>
    %530 = arith.mulf %529, %519 : vector<16x128xf32>
    %531 = arith.addf %496, %530 : vector<16x128xf32>
    %c3_278 = arith.constant 3 : index
    %c15_279 = arith.constant 15 : index
    %532 = memref.load %arg2[%c3_278, %c15_279] : memref<8x28xf32, #tpu.memory_space<smem>>
    %533 = vector.broadcast %532 : f32 to vector<16x128xf32>
    %534 = arith.mulf %533, %519 : vector<16x128xf32>
    %535 = arith.addf %500, %534 : vector<16x128xf32>
    %c4_280 = arith.constant 4 : index
    %c15_281 = arith.constant 15 : index
    %536 = memref.load %arg2[%c4_280, %c15_281] : memref<8x28xf32, #tpu.memory_space<smem>>
    %537 = vector.broadcast %536 : f32 to vector<16x128xf32>
    %538 = arith.mulf %537, %519 : vector<16x128xf32>
    %539 = arith.addf %504, %538 : vector<16x128xf32>
    %c5_282 = arith.constant 5 : index
    %c15_283 = arith.constant 15 : index
    %540 = memref.load %arg2[%c5_282, %c15_283] : memref<8x28xf32, #tpu.memory_space<smem>>
    %541 = vector.broadcast %540 : f32 to vector<16x128xf32>
    %542 = arith.mulf %541, %519 : vector<16x128xf32>
    %543 = arith.addf %508, %542 : vector<16x128xf32>
    %c6_284 = arith.constant 6 : index
    %c15_285 = arith.constant 15 : index
    %544 = memref.load %arg2[%c6_284, %c15_285] : memref<8x28xf32, #tpu.memory_space<smem>>
    %545 = vector.broadcast %544 : f32 to vector<16x128xf32>
    %546 = arith.mulf %545, %519 : vector<16x128xf32>
    %547 = arith.addf %512, %546 : vector<16x128xf32>
    %c7_286 = arith.constant 7 : index
    %c15_287 = arith.constant 15 : index
    %548 = memref.load %arg2[%c7_286, %c15_287] : memref<8x28xf32, #tpu.memory_space<smem>>
    %549 = vector.broadcast %548 : f32 to vector<16x128xf32>
    %550 = arith.mulf %549, %519 : vector<16x128xf32>
    %551 = arith.addf %516, %550 : vector<16x128xf32>
    %c16 = arith.constant 16 : index
    %c0_288 = arith.constant 0 : index
    %c0_289 = arith.constant 0 : index
    %552 = vector.load %arg1[%c16, %c0_288, %c0_289] : memref<25x16x128xbf16, #tpu.memory_space<vmem>>, vector<1x16x128xbf16>
    %553 = vector.shape_cast %552 : vector<1x16x128xbf16> to vector<16x128xbf16>
    %554 = arith.extf %553 : vector<16x128xbf16> to vector<16x128xf32>
    %c0_290 = arith.constant 0 : index
    %c16_291 = arith.constant 16 : index
    %555 = memref.load %arg2[%c0_290, %c16_291] : memref<8x28xf32, #tpu.memory_space<smem>>
    %556 = vector.broadcast %555 : f32 to vector<16x128xf32>
    %557 = arith.mulf %556, %554 : vector<16x128xf32>
    %558 = arith.addf %523, %557 : vector<16x128xf32>
    %c1_292 = arith.constant 1 : index
    %c16_293 = arith.constant 16 : index
    %559 = memref.load %arg2[%c1_292, %c16_293] : memref<8x28xf32, #tpu.memory_space<smem>>
    %560 = vector.broadcast %559 : f32 to vector<16x128xf32>
    %561 = arith.mulf %560, %554 : vector<16x128xf32>
    %562 = arith.addf %527, %561 : vector<16x128xf32>
    %c2_294 = arith.constant 2 : index
    %c16_295 = arith.constant 16 : index
    %563 = memref.load %arg2[%c2_294, %c16_295] : memref<8x28xf32, #tpu.memory_space<smem>>
    %564 = vector.broadcast %563 : f32 to vector<16x128xf32>
    %565 = arith.mulf %564, %554 : vector<16x128xf32>
    %566 = arith.addf %531, %565 : vector<16x128xf32>
    %c3_296 = arith.constant 3 : index
    %c16_297 = arith.constant 16 : index
    %567 = memref.load %arg2[%c3_296, %c16_297] : memref<8x28xf32, #tpu.memory_space<smem>>
    %568 = vector.broadcast %567 : f32 to vector<16x128xf32>
    %569 = arith.mulf %568, %554 : vector<16x128xf32>
    %570 = arith.addf %535, %569 : vector<16x128xf32>
    %c4_298 = arith.constant 4 : index
    %c16_299 = arith.constant 16 : index
    %571 = memref.load %arg2[%c4_298, %c16_299] : memref<8x28xf32, #tpu.memory_space<smem>>
    %572 = vector.broadcast %571 : f32 to vector<16x128xf32>
    %573 = arith.mulf %572, %554 : vector<16x128xf32>
    %574 = arith.addf %539, %573 : vector<16x128xf32>
    %c5_300 = arith.constant 5 : index
    %c16_301 = arith.constant 16 : index
    %575 = memref.load %arg2[%c5_300, %c16_301] : memref<8x28xf32, #tpu.memory_space<smem>>
    %576 = vector.broadcast %575 : f32 to vector<16x128xf32>
    %577 = arith.mulf %576, %554 : vector<16x128xf32>
    %578 = arith.addf %543, %577 : vector<16x128xf32>
    %c6_302 = arith.constant 6 : index
    %c16_303 = arith.constant 16 : index
    %579 = memref.load %arg2[%c6_302, %c16_303] : memref<8x28xf32, #tpu.memory_space<smem>>
    %580 = vector.broadcast %579 : f32 to vector<16x128xf32>
    %581 = arith.mulf %580, %554 : vector<16x128xf32>
    %582 = arith.addf %547, %581 : vector<16x128xf32>
    %c7_304 = arith.constant 7 : index
    %c16_305 = arith.constant 16 : index
    %583 = memref.load %arg2[%c7_304, %c16_305] : memref<8x28xf32, #tpu.memory_space<smem>>
    %584 = vector.broadcast %583 : f32 to vector<16x128xf32>
    %585 = arith.mulf %584, %554 : vector<16x128xf32>
    %586 = arith.addf %551, %585 : vector<16x128xf32>
    %c17 = arith.constant 17 : index
    %c0_306 = arith.constant 0 : index
    %c0_307 = arith.constant 0 : index
    %587 = vector.load %arg1[%c17, %c0_306, %c0_307] : memref<25x16x128xbf16, #tpu.memory_space<vmem>>, vector<1x16x128xbf16>
    %588 = vector.shape_cast %587 : vector<1x16x128xbf16> to vector<16x128xbf16>
    %589 = arith.extf %588 : vector<16x128xbf16> to vector<16x128xf32>
    %c0_308 = arith.constant 0 : index
    %c17_309 = arith.constant 17 : index
    %590 = memref.load %arg2[%c0_308, %c17_309] : memref<8x28xf32, #tpu.memory_space<smem>>
    %591 = vector.broadcast %590 : f32 to vector<16x128xf32>
    %592 = arith.mulf %591, %589 : vector<16x128xf32>
    %593 = arith.addf %558, %592 : vector<16x128xf32>
    %c1_310 = arith.constant 1 : index
    %c17_311 = arith.constant 17 : index
    %594 = memref.load %arg2[%c1_310, %c17_311] : memref<8x28xf32, #tpu.memory_space<smem>>
    %595 = vector.broadcast %594 : f32 to vector<16x128xf32>
    %596 = arith.mulf %595, %589 : vector<16x128xf32>
    %597 = arith.addf %562, %596 : vector<16x128xf32>
    %c2_312 = arith.constant 2 : index
    %c17_313 = arith.constant 17 : index
    %598 = memref.load %arg2[%c2_312, %c17_313] : memref<8x28xf32, #tpu.memory_space<smem>>
    %599 = vector.broadcast %598 : f32 to vector<16x128xf32>
    %600 = arith.mulf %599, %589 : vector<16x128xf32>
    %601 = arith.addf %566, %600 : vector<16x128xf32>
    %c3_314 = arith.constant 3 : index
    %c17_315 = arith.constant 17 : index
    %602 = memref.load %arg2[%c3_314, %c17_315] : memref<8x28xf32, #tpu.memory_space<smem>>
    %603 = vector.broadcast %602 : f32 to vector<16x128xf32>
    %604 = arith.mulf %603, %589 : vector<16x128xf32>
    %605 = arith.addf %570, %604 : vector<16x128xf32>
    %c4_316 = arith.constant 4 : index
    %c17_317 = arith.constant 17 : index
    %606 = memref.load %arg2[%c4_316, %c17_317] : memref<8x28xf32, #tpu.memory_space<smem>>
    %607 = vector.broadcast %606 : f32 to vector<16x128xf32>
    %608 = arith.mulf %607, %589 : vector<16x128xf32>
    %609 = arith.addf %574, %608 : vector<16x128xf32>
    %c5_318 = arith.constant 5 : index
    %c17_319 = arith.constant 17 : index
    %610 = memref.load %arg2[%c5_318, %c17_319] : memref<8x28xf32, #tpu.memory_space<smem>>
    %611 = vector.broadcast %610 : f32 to vector<16x128xf32>
    %612 = arith.mulf %611, %589 : vector<16x128xf32>
    %613 = arith.addf %578, %612 : vector<16x128xf32>
    %c6_320 = arith.constant 6 : index
    %c17_321 = arith.constant 17 : index
    %614 = memref.load %arg2[%c6_320, %c17_321] : memref<8x28xf32, #tpu.memory_space<smem>>
    %615 = vector.broadcast %614 : f32 to vector<16x128xf32>
    %616 = arith.mulf %615, %589 : vector<16x128xf32>
    %617 = arith.addf %582, %616 : vector<16x128xf32>
    %c7_322 = arith.constant 7 : index
    %c17_323 = arith.constant 17 : index
    %618 = memref.load %arg2[%c7_322, %c17_323] : memref<8x28xf32, #tpu.memory_space<smem>>
    %619 = vector.broadcast %618 : f32 to vector<16x128xf32>
    %620 = arith.mulf %619, %589 : vector<16x128xf32>
    %621 = arith.addf %586, %620 : vector<16x128xf32>
    %c18 = arith.constant 18 : index
    %c0_324 = arith.constant 0 : index
    %c0_325 = arith.constant 0 : index
    %622 = vector.load %arg1[%c18, %c0_324, %c0_325] : memref<25x16x128xbf16, #tpu.memory_space<vmem>>, vector<1x16x128xbf16>
    %623 = vector.shape_cast %622 : vector<1x16x128xbf16> to vector<16x128xbf16>
    %624 = arith.extf %623 : vector<16x128xbf16> to vector<16x128xf32>
    %c0_326 = arith.constant 0 : index
    %c18_327 = arith.constant 18 : index
    %625 = memref.load %arg2[%c0_326, %c18_327] : memref<8x28xf32, #tpu.memory_space<smem>>
    %626 = vector.broadcast %625 : f32 to vector<16x128xf32>
    %627 = arith.mulf %626, %624 : vector<16x128xf32>
    %628 = arith.addf %593, %627 : vector<16x128xf32>
    %c1_328 = arith.constant 1 : index
    %c18_329 = arith.constant 18 : index
    %629 = memref.load %arg2[%c1_328, %c18_329] : memref<8x28xf32, #tpu.memory_space<smem>>
    %630 = vector.broadcast %629 : f32 to vector<16x128xf32>
    %631 = arith.mulf %630, %624 : vector<16x128xf32>
    %632 = arith.addf %597, %631 : vector<16x128xf32>
    %c2_330 = arith.constant 2 : index
    %c18_331 = arith.constant 18 : index
    %633 = memref.load %arg2[%c2_330, %c18_331] : memref<8x28xf32, #tpu.memory_space<smem>>
    %634 = vector.broadcast %633 : f32 to vector<16x128xf32>
    %635 = arith.mulf %634, %624 : vector<16x128xf32>
    %636 = arith.addf %601, %635 : vector<16x128xf32>
    %c3_332 = arith.constant 3 : index
    %c18_333 = arith.constant 18 : index
    %637 = memref.load %arg2[%c3_332, %c18_333] : memref<8x28xf32, #tpu.memory_space<smem>>
    %638 = vector.broadcast %637 : f32 to vector<16x128xf32>
    %639 = arith.mulf %638, %624 : vector<16x128xf32>
    %640 = arith.addf %605, %639 : vector<16x128xf32>
    %c4_334 = arith.constant 4 : index
    %c18_335 = arith.constant 18 : index
    %641 = memref.load %arg2[%c4_334, %c18_335] : memref<8x28xf32, #tpu.memory_space<smem>>
    %642 = vector.broadcast %641 : f32 to vector<16x128xf32>
    %643 = arith.mulf %642, %624 : vector<16x128xf32>
    %644 = arith.addf %609, %643 : vector<16x128xf32>
    %c5_336 = arith.constant 5 : index
    %c18_337 = arith.constant 18 : index
    %645 = memref.load %arg2[%c5_336, %c18_337] : memref<8x28xf32, #tpu.memory_space<smem>>
    %646 = vector.broadcast %645 : f32 to vector<16x128xf32>
    %647 = arith.mulf %646, %624 : vector<16x128xf32>
    %648 = arith.addf %613, %647 : vector<16x128xf32>
    %c6_338 = arith.constant 6 : index
    %c18_339 = arith.constant 18 : index
    %649 = memref.load %arg2[%c6_338, %c18_339] : memref<8x28xf32, #tpu.memory_space<smem>>
    %650 = vector.broadcast %649 : f32 to vector<16x128xf32>
    %651 = arith.mulf %650, %624 : vector<16x128xf32>
    %652 = arith.addf %617, %651 : vector<16x128xf32>
    %c7_340 = arith.constant 7 : index
    %c18_341 = arith.constant 18 : index
    %653 = memref.load %arg2[%c7_340, %c18_341] : memref<8x28xf32, #tpu.memory_space<smem>>
    %654 = vector.broadcast %653 : f32 to vector<16x128xf32>
    %655 = arith.mulf %654, %624 : vector<16x128xf32>
    %656 = arith.addf %621, %655 : vector<16x128xf32>
    %c19 = arith.constant 19 : index
    %c0_342 = arith.constant 0 : index
    %c0_343 = arith.constant 0 : index
    %657 = vector.load %arg1[%c19, %c0_342, %c0_343] : memref<25x16x128xbf16, #tpu.memory_space<vmem>>, vector<1x16x128xbf16>
    %658 = vector.shape_cast %657 : vector<1x16x128xbf16> to vector<16x128xbf16>
    %659 = arith.extf %658 : vector<16x128xbf16> to vector<16x128xf32>
    %c0_344 = arith.constant 0 : index
    %c19_345 = arith.constant 19 : index
    %660 = memref.load %arg2[%c0_344, %c19_345] : memref<8x28xf32, #tpu.memory_space<smem>>
    %661 = vector.broadcast %660 : f32 to vector<16x128xf32>
    %662 = arith.mulf %661, %659 : vector<16x128xf32>
    %663 = arith.addf %628, %662 : vector<16x128xf32>
    %c1_346 = arith.constant 1 : index
    %c19_347 = arith.constant 19 : index
    %664 = memref.load %arg2[%c1_346, %c19_347] : memref<8x28xf32, #tpu.memory_space<smem>>
    %665 = vector.broadcast %664 : f32 to vector<16x128xf32>
    %666 = arith.mulf %665, %659 : vector<16x128xf32>
    %667 = arith.addf %632, %666 : vector<16x128xf32>
    %c2_348 = arith.constant 2 : index
    %c19_349 = arith.constant 19 : index
    %668 = memref.load %arg2[%c2_348, %c19_349] : memref<8x28xf32, #tpu.memory_space<smem>>
    %669 = vector.broadcast %668 : f32 to vector<16x128xf32>
    %670 = arith.mulf %669, %659 : vector<16x128xf32>
    %671 = arith.addf %636, %670 : vector<16x128xf32>
    %c3_350 = arith.constant 3 : index
    %c19_351 = arith.constant 19 : index
    %672 = memref.load %arg2[%c3_350, %c19_351] : memref<8x28xf32, #tpu.memory_space<smem>>
    %673 = vector.broadcast %672 : f32 to vector<16x128xf32>
    %674 = arith.mulf %673, %659 : vector<16x128xf32>
    %675 = arith.addf %640, %674 : vector<16x128xf32>
    %c4_352 = arith.constant 4 : index
    %c19_353 = arith.constant 19 : index
    %676 = memref.load %arg2[%c4_352, %c19_353] : memref<8x28xf32, #tpu.memory_space<smem>>
    %677 = vector.broadcast %676 : f32 to vector<16x128xf32>
    %678 = arith.mulf %677, %659 : vector<16x128xf32>
    %679 = arith.addf %644, %678 : vector<16x128xf32>
    %c5_354 = arith.constant 5 : index
    %c19_355 = arith.constant 19 : index
    %680 = memref.load %arg2[%c5_354, %c19_355] : memref<8x28xf32, #tpu.memory_space<smem>>
    %681 = vector.broadcast %680 : f32 to vector<16x128xf32>
    %682 = arith.mulf %681, %659 : vector<16x128xf32>
    %683 = arith.addf %648, %682 : vector<16x128xf32>
    %c6_356 = arith.constant 6 : index
    %c19_357 = arith.constant 19 : index
    %684 = memref.load %arg2[%c6_356, %c19_357] : memref<8x28xf32, #tpu.memory_space<smem>>
    %685 = vector.broadcast %684 : f32 to vector<16x128xf32>
    %686 = arith.mulf %685, %659 : vector<16x128xf32>
    %687 = arith.addf %652, %686 : vector<16x128xf32>
    %c7_358 = arith.constant 7 : index
    %c19_359 = arith.constant 19 : index
    %688 = memref.load %arg2[%c7_358, %c19_359] : memref<8x28xf32, #tpu.memory_space<smem>>
    %689 = vector.broadcast %688 : f32 to vector<16x128xf32>
    %690 = arith.mulf %689, %659 : vector<16x128xf32>
    %691 = arith.addf %656, %690 : vector<16x128xf32>
    %c20 = arith.constant 20 : index
    %c0_360 = arith.constant 0 : index
    %c0_361 = arith.constant 0 : index
    %692 = vector.load %arg1[%c20, %c0_360, %c0_361] : memref<25x16x128xbf16, #tpu.memory_space<vmem>>, vector<1x16x128xbf16>
    %693 = vector.shape_cast %692 : vector<1x16x128xbf16> to vector<16x128xbf16>
    %694 = arith.extf %693 : vector<16x128xbf16> to vector<16x128xf32>
    %c0_362 = arith.constant 0 : index
    %c20_363 = arith.constant 20 : index
    %695 = memref.load %arg2[%c0_362, %c20_363] : memref<8x28xf32, #tpu.memory_space<smem>>
    %696 = vector.broadcast %695 : f32 to vector<16x128xf32>
    %697 = arith.mulf %696, %694 : vector<16x128xf32>
    %698 = arith.addf %663, %697 : vector<16x128xf32>
    %c1_364 = arith.constant 1 : index
    %c20_365 = arith.constant 20 : index
    %699 = memref.load %arg2[%c1_364, %c20_365] : memref<8x28xf32, #tpu.memory_space<smem>>
    %700 = vector.broadcast %699 : f32 to vector<16x128xf32>
    %701 = arith.mulf %700, %694 : vector<16x128xf32>
    %702 = arith.addf %667, %701 : vector<16x128xf32>
    %c2_366 = arith.constant 2 : index
    %c20_367 = arith.constant 20 : index
    %703 = memref.load %arg2[%c2_366, %c20_367] : memref<8x28xf32, #tpu.memory_space<smem>>
    %704 = vector.broadcast %703 : f32 to vector<16x128xf32>
    %705 = arith.mulf %704, %694 : vector<16x128xf32>
    %706 = arith.addf %671, %705 : vector<16x128xf32>
    %c3_368 = arith.constant 3 : index
    %c20_369 = arith.constant 20 : index
    %707 = memref.load %arg2[%c3_368, %c20_369] : memref<8x28xf32, #tpu.memory_space<smem>>
    %708 = vector.broadcast %707 : f32 to vector<16x128xf32>
    %709 = arith.mulf %708, %694 : vector<16x128xf32>
    %710 = arith.addf %675, %709 : vector<16x128xf32>
    %c4_370 = arith.constant 4 : index
    %c20_371 = arith.constant 20 : index
    %711 = memref.load %arg2[%c4_370, %c20_371] : memref<8x28xf32, #tpu.memory_space<smem>>
    %712 = vector.broadcast %711 : f32 to vector<16x128xf32>
    %713 = arith.mulf %712, %694 : vector<16x128xf32>
    %714 = arith.addf %679, %713 : vector<16x128xf32>
    %c5_372 = arith.constant 5 : index
    %c20_373 = arith.constant 20 : index
    %715 = memref.load %arg2[%c5_372, %c20_373] : memref<8x28xf32, #tpu.memory_space<smem>>
    %716 = vector.broadcast %715 : f32 to vector<16x128xf32>
    %717 = arith.mulf %716, %694 : vector<16x128xf32>
    %718 = arith.addf %683, %717 : vector<16x128xf32>
    %c6_374 = arith.constant 6 : index
    %c20_375 = arith.constant 20 : index
    %719 = memref.load %arg2[%c6_374, %c20_375] : memref<8x28xf32, #tpu.memory_space<smem>>
    %720 = vector.broadcast %719 : f32 to vector<16x128xf32>
    %721 = arith.mulf %720, %694 : vector<16x128xf32>
    %722 = arith.addf %687, %721 : vector<16x128xf32>
    %c7_376 = arith.constant 7 : index
    %c20_377 = arith.constant 20 : index
    %723 = memref.load %arg2[%c7_376, %c20_377] : memref<8x28xf32, #tpu.memory_space<smem>>
    %724 = vector.broadcast %723 : f32 to vector<16x128xf32>
    %725 = arith.mulf %724, %694 : vector<16x128xf32>
    %726 = arith.addf %691, %725 : vector<16x128xf32>
    %c21 = arith.constant 21 : index
    %c0_378 = arith.constant 0 : index
    %c0_379 = arith.constant 0 : index
    %727 = vector.load %arg1[%c21, %c0_378, %c0_379] : memref<25x16x128xbf16, #tpu.memory_space<vmem>>, vector<1x16x128xbf16>
    %728 = vector.shape_cast %727 : vector<1x16x128xbf16> to vector<16x128xbf16>
    %729 = arith.extf %728 : vector<16x128xbf16> to vector<16x128xf32>
    %c0_380 = arith.constant 0 : index
    %c21_381 = arith.constant 21 : index
    %730 = memref.load %arg2[%c0_380, %c21_381] : memref<8x28xf32, #tpu.memory_space<smem>>
    %731 = vector.broadcast %730 : f32 to vector<16x128xf32>
    %732 = arith.mulf %731, %729 : vector<16x128xf32>
    %733 = arith.addf %698, %732 : vector<16x128xf32>
    %c1_382 = arith.constant 1 : index
    %c21_383 = arith.constant 21 : index
    %734 = memref.load %arg2[%c1_382, %c21_383] : memref<8x28xf32, #tpu.memory_space<smem>>
    %735 = vector.broadcast %734 : f32 to vector<16x128xf32>
    %736 = arith.mulf %735, %729 : vector<16x128xf32>
    %737 = arith.addf %702, %736 : vector<16x128xf32>
    %c2_384 = arith.constant 2 : index
    %c21_385 = arith.constant 21 : index
    %738 = memref.load %arg2[%c2_384, %c21_385] : memref<8x28xf32, #tpu.memory_space<smem>>
    %739 = vector.broadcast %738 : f32 to vector<16x128xf32>
    %740 = arith.mulf %739, %729 : vector<16x128xf32>
    %741 = arith.addf %706, %740 : vector<16x128xf32>
    %c3_386 = arith.constant 3 : index
    %c21_387 = arith.constant 21 : index
    %742 = memref.load %arg2[%c3_386, %c21_387] : memref<8x28xf32, #tpu.memory_space<smem>>
    %743 = vector.broadcast %742 : f32 to vector<16x128xf32>
    %744 = arith.mulf %743, %729 : vector<16x128xf32>
    %745 = arith.addf %710, %744 : vector<16x128xf32>
    %c4_388 = arith.constant 4 : index
    %c21_389 = arith.constant 21 : index
    %746 = memref.load %arg2[%c4_388, %c21_389] : memref<8x28xf32, #tpu.memory_space<smem>>
    %747 = vector.broadcast %746 : f32 to vector<16x128xf32>
    %748 = arith.mulf %747, %729 : vector<16x128xf32>
    %749 = arith.addf %714, %748 : vector<16x128xf32>
    %c5_390 = arith.constant 5 : index
    %c21_391 = arith.constant 21 : index
    %750 = memref.load %arg2[%c5_390, %c21_391] : memref<8x28xf32, #tpu.memory_space<smem>>
    %751 = vector.broadcast %750 : f32 to vector<16x128xf32>
    %752 = arith.mulf %751, %729 : vector<16x128xf32>
    %753 = arith.addf %718, %752 : vector<16x128xf32>
    %c6_392 = arith.constant 6 : index
    %c21_393 = arith.constant 21 : index
    %754 = memref.load %arg2[%c6_392, %c21_393] : memref<8x28xf32, #tpu.memory_space<smem>>
    %755 = vector.broadcast %754 : f32 to vector<16x128xf32>
    %756 = arith.mulf %755, %729 : vector<16x128xf32>
    %757 = arith.addf %722, %756 : vector<16x128xf32>
    %c7_394 = arith.constant 7 : index
    %c21_395 = arith.constant 21 : index
    %758 = memref.load %arg2[%c7_394, %c21_395] : memref<8x28xf32, #tpu.memory_space<smem>>
    %759 = vector.broadcast %758 : f32 to vector<16x128xf32>
    %760 = arith.mulf %759, %729 : vector<16x128xf32>
    %761 = arith.addf %726, %760 : vector<16x128xf32>
    %c22 = arith.constant 22 : index
    %c0_396 = arith.constant 0 : index
    %c0_397 = arith.constant 0 : index
    %762 = vector.load %arg1[%c22, %c0_396, %c0_397] : memref<25x16x128xbf16, #tpu.memory_space<vmem>>, vector<1x16x128xbf16>
    %763 = vector.shape_cast %762 : vector<1x16x128xbf16> to vector<16x128xbf16>
    %764 = arith.extf %763 : vector<16x128xbf16> to vector<16x128xf32>
    %c0_398 = arith.constant 0 : index
    %c22_399 = arith.constant 22 : index
    %765 = memref.load %arg2[%c0_398, %c22_399] : memref<8x28xf32, #tpu.memory_space<smem>>
    %766 = vector.broadcast %765 : f32 to vector<16x128xf32>
    %767 = arith.mulf %766, %764 : vector<16x128xf32>
    %768 = arith.addf %733, %767 : vector<16x128xf32>
    %c1_400 = arith.constant 1 : index
    %c22_401 = arith.constant 22 : index
    %769 = memref.load %arg2[%c1_400, %c22_401] : memref<8x28xf32, #tpu.memory_space<smem>>
    %770 = vector.broadcast %769 : f32 to vector<16x128xf32>
    %771 = arith.mulf %770, %764 : vector<16x128xf32>
    %772 = arith.addf %737, %771 : vector<16x128xf32>
    %c2_402 = arith.constant 2 : index
    %c22_403 = arith.constant 22 : index
    %773 = memref.load %arg2[%c2_402, %c22_403] : memref<8x28xf32, #tpu.memory_space<smem>>
    %774 = vector.broadcast %773 : f32 to vector<16x128xf32>
    %775 = arith.mulf %774, %764 : vector<16x128xf32>
    %776 = arith.addf %741, %775 : vector<16x128xf32>
    %c3_404 = arith.constant 3 : index
    %c22_405 = arith.constant 22 : index
    %777 = memref.load %arg2[%c3_404, %c22_405] : memref<8x28xf32, #tpu.memory_space<smem>>
    %778 = vector.broadcast %777 : f32 to vector<16x128xf32>
    %779 = arith.mulf %778, %764 : vector<16x128xf32>
    %780 = arith.addf %745, %779 : vector<16x128xf32>
    %c4_406 = arith.constant 4 : index
    %c22_407 = arith.constant 22 : index
    %781 = memref.load %arg2[%c4_406, %c22_407] : memref<8x28xf32, #tpu.memory_space<smem>>
    %782 = vector.broadcast %781 : f32 to vector<16x128xf32>
    %783 = arith.mulf %782, %764 : vector<16x128xf32>
    %784 = arith.addf %749, %783 : vector<16x128xf32>
    %c5_408 = arith.constant 5 : index
    %c22_409 = arith.constant 22 : index
    %785 = memref.load %arg2[%c5_408, %c22_409] : memref<8x28xf32, #tpu.memory_space<smem>>
    %786 = vector.broadcast %785 : f32 to vector<16x128xf32>
    %787 = arith.mulf %786, %764 : vector<16x128xf32>
    %788 = arith.addf %753, %787 : vector<16x128xf32>
    %c6_410 = arith.constant 6 : index
    %c22_411 = arith.constant 22 : index
    %789 = memref.load %arg2[%c6_410, %c22_411] : memref<8x28xf32, #tpu.memory_space<smem>>
    %790 = vector.broadcast %789 : f32 to vector<16x128xf32>
    %791 = arith.mulf %790, %764 : vector<16x128xf32>
    %792 = arith.addf %757, %791 : vector<16x128xf32>
    %c7_412 = arith.constant 7 : index
    %c22_413 = arith.constant 22 : index
    %793 = memref.load %arg2[%c7_412, %c22_413] : memref<8x28xf32, #tpu.memory_space<smem>>
    %794 = vector.broadcast %793 : f32 to vector<16x128xf32>
    %795 = arith.mulf %794, %764 : vector<16x128xf32>
    %796 = arith.addf %761, %795 : vector<16x128xf32>
    %c23 = arith.constant 23 : index
    %c0_414 = arith.constant 0 : index
    %c0_415 = arith.constant 0 : index
    %797 = vector.load %arg1[%c23, %c0_414, %c0_415] : memref<25x16x128xbf16, #tpu.memory_space<vmem>>, vector<1x16x128xbf16>
    %798 = vector.shape_cast %797 : vector<1x16x128xbf16> to vector<16x128xbf16>
    %799 = arith.extf %798 : vector<16x128xbf16> to vector<16x128xf32>
    %c0_416 = arith.constant 0 : index
    %c23_417 = arith.constant 23 : index
    %800 = memref.load %arg2[%c0_416, %c23_417] : memref<8x28xf32, #tpu.memory_space<smem>>
    %801 = vector.broadcast %800 : f32 to vector<16x128xf32>
    %802 = arith.mulf %801, %799 : vector<16x128xf32>
    %803 = arith.addf %768, %802 : vector<16x128xf32>
    %c1_418 = arith.constant 1 : index
    %c23_419 = arith.constant 23 : index
    %804 = memref.load %arg2[%c1_418, %c23_419] : memref<8x28xf32, #tpu.memory_space<smem>>
    %805 = vector.broadcast %804 : f32 to vector<16x128xf32>
    %806 = arith.mulf %805, %799 : vector<16x128xf32>
    %807 = arith.addf %772, %806 : vector<16x128xf32>
    %c2_420 = arith.constant 2 : index
    %c23_421 = arith.constant 23 : index
    %808 = memref.load %arg2[%c2_420, %c23_421] : memref<8x28xf32, #tpu.memory_space<smem>>
    %809 = vector.broadcast %808 : f32 to vector<16x128xf32>
    %810 = arith.mulf %809, %799 : vector<16x128xf32>
    %811 = arith.addf %776, %810 : vector<16x128xf32>
    %c3_422 = arith.constant 3 : index
    %c23_423 = arith.constant 23 : index
    %812 = memref.load %arg2[%c3_422, %c23_423] : memref<8x28xf32, #tpu.memory_space<smem>>
    %813 = vector.broadcast %812 : f32 to vector<16x128xf32>
    %814 = arith.mulf %813, %799 : vector<16x128xf32>
    %815 = arith.addf %780, %814 : vector<16x128xf32>
    %c4_424 = arith.constant 4 : index
    %c23_425 = arith.constant 23 : index
    %816 = memref.load %arg2[%c4_424, %c23_425] : memref<8x28xf32, #tpu.memory_space<smem>>
    %817 = vector.broadcast %816 : f32 to vector<16x128xf32>
    %818 = arith.mulf %817, %799 : vector<16x128xf32>
    %819 = arith.addf %784, %818 : vector<16x128xf32>
    %c5_426 = arith.constant 5 : index
    %c23_427 = arith.constant 23 : index
    %820 = memref.load %arg2[%c5_426, %c23_427] : memref<8x28xf32, #tpu.memory_space<smem>>
    %821 = vector.broadcast %820 : f32 to vector<16x128xf32>
    %822 = arith.mulf %821, %799 : vector<16x128xf32>
    %823 = arith.addf %788, %822 : vector<16x128xf32>
    %c6_428 = arith.constant 6 : index
    %c23_429 = arith.constant 23 : index
    %824 = memref.load %arg2[%c6_428, %c23_429] : memref<8x28xf32, #tpu.memory_space<smem>>
    %825 = vector.broadcast %824 : f32 to vector<16x128xf32>
    %826 = arith.mulf %825, %799 : vector<16x128xf32>
    %827 = arith.addf %792, %826 : vector<16x128xf32>
    %c7_430 = arith.constant 7 : index
    %c23_431 = arith.constant 23 : index
    %828 = memref.load %arg2[%c7_430, %c23_431] : memref<8x28xf32, #tpu.memory_space<smem>>
    %829 = vector.broadcast %828 : f32 to vector<16x128xf32>
    %830 = arith.mulf %829, %799 : vector<16x128xf32>
    %831 = arith.addf %796, %830 : vector<16x128xf32>
    %c24 = arith.constant 24 : index
    %c0_432 = arith.constant 0 : index
    %c0_433 = arith.constant 0 : index
    %832 = vector.load %arg1[%c24, %c0_432, %c0_433] : memref<25x16x128xbf16, #tpu.memory_space<vmem>>, vector<1x16x128xbf16>
    %833 = vector.shape_cast %832 : vector<1x16x128xbf16> to vector<16x128xbf16>
    %834 = arith.extf %833 : vector<16x128xbf16> to vector<16x128xf32>
    %c0_434 = arith.constant 0 : index
    %c24_435 = arith.constant 24 : index
    %835 = memref.load %arg2[%c0_434, %c24_435] : memref<8x28xf32, #tpu.memory_space<smem>>
    %836 = vector.broadcast %835 : f32 to vector<16x128xf32>
    %837 = arith.mulf %836, %834 : vector<16x128xf32>
    %838 = arith.addf %803, %837 : vector<16x128xf32>
    %c1_436 = arith.constant 1 : index
    %c24_437 = arith.constant 24 : index
    %839 = memref.load %arg2[%c1_436, %c24_437] : memref<8x28xf32, #tpu.memory_space<smem>>
    %840 = vector.broadcast %839 : f32 to vector<16x128xf32>
    %841 = arith.mulf %840, %834 : vector<16x128xf32>
    %842 = arith.addf %807, %841 : vector<16x128xf32>
    %c2_438 = arith.constant 2 : index
    %c24_439 = arith.constant 24 : index
    %843 = memref.load %arg2[%c2_438, %c24_439] : memref<8x28xf32, #tpu.memory_space<smem>>
    %844 = vector.broadcast %843 : f32 to vector<16x128xf32>
    %845 = arith.mulf %844, %834 : vector<16x128xf32>
    %846 = arith.addf %811, %845 : vector<16x128xf32>
    %c3_440 = arith.constant 3 : index
    %c24_441 = arith.constant 24 : index
    %847 = memref.load %arg2[%c3_440, %c24_441] : memref<8x28xf32, #tpu.memory_space<smem>>
    %848 = vector.broadcast %847 : f32 to vector<16x128xf32>
    %849 = arith.mulf %848, %834 : vector<16x128xf32>
    %850 = arith.addf %815, %849 : vector<16x128xf32>
    %c4_442 = arith.constant 4 : index
    %c24_443 = arith.constant 24 : index
    %851 = memref.load %arg2[%c4_442, %c24_443] : memref<8x28xf32, #tpu.memory_space<smem>>
    %852 = vector.broadcast %851 : f32 to vector<16x128xf32>
    %853 = arith.mulf %852, %834 : vector<16x128xf32>
    %854 = arith.addf %819, %853 : vector<16x128xf32>
    %c5_444 = arith.constant 5 : index
    %c24_445 = arith.constant 24 : index
    %855 = memref.load %arg2[%c5_444, %c24_445] : memref<8x28xf32, #tpu.memory_space<smem>>
    %856 = vector.broadcast %855 : f32 to vector<16x128xf32>
    %857 = arith.mulf %856, %834 : vector<16x128xf32>
    %858 = arith.addf %823, %857 : vector<16x128xf32>
    %c6_446 = arith.constant 6 : index
    %c24_447 = arith.constant 24 : index
    %859 = memref.load %arg2[%c6_446, %c24_447] : memref<8x28xf32, #tpu.memory_space<smem>>
    %860 = vector.broadcast %859 : f32 to vector<16x128xf32>
    %861 = arith.mulf %860, %834 : vector<16x128xf32>
    %862 = arith.addf %827, %861 : vector<16x128xf32>
    %c7_448 = arith.constant 7 : index
    %c24_449 = arith.constant 24 : index
    %863 = memref.load %arg2[%c7_448, %c24_449] : memref<8x28xf32, #tpu.memory_space<smem>>
    %864 = vector.broadcast %863 : f32 to vector<16x128xf32>
    %865 = arith.mulf %864, %834 : vector<16x128xf32>
    %866 = arith.addf %831, %865 : vector<16x128xf32>
    %c0_450 = arith.constant 0 : index
    %c25 = arith.constant 25 : index
    %867 = memref.load %arg2[%c0_450, %c25] : memref<8x28xf32, #tpu.memory_space<smem>>
    %868 = vector.broadcast %867 : f32 to vector<16x128xf32>
    %869 = arith.addf %838, %868 : vector<16x128xf32>
    %cst = arith.constant 0.000000e+00 : f32
    %870 = vector.broadcast %cst : f32 to vector<16x128xf32>
    %871 = arith.maximumf %869, %870 : vector<16x128xf32>
    %c0_451 = arith.constant 0 : index
    %c26 = arith.constant 26 : index
    %872 = memref.load %arg2[%c0_451, %c26] : memref<8x28xf32, #tpu.memory_space<smem>>
    %873 = vector.broadcast %872 : f32 to vector<16x128xf32>
    %874 = arith.mulf %871, %873 : vector<16x128xf32>
    %c0_452 = arith.constant 0 : index
    %c27 = arith.constant 27 : index
    %875 = memref.load %arg2[%c0_452, %c27] : memref<8x28xf32, #tpu.memory_space<smem>>
    %876 = vector.broadcast %875 : f32 to vector<16x128xf32>
    %877 = arith.addf %874, %876 : vector<16x128xf32>
    %cst_453 = arith.constant dense<0xFF800000> : vector<128xf32>
    %878 = vector.multi_reduction <maximumf>, %877, %cst_453 [0] : vector<16x128xf32> to vector<128xf32>
    %879 = vector.shape_cast %878 : vector<128xf32> to vector<1x128xf32>
    %c1_454 = arith.constant 1 : index
    %c25_455 = arith.constant 25 : index
    %880 = memref.load %arg2[%c1_454, %c25_455] : memref<8x28xf32, #tpu.memory_space<smem>>
    %881 = vector.broadcast %880 : f32 to vector<16x128xf32>
    %882 = arith.addf %842, %881 : vector<16x128xf32>
    %cst_456 = arith.constant 0.000000e+00 : f32
    %883 = vector.broadcast %cst_456 : f32 to vector<16x128xf32>
    %884 = arith.maximumf %882, %883 : vector<16x128xf32>
    %c1_457 = arith.constant 1 : index
    %c26_458 = arith.constant 26 : index
    %885 = memref.load %arg2[%c1_457, %c26_458] : memref<8x28xf32, #tpu.memory_space<smem>>
    %886 = vector.broadcast %885 : f32 to vector<16x128xf32>
    %887 = arith.mulf %884, %886 : vector<16x128xf32>
    %c1_459 = arith.constant 1 : index
    %c27_460 = arith.constant 27 : index
    %888 = memref.load %arg2[%c1_459, %c27_460] : memref<8x28xf32, #tpu.memory_space<smem>>
    %889 = vector.broadcast %888 : f32 to vector<16x128xf32>
    %890 = arith.addf %887, %889 : vector<16x128xf32>
    %cst_461 = arith.constant dense<0xFF800000> : vector<128xf32>
    %891 = vector.multi_reduction <maximumf>, %890, %cst_461 [0] : vector<16x128xf32> to vector<128xf32>
    %892 = vector.shape_cast %891 : vector<128xf32> to vector<1x128xf32>
    %c2_462 = arith.constant 2 : index
    %c25_463 = arith.constant 25 : index
    %893 = memref.load %arg2[%c2_462, %c25_463] : memref<8x28xf32, #tpu.memory_space<smem>>
    %894 = vector.broadcast %893 : f32 to vector<16x128xf32>
    %895 = arith.addf %846, %894 : vector<16x128xf32>
    %cst_464 = arith.constant 0.000000e+00 : f32
    %896 = vector.broadcast %cst_464 : f32 to vector<16x128xf32>
    %897 = arith.maximumf %895, %896 : vector<16x128xf32>
    %c2_465 = arith.constant 2 : index
    %c26_466 = arith.constant 26 : index
    %898 = memref.load %arg2[%c2_465, %c26_466] : memref<8x28xf32, #tpu.memory_space<smem>>
    %899 = vector.broadcast %898 : f32 to vector<16x128xf32>
    %900 = arith.mulf %897, %899 : vector<16x128xf32>
    %c2_467 = arith.constant 2 : index
    %c27_468 = arith.constant 27 : index
    %901 = memref.load %arg2[%c2_467, %c27_468] : memref<8x28xf32, #tpu.memory_space<smem>>
    %902 = vector.broadcast %901 : f32 to vector<16x128xf32>
    %903 = arith.addf %900, %902 : vector<16x128xf32>
    %cst_469 = arith.constant dense<0xFF800000> : vector<128xf32>
    %904 = vector.multi_reduction <maximumf>, %903, %cst_469 [0] : vector<16x128xf32> to vector<128xf32>
    %905 = vector.shape_cast %904 : vector<128xf32> to vector<1x128xf32>
    %c3_470 = arith.constant 3 : index
    %c25_471 = arith.constant 25 : index
    %906 = memref.load %arg2[%c3_470, %c25_471] : memref<8x28xf32, #tpu.memory_space<smem>>
    %907 = vector.broadcast %906 : f32 to vector<16x128xf32>
    %908 = arith.addf %850, %907 : vector<16x128xf32>
    %cst_472 = arith.constant 0.000000e+00 : f32
    %909 = vector.broadcast %cst_472 : f32 to vector<16x128xf32>
    %910 = arith.maximumf %908, %909 : vector<16x128xf32>
    %c3_473 = arith.constant 3 : index
    %c26_474 = arith.constant 26 : index
    %911 = memref.load %arg2[%c3_473, %c26_474] : memref<8x28xf32, #tpu.memory_space<smem>>
    %912 = vector.broadcast %911 : f32 to vector<16x128xf32>
    %913 = arith.mulf %910, %912 : vector<16x128xf32>
    %c3_475 = arith.constant 3 : index
    %c27_476 = arith.constant 27 : index
    %914 = memref.load %arg2[%c3_475, %c27_476] : memref<8x28xf32, #tpu.memory_space<smem>>
    %915 = vector.broadcast %914 : f32 to vector<16x128xf32>
    %916 = arith.addf %913, %915 : vector<16x128xf32>
    %cst_477 = arith.constant dense<0xFF800000> : vector<128xf32>
    %917 = vector.multi_reduction <maximumf>, %916, %cst_477 [0] : vector<16x128xf32> to vector<128xf32>
    %918 = vector.shape_cast %917 : vector<128xf32> to vector<1x128xf32>
    %c4_478 = arith.constant 4 : index
    %c25_479 = arith.constant 25 : index
    %919 = memref.load %arg2[%c4_478, %c25_479] : memref<8x28xf32, #tpu.memory_space<smem>>
    %920 = vector.broadcast %919 : f32 to vector<16x128xf32>
    %921 = arith.addf %854, %920 : vector<16x128xf32>
    %cst_480 = arith.constant 0.000000e+00 : f32
    %922 = vector.broadcast %cst_480 : f32 to vector<16x128xf32>
    %923 = arith.maximumf %921, %922 : vector<16x128xf32>
    %c4_481 = arith.constant 4 : index
    %c26_482 = arith.constant 26 : index
    %924 = memref.load %arg2[%c4_481, %c26_482] : memref<8x28xf32, #tpu.memory_space<smem>>
    %925 = vector.broadcast %924 : f32 to vector<16x128xf32>
    %926 = arith.mulf %923, %925 : vector<16x128xf32>
    %c4_483 = arith.constant 4 : index
    %c27_484 = arith.constant 27 : index
    %927 = memref.load %arg2[%c4_483, %c27_484] : memref<8x28xf32, #tpu.memory_space<smem>>
    %928 = vector.broadcast %927 : f32 to vector<16x128xf32>
    %929 = arith.addf %926, %928 : vector<16x128xf32>
    %cst_485 = arith.constant dense<0xFF800000> : vector<128xf32>
    %930 = vector.multi_reduction <maximumf>, %929, %cst_485 [0] : vector<16x128xf32> to vector<128xf32>
    %931 = vector.shape_cast %930 : vector<128xf32> to vector<1x128xf32>
    %c5_486 = arith.constant 5 : index
    %c25_487 = arith.constant 25 : index
    %932 = memref.load %arg2[%c5_486, %c25_487] : memref<8x28xf32, #tpu.memory_space<smem>>
    %933 = vector.broadcast %932 : f32 to vector<16x128xf32>
    %934 = arith.addf %858, %933 : vector<16x128xf32>
    %cst_488 = arith.constant 0.000000e+00 : f32
    %935 = vector.broadcast %cst_488 : f32 to vector<16x128xf32>
    %936 = arith.maximumf %934, %935 : vector<16x128xf32>
    %c5_489 = arith.constant 5 : index
    %c26_490 = arith.constant 26 : index
    %937 = memref.load %arg2[%c5_489, %c26_490] : memref<8x28xf32, #tpu.memory_space<smem>>
    %938 = vector.broadcast %937 : f32 to vector<16x128xf32>
    %939 = arith.mulf %936, %938 : vector<16x128xf32>
    %c5_491 = arith.constant 5 : index
    %c27_492 = arith.constant 27 : index
    %940 = memref.load %arg2[%c5_491, %c27_492] : memref<8x28xf32, #tpu.memory_space<smem>>
    %941 = vector.broadcast %940 : f32 to vector<16x128xf32>
    %942 = arith.addf %939, %941 : vector<16x128xf32>
    %cst_493 = arith.constant dense<0xFF800000> : vector<128xf32>
    %943 = vector.multi_reduction <maximumf>, %942, %cst_493 [0] : vector<16x128xf32> to vector<128xf32>
    %944 = vector.shape_cast %943 : vector<128xf32> to vector<1x128xf32>
    %c6_494 = arith.constant 6 : index
    %c25_495 = arith.constant 25 : index
    %945 = memref.load %arg2[%c6_494, %c25_495] : memref<8x28xf32, #tpu.memory_space<smem>>
    %946 = vector.broadcast %945 : f32 to vector<16x128xf32>
    %947 = arith.addf %862, %946 : vector<16x128xf32>
    %cst_496 = arith.constant 0.000000e+00 : f32
    %948 = vector.broadcast %cst_496 : f32 to vector<16x128xf32>
    %949 = arith.maximumf %947, %948 : vector<16x128xf32>
    %c6_497 = arith.constant 6 : index
    %c26_498 = arith.constant 26 : index
    %950 = memref.load %arg2[%c6_497, %c26_498] : memref<8x28xf32, #tpu.memory_space<smem>>
    %951 = vector.broadcast %950 : f32 to vector<16x128xf32>
    %952 = arith.mulf %949, %951 : vector<16x128xf32>
    %c6_499 = arith.constant 6 : index
    %c27_500 = arith.constant 27 : index
    %953 = memref.load %arg2[%c6_499, %c27_500] : memref<8x28xf32, #tpu.memory_space<smem>>
    %954 = vector.broadcast %953 : f32 to vector<16x128xf32>
    %955 = arith.addf %952, %954 : vector<16x128xf32>
    %cst_501 = arith.constant dense<0xFF800000> : vector<128xf32>
    %956 = vector.multi_reduction <maximumf>, %955, %cst_501 [0] : vector<16x128xf32> to vector<128xf32>
    %957 = vector.shape_cast %956 : vector<128xf32> to vector<1x128xf32>
    %c7_502 = arith.constant 7 : index
    %c25_503 = arith.constant 25 : index
    %958 = memref.load %arg2[%c7_502, %c25_503] : memref<8x28xf32, #tpu.memory_space<smem>>
    %959 = vector.broadcast %958 : f32 to vector<16x128xf32>
    %960 = arith.addf %866, %959 : vector<16x128xf32>
    %cst_504 = arith.constant 0.000000e+00 : f32
    %961 = vector.broadcast %cst_504 : f32 to vector<16x128xf32>
    %962 = arith.maximumf %960, %961 : vector<16x128xf32>
    %c7_505 = arith.constant 7 : index
    %c26_506 = arith.constant 26 : index
    %963 = memref.load %arg2[%c7_505, %c26_506] : memref<8x28xf32, #tpu.memory_space<smem>>
    %964 = vector.broadcast %963 : f32 to vector<16x128xf32>
    %965 = arith.mulf %962, %964 : vector<16x128xf32>
    %c7_507 = arith.constant 7 : index
    %c27_508 = arith.constant 27 : index
    %966 = memref.load %arg2[%c7_507, %c27_508] : memref<8x28xf32, #tpu.memory_space<smem>>
    %967 = vector.broadcast %966 : f32 to vector<16x128xf32>
    %968 = arith.addf %965, %967 : vector<16x128xf32>
    %cst_509 = arith.constant dense<0xFF800000> : vector<128xf32>
    %969 = vector.multi_reduction <maximumf>, %968, %cst_509 [0] : vector<16x128xf32> to vector<128xf32>
    %970 = vector.shape_cast %969 : vector<128xf32> to vector<1x128xf32>
    %971 = tpu.concatenate %879, %892, %905, %918, %931, %944, %957, %970 in 0 : vector<1x128xf32>, vector<1x128xf32>, vector<1x128xf32>, vector<1x128xf32>, vector<1x128xf32>, vector<1x128xf32>, vector<1x128xf32>, vector<1x128xf32> -> vector<8x128xf32>
    %c0_510 = arith.constant 0 : index
    %c0_511 = arith.constant 0 : index
    %972 = vector.load %arg3[%c0_510, %c0_511] : memref<8x128xf32, #tpu.memory_space<vmem>>, vector<8x128xf32>
    tpu.vector_store %arg3[%c0_510, %c0_511], %971 {strides = array<i32>} : memref<8x128xf32, #tpu.memory_space<vmem>>, vector<8x128xf32>,
    return
  }
  func.func @transform_0(%arg0: i32) -> (i32, i32, i32) {
    %c0_i32 = arith.constant 0 : i32
    %c0_i32_0 = arith.constant 0 : i32
    %c0_i32_1 = arith.constant 0 : i32
    return %c0_i32, %c0_i32_0, %arg0 : i32, i32, i32
  }
  func.func @transform_1(%arg0: i32) -> (i32, i32) {
    %c0_i32 = arith.constant 0 : i32
    %c0_i32_0 = arith.constant 0 : i32
    %c0_i32_1 = arith.constant 0 : i32
    return %c0_i32, %c0_i32_0 : i32, i32
  }
  func.func @transform_2(%arg0: i32) -> (i32, i32) {
    %c0_i32 = arith.constant 0 : i32
    %c0_i32_0 = arith.constant 0 : i32
    return %c0_i32, %arg0 : i32, i32
  }
}

</mosaic_0001>

<llo_original>
// kernel: cnn_classifier_forward.2
$region0: #{cnn_classifier_forward.2}
  #allocation0 [shape = 'u32[]', space=smem, size = 0x4, offset = 0x4, fixed_abs, tag = 'smem constant byte address 0x4 - core index']
  #allocation1 [shape = 'u32[144,128]{1,0:T(1,128)}', space=vmem, size = 0x12000, scoped, tag = 'internal scratch']
  %s0 = inlined_call_operand.vmem [shape: bf16[48,1024], index: 0, kind: input, shape index: {}]
  %s1 = inlined_call_operand.hbm [shape: bf16[1024,1152], index: 1, kind: input, shape index: {}]
  %s2 = inlined_call_operand.hbm [shape: bf16[640,128], index: 2, kind: input, shape index: {}]
  %s3 = inlined_call_operand.vmem [shape: f32[48,128], index: 3, kind: output, shape index: {}]
  %s4 = sld [smem:[#allocation0]]
  $region53: #{cnn_classifier_forward.2} parent=0
    _
  %s6 = ssub.s32 1, %s4
  %s7 = scalar_select 0, %s6, %s4
  $region1: #{cnn_classifier_forward.2} parent=0
    #allocation2 [shape = 'u8[2359296]{0}', space=vmem, size = 0x240000, scoped, tag = 'input window, operand 1, single buffered']
    #allocation3 [shape = 's32[2]{0}', space=sflag, size = 0x8, scoped, tag = 'scoped memory for cnn_classifier_forward.2']
    #allocation4 [shape = 'u8[163840]{0}', space=vmem, size = 0x28000, scoped, tag = 'input window, operand 2, single buffered']
    #allocation5 [shape = 's32[1]{0}', space=sflag, size = 0x4, scoped, tag = 'scoped memory for cnn_classifier_forward.2']
    %8 = vsyncpa [#allocation3], 0
    %9 = vsyncpa [#allocation5], 0
    loop: start=0, step=1, limit=4
    $region2: #{cnn_classifier_forward.2} parent=1 // loop_pre_header
      _
    $region3: #{cnn_classifier_forward.2} parent=1 // loop_header
      %s11 = sphi 0, %s15
      %p12 = scmp.ge.s32.totalorder %s11, 4
      %s21 = sphi 0, %s23
      %s24 = sphi 0, %s21
      %s25 = sphi 0, %s24
      %s41 = sphi 0, %s25
      %s45 = sphi 0, %s45
      %s47 = sphi 0, %s45
      %s48 = sphi 0, %s47
      %s62 = sphi 0, %s48
      %s66 = sphi 0, %s66
      %s68 = sphi 0, %s66
      %s69 = sphi 0, %s68
      %s83 = sphi 0, %s69
      %s89 = sphi 0, %s91
      %s92 = sphi 0, %s89
      %s93 = sphi 0, %s92
      %s109 = sphi 0, %s93
    $region4: #{cnn_classifier_forward.2} parent=1 // loop_header_branch
      %14 = sbr.rel (%p12) target = $region8
    $region5: #{cnn_classifier_forward.2} parent=1 // loop_body
      %s16 = ssub.s32 %s11, 1
      %s17 = ssub.s32 %s11, 2
      %s18 = sadd.s32 %s11, 1
      %s19 = ssub.s32 %s11, %s18
      %p20 = scmp.eq.s32.totalorder %s19, 0
      %s22 = sadd.s32 %s21, 1
      %s23 = scalar_select %p20, %s21, %s22
      %p26 = pneg %p20
      %p27 = scmp.eq.s32.totalorder %s11, 1
      %p28 = por %p26, %p27
      %p29 = scmp.ne.s32.totalorder %s21, %s24
      %p30 = scmp.eq.s32.totalorder %s11, 0
      %p31 = por %p29, %p30
      %p32 = scmp.ne.s32.totalorder %s21, %s24
      %p33 = scmp.eq.s32.totalorder %s16, 1
      %p34 = por %p32, %p33
      %p35 = scmp.ne.s32.totalorder %s24, %s25
      %p36 = scmp.eq.s32.totalorder %s16, 0
      %p37 = por %p35, %p36
      %p38 = scmp.ne.s32.totalorder %s24, %s25
      %p39 = scmp.eq.s32.totalorder %s17, 1
      %p40 = por %p38, %p39
      %p42 = scmp.ne.s32.totalorder %s25, %s41
      %p43 = scmp.eq.s32.totalorder %s17, 0
      %p44 = por %p42, %p43
      %s46 = sadd.s32 %s45, 1
      %p49 = scmp.eq.s32.totalorder %s11, 1
      %p50 = scmp.ne.s32.totalorder %s45, %s47
      %p51 = scmp.eq.s32.totalorder %s11, 0
      %p52 = por %p50, %p51
      %p53 = scmp.ne.s32.totalorder %s45, %s47
      %p54 = scmp.eq.s32.totalorder %s16, 1
      %p55 = por %p53, %p54
      %p56 = scmp.ne.s32.totalorder %s47, %s48
      %p57 = scmp.eq.s32.totalorder %s16, 0
      %p58 = por %p56, %p57
      %p59 = scmp.ne.s32.totalorder %s47, %s48
      %p60 = scmp.eq.s32.totalorder %s17, 1
      %p61 = por %p59, %p60
      %p63 = scmp.ne.s32.totalorder %s48, %s62
      %p64 = scmp.eq.s32.totalorder %s17, 0
      %p65 = por %p63, %p64
      %s67 = sadd.s32 %s66, 1
      %p70 = scmp.eq.s32.totalorder %s11, 1
      %p71 = scmp.ne.s32.totalorder %s66, %s68
      %p72 = scmp.eq.s32.totalorder %s11, 0
      %p73 = por %p71, %p72
      %p74 = scmp.ne.s32.totalorder %s66, %s68
      %p75 = scmp.eq.s32.totalorder %s16, 1
      %p76 = por %p74, %p75
      %p77 = scmp.ne.s32.totalorder %s68, %s69
      %p78 = scmp.eq.s32.totalorder %s16, 0
      %p79 = por %p77, %p78
      %p80 = scmp.ne.s32.totalorder %s68, %s69
      %p81 = scmp.eq.s32.totalorder %s17, 1
      %p82 = por %p80, %p81
      %p84 = scmp.ne.s32.totalorder %s69, %s83
      %p85 = scmp.eq.s32.totalorder %s17, 0
      %p86 = por %p84, %p85
      %s87 = ssub.s32 %s11, %s18
      %p88 = scmp.eq.s32.totalorder %s87, 0
      %s90 = sadd.s32 %s89, 1
      %s91 = scalar_select %p88, %s89, %s90
      %p94 = pneg %p88
      %p95 = scmp.eq.s32.totalorder %s11, 1
      %p96 = por %p94, %p95
      %p97 = scmp.ne.s32.totalorder %s89, %s92
      %p98 = scmp.eq.s32.totalorder %s11, 0
      %p99 = por %p97, %p98
      %p100 = scmp.ne.s32.totalorder %s89, %s92
      %p101 = scmp.eq.s32.totalorder %s16, 1
      %p102 = por %p100, %p101
      %p103 = scmp.ne.s32.totalorder %s92, %s93
      %p104 = scmp.eq.s32.totalorder %s16, 0
      %p105 = por %p103, %p104
      %p106 = scmp.ne.s32.totalorder %s92, %s93
      %p107 = scmp.eq.s32.totalorder %s17, 1
      %p108 = por %p106, %p107
      %p110 = scmp.ne.s32.totalorder %s93, %s109
      %p111 = scmp.eq.s32.totalorder %s17, 0
      %p112 = por %p110, %p111
      %p113 = scmp.le.s32.totalorder 1, %s11
      %p114 = scmp.lt.s32.totalorder %s11, 3
      %p115 = pnand %p113, %p114
      %p116 = pneg %p115
      // Predicated region
      $region9: #{cnn_classifier_forward.2} parent=5 // pred_check
        _
      $region10: #{cnn_classifier_forward.2} parent=5 // pred_check_branch
        %118 = sbr.rel (%p115) target = $region12
      $region11: #{cnn_classifier_forward.2} parent=5 // pred_region
        %s119 = ssub.s32 %s11, 1
        // Predicated region
        $region13: #{cnn_classifier_forward.2} parent=11 // pred_check
          %p120 = pneg %p58
        $region14: #{cnn_classifier_forward.2} parent=11 // pred_check_branch
          %122 = sbr.rel (%p120) target = $region16
        $region15: #{cnn_classifier_forward.2} parent=11 // pred_region
          %s124 = ssub.s32 73728, 73728
          %125 = vsyncadd [#allocation3], %s124
          %s126 = sshll.u32 [#allocation2], 4
          %s127 = int_to_ptr.vmem [resolvable:$true] %s126
          %132 = dma.hbm_to_vmem [thread:$0]  %s1, 73728, %s127, [#allocation3], 576, 576, 36
        $region16: #{cnn_classifier_forward.2} parent=11 // pred_fallthru
          _
        // Predicated region
        $region17: #{cnn_classifier_forward.2} parent=11 // pred_check
          %p133 = pneg %p79
        $region18: #{cnn_classifier_forward.2} parent=11 // pred_check_branch
          %135 = sbr.rel (%p133) target = $region20
        $region19: #{cnn_classifier_forward.2} parent=11 // pred_region
          %s137 = ssub.s32 5120, 5120
          %138 = vsyncadd [#allocation5], %s137
          %s139 = sshll.u32 [#allocation4], 4
          %s140 = int_to_ptr.vmem [resolvable:$true] %s139
          %145 = dma.hbm_to_vmem [thread:$0]  %s2, 5120, %s140, [#allocation5], 64, 64, 4
        $region20: #{cnn_classifier_forward.2} parent=11 // pred_fallthru
          _
      $region12: #{cnn_classifier_forward.2} parent=5 // pred_fallthru
        _
      %p146 = scmp.lt.s32.totalorder %s11, 2
      // Predicated region
      $region21: #{cnn_classifier_forward.2} parent=5 // pred_check
        %p147 = pneg %p146
      $region22: #{cnn_classifier_forward.2} parent=5 // pred_check_branch
        %149 = sbr.rel (%p147) target = $region24
      $region23: #{cnn_classifier_forward.2} parent=5 // pred_region
        // Predicated region
        $region25: #{cnn_classifier_forward.2} parent=23 // pred_check
          %p150 = pneg %p31
        $region26: #{cnn_classifier_forward.2} parent=23 // pred_check_branch
          %152 = sbr.rel (%p150) target = $region28
        $region27: #{cnn_classifier_forward.2} parent=23 // pred_region
          %s153 = smul.u32 3, %s11
          %p154 = scmp.lt.s32.totalorder %s153, 5
          %s155 = scalar_select %p154, %s153, 5
          %s156 = smul.addr %s155, 8
          %s157 = smul.addr %s156, 4
          %s158 = scalar_lea.vmem %s0, %s157
          %s159 = smul.u32 3, %s11
        $region28: #{cnn_classifier_forward.2} parent=23 // pred_fallthru
          _
      $region24: #{cnn_classifier_forward.2} parent=5 // pred_fallthru
        _
      %p160 = scmp.le.s32.totalorder 1, %s11
      %p161 = scmp.lt.s32.totalorder %s11, 3
      %p162 = pnand %p160, %p161
      %p163 = pneg %p162
      // Predicated region
      $region29: #{cnn_classifier_forward.2} parent=5 // pred_check
        _
      $region30: #{cnn_classifier_forward.2} parent=5 // pred_check_branch
        %165 = sbr.rel (%p162) target = $region32
      $region31: #{cnn_classifier_forward.2} parent=5 // pred_region
        %s166 = ssub.s32 %s11, 1
        // Predicated region
        $region33: #{cnn_classifier_forward.2} parent=31 // pred_check
          %p167 = pneg %p58
        $region34: #{cnn_classifier_forward.2} parent=31 // pred_check_branch
          %169 = sbr.rel (%p167) target = $region36
        $region35: #{cnn_classifier_forward.2} parent=31 // pred_region
          %170 = dma.done [#allocation3], 73728
        $region36: #{cnn_classifier_forward.2} parent=31 // pred_fallthru
          _
        // Predicated region
        $region37: #{cnn_classifier_forward.2} parent=31 // pred_check
          %p171 = pneg %p79
        $region38: #{cnn_classifier_forward.2} parent=31 // pred_check_branch
          %173 = sbr.rel (%p171) target = $region40
        $region39: #{cnn_classifier_forward.2} parent=31 // pred_region
          %174 = dma.done [#allocation5], 5120
        $region40: #{cnn_classifier_forward.2} parent=31 // pred_fallthru
          _
        %s175 = smul.u32 3, %s16
        %p176 = scmp.lt.s32.totalorder %s175, 5
        %s177 = scalar_select %p176, %s175, 5
        %s178 = smul.addr %s177, 8
        %s179 = smul.addr %s178, 4
        %s180 = scalar_lea.vmem %s0, %s179
        %p181 = pneg %p37
        %p182 = pneg %p34
        %p183 = pneg %p58
        %p184 = pneg %p55
        %p185 = pneg %p79
        %p186 = pneg %p76
        %p187 = pneg %p105
        %p188 = pneg %p102
        %s189 = smul.u32 3, %s16
        %p190 = scmp.lt.s32.totalorder %s189, 5
        %s191 = scalar_select %p190, %s189, 5
        %s192 = smul.addr %s191, 8
        %s193 = scalar_lea.vmem %s3, %s192
        %s194 = smul.u32 3, %s16
        %p195 = scmp.lt.s32.totalorder %s194, 5
        %s196 = scalar_select %p195, %s194, 5
        %s197 = smul.addr %s196, 8
        %s198 = smul.addr %s197, 4
        %s199 = scalar_lea.vmem %s0, %s198
        %s200 = smul.u32 3, %s16
        %s201 = smul.u32 3, %s16
        %p202 = scmp.lt.s32.totalorder %s201, 5
        %s203 = scalar_select %p202, %s201, 5
        %s204 = smul.addr %s203, 8
        %s205 = scalar_lea.vmem %s3, %s204
        %s206 = smul.u32 3, %s16
        %v208 = vld [vmem:[%s199] sm:$0xff]
        %v209 = vld [vmem:[%s199 + $0x8] sm:$0xff]
        %v210 = vld [vmem:[%s199 + $0x10] sm:$0xff]
        %v211 = vld [vmem:[%s199 + $0x18] sm:$0xff]
        %v212 = vld [vmem:[%s199 + $0x20] sm:$0xff]
        %v213 = vld [vmem:[%s199 + $0x28] sm:$0xff]
        %v214 = vld [vmem:[%s199 + $0x30] sm:$0xff]
        %v215 = vld [vmem:[%s199 + $0x38] sm:$0xff]
        %v216 = vld [vmem:[%s199 + $0x40] sm:$0xff]
        %v217 = vld [vmem:[%s199 + $0x48] sm:$0xff]
        %v218 = vld [vmem:[%s199 + $0x50] sm:$0xff]
        %v219 = vld [vmem:[%s199 + $0x58] sm:$0xff]
        %v220 = vld [vmem:[#allocation2] sm:$0xff]
        %v221 = vld [vmem:[#allocation2 + $0x8] sm:$0xff]
        %v222 = vld [vmem:[#allocation2 + $0x10] sm:$0xff]
        %v223 = vld [vmem:[#allocation2 + $0x18] sm:$0xff]
        %v224 = vld [vmem:[#allocation2 + $0x20] sm:$0xf]
        %v225 = vld [vmem:[#allocation2 + $0x24] sm:$0xff]
        %v226 = vld [vmem:[#allocation2 + $0x2c] sm:$0xff]
        %v227 = vld [vmem:[#allocation2 + $0x34] sm:$0xff]
        %v228 = vld [vmem:[#allocation2 + $0x3c] sm:$0xff]
        %v229 = vld [vmem:[#allocation2 + $0x44] sm:$0xf]
        %v230 = vld [vmem:[#allocation2 + $0x48] sm:$0xff]
        %v231 = vld [vmem:[#allocation2 + $0x50] sm:$0xff]
        %v232 = vld [vmem:[#allocation2 + $0x58] sm:$0xff]
        %v233 = vld [vmem:[#allocation2 + $0x60] sm:$0xff]
        %v234 = vld [vmem:[#allocation2 + $0x68] sm:$0xf]
        %v235 = vld [vmem:[#allocation2 + $0x6c] sm:$0xff]
        %v236 = vld [vmem:[#allocation2 + $0x74] sm:$0xff]
        %v237 = vld [vmem:[#allocation2 + $0x7c] sm:$0xff]
        %v238 = vld [vmem:[#allocation2 + $0x84] sm:$0xff]
        %v239 = vld [vmem:[#allocation2 + $0x8c] sm:$0xf]
        %v240 = vld [vmem:[#allocation2 + $0x90] sm:$0xff]
        %v241 = vld [vmem:[#allocation2 + $0x98] sm:$0xff]
        %v242 = vld [vmem:[#allocation2 + $0xa0] sm:$0xff]
        %v243 = vld [vmem:[#allocation2 + $0xa8] sm:$0xff]
        %v244 = vld [vmem:[#allocation2 + $0xb0] sm:$0xf]
        %v245 = vld [vmem:[#allocation2 + $0xb4] sm:$0xff]
        %v246 = vld [vmem:[#allocation2 + $0xbc] sm:$0xff]
        %v247 = vld [vmem:[#allocation2 + $0xc4] sm:$0xff]
        %v248 = vld [vmem:[#allocation2 + $0xcc] sm:$0xff]
        %v249 = vld [vmem:[#allocation2 + $0xd4] sm:$0xf]
        %v250 = vld [vmem:[#allocation2 + $0xd8] sm:$0xff]
        %v251 = vld [vmem:[#allocation2 + $0xe0] sm:$0xff]
        %v252 = vld [vmem:[#allocation2 + $0xe8] sm:$0xff]
        %v253 = vld [vmem:[#allocation2 + $0xf0] sm:$0xff]
        %v254 = vld [vmem:[#allocation2 + $0xf8] sm:$0xf]
        %v255 = vld [vmem:[#allocation2 + $0xfc] sm:$0xff]
        %v256 = vld [vmem:[#allocation2 + $0x104] sm:$0xff]
        %v257 = vld [vmem:[#allocation2 + $0x10c] sm:$0xff]
        %v258 = vld [vmem:[#allocation2 + $0x114] sm:$0xff]
        %v259 = vld [vmem:[#allocation2 + $0x11c] sm:$0xf]
        %v260 = vld [vmem:[#allocation2 + $0x120] sm:$0xff]
        %v261 = vld [vmem:[#allocation2 + $0x128] sm:$0xff]
        %v262 = vld [vmem:[#allocation2 + $0x130] sm:$0xff]
        %v263 = vld [vmem:[#allocation2 + $0x138] sm:$0xff]
        %v264 = vld [vmem:[#allocation2 + $0x140] sm:$0xf]
        %v265 = vld [vmem:[#allocation2 + $0x144] sm:$0xff]
        %v266 = vld [vmem:[#allocation2 + $0x14c] sm:$0xff]
        %v267 = vld [vmem:[#allocation2 + $0x154] sm:$0xff]
        %v268 = vld [vmem:[#allocation2 + $0x15c] sm:$0xff]
        %v269 = vld [vmem:[#allocation2 + $0x164] sm:$0xf]
        %v270 = vld [vmem:[#allocation2 + $0x168] sm:$0xff]
        %v271 = vld [vmem:[#allocation2 + $0x170] sm:$0xff]
        %v272 = vld [vmem:[#allocation2 + $0x178] sm:$0xff]
        %v273 = vld [vmem:[#allocation2 + $0x180] sm:$0xff]
        %v274 = vld [vmem:[#allocation2 + $0x188] sm:$0xf]
        %v275 = vld [vmem:[#allocation2 + $0x18c] sm:$0xff]
        %v276 = vld [vmem:[#allocation2 + $0x194] sm:$0xff]
        %v277 = vld [vmem:[#allocation2 + $0x19c] sm:$0xff]
        %v278 = vld [vmem:[#allocation2 + $0x1a4] sm:$0xff]
        %v279 = vld [vmem:[#allocation2 + $0x1ac] sm:$0xf]
        %v280 = vld [vmem:[#allocation2 + $0x1b0] sm:$0xff]
        %v281 = vld [vmem:[#allocation2 + $0x1b8] sm:$0xff]
        %v282 = vld [vmem:[#allocation2 + $0x1c0] sm:$0xff]
        %v283 = vld [vmem:[#allocation2 + $0x1c8] sm:$0xff]
        %v284 = vld [vmem:[#allocation2 + $0x1d0] sm:$0xf]
        %v285 = vld [vmem:[#allocation2 + $0x1d4] sm:$0xff]
        %v286 = vld [vmem:[#allocation2 + $0x1dc] sm:$0xff]
        %v287 = vld [vmem:[#allocation2 + $0x1e4] sm:$0xff]
        %v288 = vld [vmem:[#allocation2 + $0x1ec] sm:$0xff]
        %v289 = vld [vmem:[#allocation2 + $0x1f4] sm:$0xf]
        %v290 = vld [vmem:[#allocation2 + $0x1f8] sm:$0xff]
        %v291 = vld [vmem:[#allocation2 + $0x200] sm:$0xff]
        %v292 = vld [vmem:[#allocation2 + $0x208] sm:$0xff]
        %v293 = vld [vmem:[#allocation2 + $0x210] sm:$0xff]
        %v294 = vld [vmem:[#allocation2 + $0x218] sm:$0xf]
        %v295 = vld [vmem:[#allocation2 + $0x21c] sm:$0xff]
        %v296 = vld [vmem:[#allocation2 + $0x224] sm:$0xff]
        %v297 = vld [vmem:[#allocation2 + $0x22c] sm:$0xff]
        %v298 = vld [vmem:[#allocation2 + $0x234] sm:$0xff]
        %v299 = vld [vmem:[#allocation2 + $0x23c] sm:$0xf]
        %v300 = vld [vmem:[#allocation2 + $0x240] sm:$0xff]
        %v301 = vld [vmem:[#allocation2 + $0x248] sm:$0xff]
        %v302 = vld [vmem:[#allocation2 + $0x250] sm:$0xff]
        %v303 = vld [vmem:[#allocation2 + $0x258] sm:$0xff]
        %v304 = vld [vmem:[#allocation2 + $0x260] sm:$0xf]
        %v305 = vld [vmem:[#allocation2 + $0x264] sm:$0xff]
        %v306 = vld [vmem:[#allocation2 + $0x26c] sm:$0xff]
        %v307 = vld [vmem:[#allocation2 + $0x274] sm:$0xff]
        %v308 = vld [vmem:[#allocation2 + $0x27c] sm:$0xff]
        %v309 = vld [vmem:[#allocation2 + $0x284] sm:$0xf]
        %v310 = vld [vmem:[#allocation2 + $0x288] sm:$0xff]
        %v311 = vld [vmem:[#allocation2 + $0x290] sm:$0xff]
        %v312 = vld [vmem:[#allocation2 + $0x298] sm:$0xff]
        %v313 = vld [vmem:[#allocation2 + $0x2a0] sm:$0xff]
        %v314 = vld [vmem:[#allocation2 + $0x2a8] sm:$0xf]
        %v315 = vld [vmem:[#allocation2 + $0x2ac] sm:$0xff]
        %v316 = vld [vmem:[#allocation2 + $0x2b4] sm:$0xff]
        %v317 = vld [vmem:[#allocation2 + $0x2bc] sm:$0xff]
        %v318 = vld [vmem:[#allocation2 + $0x2c4] sm:$0xff]
        %v319 = vld [vmem:[#allocation2 + $0x2cc] sm:$0xf]
        %v320 = vld [vmem:[#allocation2 + $0x2d0] sm:$0xff]
        %v321 = vld [vmem:[#allocation2 + $0x2d8] sm:$0xff]
        %v322 = vld [vmem:[#allocation2 + $0x2e0] sm:$0xff]
        %v323 = vld [vmem:[#allocation2 + $0x2e8] sm:$0xff]
        %v324 = vld [vmem:[#allocation2 + $0x2f0] sm:$0xf]
        %v325 = vld [vmem:[#allocation2 + $0x2f4] sm:$0xff]
        %v326 = vld [vmem:[#allocation2 + $0x2fc] sm:$0xff]
        %v327 = vld [vmem:[#allocation2 + $0x304] sm:$0xff]
        %v328 = vld [vmem:[#allocation2 + $0x30c] sm:$0xff]
        %v329 = vld [vmem:[#allocation2 + $0x314] sm:$0xf]
        %v330 = vld [vmem:[#allocation2 + $0x318] sm:$0xff]
        %v331 = vld [vmem:[#allocation2 + $0x320] sm:$0xff]
        %v332 = vld [vmem:[#allocation2 + $0x328] sm:$0xff]
        %v333 = vld [vmem:[#allocation2 + $0x330] sm:$0xff]
        %v334 = vld [vmem:[#allocation2 + $0x338] sm:$0xf]
        %v335 = vld [vmem:[#allocation2 + $0x33c] sm:$0xff]
        %v336 = vld [vmem:[#allocation2 + $0x344] sm:$0xff]
        %v337 = vld [vmem:[#allocation2 + $0x34c] sm:$0xff]
        %v338 = vld [vmem:[#allocation2 + $0x354] sm:$0xff]
        %v339 = vld [vmem:[#allocation2 + $0x35c] sm:$0xf]
        %v340 = vld [vmem:[#allocation2 + $0x360] sm:$0xff]
        %v341 = vld [vmem:[#allocation2 + $0x368] sm:$0xff]
        %v342 = vld [vmem:[#allocation2 + $0x370] sm:$0xff]
        %v343 = vld [vmem:[#allocation2 + $0x378] sm:$0xff]
        %v344 = vld [vmem:[#allocation2 + $0x380] sm:$0xf]
        %v345 = vld [vmem:[#allocation2 + $0x384] sm:$0xff]
        %v346 = vld [vmem:[#allocation2 + $0x38c] sm:$0xff]
        %v347 = vld [vmem:[#allocation2 + $0x394] sm:$0xff]
        %v348 = vld [vmem:[#allocation2 + $0x39c] sm:$0xff]
        %v349 = vld [vmem:[#allocation2 + $0x3a4] sm:$0xf]
        %v350 = vld [vmem:[#allocation2 + $0x3a8] sm:$0xff]
        %v351 = vld [vmem:[#allocation2 + $0x3b0] sm:$0xff]
        %v352 = vld [vmem:[#allocation2 + $0x3b8] sm:$0xff]
        %v353 = vld [vmem:[#allocation2 + $0x3c0] sm:$0xff]
        %v354 = vld [vmem:[#allocation2 + $0x3c8] sm:$0xf]
        %v355 = vld [vmem:[#allocation2 + $0x3cc] sm:$0xff]
        %v356 = vld [vmem:[#allocation2 + $0x3d4] sm:$0xff]
        %v357 = vld [vmem:[#allocation2 + $0x3dc] sm:$0xff]
        %v358 = vld [vmem:[#allocation2 + $0x3e4] sm:$0xff]
        %v359 = vld [vmem:[#allocation2 + $0x3ec] sm:$0xf]
        %v360 = vld [vmem:[#allocation2 + $0x3f0] sm:$0xff]
        %v361 = vld [vmem:[#allocation2 + $0x3f8] sm:$0xff]
        %v362 = vld [vmem:[#allocation2 + $0x400] sm:$0xff]
        %v363 = vld [vmem:[#allocation2 + $0x408] sm:$0xff]
        %v364 = vld [vmem:[#allocation2 + $0x410] sm:$0xf]
        %v365 = vld [vmem:[#allocation2 + $0x414] sm:$0xff]
        %v366 = vld [vmem:[#allocation2 + $0x41c] sm:$0xff]
        %v367 = vld [vmem:[#allocation2 + $0x424] sm:$0xff]
        %v368 = vld [vmem:[#allocation2 + $0x42c] sm:$0xff]
        %v369 = vld [vmem:[#allocation2 + $0x434] sm:$0xf]
        %v370 = vld [vmem:[#allocation2 + $0x438] sm:$0xff]
        %v371 = vld [vmem:[#allocation2 + $0x440] sm:$0xff]
        %v372 = vld [vmem:[#allocation2 + $0x448] sm:$0xff]
        %v373 = vld [vmem:[#allocation2 + $0x450] sm:$0xff]
        %v374 = vld [vmem:[#allocation2 + $0x458] sm:$0xf]
        %v375 = vld [vmem:[#allocation2 + $0x45c] sm:$0xff]
        %v376 = vld [vmem:[#allocation2 + $0x464] sm:$0xff]
        %v377 = vld [vmem:[#allocation2 + $0x46c] sm:$0xff]
        %v378 = vld [vmem:[#allocation2 + $0x474] sm:$0xff]
        %v379 = vld [vmem:[#allocation2 + $0x47c] sm:$0xf]
        %v380 = vld [vmem:[#allocation2 + $0x480] sm:$0xff]
        %v381 = vld [vmem:[#allocation2 + $0x488] sm:$0xff]
        %v382 = vld [vmem:[#allocation2 + $0x490] sm:$0xff]
        %v383 = vld [vmem:[#allocation2 + $0x498] sm:$0xff]
        %v384 = vld [vmem:[#allocation2 + $0x4a0] sm:$0xf]
        %v385 = vld [vmem:[#allocation2 + $0x4a4] sm:$0xff]
        %v386 = vld [vmem:[#allocation2 + $0x4ac] sm:$0xff]
        %v387 = vld [vmem:[#allocation2 + $0x4b4] sm:$0xff]
        %v388 = vld [vmem:[#allocation2 + $0x4bc] sm:$0xff]
        %v389 = vld [vmem:[#allocation2 + $0x4c4] sm:$0xf]
        %v390 = vld [vmem:[#allocation2 + $0x4c8] sm:$0xff]
        %v391 = vld [vmem:[#allocation2 + $0x4d0] sm:$0xff]
        %v392 = vld [vmem:[#allocation2 + $0x4d8] sm:$0xff]
        %v393 = vld [vmem:[#allocation2 + $0x4e0] sm:$0xff]
        %v394 = vld [vmem:[#allocation2 + $0x4e8] sm:$0xf]
        %v395 = vld [vmem:[#allocation2 + $0x4ec] sm:$0xff]
        %v396 = vld [vmem:[#allocation2 + $0x4f4] sm:$0xff]
        %v397 = vld [vmem:[#allocation2 + $0x4fc] sm:$0xff]
        %v398 = vld [vmem:[#allocation2 + $0x504] sm:$0xff]
        %v399 = vld [vmem:[#allocation2 + $0x50c] sm:$0xf]
        %v400 = vld [vmem:[#allocation2 + $0x510] sm:$0xff]
        %v401 = vld [vmem:[#allocation2 + $0x518] sm:$0xff]
        %v402 = vld [vmem:[#allocation2 + $0x520] sm:$0xff]
        %v403 = vld [vmem:[#allocation2 + $0x528] sm:$0xff]
        %v404 = vld [vmem:[#allocation2 + $0x530] sm:$0xf]
        %v405 = vld [vmem:[#allocation2 + $0x534] sm:$0xff]
        %v406 = vld [vmem:[#allocation2 + $0x53c] sm:$0xff]
        %v407 = vld [vmem:[#allocation2 + $0x544] sm:$0xff]
        %v408 = vld [vmem:[#allocation2 + $0x54c] sm:$0xff]
        %v409 = vld [vmem:[#allocation2 + $0x554] sm:$0xf]
        %v410 = vld [vmem:[#allocation2 + $0x558] sm:$0xff]
        %v411 = vld [vmem:[#allocation2 + $0x560] sm:$0xff]
        %v412 = vld [vmem:[#allocation2 + $0x568] sm:$0xff]
        %v413 = vld [vmem:[#allocation2 + $0x570] sm:$0xff]
        %v414 = vld [vmem:[#allocation2 + $0x578] sm:$0xf]
        %v415 = vld [vmem:[#allocation2 + $0x57c] sm:$0xff]
        %v416 = vld [vmem:[#allocation2 + $0x584] sm:$0xff]
        %v417 = vld [vmem:[#allocation2 + $0x58c] sm:$0xff]
        %v418 = vld [vmem:[#allocation2 + $0x594] sm:$0xff]
        %v419 = vld [vmem:[#allocation2 + $0x59c] sm:$0xf]
        %v420 = vld [vmem:[#allocation2 + $0x5a0] sm:$0xff]
        %v421 = vld [vmem:[#allocation2 + $0x5a8] sm:$0xff]
        %v422 = vld [vmem:[#allocation2 + $0x5b0] sm:$0xff]
        %v423 = vld [vmem:[#allocation2 + $0x5b8] sm:$0xff]
        %v424 = vld [vmem:[#allocation2 + $0x5c0] sm:$0xf]
        %v425 = vld [vmem:[#allocation2 + $0x5c4] sm:$0xff]
        %v426 = vld [vmem:[#allocation2 + $0x5cc] sm:$0xff]
        %v427 = vld [vmem:[#allocation2 + $0x5d4] sm:$0xff]
        %v428 = vld [vmem:[#allocation2 + $0x5dc] sm:$0xff]
        %v429 = vld [vmem:[#allocation2 + $0x5e4] sm:$0xf]
        %v430 = vld [vmem:[#allocation2 + $0x5e8] sm:$0xff]
        %v431 = vld [vmem:[#allocation2 + $0x5f0] sm:$0xff]
        %v432 = vld [vmem:[#allocation2 + $0x5f8] sm:$0xff]
        %v433 = vld [vmem:[#allocation2 + $0x600] sm:$0xff]
        %v434 = vld [vmem:[#allocation2 + $0x608] sm:$0xf]
        %v435 = vld [vmem:[#allocation2 + $0x60c] sm:$0xff]
        %v436 = vld [vmem:[#allocation2 + $0x614] sm:$0xff]
        %v437 = vld [vmem:[#allocation2 + $0x61c] sm:$0xff]
        %v438 = vld [vmem:[#allocation2 + $0x624] sm:$0xff]
        %v439 = vld [vmem:[#allocation2 + $0x62c] sm:$0xf]
        %v440 = vld [vmem:[#allocation2 + $0x630] sm:$0xff]
        %v441 = vld [vmem:[#allocation2 + $0x638] sm:$0xff]
        %v442 = vld [vmem:[#allocation2 + $0x640] sm:$0xff]
        %v443 = vld [vmem:[#allocation2 + $0x648] sm:$0xff]
        %v444 = vld [vmem:[#allocation2 + $0x650] sm:$0xf]
        %v445 = vld [vmem:[#allocation2 + $0x654] sm:$0xff]
        %v446 = vld [vmem:[#allocation2 + $0x65c] sm:$0xff]
        %v447 = vld [vmem:[#allocation2 + $0x664] sm:$0xff]
        %v448 = vld [vmem:[#allocation2 + $0x66c] sm:$0xff]
        %v449 = vld [vmem:[#allocation2 + $0x674] sm:$0xf]
        %v450 = vld [vmem:[#allocation2 + $0x678] sm:$0xff]
        %v451 = vld [vmem:[#allocation2 + $0x680] sm:$0xff]
        %v452 = vld [vmem:[#allocation2 + $0x688] sm:$0xff]
        %v453 = vld [vmem:[#allocation2 + $0x690] sm:$0xff]
        %v454 = vld [vmem:[#allocation2 + $0x698] sm:$0xf]
        %v455 = vld [vmem:[#allocation2 + $0x69c] sm:$0xff]
        %v456 = vld [vmem:[#allocation2 + $0x6a4] sm:$0xff]
        %v457 = vld [vmem:[#allocation2 + $0x6ac] sm:$0xff]
        %v458 = vld [vmem:[#allocation2 + $0x6b4] sm:$0xff]
        %v459 = vld [vmem:[#allocation2 + $0x6bc] sm:$0xf]
        %v460 = vld [vmem:[#allocation2 + $0x6c0] sm:$0xff]
        %v461 = vld [vmem:[#allocation2 + $0x6c8] sm:$0xff]
        %v462 = vld [vmem:[#allocation2 + $0x6d0] sm:$0xff]
        %v463 = vld [vmem:[#allocation2 + $0x6d8] sm:$0xff]
        %v464 = vld [vmem:[#allocation2 + $0x6e0] sm:$0xf]
        %v465 = vld [vmem:[#allocation2 + $0x6e4] sm:$0xff]
        %v466 = vld [vmem:[#allocation2 + $0x6ec] sm:$0xff]
        %v467 = vld [vmem:[#allocation2 + $0x6f4] sm:$0xff]
        %v468 = vld [vmem:[#allocation2 + $0x6fc] sm:$0xff]
        %v469 = vld [vmem:[#allocation2 + $0x704] sm:$0xf]
        %v470 = vld [vmem:[#allocation2 + $0x708] sm:$0xff]
        %v471 = vld [vmem:[#allocation2 + $0x710] sm:$0xff]
        %v472 = vld [vmem:[#allocation2 + $0x718] sm:$0xff]
        %v473 = vld [vmem:[#allocation2 + $0x720] sm:$0xff]
        %v474 = vld [vmem:[#allocation2 + $0x728] sm:$0xf]
        %v475 = vld [vmem:[#allocation2 + $0x72c] sm:$0xff]
        %v476 = vld [vmem:[#allocation2 + $0x734] sm:$0xff]
        %v477 = vld [vmem:[#allocation2 + $0x73c] sm:$0xff]
        %v478 = vld [vmem:[#allocation2 + $0x744] sm:$0xff]
        %v479 = vld [vmem:[#allocation2 + $0x74c] sm:$0xf]
        %v480 = vld [vmem:[#allocation2 + $0x750] sm:$0xff]
        %v481 = vld [vmem:[#allocation2 + $0x758] sm:$0xff]
        %v482 = vld [vmem:[#allocation2 + $0x760] sm:$0xff]
        %v483 = vld [vmem:[#allocation2 + $0x768] sm:$0xff]
        %v484 = vld [vmem:[#allocation2 + $0x770] sm:$0xf]
        %v485 = vld [vmem:[#allocation2 + $0x774] sm:$0xff]
        %v486 = vld [vmem:[#allocation2 + $0x77c] sm:$0xff]
        %v487 = vld [vmem:[#allocation2 + $0x784] sm:$0xff]
        %v488 = vld [vmem:[#allocation2 + $0x78c] sm:$0xff]
        %v489 = vld [vmem:[#allocation2 + $0x794] sm:$0xf]
        %v490 = vld [vmem:[#allocation2 + $0x798] sm:$0xff]
        %v491 = vld [vmem:[#allocation2 + $0x7a0] sm:$0xff]
        %v492 = vld [vmem:[#allocation2 + $0x7a8] sm:$0xff]
        %v493 = vld [vmem:[#allocation2 + $0x7b0] sm:$0xff]
        %v494 = vld [vmem:[#allocation2 + $0x7b8] sm:$0xf]
        %v495 = vld [vmem:[#allocation2 + $0x7bc] sm:$0xff]
        %v496 = vld [vmem:[#allocation2 + $0x7c4] sm:$0xff]
        %v497 = vld [vmem:[#allocation2 + $0x7cc] sm:$0xff]
        %v498 = vld [vmem:[#allocation2 + $0x7d4] sm:$0xff]
        %v499 = vld [vmem:[#allocation2 + $0x7dc] sm:$0xf]
        %v500 = vld [vmem:[#allocation2 + $0x7e0] sm:$0xff]
        %v501 = vld [vmem:[#allocation2 + $0x7e8] sm:$0xff]
        %v502 = vld [vmem:[#allocation2 + $0x7f0] sm:$0xff]
        %v503 = vld [vmem:[#allocation2 + $0x7f8] sm:$0xff]
        %v504 = vld [vmem:[#allocation2 + $0x800] sm:$0xf]
        %v505 = vld [vmem:[#allocation2 + $0x804] sm:$0xff]
        %v506 = vld [vmem:[#allocation2 + $0x80c] sm:$0xff]
        %v507 = vld [vmem:[#allocation2 + $0x814] sm:$0xff]
        %v508 = vld [vmem:[#allocation2 + $0x81c] sm:$0xff]
        %v509 = vld [vmem:[#allocation2 + $0x824] sm:$0xf]
        %v510 = vld [vmem:[#allocation2 + $0x828] sm:$0xff]
        %v511 = vld [vmem:[#allocation2 + $0x830] sm:$0xff]
        %v512 = vld [vmem:[#allocation2 + $0x838] sm:$0xff]
        %v513 = vld [vmem:[#allocation2 + $0x840] sm:$0xff]
        %v514 = vld [vmem:[#allocation2 + $0x848] sm:$0xf]
        %v515 = vld [vmem:[#allocation2 + $0x84c] sm:$0xff]
        %v516 = vld [vmem:[#allocation2 + $0x854] sm:$0xff]
        %v517 = vld [vmem:[#allocation2 + $0x85c] sm:$0xff]
        %v518 = vld [vmem:[#allocation2 + $0x864] sm:$0xff]
        %v519 = vld [vmem:[#allocation2 + $0x86c] sm:$0xf]
        %v520 = vld [vmem:[#allocation2 + $0x870] sm:$0xff]
        %v521 = vld [vmem:[#allocation2 + $0x878] sm:$0xff]
        %v522 = vld [vmem:[#allocation2 + $0x880] sm:$0xff]
        %v523 = vld [vmem:[#allocation2 + $0x888] sm:$0xff]
        %v524 = vld [vmem:[#allocation2 + $0x890] sm:$0xf]
        %v525 = vld [vmem:[#allocation2 + $0x894] sm:$0xff]
        %v526 = vld [vmem:[#allocation2 + $0x89c] sm:$0xff]
        %v527 = vld [vmem:[#allocation2 + $0x8a4] sm:$0xff]
        %v528 = vld [vmem:[#allocation2 + $0x8ac] sm:$0xff]
        %v529 = vld [vmem:[#allocation2 + $0x8b4] sm:$0xf]
        %v530 = vld [vmem:[#allocation2 + $0x8b8] sm:$0xff]
        %v531 = vld [vmem:[#allocation2 + $0x8c0] sm:$0xff]
        %v532 = vld [vmem:[#allocation2 + $0x8c8] sm:$0xff]
        %v533 = vld [vmem:[#allocation2 + $0x8d0] sm:$0xff]
        %v534 = vld [vmem:[#allocation2 + $0x8d8] sm:$0xf]
        %v535 = vld [vmem:[#allocation2 + $0x8dc] sm:$0xff]
        %v536 = vld [vmem:[#allocation2 + $0x8e4] sm:$0xff]
        %v537 = vld [vmem:[#allocation2 + $0x8ec] sm:$0xff]
        %v538 = vld [vmem:[#allocation2 + $0x8f4] sm:$0xff]
        %v539 = vld [vmem:[#allocation2 + $0x8fc] sm:$0xf]
        %v540 = vld [vmem:[#allocation2 + $0x900] sm:$0xff]
        %v541 = vld [vmem:[#allocation2 + $0x908] sm:$0xff]
        %v542 = vld [vmem:[#allocation2 + $0x910] sm:$0xff]
        %v543 = vld [vmem:[#allocation2 + $0x918] sm:$0xff]
        %v544 = vld [vmem:[#allocation2 + $0x920] sm:$0xf]
        %v545 = vld [vmem:[#allocation2 + $0x924] sm:$0xff]
        %v546 = vld [vmem:[#allocation2 + $0x92c] sm:$0xff]
        %v547 = vld [vmem:[#allocation2 + $0x934] sm:$0xff]
        %v548 = vld [vmem:[#allocation2 + $0x93c] sm:$0xff]
        %v549 = vld [vmem:[#allocation2 + $0x944] sm:$0xf]
        %v550 = vld [vmem:[#allocation2 + $0x948] sm:$0xff]
        %v551 = vld [vmem:[#allocation2 + $0x950] sm:$0xff]
        %v552 = vld [vmem:[#allocation2 + $0x958] sm:$0xff]
        %v553 = vld [vmem:[#allocation2 + $0x960] sm:$0xff]
        %v554 = vld [vmem:[#allocation2 + $0x968] sm:$0xf]
        %v555 = vld [vmem:[#allocation2 + $0x96c] sm:$0xff]
        %v556 = vld [vmem:[#allocation2 + $0x974] sm:$0xff]
        %v557 = vld [vmem:[#allocation2 + $0x97c] sm:$0xff]
        %v558 = vld [vmem:[#allocation2 + $0x984] sm:$0xff]
        %v559 = vld [vmem:[#allocation2 + $0x98c] sm:$0xf]
        %v560 = vld [vmem:[#allocation2 + $0x990] sm:$0xff]
        %v561 = vld [vmem:[#allocation2 + $0x998] sm:$0xff]
        %v562 = vld [vmem:[#allocation2 + $0x9a0] sm:$0xff]
        %v563 = vld [vmem:[#allocation2 + $0x9a8] sm:$0xff]
        %v564 = vld [vmem:[#allocation2 + $0x9b0] sm:$0xf]
        %v565 = vld [vmem:[#allocation2 + $0x9b4] sm:$0xff]
        %v566 = vld [vmem:[#allocation2 + $0x9bc] sm:$0xff]
        %v567 = vld [vmem:[#allocation2 + $0x9c4] sm:$0xff]
        %v568 = vld [vmem:[#allocation2 + $0x9cc] sm:$0xff]
        %v569 = vld [vmem:[#allocation2 + $0x9d4] sm:$0xf]
        %v570 = vld [vmem:[#allocation2 + $0x9d8] sm:$0xff]
        %v571 = vld [vmem:[#allocation2 + $0x9e0] sm:$0xff]
        %v572 = vld [vmem:[#allocation2 + $0x9e8] sm:$0xff]
        %v573 = vld [vmem:[#allocation2 + $0x9f0] sm:$0xff]
        %v574 = vld [vmem:[#allocation2 + $0x9f8] sm:$0xf]
        %v575 = vld [vmem:[#allocation2 + $0x9fc] sm:$0xff]
        %v576 = vld [vmem:[#allocation2 + $0xa04] sm:$0xff]
        %v577 = vld [vmem:[#allocation2 + $0xa0c] sm:$0xff]
        %v578 = vld [vmem:[#allocation2 + $0xa14] sm:$0xff]
        %v579 = vld [vmem:[#allocation2 + $0xa1c] sm:$0xf]
        %v580 = vld [vmem:[#allocation2 + $0xa20] sm:$0xff]
        %v581 = vld [vmem:[#allocation2 + $0xa28] sm:$0xff]
        %v582 = vld [vmem:[#allocation2 + $0xa30] sm:$0xff]
        %v583 = vld [vmem:[#allocation2 + $0xa38] sm:$0xff]
        %v584 = vld [vmem:[#allocation2 + $0xa40] sm:$0xf]
        %v585 = vld [vmem:[#allocation2 + $0xa44] sm:$0xff]
        %v586 = vld [vmem:[#allocation2 + $0xa4c] sm:$0xff]
        %v587 = vld [vmem:[#allocation2 + $0xa54] sm:$0xff]
        %v588 = vld [vmem:[#allocation2 + $0xa5c] sm:$0xff]
        %v589 = vld [vmem:[#allocation2 + $0xa64] sm:$0xf]
        %v590 = vld [vmem:[#allocation2 + $0xa68] sm:$0xff]
        %v591 = vld [vmem:[#allocation2 + $0xa70] sm:$0xff]
        %v592 = vld [vmem:[#allocation2 + $0xa78] sm:$0xff]
        %v593 = vld [vmem:[#allocation2 + $0xa80] sm:$0xff]
        %v594 = vld [vmem:[#allocation2 + $0xa88] sm:$0xf]
        %v595 = vld [vmem:[#allocation2 + $0xa8c] sm:$0xff]
        %v596 = vld [vmem:[#allocation2 + $0xa94] sm:$0xff]
        %v597 = vld [vmem:[#allocation2 + $0xa9c] sm:$0xff]
        %v598 = vld [vmem:[#allocation2 + $0xaa4] sm:$0xff]
        %v599 = vld [vmem:[#allocation2 + $0xaac] sm:$0xf]
        %v600 = vld [vmem:[#allocation2 + $0xab0] sm:$0xff]
        %v601 = vld [vmem:[#allocation2 + $0xab8] sm:$0xff]
        %v602 = vld [vmem:[#allocation2 + $0xac0] sm:$0xff]
        %v603 = vld [vmem:[#allocation2 + $0xac8] sm:$0xff]
        %v604 = vld [vmem:[#allocation2 + $0xad0] sm:$0xf]
        %v605 = vld [vmem:[#allocation2 + $0xad4] sm:$0xff]
        %v606 = vld [vmem:[#allocation2 + $0xadc] sm:$0xff]
        %v607 = vld [vmem:[#allocation2 + $0xae4] sm:$0xff]
        %v608 = vld [vmem:[#allocation2 + $0xaec] sm:$0xff]
        %v609 = vld [vmem:[#allocation2 + $0xaf4] sm:$0xf]
        %v610 = vld [vmem:[#allocation2 + $0xaf8] sm:$0xff]
        %v611 = vld [vmem:[#allocation2 + $0xb00] sm:$0xff]
        %v612 = vld [vmem:[#allocation2 + $0xb08] sm:$0xff]
        %v613 = vld [vmem:[#allocation2 + $0xb10] sm:$0xff]
        %v614 = vld [vmem:[#allocation2 + $0xb18] sm:$0xf]
        %v615 = vld [vmem:[#allocation2 + $0xb1c] sm:$0xff]
        %v616 = vld [vmem:[#allocation2 + $0xb24] sm:$0xff]
        %v617 = vld [vmem:[#allocation2 + $0xb2c] sm:$0xff]
        %v618 = vld [vmem:[#allocation2 + $0xb34] sm:$0xff]
        %v619 = vld [vmem:[#allocation2 + $0xb3c] sm:$0xf]
        %v620 = vld [vmem:[#allocation2 + $0xb40] sm:$0xff]
        %v621 = vld [vmem:[#allocation2 + $0xb48] sm:$0xff]
        %v622 = vld [vmem:[#allocation2 + $0xb50] sm:$0xff]
        %v623 = vld [vmem:[#allocation2 + $0xb58] sm:$0xff]
        %v624 = vld [vmem:[#allocation2 + $0xb60] sm:$0xf]
        %v625 = vld [vmem:[#allocation2 + $0xb64] sm:$0xff]
        %v626 = vld [vmem:[#allocation2 + $0xb6c] sm:$0xff]
        %v627 = vld [vmem:[#allocation2 + $0xb74] sm:$0xff]
        %v628 = vld [vmem:[#allocation2 + $0xb7c] sm:$0xff]
        %v629 = vld [vmem:[#allocation2 + $0xb84] sm:$0xf]
        %v630 = vld [vmem:[#allocation2 + $0xb88] sm:$0xff]
        %v631 = vld [vmem:[#allocation2 + $0xb90] sm:$0xff]
        %v632 = vld [vmem:[#allocation2 + $0xb98] sm:$0xff]
        %v633 = vld [vmem:[#allocation2 + $0xba0] sm:$0xff]
        %v634 = vld [vmem:[#allocation2 + $0xba8] sm:$0xf]
        %v635 = vld [vmem:[#allocation2 + $0xbac] sm:$0xff]
        %v636 = vld [vmem:[#allocation2 + $0xbb4] sm:$0xff]
        %v637 = vld [vmem:[#allocation2 + $0xbbc] sm:$0xff]
        %v638 = vld [vmem:[#allocation2 + $0xbc4] sm:$0xff]
        %v639 = vld [vmem:[#allocation2 + $0xbcc] sm:$0xf]
        %v640 = vld [vmem:[#allocation2 + $0xbd0] sm:$0xff]
        %v641 = vld [vmem:[#allocation2 + $0xbd8] sm:$0xff]
        %v642 = vld [vmem:[#allocation2 + $0xbe0] sm:$0xff]
        %v643 = vld [vmem:[#allocation2 + $0xbe8] sm:$0xff]
        %v644 = vld [vmem:[#allocation2 + $0xbf0] sm:$0xf]
        %v645 = vld [vmem:[#allocation2 + $0xbf4] sm:$0xff]
        %v646 = vld [vmem:[#allocation2 + $0xbfc] sm:$0xff]
        %v647 = vld [vmem:[#allocation2 + $0xc04] sm:$0xff]
        %v648 = vld [vmem:[#allocation2 + $0xc0c] sm:$0xff]
        %v649 = vld [vmem:[#allocation2 + $0xc14] sm:$0xf]
        %v650 = vld [vmem:[#allocation2 + $0xc18] sm:$0xff]
        %v651 = vld [vmem:[#allocation2 + $0xc20] sm:$0xff]
        %v652 = vld [vmem:[#allocation2 + $0xc28] sm:$0xff]
        %v653 = vld [vmem:[#allocation2 + $0xc30] sm:$0xff]
        %v654 = vld [vmem:[#allocation2 + $0xc38] sm:$0xf]
        %v655 = vld [vmem:[#allocation2 + $0xc3c] sm:$0xff]
        %v656 = vld [vmem:[#allocation2 + $0xc44] sm:$0xff]
        %v657 = vld [vmem:[#allocation2 + $0xc4c] sm:$0xff]
        %v658 = vld [vmem:[#allocation2 + $0xc54] sm:$0xff]
        %v659 = vld [vmem:[#allocation2 + $0xc5c] sm:$0xf]
        %v660 = vld [vmem:[#allocation2 + $0xc60] sm:$0xff]
        %v661 = vld [vmem:[#allocation2 + $0xc68] sm:$0xff]
        %v662 = vld [vmem:[#allocation2 + $0xc70] sm:$0xff]
        %v663 = vld [vmem:[#allocation2 + $0xc78] sm:$0xff]
        %v664 = vld [vmem:[#allocation2 + $0xc80] sm:$0xf]
        %v665 = vld [vmem:[#allocation2 + $0xc84] sm:$0xff]
        %v666 = vld [vmem:[#allocation2 + $0xc8c] sm:$0xff]
        %v667 = vld [vmem:[#allocation2 + $0xc94] sm:$0xff]
        %v668 = vld [vmem:[#allocation2 + $0xc9c] sm:$0xff]
        %v669 = vld [vmem:[#allocation2 + $0xca4] sm:$0xf]
        %v670 = vld [vmem:[#allocation2 + $0xca8] sm:$0xff]
        %v671 = vld [vmem:[#allocation2 + $0xcb0] sm:$0xff]
        %v672 = vld [vmem:[#allocation2 + $0xcb8] sm:$0xff]
        %v673 = vld [vmem:[#allocation2 + $0xcc0] sm:$0xff]
        %v674 = vld [vmem:[#allocation2 + $0xcc8] sm:$0xf]
        %v675 = vld [vmem:[#allocation2 + $0xccc] sm:$0xff]
        %v676 = vld [vmem:[#allocation2 + $0xcd4] sm:$0xff]
        %v677 = vld [vmem:[#allocation2 + $0xcdc] sm:$0xff]
        %v678 = vld [vmem:[#allocation2 + $0xce4] sm:$0xff]
        %v679 = vld [vmem:[#allocation2 + $0xcec] sm:$0xf]
        %v680 = vld [vmem:[#allocation2 + $0xcf0] sm:$0xff]
        %v681 = vld [vmem:[#allocation2 + $0xcf8] sm:$0xff]
        %v682 = vld [vmem:[#allocation2 + $0xd00] sm:$0xff]
        %v683 = vld [vmem:[#allocation2 + $0xd08] sm:$0xff]
        %v684 = vld [vmem:[#allocation2 + $0xd10] sm:$0xf]
        %v685 = vld [vmem:[#allocation2 + $0xd14] sm:$0xff]
        %v686 = vld [vmem:[#allocation2 + $0xd1c] sm:$0xff]
        %v687 = vld [vmem:[#allocation2 + $0xd24] sm:$0xff]
        %v688 = vld [vmem:[#allocation2 + $0xd2c] sm:$0xff]
        %v689 = vld [vmem:[#allocation2 + $0xd34] sm:$0xf]
        %v690 = vld [vmem:[#allocation2 + $0xd38] sm:$0xff]
        %v691 = vld [vmem:[#allocation2 + $0xd40] sm:$0xff]
        %v692 = vld [vmem:[#allocation2 + $0xd48] sm:$0xff]
        %v693 = vld [vmem:[#allocation2 + $0xd50] sm:$0xff]
        %v694 = vld [vmem:[#allocation2 + $0xd58] sm:$0xf]
        %v695 = vld [vmem:[#allocation2 + $0xd5c] sm:$0xff]
        %v696 = vld [vmem:[#allocation2 + $0xd64] sm:$0xff]
        %v697 = vld [vmem:[#allocation2 + $0xd6c] sm:$0xff]
        %v698 = vld [vmem:[#allocation2 + $0xd74] sm:$0xff]
        %v699 = vld [vmem:[#allocation2 + $0xd7c] sm:$0xf]
        %v700 = vld [vmem:[#allocation2 + $0xd80] sm:$0xff]
        %v701 = vld [vmem:[#allocation2 + $0xd88] sm:$0xff]
        %v702 = vld [vmem:[#allocation2 + $0xd90] sm:$0xff]
        %v703 = vld [vmem:[#allocation2 + $0xd98] sm:$0xff]
        %v704 = vld [vmem:[#allocation2 + $0xda0] sm:$0xf]
        %v705 = vld [vmem:[#allocation2 + $0xda4] sm:$0xff]
        %v706 = vld [vmem:[#allocation2 + $0xdac] sm:$0xff]
        %v707 = vld [vmem:[#allocation2 + $0xdb4] sm:$0xff]
        %v708 = vld [vmem:[#allocation2 + $0xdbc] sm:$0xff]
        %v709 = vld [vmem:[#allocation2 + $0xdc4] sm:$0xf]
        %v710 = vld [vmem:[#allocation2 + $0xdc8] sm:$0xff]
        %v711 = vld [vmem:[#allocation2 + $0xdd0] sm:$0xff]
        %v712 = vld [vmem:[#allocation2 + $0xdd8] sm:$0xff]
        %v713 = vld [vmem:[#allocation2 + $0xde0] sm:$0xff]
        %v714 = vld [vmem:[#allocation2 + $0xde8] sm:$0xf]
        %v715 = vld [vmem:[#allocation2 + $0xdec] sm:$0xff]
        %v716 = vld [vmem:[#allocation2 + $0xdf4] sm:$0xff]
        %v717 = vld [vmem:[#allocation2 + $0xdfc] sm:$0xff]
        %v718 = vld [vmem:[#allocation2 + $0xe04] sm:$0xff]
        %v719 = vld [vmem:[#allocation2 + $0xe0c] sm:$0xf]
        %v720 = vld [vmem:[#allocation2 + $0xe10] sm:$0xff]
        %v721 = vld [vmem:[#allocation2 + $0xe18] sm:$0xff]
        %v722 = vld [vmem:[#allocation2 + $0xe20] sm:$0xff]
        %v723 = vld [vmem:[#allocation2 + $0xe28] sm:$0xff]
        %v724 = vld [vmem:[#allocation2 + $0xe30] sm:$0xf]
        %v725 = vld [vmem:[#allocation2 + $0xe34] sm:$0xff]
        %v726 = vld [vmem:[#allocation2 + $0xe3c] sm:$0xff]
        %v727 = vld [vmem:[#allocation2 + $0xe44] sm:$0xff]
        %v728 = vld [vmem:[#allocation2 + $0xe4c] sm:$0xff]
        %v729 = vld [vmem:[#allocation2 + $0xe54] sm:$0xf]
        %v730 = vld [vmem:[#allocation2 + $0xe58] sm:$0xff]
        %v731 = vld [vmem:[#allocation2 + $0xe60] sm:$0xff]
        %v732 = vld [vmem:[#allocation2 + $0xe68] sm:$0xff]
        %v733 = vld [vmem:[#allocation2 + $0xe70] sm:$0xff]
        %v734 = vld [vmem:[#allocation2 + $0xe78] sm:$0xf]
        %v735 = vld [vmem:[#allocation2 + $0xe7c] sm:$0xff]
        %v736 = vld [vmem:[#allocation2 + $0xe84] sm:$0xff]
        %v737 = vld [vmem:[#allocation2 + $0xe8c] sm:$0xff]
        %v738 = vld [vmem:[#allocation2 + $0xe94] sm:$0xff]
        %v739 = vld [vmem:[#allocation2 + $0xe9c] sm:$0xf]
        %v740 = vld [vmem:[#allocation2 + $0xea0] sm:$0xff]
        %v741 = vld [vmem:[#allocation2 + $0xea8] sm:$0xff]
        %v742 = vld [vmem:[#allocation2 + $0xeb0] sm:$0xff]
        %v743 = vld [vmem:[#allocation2 + $0xeb8] sm:$0xff]
        %v744 = vld [vmem:[#allocation2 + $0xec0] sm:$0xf]
        %v745 = vld [vmem:[#allocation2 + $0xec4] sm:$0xff]
        %v746 = vld [vmem:[#allocation2 + $0xecc] sm:$0xff]
        %v747 = vld [vmem:[#allocation2 + $0xed4] sm:$0xff]
        %v748 = vld [vmem:[#allocation2 + $0xedc] sm:$0xff]
        %v749 = vld [vmem:[#allocation2 + $0xee4] sm:$0xf]
        %v750 = vld [vmem:[#allocation2 + $0xee8] sm:$0xff]
        %v751 = vld [vmem:[#allocation2 + $0xef0] sm:$0xff]
        %v752 = vld [vmem:[#allocation2 + $0xef8] sm:$0xff]
        %v753 = vld [vmem:[#allocation2 + $0xf00] sm:$0xff]
        %v754 = vld [vmem:[#allocation2 + $0xf08] sm:$0xf]
        %v755 = vld [vmem:[#allocation2 + $0xf0c] sm:$0xff]
        %v756 = vld [vmem:[#allocation2 + $0xf14] sm:$0xff]
        %v757 = vld [vmem:[#allocation2 + $0xf1c] sm:$0xff]
        %v758 = vld [vmem:[#allocation2 + $0xf24] sm:$0xff]
        %v759 = vld [vmem:[#allocation2 + $0xf2c] sm:$0xf]
        %v760 = vld [vmem:[#allocation2 + $0xf30] sm:$0xff]
        %v761 = vld [vmem:[#allocation2 + $0xf38] sm:$0xff]
        %v762 = vld [vmem:[#allocation2 + $0xf40] sm:$0xff]
        %v763 = vld [vmem:[#allocation2 + $0xf48] sm:$0xff]
        %v764 = vld [vmem:[#allocation2 + $0xf50] sm:$0xf]
        %v765 = vld [vmem:[#allocation2 + $0xf54] sm:$0xff]
        %v766 = vld [vmem:[#allocation2 + $0xf5c] sm:$0xff]
        %v767 = vld [vmem:[#allocation2 + $0xf64] sm:$0xff]
        %v768 = vld [vmem:[#allocation2 + $0xf6c] sm:$0xff]
        %v769 = vld [vmem:[#allocation2 + $0xf74] sm:$0xf]
        %v770 = vld [vmem:[#allocation2 + $0xf78] sm:$0xff]
        %v771 = vld [vmem:[#allocation2 + $0xf80] sm:$0xff]
        %v772 = vld [vmem:[#allocation2 + $0xf88] sm:$0xff]
        %v773 = vld [vmem:[#allocation2 + $0xf90] sm:$0xff]
        %v774 = vld [vmem:[#allocation2 + $0xf98] sm:$0xf]
        %v775 = vld [vmem:[#allocation2 + $0xf9c] sm:$0xff]
        %v776 = vld [vmem:[#allocation2 + $0xfa4] sm:$0xff]
        %v777 = vld [vmem:[#allocation2 + $0xfac] sm:$0xff]
        %v778 = vld [vmem:[#allocation2 + $0xfb4] sm:$0xff]
        %v779 = vld [vmem:[#allocation2 + $0xfbc] sm:$0xf]
        %v780 = vld [vmem:[#allocation2 + $0xfc0] sm:$0xff]
        %v781 = vld [vmem:[#allocation2 + $0xfc8] sm:$0xff]
        %v782 = vld [vmem:[#allocation2 + $0xfd0] sm:$0xff]
        %v783 = vld [vmem:[#allocation2 + $0xfd8] sm:$0xff]
        %v784 = vld [vmem:[#allocation2 + $0xfe0] sm:$0xf]
        %v785 = vld [vmem:[#allocation2 + $0xfe4] sm:$0xff]
        %v786 = vld [vmem:[#allocation2 + $0xfec] sm:$0xff]
        %v787 = vld [vmem:[#allocation2 + $0xff4] sm:$0xff]
        %v788 = vld [vmem:[#allocation2 + $0xffc] sm:$0xff]
        %v789 = vld [vmem:[#allocation2 + $0x1004] sm:$0xf]
        %v790 = vld [vmem:[#allocation2 + $0x1008] sm:$0xff]
        %v791 = vld [vmem:[#allocation2 + $0x1010] sm:$0xff]
        %v792 = vld [vmem:[#allocation2 + $0x1018] sm:$0xff]
        %v793 = vld [vmem:[#allocation2 + $0x1020] sm:$0xff]
        %v794 = vld [vmem:[#allocation2 + $0x1028] sm:$0xf]
        %v795 = vld [vmem:[#allocation2 + $0x102c] sm:$0xff]
        %v796 = vld [vmem:[#allocation2 + $0x1034] sm:$0xff]
        %v797 = vld [vmem:[#allocation2 + $0x103c] sm:$0xff]
        %v798 = vld [vmem:[#allocation2 + $0x1044] sm:$0xff]
        %v799 = vld [vmem:[#allocation2 + $0x104c] sm:$0xf]
        %v800 = vld [vmem:[#allocation2 + $0x1050] sm:$0xff]
        %v801 = vld [vmem:[#allocation2 + $0x1058] sm:$0xff]
        %v802 = vld [vmem:[#allocation2 + $0x1060] sm:$0xff]
        %v803 = vld [vmem:[#allocation2 + $0x1068] sm:$0xff]
        %v804 = vld [vmem:[#allocation2 + $0x1070] sm:$0xf]
        %v805 = vld [vmem:[#allocation2 + $0x1074] sm:$0xff]
        %v806 = vld [vmem:[#allocation2 + $0x107c] sm:$0xff]
        %v807 = vld [vmem:[#allocation2 + $0x1084] sm:$0xff]
        %v808 = vld [vmem:[#allocation2 + $0x108c] sm:$0xff]
        %v809 = vld [vmem:[#allocation2 + $0x1094] sm:$0xf]
        %v810 = vld [vmem:[#allocation2 + $0x1098] sm:$0xff]
        %v811 = vld [vmem:[#allocation2 + $0x10a0] sm:$0xff]
        %v812 = vld [vmem:[#allocation2 + $0x10a8] sm:$0xff]
        %v813 = vld [vmem:[#allocation2 + $0x10b0] sm:$0xff]
        %v814 = vld [vmem:[#allocation2 + $0x10b8] sm:$0xf]
        %v815 = vld [vmem:[#allocation2 + $0x10bc] sm:$0xff]
        %v816 = vld [vmem:[#allocation2 + $0x10c4] sm:$0xff]
        %v817 = vld [vmem:[#allocation2 + $0x10cc] sm:$0xff]
        %v818 = vld [vmem:[#allocation2 + $0x10d4] sm:$0xff]
        %v819 = vld [vmem:[#allocation2 + $0x10dc] sm:$0xf]
        %v820 = vld [vmem:[#allocation2 + $0x10e0] sm:$0xff]
        %v821 = vld [vmem:[#allocation2 + $0x10e8] sm:$0xff]
        %v822 = vld [vmem:[#allocation2 + $0x10f0] sm:$0xff]
        %v823 = vld [vmem:[#allocation2 + $0x10f8] sm:$0xff]
        %v824 = vld [vmem:[#allocation2 + $0x1100] sm:$0xf]
        %v825 = vld [vmem:[#allocation2 + $0x1104] sm:$0xff]
        %v826 = vld [vmem:[#allocation2 + $0x110c] sm:$0xff]
        %v827 = vld [vmem:[#allocation2 + $0x1114] sm:$0xff]
        %v828 = vld [vmem:[#allocation2 + $0x111c] sm:$0xff]
        %v829 = vld [vmem:[#allocation2 + $0x1124] sm:$0xf]
        %v830 = vld [vmem:[#allocation2 + $0x1128] sm:$0xff]
        %v831 = vld [vmem:[#allocation2 + $0x1130] sm:$0xff]
        %v832 = vld [vmem:[#allocation2 + $0x1138] sm:$0xff]
        %v833 = vld [vmem:[#allocation2 + $0x1140] sm:$0xff]
        %v834 = vld [vmem:[#allocation2 + $0x1148] sm:$0xf]
        %v835 = vld [vmem:[#allocation2 + $0x114c] sm:$0xff]
        %v836 = vld [vmem:[#allocation2 + $0x1154] sm:$0xff]
        %v837 = vld [vmem:[#allocation2 + $0x115c] sm:$0xff]
        %v838 = vld [vmem:[#allocation2 + $0x1164] sm:$0xff]
        %v839 = vld [vmem:[#allocation2 + $0x116c] sm:$0xf]
        %v840 = vld [vmem:[#allocation2 + $0x1170] sm:$0xff]
        %v841 = vld [vmem:[#allocation2 + $0x1178] sm:$0xff]
        %v842 = vld [vmem:[#allocation2 + $0x1180] sm:$0xff]
        %v843 = vld [vmem:[#allocation2 + $0x1188] sm:$0xff]
        %v844 = vld [vmem:[#allocation2 + $0x1190] sm:$0xf]
        %v845 = vld [vmem:[#allocation2 + $0x1194] sm:$0xff]
        %v846 = vld [vmem:[#allocation2 + $0x119c] sm:$0xff]
        %v847 = vld [vmem:[#allocation2 + $0x11a4] sm:$0xff]
        %v848 = vld [vmem:[#allocation2 + $0x11ac] sm:$0xff]
        %v849 = vld [vmem:[#allocation2 + $0x11b4] sm:$0xf]
        %v850 = vld [vmem:[#allocation2 + $0x11b8] sm:$0xff]
        %v851 = vld [vmem:[#allocation2 + $0x11c0] sm:$0xff]
        %v852 = vld [vmem:[#allocation2 + $0x11c8] sm:$0xff]
        %v853 = vld [vmem:[#allocation2 + $0x11d0] sm:$0xff]
        %v854 = vld [vmem:[#allocation2 + $0x11d8] sm:$0xf]
        %v855 = vld [vmem:[#allocation2 + $0x11dc] sm:$0xff]
        %v856 = vld [vmem:[#allocation2 + $0x11e4] sm:$0xff]
        %v857 = vld [vmem:[#allocation2 + $0x11ec] sm:$0xff]
        %v858 = vld [vmem:[#allocation2 + $0x11f4] sm:$0xff]
        %v859 = vld [vmem:[#allocation2 + $0x11fc] sm:$0xf]
        %v872 = vunpack.c.l.b16 %v208
        %v873 = vunpack.c.h.b16 %v208
        %v874 = vunpack.c.l.b16 %v209
        %v875 = vunpack.c.h.b16 %v209
        %v876 = vunpack.c.l.b16 %v210
        %v877 = vunpack.c.h.b16 %v210
        %v878 = vunpack.c.l.b16 %v211
        %v879 = vunpack.c.h.b16 %v211
        %v880 = vunpack.c.l.b16 %v212
        %v881 = vunpack.c.h.b16 %v212
        %v882 = vunpack.c.l.b16 %v213
        %v883 = vunpack.c.h.b16 %v213
        %v884 = vunpack.c.l.b16 %v214
        %v885 = vunpack.c.h.b16 %v214
        %v886 = vunpack.c.l.b16 %v215
        %v887 = vunpack.c.h.b16 %v215
        %v888 = vunpack.c.l.b16 %v216
        %v889 = vunpack.c.h.b16 %v216
        %v890 = vunpack.c.l.b16 %v217
        %v891 = vunpack.c.h.b16 %v217
        %v892 = vunpack.c.l.b16 %v218
        %v893 = vunpack.c.h.b16 %v218
        %v894 = vunpack.c.l.b16 %v219
        %v895 = vunpack.c.h.b16 %v219
        %v896 = vpack.c.b16 %v880, %v872
        %v897 = vpack.c.b16 %v881, %v873
        %v898 = vpack.c.b16 %v882, %v874
        %v899 = vpack.c.b16 %v883, %v875
        %v900 = vpack.c.b16 %v884, %v876
        %v901 = vpack.c.b16 %v885, %v877
        %v902 = vpack.c.b16 %v886, %v878
        %v903 = vpack.c.b16 %v887, %v879
        %v904 = vpack.c.b16 %v888, %v888
        %v905 = vpack.c.b16 %v889, %v889
        %v906 = vpack.c.b16 %v890, %v890
        %v907 = vpack.c.b16 %v891, %v891
        %v908 = vpack.c.b16 %v892, %v892
        %v909 = vpack.c.b16 %v893, %v893
        %v910 = vpack.c.b16 %v894, %v894
        %v911 = vpack.c.b16 %v895, %v895
        %v1568 = vunpack.c.l.b16 %v220
        %v1569 = vunpack.c.h.b16 %v220
        %v1570 = vunpack.c.l.b16 %v221
        %v1571 = vunpack.c.h.b16 %v221
        %v1572 = vunpack.c.l.b16 %v222
        %v1573 = vunpack.c.h.b16 %v222
        %v1574 = vunpack.c.l.b16 %v223
        %v1575 = vunpack.c.h.b16 %v223
        %v1576 = vunpack.c.l.b16 %v224
        %v1577 = vunpack.c.l.b16 %v225
        %v1578 = vunpack.c.h.b16 %v225
        %v1579 = vunpack.c.l.b16 %v226
        %v1580 = vunpack.c.h.b16 %v226
        %v1581 = vunpack.c.l.b16 %v227
        %v1582 = vunpack.c.h.b16 %v227
        %v1583 = vunpack.c.l.b16 %v228
        %v1584 = vunpack.c.h.b16 %v228
        %v1585 = vunpack.c.l.b16 %v229
        %v1586 = vunpack.c.l.b16 %v230
        %v1587 = vunpack.c.h.b16 %v230
        %v1588 = vunpack.c.l.b16 %v231
        %v1589 = vunpack.c.h.b16 %v231
        %v1590 = vunpack.c.l.b16 %v232
        %v1591 = vunpack.c.h.b16 %v232
        %v1592 = vunpack.c.l.b16 %v233
        %v1593 = vunpack.c.h.b16 %v233
        %v1594 = vunpack.c.l.b16 %v234
        %v1595 = vunpack.c.l.b16 %v235
        %v1596 = vunpack.c.h.b16 %v235
        %v1597 = vunpack.c.l.b16 %v236
        %v1598 = vunpack.c.h.b16 %v236
        %v1599 = vunpack.c.l.b16 %v237
        %v1600 = vunpack.c.h.b16 %v237
        %v1601 = vunpack.c.l.b16 %v238
        %v1602 = vunpack.c.h.b16 %v238
        %v1603 = vunpack.c.l.b16 %v239
        %v1604 = vunpack.c.l.b16 %v240
        %v1605 = vunpack.c.h.b16 %v240
        %v1606 = vunpack.c.l.b16 %v241
        %v1607 = vunpack.c.h.b16 %v241
        %v1608 = vunpack.c.l.b16 %v242
        %v1609 = vunpack.c.h.b16 %v242
        %v1610 = vunpack.c.l.b16 %v243
        %v1611 = vunpack.c.h.b16 %v243
        %v1612 = vunpack.c.l.b16 %v244
        %v1613 = vunpack.c.l.b16 %v245
        %v1614 = vunpack.c.h.b16 %v245
        %v1615 = vunpack.c.l.b16 %v246
        %v1616 = vunpack.c.h.b16 %v246
        %v1617 = vunpack.c.l.b16 %v247
        %v1618 = vunpack.c.h.b16 %v247
        %v1619 = vunpack.c.l.b16 %v248
        %v1620 = vunpack.c.h.b16 %v248
        %v1621 = vunpack.c.l.b16 %v249
        %v1622 = vunpack.c.l.b16 %v250
        %v1623 = vunpack.c.h.b16 %v250
        %v1624 = vunpack.c.l.b16 %v251
        %v1625 = vunpack.c.h.b16 %v251
        %v1626 = vunpack.c.l.b16 %v252
        %v1627 = vunpack.c.h.b16 %v252
        %v1628 = vunpack.c.l.b16 %v253
        %v1629 = vunpack.c.h.b16 %v253
        %v1630 = vunpack.c.l.b16 %v254
        %v1631 = vunpack.c.l.b16 %v255
        %v1632 = vunpack.c.h.b16 %v255
        %v1633 = vunpack.c.l.b16 %v256
        %v1634 = vunpack.c.h.b16 %v256
        %v1635 = vunpack.c.l.b16 %v257
        %v1636 = vunpack.c.h.b16 %v257
        %v1637 = vunpack.c.l.b16 %v258
        %v1638 = vunpack.c.h.b16 %v258
        %v1639 = vunpack.c.l.b16 %v259
        %v1640 = vunpack.c.l.b16 %v260
        %v1641 = vunpack.c.h.b16 %v260
        %v1642 = vunpack.c.l.b16 %v261
        %v1643 = vunpack.c.h.b16 %v261
        %v1644 = vunpack.c.l.b16 %v262
        %v1645 = vunpack.c.h.b16 %v262
        %v1646 = vunpack.c.l.b16 %v263
        %v1647 = vunpack.c.h.b16 %v263
        %v1648 = vunpack.c.l.b16 %v264
        %v1649 = vunpack.c.l.b16 %v265
        %v1650 = vunpack.c.h.b16 %v265
        %v1651 = vunpack.c.l.b16 %v266
        %v1652 = vunpack.c.h.b16 %v266
        %v1653 = vunpack.c.l.b16 %v267
        %v1654 = vunpack.c.h.b16 %v267
        %v1655 = vunpack.c.l.b16 %v268
        %v1656 = vunpack.c.h.b16 %v268
        %v1657 = vunpack.c.l.b16 %v269
        %v1658 = vunpack.c.l.b16 %v270
        %v1659 = vunpack.c.h.b16 %v270
        %v1660 = vunpack.c.l.b16 %v271
        %v1661 = vunpack.c.h.b16 %v271
        %v1662 = vunpack.c.l.b16 %v272
        %v1663 = vunpack.c.h.b16 %v272
        %v1664 = vunpack.c.l.b16 %v273
        %v1665 = vunpack.c.h.b16 %v273
        %v1666 = vunpack.c.l.b16 %v274
        %v1667 = vunpack.c.l.b16 %v275
        %v1668 = vunpack.c.h.b16 %v275
        %v1669 = vunpack.c.l.b16 %v276
        %v1670 = vunpack.c.h.b16 %v276
        %v1671 = vunpack.c.l.b16 %v277
        %v1672 = vunpack.c.h.b16 %v277
        %v1673 = vunpack.c.l.b16 %v278
        %v1674 = vunpack.c.h.b16 %v278
        %v1675 = vunpack.c.l.b16 %v279
        %v1676 = vunpack.c.l.b16 %v280
        %v1677 = vunpack.c.h.b16 %v280
        %v1678 = vunpack.c.l.b16 %v281
        %v1679 = vunpack.c.h.b16 %v281
        %v1680 = vunpack.c.l.b16 %v282
        %v1681 = vunpack.c.h.b16 %v282
        %v1682 = vunpack.c.l.b16 %v283
        %v1683 = vunpack.c.h.b16 %v283
        %v1684 = vunpack.c.l.b16 %v284
        %v1685 = vunpack.c.l.b16 %v285
        %v1686 = vunpack.c.h.b16 %v285
        %v1687 = vunpack.c.l.b16 %v286
        %v1688 = vunpack.c.h.b16 %v286
        %v1689 = vunpack.c.l.b16 %v287
        %v1690 = vunpack.c.h.b16 %v287
        %v1691 = vunpack.c.l.b16 %v288
        %v1692 = vunpack.c.h.b16 %v288
        %v1693 = vunpack.c.l.b16 %v289
        %v1694 = vunpack.c.l.b16 %v290
        %v1695 = vunpack.c.h.b16 %v290
        %v1696 = vunpack.c.l.b16 %v291
        %v1697 = vunpack.c.h.b16 %v291
        %v1698 = vunpack.c.l.b16 %v292
        %v1699 = vunpack.c.h.b16 %v292
        %v1700 = vunpack.c.l.b16 %v293
        %v1701 = vunpack.c.h.b16 %v293
        %v1702 = vunpack.c.l.b16 %v294
        %v1703 = vunpack.c.l.b16 %v295
        %v1704 = vunpack.c.h.b16 %v295
        %v1705 = vunpack.c.l.b16 %v296
        %v1706 = vunpack.c.h.b16 %v296
        %v1707 = vunpack.c.l.b16 %v297
        %v1708 = vunpack.c.h.b16 %v297
        %v1709 = vunpack.c.l.b16 %v298
        %v1710 = vunpack.c.h.b16 %v298
        %v1711 = vunpack.c.l.b16 %v299
        %v1712 = vunpack.c.l.b16 %v300
        %v1713 = vunpack.c.h.b16 %v300
        %v1714 = vunpack.c.l.b16 %v301
        %v1715 = vunpack.c.h.b16 %v301
        %v1716 = vunpack.c.l.b16 %v302
        %v1717 = vunpack.c.h.b16 %v302
        %v1718 = vunpack.c.l.b16 %v303
        %v1719 = vunpack.c.h.b16 %v303
        %v1720 = vunpack.c.l.b16 %v304
        %v1721 = vunpack.c.l.b16 %v305
        %v1722 = vunpack.c.h.b16 %v305
        %v1723 = vunpack.c.l.b16 %v306
        %v1724 = vunpack.c.h.b16 %v306
        %v1725 = vunpack.c.l.b16 %v307
        %v1726 = vunpack.c.h.b16 %v307
        %v1727 = vunpack.c.l.b16 %v308
        %v1728 = vunpack.c.h.b16 %v308
        %v1729 = vunpack.c.l.b16 %v309
        %v1730 = vunpack.c.l.b16 %v310
        %v1731 = vunpack.c.h.b16 %v310
        %v1732 = vunpack.c.l.b16 %v311
        %v1733 = vunpack.c.h.b16 %v311
        %v1734 = vunpack.c.l.b16 %v312
        %v1735 = vunpack.c.h.b16 %v312
        %v1736 = vunpack.c.l.b16 %v313
        %v1737 = vunpack.c.h.b16 %v313
        %v1738 = vunpack.c.l.b16 %v314
        %v1739 = vunpack.c.l.b16 %v315
        %v1740 = vunpack.c.h.b16 %v315
        %v1741 = vunpack.c.l.b16 %v316
        %v1742 = vunpack.c.h.b16 %v316
        %v1743 = vunpack.c.l.b16 %v317
        %v1744 = vunpack.c.h.b16 %v317
        %v1745 = vunpack.c.l.b16 %v318
        %v1746 = vunpack.c.h.b16 %v318
        %v1747 = vunpack.c.l.b16 %v319
        %v1748 = vunpack.c.l.b16 %v320
        %v1749 = vunpack.c.h.b16 %v320
        %v1750 = vunpack.c.l.b16 %v321
        %v1751 = vunpack.c.h.b16 %v321
        %v1752 = vunpack.c.l.b16 %v322
        %v1753 = vunpack.c.h.b16 %v322
        %v1754 = vunpack.c.l.b16 %v323
        %v1755 = vunpack.c.h.b16 %v323
        %v1756 = vunpack.c.l.b16 %v324
        %v1757 = vunpack.c.l.b16 %v325
        %v1758 = vunpack.c.h.b16 %v325
        %v1759 = vunpack.c.l.b16 %v326
        %v1760 = vunpack.c.h.b16 %v326
        %v1761 = vunpack.c.l.b16 %v327
        %v1762 = vunpack.c.h.b16 %v327
        %v1763 = vunpack.c.l.b16 %v328
        %v1764 = vunpack.c.h.b16 %v328
        %v1765 = vunpack.c.l.b16 %v329
        %v1766 = vunpack.c.l.b16 %v330
        %v1767 = vunpack.c.h.b16 %v330
        %v1768 = vunpack.c.l.b16 %v331
        %v1769 = vunpack.c.h.b16 %v331
        %v1770 = vunpack.c.l.b16 %v332
        %v1771 = vunpack.c.h.b16 %v332
        %v1772 = vunpack.c.l.b16 %v333
        %v1773 = vunpack.c.h.b16 %v333
        %v1774 = vunpack.c.l.b16 %v334
        %v1775 = vunpack.c.l.b16 %v335
        %v1776 = vunpack.c.h.b16 %v335
        %v1777 = vunpack.c.l.b16 %v336
        %v1778 = vunpack.c.h.b16 %v336
        %v1779 = vunpack.c.l.b16 %v337
        %v1780 = vunpack.c.h.b16 %v337
        %v1781 = vunpack.c.l.b16 %v338
        %v1782 = vunpack.c.h.b16 %v338
        %v1783 = vunpack.c.l.b16 %v339
        %v1784 = vunpack.c.l.b16 %v340
        %v1785 = vunpack.c.h.b16 %v340
        %v1786 = vunpack.c.l.b16 %v341
        %v1787 = vunpack.c.h.b16 %v341
        %v1788 = vunpack.c.l.b16 %v342
        %v1789 = vunpack.c.h.b16 %v342
        %v1790 = vunpack.c.l.b16 %v343
        %v1791 = vunpack.c.h.b16 %v343
        %v1792 = vunpack.c.l.b16 %v344
        %v1793 = vunpack.c.l.b16 %v345
        %v1794 = vunpack.c.h.b16 %v345
        %v1795 = vunpack.c.l.b16 %v346
        %v1796 = vunpack.c.h.b16 %v346
        %v1797 = vunpack.c.l.b16 %v347
        %v1798 = vunpack.c.h.b16 %v347
        %v1799 = vunpack.c.l.b16 %v348
        %v1800 = vunpack.c.h.b16 %v348
        %v1801 = vunpack.c.l.b16 %v349
        %v1802 = vunpack.c.l.b16 %v350
        %v1803 = vunpack.c.h.b16 %v350
        %v1804 = vunpack.c.l.b16 %v351
        %v1805 = vunpack.c.h.b16 %v351
        %v1806 = vunpack.c.l.b16 %v352
        %v1807 = vunpack.c.h.b16 %v352
        %v1808 = vunpack.c.l.b16 %v353
        %v1809 = vunpack.c.h.b16 %v353
        %v1810 = vunpack.c.l.b16 %v354
        %v1811 = vunpack.c.l.b16 %v355
        %v1812 = vunpack.c.h.b16 %v355
        %v1813 = vunpack.c.l.b16 %v356
        %v1814 = vunpack.c.h.b16 %v356
        %v1815 = vunpack.c.l.b16 %v357
        %v1816 = vunpack.c.h.b16 %v357
        %v1817 = vunpack.c.l.b16 %v358
        %v1818 = vunpack.c.h.b16 %v358
        %v1819 = vunpack.c.l.b16 %v359
        %v1820 = vunpack.c.l.b16 %v360
        %v1821 = vunpack.c.h.b16 %v360
        %v1822 = vunpack.c.l.b16 %v361
        %v1823 = vunpack.c.h.b16 %v361
        %v1824 = vunpack.c.l.b16 %v362
        %v1825 = vunpack.c.h.b16 %v362
        %v1826 = vunpack.c.l.b16 %v363
        %v1827 = vunpack.c.h.b16 %v363
        %v1828 = vunpack.c.l.b16 %v364
        %v1829 = vunpack.c.l.b16 %v365
        %v1830 = vunpack.c.h.b16 %v365
        %v1831 = vunpack.c.l.b16 %v366
        %v1832 = vunpack.c.h.b16 %v366
        %v1833 = vunpack.c.l.b16 %v367
        %v1834 = vunpack.c.h.b16 %v367
        %v1835 = vunpack.c.l.b16 %v368
        %v1836 = vunpack.c.h.b16 %v368
        %v1837 = vunpack.c.l.b16 %v369
        %v1838 = vunpack.c.l.b16 %v370
        %v1839 = vunpack.c.h.b16 %v370
        %v1840 = vunpack.c.l.b16 %v371
        %v1841 = vunpack.c.h.b16 %v371
        %v1842 = vunpack.c.l.b16 %v372
        %v1843 = vunpack.c.h.b16 %v372
        %v1844 = vunpack.c.l.b16 %v373
        %v1845 = vunpack.c.h.b16 %v373
        %v1846 = vunpack.c.l.b16 %v374
        %v1847 = vunpack.c.l.b16 %v375
        %v1848 = vunpack.c.h.b16 %v375
        %v1849 = vunpack.c.l.b16 %v376
        %v1850 = vunpack.c.h.b16 %v376
        %v1851 = vunpack.c.l.b16 %v377
        %v1852 = vunpack.c.h.b16 %v377
        %v1853 = vunpack.c.l.b16 %v378
        %v1854 = vunpack.c.h.b16 %v378
        %v1855 = vunpack.c.l.b16 %v379
        %v1856 = vunpack.c.l.b16 %v380
        %v1857 = vunpack.c.h.b16 %v380
        %v1858 = vunpack.c.l.b16 %v381
        %v1859 = vunpack.c.h.b16 %v381
        %v1860 = vunpack.c.l.b16 %v382
        %v1861 = vunpack.c.h.b16 %v382
        %v1862 = vunpack.c.l.b16 %v383
        %v1863 = vunpack.c.h.b16 %v383
        %v1864 = vunpack.c.l.b16 %v384
        %v1865 = vunpack.c.l.b16 %v385
        %v1866 = vunpack.c.h.b16 %v385
        %v1867 = vunpack.c.l.b16 %v386
        %v1868 = vunpack.c.h.b16 %v386
        %v1869 = vunpack.c.l.b16 %v387
        %v1870 = vunpack.c.h.b16 %v387
        %v1871 = vunpack.c.l.b16 %v388
        %v1872 = vunpack.c.h.b16 %v388
        %v1873 = vunpack.c.l.b16 %v389
        %v1874 = vunpack.c.l.b16 %v390
        %v1875 = vunpack.c.h.b16 %v390
        %v1876 = vunpack.c.l.b16 %v391
        %v1877 = vunpack.c.h.b16 %v391
        %v1878 = vunpack.c.l.b16 %v392
        %v1879 = vunpack.c.h.b16 %v392
        %v1880 = vunpack.c.l.b16 %v393
        %v1881 = vunpack.c.h.b16 %v393
        %v1882 = vunpack.c.l.b16 %v394
        %v1883 = vunpack.c.l.b16 %v395
        %v1884 = vunpack.c.h.b16 %v395
        %v1885 = vunpack.c.l.b16 %v396
        %v1886 = vunpack.c.h.b16 %v396
        %v1887 = vunpack.c.l.b16 %v397
        %v1888 = vunpack.c.h.b16 %v397
        %v1889 = vunpack.c.l.b16 %v398
        %v1890 = vunpack.c.h.b16 %v398
        %v1891 = vunpack.c.l.b16 %v399
        %v1892 = vunpack.c.l.b16 %v400
        %v1893 = vunpack.c.h.b16 %v400
        %v1894 = vunpack.c.l.b16 %v401
        %v1895 = vunpack.c.h.b16 %v401
        %v1896 = vunpack.c.l.b16 %v402
        %v1897 = vunpack.c.h.b16 %v402
        %v1898 = vunpack.c.l.b16 %v403
        %v1899 = vunpack.c.h.b16 %v403
        %v1900 = vunpack.c.l.b16 %v404
        %v1901 = vunpack.c.l.b16 %v405
        %v1902 = vunpack.c.h.b16 %v405
        %v1903 = vunpack.c.l.b16 %v406
        %v1904 = vunpack.c.h.b16 %v406
        %v1905 = vunpack.c.l.b16 %v407
        %v1906 = vunpack.c.h.b16 %v407
        %v1907 = vunpack.c.l.b16 %v408
        %v1908 = vunpack.c.h.b16 %v408
        %v1909 = vunpack.c.l.b16 %v409
        %v1910 = vunpack.c.l.b16 %v410
        %v1911 = vunpack.c.h.b16 %v410
        %v1912 = vunpack.c.l.b16 %v411
        %v1913 = vunpack.c.h.b16 %v411
        %v1914 = vunpack.c.l.b16 %v412
        %v1915 = vunpack.c.h.b16 %v412
        %v1916 = vunpack.c.l.b16 %v413
        %v1917 = vunpack.c.h.b16 %v413
        %v1918 = vunpack.c.l.b16 %v414
        %v1919 = vunpack.c.l.b16 %v415
        %v1920 = vunpack.c.h.b16 %v415
        %v1921 = vunpack.c.l.b16 %v416
        %v1922 = vunpack.c.h.b16 %v416
        %v1923 = vunpack.c.l.b16 %v417
        %v1924 = vunpack.c.h.b16 %v417
        %v1925 = vunpack.c.l.b16 %v418
        %v1926 = vunpack.c.h.b16 %v418
        %v1927 = vunpack.c.l.b16 %v419
        %v1928 = vunpack.c.l.b16 %v420
        %v1929 = vunpack.c.h.b16 %v420
        %v1930 = vunpack.c.l.b16 %v421
        %v1931 = vunpack.c.h.b16 %v421
        %v1932 = vunpack.c.l.b16 %v422
        %v1933 = vunpack.c.h.b16 %v422
        %v1934 = vunpack.c.l.b16 %v423
        %v1935 = vunpack.c.h.b16 %v423
        %v1936 = vunpack.c.l.b16 %v424
        %v1937 = vunpack.c.l.b16 %v425
        %v1938 = vunpack.c.h.b16 %v425
        %v1939 = vunpack.c.l.b16 %v426
        %v1940 = vunpack.c.h.b16 %v426
        %v1941 = vunpack.c.l.b16 %v427
        %v1942 = vunpack.c.h.b16 %v427
        %v1943 = vunpack.c.l.b16 %v428
        %v1944 = vunpack.c.h.b16 %v428
        %v1945 = vunpack.c.l.b16 %v429
        %v1946 = vunpack.c.l.b16 %v430
        %v1947 = vunpack.c.h.b16 %v430
        %v1948 = vunpack.c.l.b16 %v431
        %v1949 = vunpack.c.h.b16 %v431
        %v1950 = vunpack.c.l.b16 %v432
        %v1951 = vunpack.c.h.b16 %v432
        %v1952 = vunpack.c.l.b16 %v433
        %v1953 = vunpack.c.h.b16 %v433
        %v1954 = vunpack.c.l.b16 %v434
        %v1955 = vunpack.c.l.b16 %v435
        %v1956 = vunpack.c.h.b16 %v435
        %v1957 = vunpack.c.l.b16 %v436
        %v1958 = vunpack.c.h.b16 %v436
        %v1959 = vunpack.c.l.b16 %v437
        %v1960 = vunpack.c.h.b16 %v437
        %v1961 = vunpack.c.l.b16 %v438
        %v1962 = vunpack.c.h.b16 %v438
        %v1963 = vunpack.c.l.b16 %v439
        %v1964 = vunpack.c.l.b16 %v440
        %v1965 = vunpack.c.h.b16 %v440
        %v1966 = vunpack.c.l.b16 %v441
        %v1967 = vunpack.c.h.b16 %v441
        %v1968 = vunpack.c.l.b16 %v442
        %v1969 = vunpack.c.h.b16 %v442
        %v1970 = vunpack.c.l.b16 %v443
        %v1971 = vunpack.c.h.b16 %v443
        %v1972 = vunpack.c.l.b16 %v444
        %v1973 = vunpack.c.l.b16 %v445
        %v1974 = vunpack.c.h.b16 %v445
        %v1975 = vunpack.c.l.b16 %v446
        %v1976 = vunpack.c.h.b16 %v446
        %v1977 = vunpack.c.l.b16 %v447
        %v1978 = vunpack.c.h.b16 %v447
        %v1979 = vunpack.c.l.b16 %v448
        %v1980 = vunpack.c.h.b16 %v448
        %v1981 = vunpack.c.l.b16 %v449
        %v1982 = vunpack.c.l.b16 %v450
        %v1983 = vunpack.c.h.b16 %v450
        %v1984 = vunpack.c.l.b16 %v451
        %v1985 = vunpack.c.h.b16 %v451
        %v1986 = vunpack.c.l.b16 %v452
        %v1987 = vunpack.c.h.b16 %v452
        %v1988 = vunpack.c.l.b16 %v453
        %v1989 = vunpack.c.h.b16 %v453
        %v1990 = vunpack.c.l.b16 %v454
        %v1991 = vunpack.c.l.b16 %v455
        %v1992 = vunpack.c.h.b16 %v455
        %v1993 = vunpack.c.l.b16 %v456
        %v1994 = vunpack.c.h.b16 %v456
        %v1995 = vunpack.c.l.b16 %v457
        %v1996 = vunpack.c.h.b16 %v457
        %v1997 = vunpack.c.l.b16 %v458
        %v1998 = vunpack.c.h.b16 %v458
        %v1999 = vunpack.c.l.b16 %v459
        %v2000 = vunpack.c.l.b16 %v460
        %v2001 = vunpack.c.h.b16 %v460
        %v2002 = vunpack.c.l.b16 %v461
        %v2003 = vunpack.c.h.b16 %v461
        %v2004 = vunpack.c.l.b16 %v462
        %v2005 = vunpack.c.h.b16 %v462
        %v2006 = vunpack.c.l.b16 %v463
        %v2007 = vunpack.c.h.b16 %v463
        %v2008 = vunpack.c.l.b16 %v464
        %v2009 = vunpack.c.l.b16 %v465
        %v2010 = vunpack.c.h.b16 %v465
        %v2011 = vunpack.c.l.b16 %v466
        %v2012 = vunpack.c.h.b16 %v466
        %v2013 = vunpack.c.l.b16 %v467
        %v2014 = vunpack.c.h.b16 %v467
        %v2015 = vunpack.c.l.b16 %v468
        %v2016 = vunpack.c.h.b16 %v468
        %v2017 = vunpack.c.l.b16 %v469
        %v2018 = vunpack.c.l.b16 %v470
        %v2019 = vunpack.c.h.b16 %v470
        %v2020 = vunpack.c.l.b16 %v471
        %v2021 = vunpack.c.h.b16 %v471
        %v2022 = vunpack.c.l.b16 %v472
        %v2023 = vunpack.c.h.b16 %v472
        %v2024 = vunpack.c.l.b16 %v473
        %v2025 = vunpack.c.h.b16 %v473
        %v2026 = vunpack.c.l.b16 %v474
        %v2027 = vunpack.c.l.b16 %v475
        %v2028 = vunpack.c.h.b16 %v475
        %v2029 = vunpack.c.l.b16 %v476
        %v2030 = vunpack.c.h.b16 %v476
        %v2031 = vunpack.c.l.b16 %v477
        %v2032 = vunpack.c.h.b16 %v477
        %v2033 = vunpack.c.l.b16 %v478
        %v2034 = vunpack.c.h.b16 %v478
        %v2035 = vunpack.c.l.b16 %v479
        %v2036 = vunpack.c.l.b16 %v480
        %v2037 = vunpack.c.h.b16 %v480
        %v2038 = vunpack.c.l.b16 %v481
        %v2039 = vunpack.c.h.b16 %v481
        %v2040 = vunpack.c.l.b16 %v482
        %v2041 = vunpack.c.h.b16 %v482
        %v2042 = vunpack.c.l.b16 %v483
        %v2043 = vunpack.c.h.b16 %v483
        %v2044 = vunpack.c.l.b16 %v484
        %v2045 = vunpack.c.l.b16 %v485
        %v2046 = vunpack.c.h.b16 %v485
        %v2047 = vunpack.c.l.b16 %v486
        %v2048 = vunpack.c.h.b16 %v486
        %v2049 = vunpack.c.l.b16 %v487
        %v2050 = vunpack.c.h.b16 %v487
        %v2051 = vunpack.c.l.b16 %v488
        %v2052 = vunpack.c.h.b16 %v488
        %v2053 = vunpack.c.l.b16 %v489
        %v2054 = vunpack.c.l.b16 %v490
        %v2055 = vunpack.c.h.b16 %v490
        %v2056 = vunpack.c.l.b16 %v491
        %v2057 = vunpack.c.h.b16 %v491
        %v2058 = vunpack.c.l.b16 %v492
        %v2059 = vunpack.c.h.b16 %v492
        %v2060 = vunpack.c.l.b16 %v493
        %v2061 = vunpack.c.h.b16 %v493
        %v2062 = vunpack.c.l.b16 %v494
        %v2063 = vunpack.c.l.b16 %v495
        %v2064 = vunpack.c.h.b16 %v495
        %v2065 = vunpack.c.l.b16 %v496
        %v2066 = vunpack.c.h.b16 %v496
        %v2067 = vunpack.c.l.b16 %v497
        %v2068 = vunpack.c.h.b16 %v497
        %v2069 = vunpack.c.l.b16 %v498
        %v2070 = vunpack.c.h.b16 %v498
        %v2071 = vunpack.c.l.b16 %v499
        %v2072 = vunpack.c.l.b16 %v500
        %v2073 = vunpack.c.h.b16 %v500
        %v2074 = vunpack.c.l.b16 %v501
        %v2075 = vunpack.c.h.b16 %v501
        %v2076 = vunpack.c.l.b16 %v502
        %v2077 = vunpack.c.h.b16 %v502
        %v2078 = vunpack.c.l.b16 %v503
        %v2079 = vunpack.c.h.b16 %v503
        %v2080 = vunpack.c.l.b16 %v504
        %v2081 = vunpack.c.l.b16 %v505
        %v2082 = vunpack.c.h.b16 %v505
        %v2083 = vunpack.c.l.b16 %v506
        %v2084 = vunpack.c.h.b16 %v506
        %v2085 = vunpack.c.l.b16 %v507
        %v2086 = vunpack.c.h.b16 %v507
        %v2087 = vunpack.c.l.b16 %v508
        %v2088 = vunpack.c.h.b16 %v508
        %v2089 = vunpack.c.l.b16 %v509
        %v2090 = vunpack.c.l.b16 %v510
        %v2091 = vunpack.c.h.b16 %v510
        %v2092 = vunpack.c.l.b16 %v511
        %v2093 = vunpack.c.h.b16 %v511
        %v2094 = vunpack.c.l.b16 %v512
        %v2095 = vunpack.c.h.b16 %v512
        %v2096 = vunpack.c.l.b16 %v513
        %v2097 = vunpack.c.h.b16 %v513
        %v2098 = vunpack.c.l.b16 %v514
        %v2099 = vunpack.c.l.b16 %v515
        %v2100 = vunpack.c.h.b16 %v515
        %v2101 = vunpack.c.l.b16 %v516
        %v2102 = vunpack.c.h.b16 %v516
        %v2103 = vunpack.c.l.b16 %v517
        %v2104 = vunpack.c.h.b16 %v517
        %v2105 = vunpack.c.l.b16 %v518
        %v2106 = vunpack.c.h.b16 %v518
        %v2107 = vunpack.c.l.b16 %v519
        %v2108 = vunpack.c.l.b16 %v520
        %v2109 = vunpack.c.h.b16 %v520
        %v2110 = vunpack.c.l.b16 %v521
        %v2111 = vunpack.c.h.b16 %v521
        %v2112 = vunpack.c.l.b16 %v522
        %v2113 = vunpack.c.h.b16 %v522
        %v2114 = vunpack.c.l.b16 %v523
        %v2115 = vunpack.c.h.b16 %v523
        %v2116 = vunpack.c.l.b16 %v524
        %v2117 = vunpack.c.l.b16 %v525
        %v2118 = vunpack.c.h.b16 %v525
        %v2119 = vunpack.c.l.b16 %v526
        %v2120 = vunpack.c.h.b16 %v526
        %v2121 = vunpack.c.l.b16 %v527
        %v2122 = vunpack.c.h.b16 %v527
        %v2123 = vunpack.c.l.b16 %v528
        %v2124 = vunpack.c.h.b16 %v528
        %v2125 = vunpack.c.l.b16 %v529
        %v2126 = vunpack.c.l.b16 %v530
        %v2127 = vunpack.c.h.b16 %v530
        %v2128 = vunpack.c.l.b16 %v531
        %v2129 = vunpack.c.h.b16 %v531
        %v2130 = vunpack.c.l.b16 %v532
        %v2131 = vunpack.c.h.b16 %v532
        %v2132 = vunpack.c.l.b16 %v533
        %v2133 = vunpack.c.h.b16 %v533
        %v2134 = vunpack.c.l.b16 %v534
        %v2135 = vunpack.c.l.b16 %v535
        %v2136 = vunpack.c.h.b16 %v535
        %v2137 = vunpack.c.l.b16 %v536
        %v2138 = vunpack.c.h.b16 %v536
        %v2139 = vunpack.c.l.b16 %v537
        %v2140 = vunpack.c.h.b16 %v537
        %v2141 = vunpack.c.l.b16 %v538
        %v2142 = vunpack.c.h.b16 %v538
        %v2143 = vunpack.c.l.b16 %v539
        %v2144 = vunpack.c.l.b16 %v540
        %v2145 = vunpack.c.h.b16 %v540
        %v2146 = vunpack.c.l.b16 %v541
        %v2147 = vunpack.c.h.b16 %v541
        %v2148 = vunpack.c.l.b16 %v542
        %v2149 = vunpack.c.h.b16 %v542
        %v2150 = vunpack.c.l.b16 %v543
        %v2151 = vunpack.c.h.b16 %v543
        %v2152 = vunpack.c.l.b16 %v544
        %v2153 = vunpack.c.l.b16 %v545
        %v2154 = vunpack.c.h.b16 %v545
        %v2155 = vunpack.c.l.b16 %v546
        %v2156 = vunpack.c.h.b16 %v546
        %v2157 = vunpack.c.l.b16 %v547
        %v2158 = vunpack.c.h.b16 %v547
        %v2159 = vunpack.c.l.b16 %v548
        %v2160 = vunpack.c.h.b16 %v548
        %v2161 = vunpack.c.l.b16 %v549
        %v2162 = vunpack.c.l.b16 %v550
        %v2163 = vunpack.c.h.b16 %v550
        %v2164 = vunpack.c.l.b16 %v551
        %v2165 = vunpack.c.h.b16 %v551
        %v2166 = vunpack.c.l.b16 %v552
        %v2167 = vunpack.c.h.b16 %v552
        %v2168 = vunpack.c.l.b16 %v553
        %v2169 = vunpack.c.h.b16 %v553
        %v2170 = vunpack.c.l.b16 %v554
        %v2171 = vunpack.c.l.b16 %v555
        %v2172 = vunpack.c.h.b16 %v555
        %v2173 = vunpack.c.l.b16 %v556
        %v2174 = vunpack.c.h.b16 %v556
        %v2175 = vunpack.c.l.b16 %v557
        %v2176 = vunpack.c.h.b16 %v557
        %v2177 = vunpack.c.l.b16 %v558
        %v2178 = vunpack.c.h.b16 %v558
        %v2179 = vunpack.c.l.b16 %v559
        %v2180 = vunpack.c.l.b16 %v560
        %v2181 = vunpack.c.h.b16 %v560
        %v2182 = vunpack.c.l.b16 %v561
        %v2183 = vunpack.c.h.b16 %v561
        %v2184 = vunpack.c.l.b16 %v562
        %v2185 = vunpack.c.h.b16 %v562
        %v2186 = vunpack.c.l.b16 %v563
        %v2187 = vunpack.c.h.b16 %v563
        %v2188 = vunpack.c.l.b16 %v564
        %v2189 = vunpack.c.l.b16 %v565
        %v2190 = vunpack.c.h.b16 %v565
        %v2191 = vunpack.c.l.b16 %v566
        %v2192 = vunpack.c.h.b16 %v566
        %v2193 = vunpack.c.l.b16 %v567
        %v2194 = vunpack.c.h.b16 %v567
        %v2195 = vunpack.c.l.b16 %v568
        %v2196 = vunpack.c.h.b16 %v568
        %v2197 = vunpack.c.l.b16 %v569
        %v2198 = vunpack.c.l.b16 %v570
        %v2199 = vunpack.c.h.b16 %v570
        %v2200 = vunpack.c.l.b16 %v571
        %v2201 = vunpack.c.h.b16 %v571
        %v2202 = vunpack.c.l.b16 %v572
        %v2203 = vunpack.c.h.b16 %v572
        %v2204 = vunpack.c.l.b16 %v573
        %v2205 = vunpack.c.h.b16 %v573
        %v2206 = vunpack.c.l.b16 %v574
        %v2207 = vunpack.c.l.b16 %v575
        %v2208 = vunpack.c.h.b16 %v575
        %v2209 = vunpack.c.l.b16 %v576
        %v2210 = vunpack.c.h.b16 %v576
        %v2211 = vunpack.c.l.b16 %v577
        %v2212 = vunpack.c.h.b16 %v577
        %v2213 = vunpack.c.l.b16 %v578
        %v2214 = vunpack.c.h.b16 %v578
        %v2215 = vunpack.c.l.b16 %v579
        %v2216 = vunpack.c.l.b16 %v580
        %v2217 = vunpack.c.h.b16 %v580
        %v2218 = vunpack.c.l.b16 %v581
        %v2219 = vunpack.c.h.b16 %v581
        %v2220 = vunpack.c.l.b16 %v582
        %v2221 = vunpack.c.h.b16 %v582
        %v2222 = vunpack.c.l.b16 %v583
        %v2223 = vunpack.c.h.b16 %v583
        %v2224 = vunpack.c.l.b16 %v584
        %v2225 = vunpack.c.l.b16 %v585
        %v2226 = vunpack.c.h.b16 %v585
        %v2227 = vunpack.c.l.b16 %v586
        %v2228 = vunpack.c.h.b16 %v586
        %v2229 = vunpack.c.l.b16 %v587
        %v2230 = vunpack.c.h.b16 %v587
        %v2231 = vunpack.c.l.b16 %v588
        %v2232 = vunpack.c.h.b16 %v588
        %v2233 = vunpack.c.l.b16 %v589
        %v2234 = vunpack.c.l.b16 %v590
        %v2235 = vunpack.c.h.b16 %v590
        %v2236 = vunpack.c.l.b16 %v591
        %v2237 = vunpack.c.h.b16 %v591
        %v2238 = vunpack.c.l.b16 %v592
        %v2239 = vunpack.c.h.b16 %v592
        %v2240 = vunpack.c.l.b16 %v593
        %v2241 = vunpack.c.h.b16 %v593
        %v2242 = vunpack.c.l.b16 %v594
        %v2243 = vunpack.c.l.b16 %v595
        %v2244 = vunpack.c.h.b16 %v595
        %v2245 = vunpack.c.l.b16 %v596
        %v2246 = vunpack.c.h.b16 %v596
        %v2247 = vunpack.c.l.b16 %v597
        %v2248 = vunpack.c.h.b16 %v597
        %v2249 = vunpack.c.l.b16 %v598
        %v2250 = vunpack.c.h.b16 %v598
        %v2251 = vunpack.c.l.b16 %v599
        %v2252 = vunpack.c.l.b16 %v600
        %v2253 = vunpack.c.h.b16 %v600
        %v2254 = vunpack.c.l.b16 %v601
        %v2255 = vunpack.c.h.b16 %v601
        %v2256 = vunpack.c.l.b16 %v602
        %v2257 = vunpack.c.h.b16 %v602
        %v2258 = vunpack.c.l.b16 %v603
        %v2259 = vunpack.c.h.b16 %v603
        %v2260 = vunpack.c.l.b16 %v604
        %v2261 = vunpack.c.l.b16 %v605
        %v2262 = vunpack.c.h.b16 %v605
        %v2263 = vunpack.c.l.b16 %v606
        %v2264 = vunpack.c.h.b16 %v606
        %v2265 = vunpack.c.l.b16 %v607
        %v2266 = vunpack.c.h.b16 %v607
        %v2267 = vunpack.c.l.b16 %v608
        %v2268 = vunpack.c.h.b16 %v608
        %v2269 = vunpack.c.l.b16 %v609
        %v2270 = vunpack.c.l.b16 %v610
        %v2271 = vunpack.c.h.b16 %v610
        %v2272 = vunpack.c.l.b16 %v611
        %v2273 = vunpack.c.h.b16 %v611
        %v2274 = vunpack.c.l.b16 %v612
        %v2275 = vunpack.c.h.b16 %v612
        %v2276 = vunpack.c.l.b16 %v613
        %v2277 = vunpack.c.h.b16 %v613
        %v2278 = vunpack.c.l.b16 %v614
        %v2279 = vunpack.c.l.b16 %v615
        %v2280 = vunpack.c.h.b16 %v615
        %v2281 = vunpack.c.l.b16 %v616
        %v2282 = vunpack.c.h.b16 %v616
        %v2283 = vunpack.c.l.b16 %v617
        %v2284 = vunpack.c.h.b16 %v617
        %v2285 = vunpack.c.l.b16 %v618
        %v2286 = vunpack.c.h.b16 %v618
        %v2287 = vunpack.c.l.b16 %v619
        %v2288 = vunpack.c.l.b16 %v620
        %v2289 = vunpack.c.h.b16 %v620
        %v2290 = vunpack.c.l.b16 %v621
        %v2291 = vunpack.c.h.b16 %v621
        %v2292 = vunpack.c.l.b16 %v622
        %v2293 = vunpack.c.h.b16 %v622
        %v2294 = vunpack.c.l.b16 %v623
        %v2295 = vunpack.c.h.b16 %v623
        %v2296 = vunpack.c.l.b16 %v624
        %v2297 = vunpack.c.l.b16 %v625
        %v2298 = vunpack.c.h.b16 %v625
        %v2299 = vunpack.c.l.b16 %v626
        %v2300 = vunpack.c.h.b16 %v626
        %v2301 = vunpack.c.l.b16 %v627
        %v2302 = vunpack.c.h.b16 %v627
        %v2303 = vunpack.c.l.b16 %v628
        %v2304 = vunpack.c.h.b16 %v628
        %v2305 = vunpack.c.l.b16 %v629
        %v2306 = vunpack.c.l.b16 %v630
        %v2307 = vunpack.c.h.b16 %v630
        %v2308 = vunpack.c.l.b16 %v631
        %v2309 = vunpack.c.h.b16 %v631
        %v2310 = vunpack.c.l.b16 %v632
        %v2311 = vunpack.c.h.b16 %v632
        %v2312 = vunpack.c.l.b16 %v633
        %v2313 = vunpack.c.h.b16 %v633
        %v2314 = vunpack.c.l.b16 %v634
        %v2315 = vunpack.c.l.b16 %v635
        %v2316 = vunpack.c.h.b16 %v635
        %v2317 = vunpack.c.l.b16 %v636
        %v2318 = vunpack.c.h.b16 %v636
        %v2319 = vunpack.c.l.b16 %v637
        %v2320 = vunpack.c.h.b16 %v637
        %v2321 = vunpack.c.l.b16 %v638
        %v2322 = vunpack.c.h.b16 %v638
        %v2323 = vunpack.c.l.b16 %v639
        %v2324 = vunpack.c.l.b16 %v640
        %v2325 = vunpack.c.h.b16 %v640
        %v2326 = vunpack.c.l.b16 %v641
        %v2327 = vunpack.c.h.b16 %v641
        %v2328 = vunpack.c.l.b16 %v642
        %v2329 = vunpack.c.h.b16 %v642
        %v2330 = vunpack.c.l.b16 %v643
        %v2331 = vunpack.c.h.b16 %v643
        %v2332 = vunpack.c.l.b16 %v644
        %v2333 = vunpack.c.l.b16 %v645
        %v2334 = vunpack.c.h.b16 %v645
        %v2335 = vunpack.c.l.b16 %v646
        %v2336 = vunpack.c.h.b16 %v646
        %v2337 = vunpack.c.l.b16 %v647
        %v2338 = vunpack.c.h.b16 %v647
        %v2339 = vunpack.c.l.b16 %v648
        %v2340 = vunpack.c.h.b16 %v648
        %v2341 = vunpack.c.l.b16 %v649
        %v2342 = vunpack.c.l.b16 %v650
        %v2343 = vunpack.c.h.b16 %v650
        %v2344 = vunpack.c.l.b16 %v651
        %v2345 = vunpack.c.h.b16 %v651
        %v2346 = vunpack.c.l.b16 %v652
        %v2347 = vunpack.c.h.b16 %v652
        %v2348 = vunpack.c.l.b16 %v653
        %v2349 = vunpack.c.h.b16 %v653
        %v2350 = vunpack.c.l.b16 %v654
        %v2351 = vunpack.c.l.b16 %v655
        %v2352 = vunpack.c.h.b16 %v655
        %v2353 = vunpack.c.l.b16 %v656
        %v2354 = vunpack.c.h.b16 %v656
        %v2355 = vunpack.c.l.b16 %v657
        %v2356 = vunpack.c.h.b16 %v657
        %v2357 = vunpack.c.l.b16 %v658
        %v2358 = vunpack.c.h.b16 %v658
        %v2359 = vunpack.c.l.b16 %v659
        %v2360 = vunpack.c.l.b16 %v660
        %v2361 = vunpack.c.h.b16 %v660
        %v2362 = vunpack.c.l.b16 %v661
        %v2363 = vunpack.c.h.b16 %v661
        %v2364 = vunpack.c.l.b16 %v662
        %v2365 = vunpack.c.h.b16 %v662
        %v2366 = vunpack.c.l.b16 %v663
        %v2367 = vunpack.c.h.b16 %v663
        %v2368 = vunpack.c.l.b16 %v664
        %v2369 = vunpack.c.l.b16 %v665
        %v2370 = vunpack.c.h.b16 %v665
        %v2371 = vunpack.c.l.b16 %v666
        %v2372 = vunpack.c.h.b16 %v666
        %v2373 = vunpack.c.l.b16 %v667
        %v2374 = vunpack.c.h.b16 %v667
        %v2375 = vunpack.c.l.b16 %v668
        %v2376 = vunpack.c.h.b16 %v668
        %v2377 = vunpack.c.l.b16 %v669
        %v2378 = vunpack.c.l.b16 %v670
        %v2379 = vunpack.c.h.b16 %v670
        %v2380 = vunpack.c.l.b16 %v671
        %v2381 = vunpack.c.h.b16 %v671
        %v2382 = vunpack.c.l.b16 %v672
        %v2383 = vunpack.c.h.b16 %v672
        %v2384 = vunpack.c.l.b16 %v673
        %v2385 = vunpack.c.h.b16 %v673
        %v2386 = vunpack.c.l.b16 %v674
        %v2387 = vunpack.c.l.b16 %v675
        %v2388 = vunpack.c.h.b16 %v675
        %v2389 = vunpack.c.l.b16 %v676
        %v2390 = vunpack.c.h.b16 %v676
        %v2391 = vunpack.c.l.b16 %v677
        %v2392 = vunpack.c.h.b16 %v677
        %v2393 = vunpack.c.l.b16 %v678
        %v2394 = vunpack.c.h.b16 %v678
        %v2395 = vunpack.c.l.b16 %v679
        %v2396 = vunpack.c.l.b16 %v680
        %v2397 = vunpack.c.h.b16 %v680
        %v2398 = vunpack.c.l.b16 %v681
        %v2399 = vunpack.c.h.b16 %v681
        %v2400 = vunpack.c.l.b16 %v682
        %v2401 = vunpack.c.h.b16 %v682
        %v2402 = vunpack.c.l.b16 %v683
        %v2403 = vunpack.c.h.b16 %v683
        %v2404 = vunpack.c.l.b16 %v684
        %v2405 = vunpack.c.l.b16 %v685
        %v2406 = vunpack.c.h.b16 %v685
        %v2407 = vunpack.c.l.b16 %v686
        %v2408 = vunpack.c.h.b16 %v686
        %v2409 = vunpack.c.l.b16 %v687
        %v2410 = vunpack.c.h.b16 %v687
        %v2411 = vunpack.c.l.b16 %v688
        %v2412 = vunpack.c.h.b16 %v688
        %v2413 = vunpack.c.l.b16 %v689
        %v2414 = vunpack.c.l.b16 %v690
        %v2415 = vunpack.c.h.b16 %v690
        %v2416 = vunpack.c.l.b16 %v691
        %v2417 = vunpack.c.h.b16 %v691
        %v2418 = vunpack.c.l.b16 %v692
        %v2419 = vunpack.c.h.b16 %v692
        %v2420 = vunpack.c.l.b16 %v693
        %v2421 = vunpack.c.h.b16 %v693
        %v2422 = vunpack.c.l.b16 %v694
        %v2423 = vunpack.c.l.b16 %v695
        %v2424 = vunpack.c.h.b16 %v695
        %v2425 = vunpack.c.l.b16 %v696
        %v2426 = vunpack.c.h.b16 %v696
        %v2427 = vunpack.c.l.b16 %v697
        %v2428 = vunpack.c.h.b16 %v697
        %v2429 = vunpack.c.l.b16 %v698
        %v2430 = vunpack.c.h.b16 %v698
        %v2431 = vunpack.c.l.b16 %v699
        %v2432 = vunpack.c.l.b16 %v700
        %v2433 = vunpack.c.h.b16 %v700
        %v2434 = vunpack.c.l.b16 %v701
        %v2435 = vunpack.c.h.b16 %v701
        %v2436 = vunpack.c.l.b16 %v702
        %v2437 = vunpack.c.h.b16 %v702
        %v2438 = vunpack.c.l.b16 %v703
        %v2439 = vunpack.c.h.b16 %v703
        %v2440 = vunpack.c.l.b16 %v704
        %v2441 = vunpack.c.l.b16 %v705
        %v2442 = vunpack.c.h.b16 %v705
        %v2443 = vunpack.c.l.b16 %v706
        %v2444 = vunpack.c.h.b16 %v706
        %v2445 = vunpack.c.l.b16 %v707
        %v2446 = vunpack.c.h.b16 %v707
        %v2447 = vunpack.c.l.b16 %v708
        %v2448 = vunpack.c.h.b16 %v708
        %v2449 = vunpack.c.l.b16 %v709
        %v2450 = vunpack.c.l.b16 %v710
        %v2451 = vunpack.c.h.b16 %v710
        %v2452 = vunpack.c.l.b16 %v711
        %v2453 = vunpack.c.h.b16 %v711
        %v2454 = vunpack.c.l.b16 %v712
        %v2455 = vunpack.c.h.b16 %v712
        %v2456 = vunpack.c.l.b16 %v713
        %v2457 = vunpack.c.h.b16 %v713
        %v2458 = vunpack.c.l.b16 %v714
        %v2459 = vunpack.c.l.b16 %v715
        %v2460 = vunpack.c.h.b16 %v715
        %v2461 = vunpack.c.l.b16 %v716
        %v2462 = vunpack.c.h.b16 %v716
        %v2463 = vunpack.c.l.b16 %v717
        %v2464 = vunpack.c.h.b16 %v717
        %v2465 = vunpack.c.l.b16 %v718
        %v2466 = vunpack.c.h.b16 %v718
        %v2467 = vunpack.c.l.b16 %v719
        %v2468 = vunpack.c.l.b16 %v720
        %v2469 = vunpack.c.h.b16 %v720
        %v2470 = vunpack.c.l.b16 %v721
        %v2471 = vunpack.c.h.b16 %v721
        %v2472 = vunpack.c.l.b16 %v722
        %v2473 = vunpack.c.h.b16 %v722
        %v2474 = vunpack.c.l.b16 %v723
        %v2475 = vunpack.c.h.b16 %v723
        %v2476 = vunpack.c.l.b16 %v724
        %v2477 = vunpack.c.l.b16 %v725
        %v2478 = vunpack.c.h.b16 %v725
        %v2479 = vunpack.c.l.b16 %v726
        %v2480 = vunpack.c.h.b16 %v726
        %v2481 = vunpack.c.l.b16 %v727
        %v2482 = vunpack.c.h.b16 %v727
        %v2483 = vunpack.c.l.b16 %v728
        %v2484 = vunpack.c.h.b16 %v728
        %v2485 = vunpack.c.l.b16 %v729
        %v2486 = vunpack.c.l.b16 %v730
        %v2487 = vunpack.c.h.b16 %v730
        %v2488 = vunpack.c.l.b16 %v731
        %v2489 = vunpack.c.h.b16 %v731
        %v2490 = vunpack.c.l.b16 %v732
        %v2491 = vunpack.c.h.b16 %v732
        %v2492 = vunpack.c.l.b16 %v733
        %v2493 = vunpack.c.h.b16 %v733
        %v2494 = vunpack.c.l.b16 %v734
        %v2495 = vunpack.c.l.b16 %v735
        %v2496 = vunpack.c.h.b16 %v735
        %v2497 = vunpack.c.l.b16 %v736
        %v2498 = vunpack.c.h.b16 %v736
        %v2499 = vunpack.c.l.b16 %v737
        %v2500 = vunpack.c.h.b16 %v737
        %v2501 = vunpack.c.l.b16 %v738
        %v2502 = vunpack.c.h.b16 %v738
        %v2503 = vunpack.c.l.b16 %v739
        %v2504 = vunpack.c.l.b16 %v740
        %v2505 = vunpack.c.h.b16 %v740
        %v2506 = vunpack.c.l.b16 %v741
        %v2507 = vunpack.c.h.b16 %v741
        %v2508 = vunpack.c.l.b16 %v742
        %v2509 = vunpack.c.h.b16 %v742
        %v2510 = vunpack.c.l.b16 %v743
        %v2511 = vunpack.c.h.b16 %v743
        %v2512 = vunpack.c.l.b16 %v744
        %v2513 = vunpack.c.l.b16 %v745
        %v2514 = vunpack.c.h.b16 %v745
        %v2515 = vunpack.c.l.b16 %v746
        %v2516 = vunpack.c.h.b16 %v746
        %v2517 = vunpack.c.l.b16 %v747
        %v2518 = vunpack.c.h.b16 %v747
        %v2519 = vunpack.c.l.b16 %v748
        %v2520 = vunpack.c.h.b16 %v748
        %v2521 = vunpack.c.l.b16 %v749
        %v2522 = vunpack.c.l.b16 %v750
        %v2523 = vunpack.c.h.b16 %v750
        %v2524 = vunpack.c.l.b16 %v751
        %v2525 = vunpack.c.h.b16 %v751
        %v2526 = vunpack.c.l.b16 %v752
        %v2527 = vunpack.c.h.b16 %v752
        %v2528 = vunpack.c.l.b16 %v753
        %v2529 = vunpack.c.h.b16 %v753
        %v2530 = vunpack.c.l.b16 %v754
        %v2531 = vunpack.c.l.b16 %v755
        %v2532 = vunpack.c.h.b16 %v755
        %v2533 = vunpack.c.l.b16 %v756
        %v2534 = vunpack.c.h.b16 %v756
        %v2535 = vunpack.c.l.b16 %v757
        %v2536 = vunpack.c.h.b16 %v757
        %v2537 = vunpack.c.l.b16 %v758
        %v2538 = vunpack.c.h.b16 %v758
        %v2539 = vunpack.c.l.b16 %v759
        %v2540 = vunpack.c.l.b16 %v760
        %v2541 = vunpack.c.h.b16 %v760
        %v2542 = vunpack.c.l.b16 %v761
        %v2543 = vunpack.c.h.b16 %v761
        %v2544 = vunpack.c.l.b16 %v762
        %v2545 = vunpack.c.h.b16 %v762
        %v2546 = vunpack.c.l.b16 %v763
        %v2547 = vunpack.c.h.b16 %v763
        %v2548 = vunpack.c.l.b16 %v764
        %v2549 = vunpack.c.l.b16 %v765
        %v2550 = vunpack.c.h.b16 %v765
        %v2551 = vunpack.c.l.b16 %v766
        %v2552 = vunpack.c.h.b16 %v766
        %v2553 = vunpack.c.l.b16 %v767
        %v2554 = vunpack.c.h.b16 %v767
        %v2555 = vunpack.c.l.b16 %v768
        %v2556 = vunpack.c.h.b16 %v768
        %v2557 = vunpack.c.l.b16 %v769
        %v2558 = vunpack.c.l.b16 %v770
        %v2559 = vunpack.c.h.b16 %v770
        %v2560 = vunpack.c.l.b16 %v771
        %v2561 = vunpack.c.h.b16 %v771
        %v2562 = vunpack.c.l.b16 %v772
        %v2563 = vunpack.c.h.b16 %v772
        %v2564 = vunpack.c.l.b16 %v773
        %v2565 = vunpack.c.h.b16 %v773
        %v2566 = vunpack.c.l.b16 %v774
        %v2567 = vunpack.c.l.b16 %v775
        %v2568 = vunpack.c.h.b16 %v775
        %v2569 = vunpack.c.l.b16 %v776
        %v2570 = vunpack.c.h.b16 %v776
        %v2571 = vunpack.c.l.b16 %v777
        %v2572 = vunpack.c.h.b16 %v777
        %v2573 = vunpack.c.l.b16 %v778
        %v2574 = vunpack.c.h.b16 %v778
        %v2575 = vunpack.c.l.b16 %v779
        %v2576 = vunpack.c.l.b16 %v780
        %v2577 = vunpack.c.h.b16 %v780
        %v2578 = vunpack.c.l.b16 %v781
        %v2579 = vunpack.c.h.b16 %v781
        %v2580 = vunpack.c.l.b16 %v782
        %v2581 = vunpack.c.h.b16 %v782
        %v2582 = vunpack.c.l.b16 %v783
        %v2583 = vunpack.c.h.b16 %v783
        %v2584 = vunpack.c.l.b16 %v784
        %v2585 = vunpack.c.l.b16 %v785
        %v2586 = vunpack.c.h.b16 %v785
        %v2587 = vunpack.c.l.b16 %v786
        %v2588 = vunpack.c.h.b16 %v786
        %v2589 = vunpack.c.l.b16 %v787
        %v2590 = vunpack.c.h.b16 %v787
        %v2591 = vunpack.c.l.b16 %v788
        %v2592 = vunpack.c.h.b16 %v788
        %v2593 = vunpack.c.l.b16 %v789
        %v2594 = vunpack.c.l.b16 %v790
        %v2595 = vunpack.c.h.b16 %v790
        %v2596 = vunpack.c.l.b16 %v791
        %v2597 = vunpack.c.h.b16 %v791
        %v2598 = vunpack.c.l.b16 %v792
        %v2599 = vunpack.c.h.b16 %v792
        %v2600 = vunpack.c.l.b16 %v793
        %v2601 = vunpack.c.h.b16 %v793
        %v2602 = vunpack.c.l.b16 %v794
        %v2603 = vunpack.c.l.b16 %v795
        %v2604 = vunpack.c.h.b16 %v795
        %v2605 = vunpack.c.l.b16 %v796
        %v2606 = vunpack.c.h.b16 %v796
        %v2607 = vunpack.c.l.b16 %v797
        %v2608 = vunpack.c.h.b16 %v797
        %v2609 = vunpack.c.l.b16 %v798
        %v2610 = vunpack.c.h.b16 %v798
        %v2611 = vunpack.c.l.b16 %v799
        %v2612 = vunpack.c.l.b16 %v800
        %v2613 = vunpack.c.h.b16 %v800
        %v2614 = vunpack.c.l.b16 %v801
        %v2615 = vunpack.c.h.b16 %v801
        %v2616 = vunpack.c.l.b16 %v802
        %v2617 = vunpack.c.h.b16 %v802
        %v2618 = vunpack.c.l.b16 %v803
        %v2619 = vunpack.c.h.b16 %v803
        %v2620 = vunpack.c.l.b16 %v804
        %v2621 = vunpack.c.l.b16 %v805
        %v2622 = vunpack.c.h.b16 %v805
        %v2623 = vunpack.c.l.b16 %v806
        %v2624 = vunpack.c.h.b16 %v806
        %v2625 = vunpack.c.l.b16 %v807
        %v2626 = vunpack.c.h.b16 %v807
        %v2627 = vunpack.c.l.b16 %v808
        %v2628 = vunpack.c.h.b16 %v808
        %v2629 = vunpack.c.l.b16 %v809
        %v2630 = vunpack.c.l.b16 %v810
        %v2631 = vunpack.c.h.b16 %v810
        %v2632 = vunpack.c.l.b16 %v811
        %v2633 = vunpack.c.h.b16 %v811
        %v2634 = vunpack.c.l.b16 %v812
        %v2635 = vunpack.c.h.b16 %v812
        %v2636 = vunpack.c.l.b16 %v813
        %v2637 = vunpack.c.h.b16 %v813
        %v2638 = vunpack.c.l.b16 %v814
        %v2639 = vunpack.c.l.b16 %v815
        %v2640 = vunpack.c.h.b16 %v815
        %v2641 = vunpack.c.l.b16 %v816
        %v2642 = vunpack.c.h.b16 %v816
        %v2643 = vunpack.c.l.b16 %v817
        %v2644 = vunpack.c.h.b16 %v817
        %v2645 = vunpack.c.l.b16 %v818
        %v2646 = vunpack.c.h.b16 %v818
        %v2647 = vunpack.c.l.b16 %v819
        %v2648 = vunpack.c.l.b16 %v820
        %v2649 = vunpack.c.h.b16 %v820
        %v2650 = vunpack.c.l.b16 %v821
        %v2651 = vunpack.c.h.b16 %v821
        %v2652 = vunpack.c.l.b16 %v822
        %v2653 = vunpack.c.h.b16 %v822
        %v2654 = vunpack.c.l.b16 %v823
        %v2655 = vunpack.c.h.b16 %v823
        %v2656 = vunpack.c.l.b16 %v824
        %v2657 = vunpack.c.l.b16 %v825
        %v2658 = vunpack.c.h.b16 %v825
        %v2659 = vunpack.c.l.b16 %v826
        %v2660 = vunpack.c.h.b16 %v826
        %v2661 = vunpack.c.l.b16 %v827
        %v2662 = vunpack.c.h.b16 %v827
        %v2663 = vunpack.c.l.b16 %v828
        %v2664 = vunpack.c.h.b16 %v828
        %v2665 = vunpack.c.l.b16 %v829
        %v2666 = vunpack.c.l.b16 %v830
        %v2667 = vunpack.c.h.b16 %v830
        %v2668 = vunpack.c.l.b16 %v831
        %v2669 = vunpack.c.h.b16 %v831
        %v2670 = vunpack.c.l.b16 %v832
        %v2671 = vunpack.c.h.b16 %v832
        %v2672 = vunpack.c.l.b16 %v833
        %v2673 = vunpack.c.h.b16 %v833
        %v2674 = vunpack.c.l.b16 %v834
        %v2675 = vunpack.c.l.b16 %v835
        %v2676 = vunpack.c.h.b16 %v835
        %v2677 = vunpack.c.l.b16 %v836
        %v2678 = vunpack.c.h.b16 %v836
        %v2679 = vunpack.c.l.b16 %v837
        %v2680 = vunpack.c.h.b16 %v837
        %v2681 = vunpack.c.l.b16 %v838
        %v2682 = vunpack.c.h.b16 %v838
        %v2683 = vunpack.c.l.b16 %v839
        %v2684 = vunpack.c.l.b16 %v840
        %v2685 = vunpack.c.h.b16 %v840
        %v2686 = vunpack.c.l.b16 %v841
        %v2687 = vunpack.c.h.b16 %v841
        %v2688 = vunpack.c.l.b16 %v842
        %v2689 = vunpack.c.h.b16 %v842
        %v2690 = vunpack.c.l.b16 %v843
        %v2691 = vunpack.c.h.b16 %v843
        %v2692 = vunpack.c.l.b16 %v844
        %v2693 = vunpack.c.l.b16 %v845
        %v2694 = vunpack.c.h.b16 %v845
        %v2695 = vunpack.c.l.b16 %v846
        %v2696 = vunpack.c.h.b16 %v846
        %v2697 = vunpack.c.l.b16 %v847
        %v2698 = vunpack.c.h.b16 %v847
        %v2699 = vunpack.c.l.b16 %v848
        %v2700 = vunpack.c.h.b16 %v848
        %v2701 = vunpack.c.l.b16 %v849
        %v2702 = vunpack.c.l.b16 %v850
        %v2703 = vunpack.c.h.b16 %v850
        %v2704 = vunpack.c.l.b16 %v851
        %v2705 = vunpack.c.h.b16 %v851
        %v2706 = vunpack.c.l.b16 %v852
        %v2707 = vunpack.c.h.b16 %v852
        %v2708 = vunpack.c.l.b16 %v853
        %v2709 = vunpack.c.h.b16 %v853
        %v2710 = vunpack.c.l.b16 %v854
        %v2711 = vunpack.c.l.b16 %v855
        %v2712 = vunpack.c.h.b16 %v855
        %v2713 = vunpack.c.l.b16 %v856
        %v2714 = vunpack.c.h.b16 %v856
        %v2715 = vunpack.c.l.b16 %v857
        %v2716 = vunpack.c.h.b16 %v857
        %v2717 = vunpack.c.l.b16 %v858
        %v2718 = vunpack.c.h.b16 %v858
        %v2719 = vunpack.c.l.b16 %v859
        %v2720 = vpack.c.b16 %v1577, %v1568
        %v2721 = vpack.c.b16 %v1578, %v1569
        %v2722 = vpack.c.b16 %v1579, %v1570
        %v2723 = vpack.c.b16 %v1580, %v1571
        %v2724 = vpack.c.b16 %v1581, %v1572
        %v2725 = vpack.c.b16 %v1582, %v1573
        %v2726 = vpack.c.b16 %v1583, %v1574
        %v2727 = vpack.c.b16 %v1584, %v1575
        %v2728 = vpack.c.b16 %v1585, %v1576
        %v2729 = vpack.c.b16 %v1595, %v1586
        %v2730 = vpack.c.b16 %v1596, %v1587
        %v2731 = vpack.c.b16 %v1597, %v1588
        %v2732 = vpack.c.b16 %v1598, %v1589
        %v2733 = vpack.c.b16 %v1599, %v1590
        %v2734 = vpack.c.b16 %v1600, %v1591
        %v2735 = vpack.c.b16 %v1601, %v1592
        %v2736 = vpack.c.b16 %v1602, %v1593
        %v2737 = vpack.c.b16 %v1603, %v1594
        %v2738 = vpack.c.b16 %v1613, %v1604
        %v2739 = vpack.c.b16 %v1614, %v1605
        %v2740 = vpack.c.b16 %v1615, %v1606
        %v2741 = vpack.c.b16 %v1616, %v1607
        %v2742 = vpack.c.b16 %v1617, %v1608
        %v2743 = vpack.c.b16 %v1618, %v1609
        %v2744 = vpack.c.b16 %v1619, %v1610
        %v2745 = vpack.c.b16 %v1620, %v1611
        %v2746 = vpack.c.b16 %v1621, %v1612
        %v2747 = vpack.c.b16 %v1631, %v1622
        %v2748 = vpack.c.b16 %v1632, %v1623
        %v2749 = vpack.c.b16 %v1633, %v1624
        %v2750 = vpack.c.b16 %v1634, %v1625
        %v2751 = vpack.c.b16 %v1635, %v1626
        %v2752 = vpack.c.b16 %v1636, %v1627
        %v2753 = vpack.c.b16 %v1637, %v1628
        %v2754 = vpack.c.b16 %v1638, %v1629
        %v2755 = vpack.c.b16 %v1639, %v1630
        %v2756 = vpack.c.b16 %v1649, %v1640
        %v2757 = vpack.c.b16 %v1650, %v1641
        %v2758 = vpack.c.b16 %v1651, %v1642
        %v2759 = vpack.c.b16 %v1652, %v1643
        %v2760 = vpack.c.b16 %v1653, %v1644
        %v2761 = vpack.c.b16 %v1654, %v1645
        %v2762 = vpack.c.b16 %v1655, %v1646
        %v2763 = vpack.c.b16 %v1656, %v1647
        %v2764 = vpack.c.b16 %v1657, %v1648
        %v2765 = vpack.c.b16 %v1667, %v1658
        %v2766 = vpack.c.b16 %v1668, %v1659
        %v2767 = vpack.c.b16 %v1669, %v1660
        %v2768 = vpack.c.b16 %v1670, %v1661
        %v2769 = vpack.c.b16 %v1671, %v1662
        %v2770 = vpack.c.b16 %v1672, %v1663
        %v2771 = vpack.c.b16 %v1673, %v1664
        %v2772 = vpack.c.b16 %v1674, %v1665
        %v2773 = vpack.c.b16 %v1675, %v1666
        %v2774 = vpack.c.b16 %v1685, %v1676
        %v2775 = vpack.c.b16 %v1686, %v1677
        %v2776 = vpack.c.b16 %v1687, %v1678
        %v2777 = vpack.c.b16 %v1688, %v1679
        %v2778 = vpack.c.b16 %v1689, %v1680
        %v2779 = vpack.c.b16 %v1690, %v1681
        %v2780 = vpack.c.b16 %v1691, %v1682
        %v2781 = vpack.c.b16 %v1692, %v1683
        %v2782 = vpack.c.b16 %v1693, %v1684
        %v2783 = vpack.c.b16 %v1703, %v1694
        %v2784 = vpack.c.b16 %v1704, %v1695
        %v2785 = vpack.c.b16 %v1705, %v1696
        %v2786 = vpack.c.b16 %v1706, %v1697
        %v2787 = vpack.c.b16 %v1707, %v1698
        %v2788 = vpack.c.b16 %v1708, %v1699
        %v2789 = vpack.c.b16 %v1709, %v1700
        %v2790 = vpack.c.b16 %v1710, %v1701
        %v2791 = vpack.c.b16 %v1711, %v1702
        %v2792 = vpack.c.b16 %v1721, %v1712
        %v2793 = vpack.c.b16 %v1722, %v1713
        %v2794 = vpack.c.b16 %v1723, %v1714
        %v2795 = vpack.c.b16 %v1724, %v1715
        %v2796 = vpack.c.b16 %v1725, %v1716
        %v2797 = vpack.c.b16 %v1726, %v1717
        %v2798 = vpack.c.b16 %v1727, %v1718
        %v2799 = vpack.c.b16 %v1728, %v1719
        %v2800 = vpack.c.b16 %v1729, %v1720
        %v2801 = vpack.c.b16 %v1739, %v1730
        %v2802 = vpack.c.b16 %v1740, %v1731
        %v2803 = vpack.c.b16 %v1741, %v1732
        %v2804 = vpack.c.b16 %v1742, %v1733
        %v2805 = vpack.c.b16 %v1743, %v1734
        %v2806 = vpack.c.b16 %v1744, %v1735
        %v2807 = vpack.c.b16 %v1745, %v1736
        %v2808 = vpack.c.b16 %v1746, %v1737
        %v2809 = vpack.c.b16 %v1747, %v1738
        %v2810 = vpack.c.b16 %v1757, %v1748
        %v2811 = vpack.c.b16 %v1758, %v1749
        %v2812 = vpack.c.b16 %v1759, %v1750
        %v2813 = vpack.c.b16 %v1760, %v1751
        %v2814 = vpack.c.b16 %v1761, %v1752
        %v2815 = vpack.c.b16 %v1762, %v1753
        %v2816 = vpack.c.b16 %v1763, %v1754
        %v2817 = vpack.c.b16 %v1764, %v1755
        %v2818 = vpack.c.b16 %v1765, %v1756
        %v2819 = vpack.c.b16 %v1775, %v1766
        %v2820 = vpack.c.b16 %v1776, %v1767
        %v2821 = vpack.c.b16 %v1777, %v1768
        %v2822 = vpack.c.b16 %v1778, %v1769
        %v2823 = vpack.c.b16 %v1779, %v1770
        %v2824 = vpack.c.b16 %v1780, %v1771
        %v2825 = vpack.c.b16 %v1781, %v1772
        %v2826 = vpack.c.b16 %v1782, %v1773
        %v2827 = vpack.c.b16 %v1783, %v1774
        %v2828 = vpack.c.b16 %v1793, %v1784
        %v2829 = vpack.c.b16 %v1794, %v1785
        %v2830 = vpack.c.b16 %v1795, %v1786
        %v2831 = vpack.c.b16 %v1796, %v1787
        %v2832 = vpack.c.b16 %v1797, %v1788
        %v2833 = vpack.c.b16 %v1798, %v1789
        %v2834 = vpack.c.b16 %v1799, %v1790
        %v2835 = vpack.c.b16 %v1800, %v1791
        %v2836 = vpack.c.b16 %v1801, %v1792
        %v2837 = vpack.c.b16 %v1811, %v1802
        %v2838 = vpack.c.b16 %v1812, %v1803
        %v2839 = vpack.c.b16 %v1813, %v1804
        %v2840 = vpack.c.b16 %v1814, %v1805
        %v2841 = vpack.c.b16 %v1815, %v1806
        %v2842 = vpack.c.b16 %v1816, %v1807
        %v2843 = vpack.c.b16 %v1817, %v1808
        %v2844 = vpack.c.b16 %v1818, %v1809
        %v2845 = vpack.c.b16 %v1819, %v1810
        %v2846 = vpack.c.b16 %v1829, %v1820
        %v2847 = vpack.c.b16 %v1830, %v1821
        %v2848 = vpack.c.b16 %v1831, %v1822
        %v2849 = vpack.c.b16 %v1832, %v1823
        %v2850 = vpack.c.b16 %v1833, %v1824
        %v2851 = vpack.c.b16 %v1834, %v1825
        %v2852 = vpack.c.b16 %v1835, %v1826
        %v2853 = vpack.c.b16 %v1836, %v1827
        %v2854 = vpack.c.b16 %v1837, %v1828
        %v2855 = vpack.c.b16 %v1847, %v1838
        %v2856 = vpack.c.b16 %v1848, %v1839
        %v2857 = vpack.c.b16 %v1849, %v1840
        %v2858 = vpack.c.b16 %v1850, %v1841
        %v2859 = vpack.c.b16 %v1851, %v1842
        %v2860 = vpack.c.b16 %v1852, %v1843
        %v2861 = vpack.c.b16 %v1853, %v1844
        %v2862 = vpack.c.b16 %v1854, %v1845
        %v2863 = vpack.c.b16 %v1855, %v1846
        %v2864 = vpack.c.b16 %v1865, %v1856
        %v2865 = vpack.c.b16 %v1866, %v1857
        %v2866 = vpack.c.b16 %v1867, %v1858
        %v2867 = vpack.c.b16 %v1868, %v1859
        %v2868 = vpack.c.b16 %v1869, %v1860
        %v2869 = vpack.c.b16 %v1870, %v1861
        %v2870 = vpack.c.b16 %v1871, %v1862
        %v2871 = vpack.c.b16 %v1872, %v1863
        %v2872 = vpack.c.b16 %v1873, %v1864
        %v2873 = vpack.c.b16 %v1883, %v1874
        %v2874 = vpack.c.b16 %v1884, %v1875
        %v2875 = vpack.c.b16 %v1885, %v1876
        %v2876 = vpack.c.b16 %v1886, %v1877
        %v2877 = vpack.c.b16 %v1887, %v1878
        %v2878 = vpack.c.b16 %v1888, %v1879
        %v2879 = vpack.c.b16 %v1889, %v1880
        %v2880 = vpack.c.b16 %v1890, %v1881
        %v2881 = vpack.c.b16 %v1891, %v1882
        %v2882 = vpack.c.b16 %v1901, %v1892
        %v2883 = vpack.c.b16 %v1902, %v1893
        %v2884 = vpack.c.b16 %v1903, %v1894
        %v2885 = vpack.c.b16 %v1904, %v1895
        %v2886 = vpack.c.b16 %v1905, %v1896
        %v2887 = vpack.c.b16 %v1906, %v1897
        %v2888 = vpack.c.b16 %v1907, %v1898
        %v2889 = vpack.c.b16 %v1908, %v1899
        %v2890 = vpack.c.b16 %v1909, %v1900
        %v2891 = vpack.c.b16 %v1919, %v1910
        %v2892 = vpack.c.b16 %v1920, %v1911
        %v2893 = vpack.c.b16 %v1921, %v1912
        %v2894 = vpack.c.b16 %v1922, %v1913
        %v2895 = vpack.c.b16 %v1923, %v1914
        %v2896 = vpack.c.b16 %v1924, %v1915
        %v2897 = vpack.c.b16 %v1925, %v1916
        %v2898 = vpack.c.b16 %v1926, %v1917
        %v2899 = vpack.c.b16 %v1927, %v1918
        %v2900 = vpack.c.b16 %v1937, %v1928
        %v2901 = vpack.c.b16 %v1938, %v1929
        %v2902 = vpack.c.b16 %v1939, %v1930
        %v2903 = vpack.c.b16 %v1940, %v1931
        %v2904 = vpack.c.b16 %v1941, %v1932
        %v2905 = vpack.c.b16 %v1942, %v1933
        %v2906 = vpack.c.b16 %v1943, %v1934
        %v2907 = vpack.c.b16 %v1944, %v1935
        %v2908 = vpack.c.b16 %v1945, %v1936
        %v2909 = vpack.c.b16 %v1955, %v1946
        %v2910 = vpack.c.b16 %v1956, %v1947
        %v2911 = vpack.c.b16 %v1957, %v1948
        %v2912 = vpack.c.b16 %v1958, %v1949
        %v2913 = vpack.c.b16 %v1959, %v1950
        %v2914 = vpack.c.b16 %v1960, %v1951
        %v2915 = vpack.c.b16 %v1961, %v1952
        %v2916 = vpack.c.b16 %v1962, %v1953
        %v2917 = vpack.c.b16 %v1963, %v1954
        %v2918 = vpack.c.b16 %v1973, %v1964
        %v2919 = vpack.c.b16 %v1974, %v1965
        %v2920 = vpack.c.b16 %v1975, %v1966
        %v2921 = vpack.c.b16 %v1976, %v1967
        %v2922 = vpack.c.b16 %v1977, %v1968
        %v2923 = vpack.c.b16 %v1978, %v1969
        %v2924 = vpack.c.b16 %v1979, %v1970
        %v2925 = vpack.c.b16 %v1980, %v1971
        %v2926 = vpack.c.b16 %v1981, %v1972
        %v2927 = vpack.c.b16 %v1991, %v1982
        %v2928 = vpack.c.b16 %v1992, %v1983
        %v2929 = vpack.c.b16 %v1993, %v1984
        %v2930 = vpack.c.b16 %v1994, %v1985
        %v2931 = vpack.c.b16 %v1995, %v1986
        %v2932 = vpack.c.b16 %v1996, %v1987
        %v2933 = vpack.c.b16 %v1997, %v1988
        %v2934 = vpack.c.b16 %v1998, %v1989
        %v2935 = vpack.c.b16 %v1999, %v1990
        %v2936 = vpack.c.b16 %v2009, %v2000
        %v2937 = vpack.c.b16 %v2010, %v2001
        %v2938 = vpack.c.b16 %v2011, %v2002
        %v2939 = vpack.c.b16 %v2012, %v2003
        %v2940 = vpack.c.b16 %v2013, %v2004
        %v2941 = vpack.c.b16 %v2014, %v2005
        %v2942 = vpack.c.b16 %v2015, %v2006
        %v2943 = vpack.c.b16 %v2016, %v2007
        %v2944 = vpack.c.b16 %v2017, %v2008
        %v2945 = vpack.c.b16 %v2027, %v2018
        %v2946 = vpack.c.b16 %v2028, %v2019
        %v2947 = vpack.c.b16 %v2029, %v2020
        %v2948 = vpack.c.b16 %v2030, %v2021
        %v2949 = vpack.c.b16 %v2031, %v2022
        %v2950 = vpack.c.b16 %v2032, %v2023
        %v2951 = vpack.c.b16 %v2033, %v2024
        %v2952 = vpack.c.b16 %v2034, %v2025
        %v2953 = vpack.c.b16 %v2035, %v2026
        %v2954 = vpack.c.b16 %v2045, %v2036
        %v2955 = vpack.c.b16 %v2046, %v2037
        %v2956 = vpack.c.b16 %v2047, %v2038
        %v2957 = vpack.c.b16 %v2048, %v2039
        %v2958 = vpack.c.b16 %v2049, %v2040
        %v2959 = vpack.c.b16 %v2050, %v2041
        %v2960 = vpack.c.b16 %v2051, %v2042
        %v2961 = vpack.c.b16 %v2052, %v2043
        %v2962 = vpack.c.b16 %v2053, %v2044
        %v2963 = vpack.c.b16 %v2063, %v2054
        %v2964 = vpack.c.b16 %v2064, %v2055
        %v2965 = vpack.c.b16 %v2065, %v2056
        %v2966 = vpack.c.b16 %v2066, %v2057
        %v2967 = vpack.c.b16 %v2067, %v2058
        %v2968 = vpack.c.b16 %v2068, %v2059
        %v2969 = vpack.c.b16 %v2069, %v2060
        %v2970 = vpack.c.b16 %v2070, %v2061
        %v2971 = vpack.c.b16 %v2071, %v2062
        %v2972 = vpack.c.b16 %v2081, %v2072
        %v2973 = vpack.c.b16 %v2082, %v2073
        %v2974 = vpack.c.b16 %v2083, %v2074
        %v2975 = vpack.c.b16 %v2084, %v2075
        %v2976 = vpack.c.b16 %v2085, %v2076
        %v2977 = vpack.c.b16 %v2086, %v2077
        %v2978 = vpack.c.b16 %v2087, %v2078
        %v2979 = vpack.c.b16 %v2088, %v2079
        %v2980 = vpack.c.b16 %v2089, %v2080
        %v2981 = vpack.c.b16 %v2099, %v2090
        %v2982 = vpack.c.b16 %v2100, %v2091
        %v2983 = vpack.c.b16 %v2101, %v2092
        %v2984 = vpack.c.b16 %v2102, %v2093
        %v2985 = vpack.c.b16 %v2103, %v2094
        %v2986 = vpack.c.b16 %v2104, %v2095
        %v2987 = vpack.c.b16 %v2105, %v2096
        %v2988 = vpack.c.b16 %v2106, %v2097
        %v2989 = vpack.c.b16 %v2107, %v2098
        %v2990 = vpack.c.b16 %v2117, %v2108
        %v2991 = vpack.c.b16 %v2118, %v2109
        %v2992 = vpack.c.b16 %v2119, %v2110
        %v2993 = vpack.c.b16 %v2120, %v2111
        %v2994 = vpack.c.b16 %v2121, %v2112
        %v2995 = vpack.c.b16 %v2122, %v2113
        %v2996 = vpack.c.b16 %v2123, %v2114
        %v2997 = vpack.c.b16 %v2124, %v2115
        %v2998 = vpack.c.b16 %v2125, %v2116
        %v2999 = vpack.c.b16 %v2135, %v2126
        %v3000 = vpack.c.b16 %v2136, %v2127
        %v3001 = vpack.c.b16 %v2137, %v2128
        %v3002 = vpack.c.b16 %v2138, %v2129
        %v3003 = vpack.c.b16 %v2139, %v2130
        %v3004 = vpack.c.b16 %v2140, %v2131
        %v3005 = vpack.c.b16 %v2141, %v2132
        %v3006 = vpack.c.b16 %v2142, %v2133
        %v3007 = vpack.c.b16 %v2143, %v2134
        %v3008 = vpack.c.b16 %v2153, %v2144
        %v3009 = vpack.c.b16 %v2154, %v2145
        %v3010 = vpack.c.b16 %v2155, %v2146
        %v3011 = vpack.c.b16 %v2156, %v2147
        %v3012 = vpack.c.b16 %v2157, %v2148
        %v3013 = vpack.c.b16 %v2158, %v2149
        %v3014 = vpack.c.b16 %v2159, %v2150
        %v3015 = vpack.c.b16 %v2160, %v2151
        %v3016 = vpack.c.b16 %v2161, %v2152
        %v3017 = vpack.c.b16 %v2171, %v2162
        %v3018 = vpack.c.b16 %v2172, %v2163
        %v3019 = vpack.c.b16 %v2173, %v2164
        %v3020 = vpack.c.b16 %v2174, %v2165
        %v3021 = vpack.c.b16 %v2175, %v2166
        %v3022 = vpack.c.b16 %v2176, %v2167
        %v3023 = vpack.c.b16 %v2177, %v2168
        %v3024 = vpack.c.b16 %v2178, %v2169
        %v3025 = vpack.c.b16 %v2179, %v2170
        %v3026 = vpack.c.b16 %v2189, %v2180
        %v3027 = vpack.c.b16 %v2190, %v2181
        %v3028 = vpack.c.b16 %v2191, %v2182
        %v3029 = vpack.c.b16 %v2192, %v2183
        %v3030 = vpack.c.b16 %v2193, %v2184
        %v3031 = vpack.c.b16 %v2194, %v2185
        %v3032 = vpack.c.b16 %v2195, %v2186
        %v3033 = vpack.c.b16 %v2196, %v2187
        %v3034 = vpack.c.b16 %v2197, %v2188
        %v3035 = vpack.c.b16 %v2207, %v2198
        %v3036 = vpack.c.b16 %v2208, %v2199
        %v3037 = vpack.c.b16 %v2209, %v2200
        %v3038 = vpack.c.b16 %v2210, %v2201
        %v3039 = vpack.c.b16 %v2211, %v2202
        %v3040 = vpack.c.b16 %v2212, %v2203
        %v3041 = vpack.c.b16 %v2213, %v2204
        %v3042 = vpack.c.b16 %v2214, %v2205
        %v3043 = vpack.c.b16 %v2215, %v2206
        %v3044 = vpack.c.b16 %v2225, %v2216
        %v3045 = vpack.c.b16 %v2226, %v2217
        %v3046 = vpack.c.b16 %v2227, %v2218
        %v3047 = vpack.c.b16 %v2228, %v2219
        %v3048 = vpack.c.b16 %v2229, %v2220
        %v3049 = vpack.c.b16 %v2230, %v2221
        %v3050 = vpack.c.b16 %v2231, %v2222
        %v3051 = vpack.c.b16 %v2232, %v2223
        %v3052 = vpack.c.b16 %v2233, %v2224
        %v3053 = vpack.c.b16 %v2243, %v2234
        %v3054 = vpack.c.b16 %v2244, %v2235
        %v3055 = vpack.c.b16 %v2245, %v2236
        %v3056 = vpack.c.b16 %v2246, %v2237
        %v3057 = vpack.c.b16 %v2247, %v2238
        %v3058 = vpack.c.b16 %v2248, %v2239
        %v3059 = vpack.c.b16 %v2249, %v2240
        %v3060 = vpack.c.b16 %v2250, %v2241
        %v3061 = vpack.c.b16 %v2251, %v2242
        %v3062 = vpack.c.b16 %v2261, %v2252
        %v3063 = vpack.c.b16 %v2262, %v2253
        %v3064 = vpack.c.b16 %v2263, %v2254
        %v3065 = vpack.c.b16 %v2264, %v2255
        %v3066 = vpack.c.b16 %v2265, %v2256
        %v3067 = vpack.c.b16 %v2266, %v2257
        %v3068 = vpack.c.b16 %v2267, %v2258
        %v3069 = vpack.c.b16 %v2268, %v2259
        %v3070 = vpack.c.b16 %v2269, %v2260
        %v3071 = vpack.c.b16 %v2279, %v2270
        %v3072 = vpack.c.b16 %v2280, %v2271
        %v3073 = vpack.c.b16 %v2281, %v2272
        %v3074 = vpack.c.b16 %v2282, %v2273
        %v3075 = vpack.c.b16 %v2283, %v2274
        %v3076 = vpack.c.b16 %v2284, %v2275
        %v3077 = vpack.c.b16 %v2285, %v2276
        %v3078 = vpack.c.b16 %v2286, %v2277
        %v3079 = vpack.c.b16 %v2287, %v2278
        %v3080 = vpack.c.b16 %v2297, %v2288
        %v3081 = vpack.c.b16 %v2298, %v2289
        %v3082 = vpack.c.b16 %v2299, %v2290
        %v3083 = vpack.c.b16 %v2300, %v2291
        %v3084 = vpack.c.b16 %v2301, %v2292
        %v3085 = vpack.c.b16 %v2302, %v2293
        %v3086 = vpack.c.b16 %v2303, %v2294
        %v3087 = vpack.c.b16 %v2304, %v2295
        %v3088 = vpack.c.b16 %v2305, %v2296
        %v3089 = vpack.c.b16 %v2315, %v2306
        %v3090 = vpack.c.b16 %v2316, %v2307
        %v3091 = vpack.c.b16 %v2317, %v2308
        %v3092 = vpack.c.b16 %v2318, %v2309
        %v3093 = vpack.c.b16 %v2319, %v2310
        %v3094 = vpack.c.b16 %v2320, %v2311
        %v3095 = vpack.c.b16 %v2321, %v2312
        %v3096 = vpack.c.b16 %v2322, %v2313
        %v3097 = vpack.c.b16 %v2323, %v2314
        %v3098 = vpack.c.b16 %v2333, %v2324
        %v3099 = vpack.c.b16 %v2334, %v2325
        %v3100 = vpack.c.b16 %v2335, %v2326
        %v3101 = vpack.c.b16 %v2336, %v2327
        %v3102 = vpack.c.b16 %v2337, %v2328
        %v3103 = vpack.c.b16 %v2338, %v2329
        %v3104 = vpack.c.b16 %v2339, %v2330
        %v3105 = vpack.c.b16 %v2340, %v2331
        %v3106 = vpack.c.b16 %v2341, %v2332
        %v3107 = vpack.c.b16 %v2351, %v2342
        %v3108 = vpack.c.b16 %v2352, %v2343
        %v3109 = vpack.c.b16 %v2353, %v2344
        %v3110 = vpack.c.b16 %v2354, %v2345
        %v3111 = vpack.c.b16 %v2355, %v2346
        %v3112 = vpack.c.b16 %v2356, %v2347
        %v3113 = vpack.c.b16 %v2357, %v2348
        %v3114 = vpack.c.b16 %v2358, %v2349
        %v3115 = vpack.c.b16 %v2359, %v2350
        %v3116 = vpack.c.b16 %v2369, %v2360
        %v3117 = vpack.c.b16 %v2370, %v2361
        %v3118 = vpack.c.b16 %v2371, %v2362
        %v3119 = vpack.c.b16 %v2372, %v2363
        %v3120 = vpack.c.b16 %v2373, %v2364
        %v3121 = vpack.c.b16 %v2374, %v2365
        %v3122 = vpack.c.b16 %v2375, %v2366
        %v3123 = vpack.c.b16 %v2376, %v2367
        %v3124 = vpack.c.b16 %v2377, %v2368
        %v3125 = vpack.c.b16 %v2387, %v2378
        %v3126 = vpack.c.b16 %v2388, %v2379
        %v3127 = vpack.c.b16 %v2389, %v2380
        %v3128 = vpack.c.b16 %v2390, %v2381
        %v3129 = vpack.c.b16 %v2391, %v2382
        %v3130 = vpack.c.b16 %v2392, %v2383
        %v3131 = vpack.c.b16 %v2393, %v2384
        %v3132 = vpack.c.b16 %v2394, %v2385
        %v3133 = vpack.c.b16 %v2395, %v2386
        %v3134 = vpack.c.b16 %v2405, %v2396
        %v3135 = vpack.c.b16 %v2406, %v2397
        %v3136 = vpack.c.b16 %v2407, %v2398
        %v3137 = vpack.c.b16 %v2408, %v2399
        %v3138 = vpack.c.b16 %v2409, %v2400
        %v3139 = vpack.c.b16 %v2410, %v2401
        %v3140 = vpack.c.b16 %v2411, %v2402
        %v3141 = vpack.c.b16 %v2412, %v2403
        %v3142 = vpack.c.b16 %v2413, %v2404
        %v3143 = vpack.c.b16 %v2423, %v2414
        %v3144 = vpack.c.b16 %v2424, %v2415
        %v3145 = vpack.c.b16 %v2425, %v2416
        %v3146 = vpack.c.b16 %v2426, %v2417
        %v3147 = vpack.c.b16 %v2427, %v2418
        %v3148 = vpack.c.b16 %v2428, %v2419
        %v3149 = vpack.c.b16 %v2429, %v2420
        %v3150 = vpack.c.b16 %v2430, %v2421
        %v3151 = vpack.c.b16 %v2431, %v2422
        %v3152 = vpack.c.b16 %v2441, %v2432
        %v3153 = vpack.c.b16 %v2442, %v2433
        %v3154 = vpack.c.b16 %v2443, %v2434
        %v3155 = vpack.c.b16 %v2444, %v2435
        %v3156 = vpack.c.b16 %v2445, %v2436
        %v3157 = vpack.c.b16 %v2446, %v2437
        %v3158 = vpack.c.b16 %v2447, %v2438
        %v3159 = vpack.c.b16 %v2448, %v2439
        %v3160 = vpack.c.b16 %v2449, %v2440
        %v3161 = vpack.c.b16 %v2459, %v2450
        %v3162 = vpack.c.b16 %v2460, %v2451
        %v3163 = vpack.c.b16 %v2461, %v2452
        %v3164 = vpack.c.b16 %v2462, %v2453
        %v3165 = vpack.c.b16 %v2463, %v2454
        %v3166 = vpack.c.b16 %v2464, %v2455
        %v3167 = vpack.c.b16 %v2465, %v2456
        %v3168 = vpack.c.b16 %v2466, %v2457
        %v3169 = vpack.c.b16 %v2467, %v2458
        %v3170 = vpack.c.b16 %v2477, %v2468
        %v3171 = vpack.c.b16 %v2478, %v2469
        %v3172 = vpack.c.b16 %v2479, %v2470
        %v3173 = vpack.c.b16 %v2480, %v2471
        %v3174 = vpack.c.b16 %v2481, %v2472
        %v3175 = vpack.c.b16 %v2482, %v2473
        %v3176 = vpack.c.b16 %v2483, %v2474
        %v3177 = vpack.c.b16 %v2484, %v2475
        %v3178 = vpack.c.b16 %v2485, %v2476
        %v3179 = vpack.c.b16 %v2495, %v2486
        %v3180 = vpack.c.b16 %v2496, %v2487
        %v3181 = vpack.c.b16 %v2497, %v2488
        %v3182 = vpack.c.b16 %v2498, %v2489
        %v3183 = vpack.c.b16 %v2499, %v2490
        %v3184 = vpack.c.b16 %v2500, %v2491
        %v3185 = vpack.c.b16 %v2501, %v2492
        %v3186 = vpack.c.b16 %v2502, %v2493
        %v3187 = vpack.c.b16 %v2503, %v2494
        %v3188 = vpack.c.b16 %v2513, %v2504
        %v3189 = vpack.c.b16 %v2514, %v2505
        %v3190 = vpack.c.b16 %v2515, %v2506
        %v3191 = vpack.c.b16 %v2516, %v2507
        %v3192 = vpack.c.b16 %v2517, %v2508
        %v3193 = vpack.c.b16 %v2518, %v2509
        %v3194 = vpack.c.b16 %v2519, %v2510
        %v3195 = vpack.c.b16 %v2520, %v2511
        %v3196 = vpack.c.b16 %v2521, %v2512
        %v3197 = vpack.c.b16 %v2531, %v2522
        %v3198 = vpack.c.b16 %v2532, %v2523
        %v3199 = vpack.c.b16 %v2533, %v2524
        %v3200 = vpack.c.b16 %v2534, %v2525
        %v3201 = vpack.c.b16 %v2535, %v2526
        %v3202 = vpack.c.b16 %v2536, %v2527
        %v3203 = vpack.c.b16 %v2537, %v2528
        %v3204 = vpack.c.b16 %v2538, %v2529
        %v3205 = vpack.c.b16 %v2539, %v2530
        %v3206 = vpack.c.b16 %v2549, %v2540
        %v3207 = vpack.c.b16 %v2550, %v2541
        %v3208 = vpack.c.b16 %v2551, %v2542
        %v3209 = vpack.c.b16 %v2552, %v2543
        %v3210 = vpack.c.b16 %v2553, %v2544
        %v3211 = vpack.c.b16 %v2554, %v2545
        %v3212 = vpack.c.b16 %v2555, %v2546
        %v3213 = vpack.c.b16 %v2556, %v2547
        %v3214 = vpack.c.b16 %v2557, %v2548
        %v3215 = vpack.c.b16 %v2567, %v2558
        %v3216 = vpack.c.b16 %v2568, %v2559
        %v3217 = vpack.c.b16 %v2569, %v2560
        %v3218 = vpack.c.b16 %v2570, %v2561
        %v3219 = vpack.c.b16 %v2571, %v2562
        %v3220 = vpack.c.b16 %v2572, %v2563
        %v3221 = vpack.c.b16 %v2573, %v2564
        %v3222 = vpack.c.b16 %v2574, %v2565
        %v3223 = vpack.c.b16 %v2575, %v2566
        %v3224 = vpack.c.b16 %v2585, %v2576
        %v3225 = vpack.c.b16 %v2586, %v2577
        %v3226 = vpack.c.b16 %v2587, %v2578
        %v3227 = vpack.c.b16 %v2588, %v2579
        %v3228 = vpack.c.b16 %v2589, %v2580
        %v3229 = vpack.c.b16 %v2590, %v2581
        %v3230 = vpack.c.b16 %v2591, %v2582
        %v3231 = vpack.c.b16 %v2592, %v2583
        %v3232 = vpack.c.b16 %v2593, %v2584
        %v3233 = vpack.c.b16 %v2603, %v2594
        %v3234 = vpack.c.b16 %v2604, %v2595
        %v3235 = vpack.c.b16 %v2605, %v2596
        %v3236 = vpack.c.b16 %v2606, %v2597
        %v3237 = vpack.c.b16 %v2607, %v2598
        %v3238 = vpack.c.b16 %v2608, %v2599
        %v3239 = vpack.c.b16 %v2609, %v2600
        %v3240 = vpack.c.b16 %v2610, %v2601
        %v3241 = vpack.c.b16 %v2611, %v2602
        %v3242 = vpack.c.b16 %v2621, %v2612
        %v3243 = vpack.c.b16 %v2622, %v2613
        %v3244 = vpack.c.b16 %v2623, %v2614
        %v3245 = vpack.c.b16 %v2624, %v2615
        %v3246 = vpack.c.b16 %v2625, %v2616
        %v3247 = vpack.c.b16 %v2626, %v2617
        %v3248 = vpack.c.b16 %v2627, %v2618
        %v3249 = vpack.c.b16 %v2628, %v2619
        %v3250 = vpack.c.b16 %v2629, %v2620
        %v3251 = vpack.c.b16 %v2639, %v2630
        %v3252 = vpack.c.b16 %v2640, %v2631
        %v3253 = vpack.c.b16 %v2641, %v2632
        %v3254 = vpack.c.b16 %v2642, %v2633
        %v3255 = vpack.c.b16 %v2643, %v2634
        %v3256 = vpack.c.b16 %v2644, %v2635
        %v3257 = vpack.c.b16 %v2645, %v2636
        %v3258 = vpack.c.b16 %v2646, %v2637
        %v3259 = vpack.c.b16 %v2647, %v2638
        %v3260 = vpack.c.b16 %v2657, %v2648
        %v3261 = vpack.c.b16 %v2658, %v2649
        %v3262 = vpack.c.b16 %v2659, %v2650
        %v3263 = vpack.c.b16 %v2660, %v2651
        %v3264 = vpack.c.b16 %v2661, %v2652
        %v3265 = vpack.c.b16 %v2662, %v2653
        %v3266 = vpack.c.b16 %v2663, %v2654
        %v3267 = vpack.c.b16 %v2664, %v2655
        %v3268 = vpack.c.b16 %v2665, %v2656
        %v3269 = vpack.c.b16 %v2675, %v2666
        %v3270 = vpack.c.b16 %v2676, %v2667
        %v3271 = vpack.c.b16 %v2677, %v2668
        %v3272 = vpack.c.b16 %v2678, %v2669
        %v3273 = vpack.c.b16 %v2679, %v2670
        %v3274 = vpack.c.b16 %v2680, %v2671
        %v3275 = vpack.c.b16 %v2681, %v2672
        %v3276 = vpack.c.b16 %v2682, %v2673
        %v3277 = vpack.c.b16 %v2683, %v2674
        %v3278 = vpack.c.b16 %v2693, %v2684
        %v3279 = vpack.c.b16 %v2694, %v2685
        %v3280 = vpack.c.b16 %v2695, %v2686
        %v3281 = vpack.c.b16 %v2696, %v2687
        %v3282 = vpack.c.b16 %v2697, %v2688
        %v3283 = vpack.c.b16 %v2698, %v2689
        %v3284 = vpack.c.b16 %v2699, %v2690
        %v3285 = vpack.c.b16 %v2700, %v2691
        %v3286 = vpack.c.b16 %v2701, %v2692
        %v3287 = vpack.c.b16 %v2711, %v2702
        %v3288 = vpack.c.b16 %v2712, %v2703
        %v3289 = vpack.c.b16 %v2713, %v2704
        %v3290 = vpack.c.b16 %v2714, %v2705
        %v3291 = vpack.c.b16 %v2715, %v2706
        %v3292 = vpack.c.b16 %v2716, %v2707
        %v3293 = vpack.c.b16 %v2717, %v2708
        %v3294 = vpack.c.b16 %v2718, %v2709
        %v3295 = vpack.c.b16 %v2719, %v2710
        %3872 = vmatprep.subr.bf16.mxu0 %v2721
        %3873 = vmatpush1.bf16.msra.mxu0 %v2720
        %3874 = vmatprep.subr.bf16.mxu0 %v2730
        %3875 = vmatpush1.bf16.msra.mxu0 %v2729
        %3876 = vmatprep.subr.bf16.mxu0 %v2739
        %3877 = vmatpush1.bf16.msra.mxu0 %v2738
        %3878 = vmatprep.subr.bf16.mxu0 %v2748
        %3879 = vmatpush1.bf16.msra.mxu0 %v2747
        %3880 = vmatprep.subr.bf16.mxu0 %v2757
        %3881 = vmatpush1.bf16.msra.mxu0 %v2756
        %3882 = vmatprep.subr.bf16.mxu0 %v2766
        %3883 = vmatpush1.bf16.msra.mxu0 %v2765
        %3884 = vmatprep.subr.bf16.mxu0 %v2775
        %3885 = vmatpush1.bf16.msra.mxu0 %v2774
        %3886 = vmatprep.subr.bf16.mxu0 %v2784
        %3887 = vmatpush1.bf16.msra.mxu0 %v2783
        %3888 = vmatprep.subr.bf16.mxu0 %v2793
        %3889 = vmatpush1.bf16.msra.mxu0 %v2792
        %3890 = vmatprep.subr.bf16.mxu0 %v2802
        %3891 = vmatpush1.bf16.msra.mxu0 %v2801
        %3892 = vmatprep.subr.bf16.mxu0 %v2811
        %3893 = vmatpush1.bf16.msra.mxu0 %v2810
        %3894 = vmatprep.subr.bf16.mxu0 %v2820
        %3895 = vmatpush1.bf16.msra.mxu0 %v2819
        %3896 = vmatprep.subr.bf16.mxu0 %v2829
        %3897 = vmatpush1.bf16.msra.mxu0 %v2828
        %3898 = vmatprep.subr.bf16.mxu0 %v2838
        %3899 = vmatpush1.bf16.msra.mxu0 %v2837
        %3900 = vmatprep.subr.bf16.mxu0 %v2847
        %3901 = vmatpush1.bf16.msra.mxu0 %v2846
        %3902 = vmatprep.subr.bf16.mxu0 %v2856
        %3903 = vmatpush1.bf16.msra.mxu0 %v2855
        %3904 = vmatprep.mubr.bf16.mxu0 %v897
        %3905 = vmatmul.mubr.bf16.gmra.mrb[0].mxu0 %v896
        %v3906 = vpop.f32.mrb[0].mxu0
        %v3907 = vadd.f32 0.0, %v3906
        %v3908 = vpop.f32.mrb[0].mxu0
        %v3909 = vadd.f32 0.0, %v3908
        %v3910 = vpop.f32.mrb[0].mxu0
        %v3911 = vadd.f32 0.0, %v3910
        %v3912 = vpop.f32.mrb[0].mxu0
        %v3913 = vadd.f32 0.0, %v3912
        %3914 = vmatprep.mubr.bf16.mxu0 %v905
        %3915 = vmatmul.mubr.bf16.gmra.mrb[0].mxu0 %v904
        %v3916 = vpop.f32.mrb[0].mxu0
        %v3917 = vadd.f32 0.0, %v3916
        %v3918 = vpop.f32.mrb[0].mxu0
        %v3919 = vadd.f32 0.0, %v3918
        %v3920 = vpop.f32.mrb[0].mxu0
        %v3921 = vpop.f32.mrb[0].mxu0
        %3922 = vdwg.mxu0
        %3923 = vmatprep.subr.bf16.mxu0 %v2865
        %3924 = vmatpush1.bf16.msra.mxu0 %v2864
        %3925 = vmatprep.subr.bf16.mxu0 %v2874
        %3926 = vmatpush1.bf16.msra.mxu0 %v2873
        %3927 = vmatprep.subr.bf16.mxu0 %v2883
        %3928 = vmatpush1.bf16.msra.mxu0 %v2882
        %3929 = vmatprep.subr.bf16.mxu0 %v2892
        %3930 = vmatpush1.bf16.msra.mxu0 %v2891
        %3931 = vmatprep.subr.bf16.mxu0 %v2901
        %3932 = vmatpush1.bf16.msra.mxu0 %v2900
        %3933 = vmatprep.subr.bf16.mxu0 %v2910
        %3934 = vmatpush1.bf16.msra.mxu0 %v2909
        %3935 = vmatprep.subr.bf16.mxu0 %v2919
        %3936 = vmatpush1.bf16.msra.mxu0 %v2918
        %3937 = vmatprep.subr.bf16.mxu0 %v2928
        %3938 = vmatpush1.bf16.msra.mxu0 %v2927
        %3939 = vmatprep.subr.bf16.mxu0 %v2937
        %3940 = vmatpush1.bf16.msra.mxu0 %v2936
        %3941 = vmatprep.subr.bf16.mxu0 %v2946
        %3942 = vmatpush1.bf16.msra.mxu0 %v2945
        %3943 = vmatprep.subr.bf16.mxu0 %v2955
        %3944 = vmatpush1.bf16.msra.mxu0 %v2954
        %3945 = vmatprep.subr.bf16.mxu0 %v2964
        %3946 = vmatpush1.bf16.msra.mxu0 %v2963
        %3947 = vmatprep.subr.bf16.mxu0 %v2973
        %3948 = vmatpush1.bf16.msra.mxu0 %v2972
        %3949 = vmatprep.subr.bf16.mxu0 %v2982
        %3950 = vmatpush1.bf16.msra.mxu0 %v2981
        %3951 = vmatprep.subr.bf16.mxu0 %v2991
        %3952 = vmatpush1.bf16.msra.mxu0 %v2990
        %3953 = vmatprep.subr.bf16.mxu0 %v3000
        %3954 = vmatpush1.bf16.msra.mxu0 %v2999
        %3955 = vmatprep.mubr.bf16.mxu0 %v899
        %3956 = vmatmul.mubr.bf16.gmra.mrb[0].mxu0 %v898
        %v3957 = vpop.f32.mrb[0].mxu0
        %v3958 = vadd.f32 %v3907, %v3957
        %v3959 = vpop.f32.mrb[0].mxu0
        %v3960 = vadd.f32 %v3909, %v3959
        %v3961 = vpop.f32.mrb[0].mxu0
        %v3962 = vadd.f32 %v3911, %v3961
        %v3963 = vpop.f32.mrb[0].mxu0
        %v3964 = vadd.f32 %v3913, %v3963
        %3965 = vmatprep.mubr.bf16.mxu0 %v907
        %3966 = vmatmul.mubr.bf16.gmra.mrb[0].mxu0 %v906
        %v3967 = vpop.f32.mrb[0].mxu0
        %v3968 = vadd.f32 %v3917, %v3967
        %v3969 = vpop.f32.mrb[0].mxu0
        %v3970 = vadd.f32 %v3919, %v3969
        %v3971 = vpop.f32.mrb[0].mxu0
        %v3972 = vpop.f32.mrb[0].mxu0
        %3973 = vdwg.mxu0
        %3974 = vmatprep.subr.bf16.mxu0 %v3009
        %3975 = vmatpush1.bf16.msra.mxu0 %v3008
        %3976 = vmatprep.subr.bf16.mxu0 %v3018
        %3977 = vmatpush1.bf16.msra.mxu0 %v3017
        %3978 = vmatprep.subr.bf16.mxu0 %v3027
        %3979 = vmatpush1.bf16.msra.mxu0 %v3026
        %3980 = vmatprep.subr.bf16.mxu0 %v3036
        %3981 = vmatpush1.bf16.msra.mxu0 %v3035
        %3982 = vmatprep.subr.bf16.mxu0 %v3045
        %3983 = vmatpush1.bf16.msra.mxu0 %v3044
        %3984 = vmatprep.subr.bf16.mxu0 %v3054
        %3985 = vmatpush1.bf16.msra.mxu0 %v3053
        %3986 = vmatprep.subr.bf16.mxu0 %v3063
        %3987 = vmatpush1.bf16.msra.mxu0 %v3062
        %3988 = vmatprep.subr.bf16.mxu0 %v3072
        %3989 = vmatpush1.bf16.msra.mxu0 %v3071
        %3990 = vmatprep.subr.bf16.mxu0 %v3081
        %3991 = vmatpush1.bf16.msra.mxu0 %v3080
        %3992 = vmatprep.subr.bf16.mxu0 %v3090
        %3993 = vmatpush1.bf16.msra.mxu0 %v3089
        %3994 = vmatprep.subr.bf16.mxu0 %v3099
        %3995 = vmatpush1.bf16.msra.mxu0 %v3098
        %3996 = vmatprep.subr.bf16.mxu0 %v3108
        %3997 = vmatpush1.bf16.msra.mxu0 %v3107
        %3998 = vmatprep.subr.bf16.mxu0 %v3117
        %3999 = vmatpush1.bf16.msra.mxu0 %v3116
        %4000 = vmatprep.subr.bf16.mxu0 %v3126
        %4001 = vmatpush1.bf16.msra.mxu0 %v3125
        %4002 = vmatprep.subr.bf16.mxu0 %v3135
        %4003 = vmatpush1.bf16.msra.mxu0 %v3134
        %4004 = vmatprep.subr.bf16.mxu0 %v3144
        %4005 = vmatpush1.bf16.msra.mxu0 %v3143
        %4006 = vmatprep.mubr.bf16.mxu0 %v901
        %4007 = vmatmul.mubr.bf16.gmra.mrb[0].mxu0 %v900
        %v4008 = vpop.f32.mrb[0].mxu0
        %v4009 = vadd.f32 %v3958, %v4008
        %v4010 = vpop.f32.mrb[0].mxu0
        %v4011 = vadd.f32 %v3960, %v4010
        %v4012 = vpop.f32.mrb[0].mxu0
        %v4013 = vadd.f32 %v3962, %v4012
        %v4014 = vpop.f32.mrb[0].mxu0
        %v4015 = vadd.f32 %v3964, %v4014
        %4016 = vmatprep.mubr.bf16.mxu0 %v909
        %4017 = vmatmul.mubr.bf16.gmra.mrb[0].mxu0 %v908
        %v4018 = vpop.f32.mrb[0].mxu0
        %v4019 = vadd.f32 %v3968, %v4018
        %v4020 = vpop.f32.mrb[0].mxu0
        %v4021 = vadd.f32 %v3970, %v4020
        %v4022 = vpop.f32.mrb[0].mxu0
        %v4023 = vpop.f32.mrb[0].mxu0
        %4024 = vdwg.mxu0
        %4025 = vmatprep.subr.bf16.mxu0 %v3153
        %4026 = vmatpush1.bf16.msra.mxu0 %v3152
        %4027 = vmatprep.subr.bf16.mxu0 %v3162
        %4028 = vmatpush1.bf16.msra.mxu0 %v3161
        %4029 = vmatprep.subr.bf16.mxu0 %v3171
        %4030 = vmatpush1.bf16.msra.mxu0 %v3170
        %4031 = vmatprep.subr.bf16.mxu0 %v3180
        %4032 = vmatpush1.bf16.msra.mxu0 %v3179
        %4033 = vmatprep.subr.bf16.mxu0 %v3189
        %4034 = vmatpush1.bf16.msra.mxu0 %v3188
        %4035 = vmatprep.subr.bf16.mxu0 %v3198
        %4036 = vmatpush1.bf16.msra.mxu0 %v3197
        %4037 = vmatprep.subr.bf16.mxu0 %v3207
        %4038 = vmatpush1.bf16.msra.mxu0 %v3206
        %4039 = vmatprep.subr.bf16.mxu0 %v3216
        %4040 = vmatpush1.bf16.msra.mxu0 %v3215
        %4041 = vmatprep.subr.bf16.mxu0 %v3225
        %4042 = vmatpush1.bf16.msra.mxu0 %v3224
        %4043 = vmatprep.subr.bf16.mxu0 %v3234
        %4044 = vmatpush1.bf16.msra.mxu0 %v3233
        %4045 = vmatprep.subr.bf16.mxu0 %v3243
        %4046 = vmatpush1.bf16.msra.mxu0 %v3242
        %4047 = vmatprep.subr.bf16.mxu0 %v3252
        %4048 = vmatpush1.bf16.msra.mxu0 %v3251
        %4049 = vmatprep.subr.bf16.mxu0 %v3261
        %4050 = vmatpush1.bf16.msra.mxu0 %v3260
        %4051 = vmatprep.subr.bf16.mxu0 %v3270
        %4052 = vmatpush1.bf16.msra.mxu0 %v3269
        %4053 = vmatprep.subr.bf16.mxu0 %v3279
        %4054 = vmatpush1.bf16.msra.mxu0 %v3278
        %4055 = vmatprep.subr.bf16.mxu0 %v3288
        %4056 = vmatpush1.bf16.msra.mxu0 %v3287
        %4057 = vmatprep.mubr.bf16.mxu0 %v903
        %4058 = vmatmul.mubr.bf16.gmra.mrb[0].mxu0 %v902
        %v4059 = vpop.f32.mrb[0].mxu0
        %v4060 = vadd.f32 %v4009, %v4059
        %v4061 = vpop.f32.mrb[0].mxu0
        %v4062 = vadd.f32 %v4011, %v4061
        %v4063 = vpop.f32.mrb[0].mxu0
        %v4064 = vadd.f32 %v4013, %v4063
        %v4065 = vpop.f32.mrb[0].mxu0
        %v4066 = vadd.f32 %v4015, %v4065
        %4067 = vmatprep.mubr.bf16.mxu0 %v911
        %4068 = vmatmul.mubr.bf16.gmra.mrb[0].mxu0 %v910
        %v4069 = vpop.f32.mrb[0].mxu0
        %v4070 = vadd.f32 %v4019, %v4069
        %v4071 = vpop.f32.mrb[0].mxu0
        %v4072 = vadd.f32 %v4021, %v4071
        %v4073 = vpop.f32.mrb[0].mxu0
        %v4074 = vpop.f32.mrb[0].mxu0
        %4075 = vdwg.mxu0
        %4076 = vmatprep.subr.bf16.mxu0 %v2723
        %4077 = vmatpush1.bf16.msra.mxu0 %v2722
        %4078 = vmatprep.subr.bf16.mxu0 %v2732
        %4079 = vmatpush1.bf16.msra.mxu0 %v2731
        %4080 = vmatprep.subr.bf16.mxu0 %v2741
        %4081 = vmatpush1.bf16.msra.mxu0 %v2740
        %4082 = vmatprep.subr.bf16.mxu0 %v2750
        %4083 = vmatpush1.bf16.msra.mxu0 %v2749
        %4084 = vmatprep.subr.bf16.mxu0 %v2759
        %4085 = vmatpush1.bf16.msra.mxu0 %v2758
        %4086 = vmatprep.subr.bf16.mxu0 %v2768
        %4087 = vmatpush1.bf16.msra.mxu0 %v2767
        %4088 = vmatprep.subr.bf16.mxu0 %v2777
        %4089 = vmatpush1.bf16.msra.mxu0 %v2776
        %4090 = vmatprep.subr.bf16.mxu0 %v2786
        %4091 = vmatpush1.bf16.msra.mxu0 %v2785
        %4092 = vmatprep.subr.bf16.mxu0 %v2795
        %4093 = vmatpush1.bf16.msra.mxu0 %v2794
        %4094 = vmatprep.subr.bf16.mxu0 %v2804
        %4095 = vmatpush1.bf16.msra.mxu0 %v2803
        %4096 = vmatprep.subr.bf16.mxu0 %v2813
        %4097 = vmatpush1.bf16.msra.mxu0 %v2812
        %4098 = vmatprep.subr.bf16.mxu0 %v2822
        %4099 = vmatpush1.bf16.msra.mxu0 %v2821
        %4100 = vmatprep.subr.bf16.mxu0 %v2831
        %4101 = vmatpush1.bf16.msra.mxu0 %v2830
        %4102 = vmatprep.subr.bf16.mxu0 %v2840
        %4103 = vmatpush1.bf16.msra.mxu0 %v2839
        %4104 = vmatprep.subr.bf16.mxu0 %v2849
        %4105 = vmatpush1.bf16.msra.mxu0 %v2848
        %4106 = vmatprep.subr.bf16.mxu0 %v2858
        %4107 = vmatpush1.bf16.msra.mxu0 %v2857
        %4108 = vmatprep.mubr.bf16.mxu0 %v897
        %4109 = vmatmul.mubr.bf16.gmra.mrb[0].mxu0 %v896
        %v4110 = vpop.f32.mrb[0].mxu0
        %v4111 = vadd.f32 0.0, %v4110
        %v4112 = vpop.f32.mrb[0].mxu0
        %v4113 = vadd.f32 0.0, %v4112
        %v4114 = vpop.f32.mrb[0].mxu0
        %v4115 = vadd.f32 0.0, %v4114
        %v4116 = vpop.f32.mrb[0].mxu0
        %v4117 = vadd.f32 0.0, %v4116
        %4118 = vmatprep.mubr.bf16.mxu0 %v905
        %4119 = vmatmul.mubr.bf16.gmra.mrb[0].mxu0 %v904
        %v4120 = vpop.f32.mrb[0].mxu0
        %v4121 = vadd.f32 0.0, %v4120
        %v4122 = vpop.f32.mrb[0].mxu0
        %v4123 = vadd.f32 0.0, %v4122
        %v4124 = vpop.f32.mrb[0].mxu0
        %v4125 = vpop.f32.mrb[0].mxu0
        %4126 = vdwg.mxu0
        %4127 = vmatprep.subr.bf16.mxu0 %v2867
        %4128 = vmatpush1.bf16.msra.mxu0 %v2866
        %4129 = vmatprep.subr.bf16.mxu0 %v2876
        %4130 = vmatpush1.bf16.msra.mxu0 %v2875
        %4131 = vmatprep.subr.bf16.mxu0 %v2885
        %4132 = vmatpush1.bf16.msra.mxu0 %v2884
        %4133 = vmatprep.subr.bf16.mxu0 %v2894
        %4134 = vmatpush1.bf16.msra.mxu0 %v2893
        %4135 = vmatprep.subr.bf16.mxu0 %v2903
        %4136 = vmatpush1.bf16.msra.mxu0 %v2902
        %4137 = vmatprep.subr.bf16.mxu0 %v2912
        %4138 = vmatpush1.bf16.msra.mxu0 %v2911
        %4139 = vmatprep.subr.bf16.mxu0 %v2921
        %4140 = vmatpush1.bf16.msra.mxu0 %v2920
        %4141 = vmatprep.subr.bf16.mxu0 %v2930
        %4142 = vmatpush1.bf16.msra.mxu0 %v2929
        %4143 = vmatprep.subr.bf16.mxu0 %v2939
        %4144 = vmatpush1.bf16.msra.mxu0 %v2938
        %4145 = vmatprep.subr.bf16.mxu0 %v2948
        %4146 = vmatpush1.bf16.msra.mxu0 %v2947
        %4147 = vmatprep.subr.bf16.mxu0 %v2957
        %4148 = vmatpush1.bf16.msra.mxu0 %v2956
        %4149 = vmatprep.subr.bf16.mxu0 %v2966
        %4150 = vmatpush1.bf16.msra.mxu0 %v2965
        %4151 = vmatprep.subr.bf16.mxu0 %v2975
        %4152 = vmatpush1.bf16.msra.mxu0 %v2974
        %4153 = vmatprep.subr.bf16.mxu0 %v2984
        %4154 = vmatpush1.bf16.msra.mxu0 %v2983
        %4155 = vmatprep.subr.bf16.mxu0 %v2993
        %4156 = vmatpush1.bf16.msra.mxu0 %v2992
        %4157 = vmatprep.subr.bf16.mxu0 %v3002
        %4158 = vmatpush1.bf16.msra.mxu0 %v3001
        %4159 = vmatprep.mubr.bf16.mxu0 %v899
        %4160 = vmatmul.mubr.bf16.gmra.mrb[0].mxu0 %v898
        %v4161 = vpop.f32.mrb[0].mxu0
        %v4162 = vadd.f32 %v4111, %v4161
        %v4163 = vpop.f32.mrb[0].mxu0
        %v4164 = vadd.f32 %v4113, %v4163
        %v4165 = vpop.f32.mrb[0].mxu0
        %v4166 = vadd.f32 %v4115, %v4165
        %v4167 = vpop.f32.mrb[0].mxu0
        %v4168 = vadd.f32 %v4117, %v4167
        %4169 = vmatprep.mubr.bf16.mxu0 %v907
        %4170 = vmatmul.mubr.bf16.gmra.mrb[0].mxu0 %v906
        %v4171 = vpop.f32.mrb[0].mxu0
        %v4172 = vadd.f32 %v4121, %v4171
        %v4173 = vpop.f32.mrb[0].mxu0
        %v4174 = vadd.f32 %v4123, %v4173
        %v4175 = vpop.f32.mrb[0].mxu0
        %v4176 = vpop.f32.mrb[0].mxu0
        %4177 = vdwg.mxu0
        %4178 = vmatprep.subr.bf16.mxu0 %v3011
        %4179 = vmatpush1.bf16.msra.mxu0 %v3010
        %4180 = vmatprep.subr.bf16.mxu0 %v3020
        %4181 = vmatpush1.bf16.msra.mxu0 %v3019
        %4182 = vmatprep.subr.bf16.mxu0 %v3029
        %4183 = vmatpush1.bf16.msra.mxu0 %v3028
        %4184 = vmatprep.subr.bf16.mxu0 %v3038
        %4185 = vmatpush1.bf16.msra.mxu0 %v3037
        %4186 = vmatprep.subr.bf16.mxu0 %v3047
        %4187 = vmatpush1.bf16.msra.mxu0 %v3046
        %4188 = vmatprep.subr.bf16.mxu0 %v3056
        %4189 = vmatpush1.bf16.msra.mxu0 %v3055
        %4190 = vmatprep.subr.bf16.mxu0 %v3065
        %4191 = vmatpush1.bf16.msra.mxu0 %v3064
        %4192 = vmatprep.subr.bf16.mxu0 %v3074
        %4193 = vmatpush1.bf16.msra.mxu0 %v3073
        %4194 = vmatprep.subr.bf16.mxu0 %v3083
        %4195 = vmatpush1.bf16.msra.mxu0 %v3082
        %4196 = vmatprep.subr.bf16.mxu0 %v3092
        %4197 = vmatpush1.bf16.msra.mxu0 %v3091
        %4198 = vmatprep.subr.bf16.mxu0 %v3101
        %4199 = vmatpush1.bf16.msra.mxu0 %v3100
        %4200 = vmatprep.subr.bf16.mxu0 %v3110
        %4201 = vmatpush1.bf16.msra.mxu0 %v3109
        %4202 = vmatprep.subr.bf16.mxu0 %v3119
        %4203 = vmatpush1.bf16.msra.mxu0 %v3118
        %4204 = vmatprep.subr.bf16.mxu0 %v3128
        %4205 = vmatpush1.bf16.msra.mxu0 %v3127
        %4206 = vmatprep.subr.bf16.mxu0 %v3137
        %4207 = vmatpush1.bf16.msra.mxu0 %v3136
        %4208 = vmatprep.subr.bf16.mxu0 %v3146
        %4209 = vmatpush1.bf16.msra.mxu0 %v3145
        %4210 = vmatprep.mubr.bf16.mxu0 %v901
        %4211 = vmatmul.mubr.bf16.gmra.mrb[0].mxu0 %v900
        %v4212 = vpop.f32.mrb[0].mxu0
        %v4213 = vadd.f32 %v4162, %v4212
        %v4214 = vpop.f32.mrb[0].mxu0
        %v4215 = vadd.f32 %v4164, %v4214
        %v4216 = vpop.f32.mrb[0].mxu0
        %v4217 = vadd.f32 %v4166, %v4216
        %v4218 = vpop.f32.mrb[0].mxu0
        %v4219 = vadd.f32 %v4168, %v4218
        %4220 = vmatprep.mubr.bf16.mxu0 %v909
        %4221 = vmatmul.mubr.bf16.gmra.mrb[0].mxu0 %v908
        %v4222 = vpop.f32.mrb[0].mxu0
        %v4223 = vadd.f32 %v4172, %v4222
        %v4224 = vpop.f32.mrb[0].mxu0
        %v4225 = vadd.f32 %v4174, %v4224
        %v4226 = vpop.f32.mrb[0].mxu0
        %v4227 = vpop.f32.mrb[0].mxu0
        %4228 = vdwg.mxu0
        %4229 = vmatprep.subr.bf16.mxu0 %v3155
        %4230 = vmatpush1.bf16.msra.mxu0 %v3154
        %4231 = vmatprep.subr.bf16.mxu0 %v3164
        %4232 = vmatpush1.bf16.msra.mxu0 %v3163
        %4233 = vmatprep.subr.bf16.mxu0 %v3173
        %4234 = vmatpush1.bf16.msra.mxu0 %v3172
        %4235 = vmatprep.subr.bf16.mxu0 %v3182
        %4236 = vmatpush1.bf16.msra.mxu0 %v3181
        %4237 = vmatprep.subr.bf16.mxu0 %v3191
        %4238 = vmatpush1.bf16.msra.mxu0 %v3190
        %4239 = vmatprep.subr.bf16.mxu0 %v3200
        %4240 = vmatpush1.bf16.msra.mxu0 %v3199
        %4241 = vmatprep.subr.bf16.mxu0 %v3209
        %4242 = vmatpush1.bf16.msra.mxu0 %v3208
        %4243 = vmatprep.subr.bf16.mxu0 %v3218
        %4244 = vmatpush1.bf16.msra.mxu0 %v3217
        %4245 = vmatprep.subr.bf16.mxu0 %v3227
        %4246 = vmatpush1.bf16.msra.mxu0 %v3226
        %4247 = vmatprep.subr.bf16.mxu0 %v3236
        %4248 = vmatpush1.bf16.msra.mxu0 %v3235
        %4249 = vmatprep.subr.bf16.mxu0 %v3245
        %4250 = vmatpush1.bf16.msra.mxu0 %v3244
        %4251 = vmatprep.subr.bf16.mxu0 %v3254
        %4252 = vmatpush1.bf16.msra.mxu0 %v3253
        %4253 = vmatprep.subr.bf16.mxu0 %v3263
        %4254 = vmatpush1.bf16.msra.mxu0 %v3262
        %4255 = vmatprep.subr.bf16.mxu0 %v3272
        %4256 = vmatpush1.bf16.msra.mxu0 %v3271
        %4257 = vmatprep.subr.bf16.mxu0 %v3281
        %4258 = vmatpush1.bf16.msra.mxu0 %v3280
        %4259 = vmatprep.subr.bf16.mxu0 %v3290
        %4260 = vmatpush1.bf16.msra.mxu0 %v3289
        %4261 = vmatprep.mubr.bf16.mxu0 %v903
        %4262 = vmatmul.mubr.bf16.gmra.mrb[0].mxu0 %v902
        %v4263 = vpop.f32.mrb[0].mxu0
        %v4264 = vadd.f32 %v4213, %v4263
        %v4265 = vpop.f32.mrb[0].mxu0
        %v4266 = vadd.f32 %v4215, %v4265
        %v4267 = vpop.f32.mrb[0].mxu0
        %v4268 = vadd.f32 %v4217, %v4267
        %v4269 = vpop.f32.mrb[0].mxu0
        %v4270 = vadd.f32 %v4219, %v4269
        %4271 = vmatprep.mubr.bf16.mxu0 %v911
        %4272 = vmatmul.mubr.bf16.gmra.mrb[0].mxu0 %v910
        %v4273 = vpop.f32.mrb[0].mxu0
        %v4274 = vadd.f32 %v4223, %v4273
        %v4275 = vpop.f32.mrb[0].mxu0
        %v4276 = vadd.f32 %v4225, %v4275
        %v4277 = vpop.f32.mrb[0].mxu0
        %v4278 = vpop.f32.mrb[0].mxu0
        %4279 = vdwg.mxu0
        %4280 = vmatprep.subr.bf16.mxu0 %v2725
        %4281 = vmatpush1.bf16.msra.mxu0 %v2724
        %4282 = vmatprep.subr.bf16.mxu0 %v2734
        %4283 = vmatpush1.bf16.msra.mxu0 %v2733
        %4284 = vmatprep.subr.bf16.mxu0 %v2743
        %4285 = vmatpush1.bf16.msra.mxu0 %v2742
        %4286 = vmatprep.subr.bf16.mxu0 %v2752
        %4287 = vmatpush1.bf16.msra.mxu0 %v2751
        %4288 = vmatprep.subr.bf16.mxu0 %v2761
        %4289 = vmatpush1.bf16.msra.mxu0 %v2760
        %4290 = vmatprep.subr.bf16.mxu0 %v2770
        %4291 = vmatpush1.bf16.msra.mxu0 %v2769
        %4292 = vmatprep.subr.bf16.mxu0 %v2779
        %4293 = vmatpush1.bf16.msra.mxu0 %v2778
        %4294 = vmatprep.subr.bf16.mxu0 %v2788
        %4295 = vmatpush1.bf16.msra.mxu0 %v2787
        %4296 = vmatprep.subr.bf16.mxu0 %v2797
        %4297 = vmatpush1.bf16.msra.mxu0 %v2796
        %4298 = vmatprep.subr.bf16.mxu0 %v2806
        %4299 = vmatpush1.bf16.msra.mxu0 %v2805
        %4300 = vmatprep.subr.bf16.mxu0 %v2815
        %4301 = vmatpush1.bf16.msra.mxu0 %v2814
        %4302 = vmatprep.subr.bf16.mxu0 %v2824
        %4303 = vmatpush1.bf16.msra.mxu0 %v2823
        %4304 = vmatprep.subr.bf16.mxu0 %v2833
        %4305 = vmatpush1.bf16.msra.mxu0 %v2832
        %4306 = vmatprep.subr.bf16.mxu0 %v2842
        %4307 = vmatpush1.bf16.msra.mxu0 %v2841
        %4308 = vmatprep.subr.bf16.mxu0 %v2851
        %4309 = vmatpush1.bf16.msra.mxu0 %v2850
        %4310 = vmatprep.subr.bf16.mxu0 %v2860
        %4311 = vmatpush1.bf16.msra.mxu0 %v2859
        %4312 = vmatprep.mubr.bf16.mxu0 %v897
        %4313 = vmatmul.mubr.bf16.gmra.mrb[0].mxu0 %v896
        %v4314 = vpop.f32.mrb[0].mxu0
        %v4315 = vadd.f32 0.0, %v4314
        %v4316 = vpop.f32.mrb[0].mxu0
        %v4317 = vadd.f32 0.0, %v4316
        %v4318 = vpop.f32.mrb[0].mxu0
        %v4319 = vadd.f32 0.0, %v4318
        %v4320 = vpop.f32.mrb[0].mxu0
        %v4321 = vadd.f32 0.0, %v4320
        %4322 = vmatprep.mubr.bf16.mxu0 %v905
        %4323 = vmatmul.mubr.bf16.gmra.mrb[0].mxu0 %v904
        %v4324 = vpop.f32.mrb[0].mxu0
        %v4325 = vadd.f32 0.0, %v4324
        %v4326 = vpop.f32.mrb[0].mxu0
        %v4327 = vadd.f32 0.0, %v4326
        %v4328 = vpop.f32.mrb[0].mxu0
        %v4329 = vpop.f32.mrb[0].mxu0
        %4330 = vdwg.mxu0
        %4331 = vmatprep.subr.bf16.mxu0 %v2869
        %4332 = vmatpush1.bf16.msra.mxu0 %v2868
        %4333 = vmatprep.subr.bf16.mxu0 %v2878
        %4334 = vmatpush1.bf16.msra.mxu0 %v2877
        %4335 = vmatprep.subr.bf16.mxu0 %v2887
        %4336 = vmatpush1.bf16.msra.mxu0 %v2886
        %4337 = vmatprep.subr.bf16.mxu0 %v2896
        %4338 = vmatpush1.bf16.msra.mxu0 %v2895
        %4339 = vmatprep.subr.bf16.mxu0 %v2905
        %4340 = vmatpush1.bf16.msra.mxu0 %v2904
        %4341 = vmatprep.subr.bf16.mxu0 %v2914
        %4342 = vmatpush1.bf16.msra.mxu0 %v2913
        %4343 = vmatprep.subr.bf16.mxu0 %v2923
        %4344 = vmatpush1.bf16.msra.mxu0 %v2922
        %4345 = vmatprep.subr.bf16.mxu0 %v2932
        %4346 = vmatpush1.bf16.msra.mxu0 %v2931
        %4347 = vmatprep.subr.bf16.mxu0 %v2941
        %4348 = vmatpush1.bf16.msra.mxu0 %v2940
        %4349 = vmatprep.subr.bf16.mxu0 %v2950
        %4350 = vmatpush1.bf16.msra.mxu0 %v2949
        %4351 = vmatprep.subr.bf16.mxu0 %v2959
        %4352 = vmatpush1.bf16.msra.mxu0 %v2958
        %4353 = vmatprep.subr.bf16.mxu0 %v2968
        %4354 = vmatpush1.bf16.msra.mxu0 %v2967
        %4355 = vmatprep.subr.bf16.mxu0 %v2977
        %4356 = vmatpush1.bf16.msra.mxu0 %v2976
        %4357 = vmatprep.subr.bf16.mxu0 %v2986
        %4358 = vmatpush1.bf16.msra.mxu0 %v2985
        %4359 = vmatprep.subr.bf16.mxu0 %v2995
        %4360 = vmatpush1.bf16.msra.mxu0 %v2994
        %4361 = vmatprep.subr.bf16.mxu0 %v3004
        %4362 = vmatpush1.bf16.msra.mxu0 %v3003
        %4363 = vmatprep.mubr.bf16.mxu0 %v899
        %4364 = vmatmul.mubr.bf16.gmra.mrb[0].mxu0 %v898
        %v4365 = vpop.f32.mrb[0].mxu0
        %v4366 = vadd.f32 %v4315, %v4365
        %v4367 = vpop.f32.mrb[0].mxu0
        %v4368 = vadd.f32 %v4317, %v4367
        %v4369 = vpop.f32.mrb[0].mxu0
        %v4370 = vadd.f32 %v4319, %v4369
        %v4371 = vpop.f32.mrb[0].mxu0
        %v4372 = vadd.f32 %v4321, %v4371
        %4373 = vmatprep.mubr.bf16.mxu0 %v907
        %4374 = vmatmul.mubr.bf16.gmra.mrb[0].mxu0 %v906
        %v4375 = vpop.f32.mrb[0].mxu0
        %v4376 = vadd.f32 %v4325, %v4375
        %v4377 = vpop.f32.mrb[0].mxu0
        %v4378 = vadd.f32 %v4327, %v4377
        %v4379 = vpop.f32.mrb[0].mxu0
        %v4380 = vpop.f32.mrb[0].mxu0
        %4381 = vdwg.mxu0
        %4382 = vmatprep.subr.bf16.mxu0 %v3013
        %4383 = vmatpush1.bf16.msra.mxu0 %v3012
        %4384 = vmatprep.subr.bf16.mxu0 %v3022
        %4385 = vmatpush1.bf16.msra.mxu0 %v3021
        %4386 = vmatprep.subr.bf16.mxu0 %v3031
        %4387 = vmatpush1.bf16.msra.mxu0 %v3030
        %4388 = vmatprep.subr.bf16.mxu0 %v3040
        %4389 = vmatpush1.bf16.msra.mxu0 %v3039
        %4390 = vmatprep.subr.bf16.mxu0 %v3049
        %4391 = vmatpush1.bf16.msra.mxu0 %v3048
        %4392 = vmatprep.subr.bf16.mxu0 %v3058
        %4393 = vmatpush1.bf16.msra.mxu0 %v3057
        %4394 = vmatprep.subr.bf16.mxu0 %v3067
        %4395 = vmatpush1.bf16.msra.mxu0 %v3066
        %4396 = vmatprep.subr.bf16.mxu0 %v3076
        %4397 = vmatpush1.bf16.msra.mxu0 %v3075
        %4398 = vmatprep.subr.bf16.mxu0 %v3085
        %4399 = vmatpush1.bf16.msra.mxu0 %v3084
        %4400 = vmatprep.subr.bf16.mxu0 %v3094
        %4401 = vmatpush1.bf16.msra.mxu0 %v3093
        %4402 = vmatprep.subr.bf16.mxu0 %v3103
        %4403 = vmatpush1.bf16.msra.mxu0 %v3102
        %4404 = vmatprep.subr.bf16.mxu0 %v3112
        %4405 = vmatpush1.bf16.msra.mxu0 %v3111
        %4406 = vmatprep.subr.bf16.mxu0 %v3121
        %4407 = vmatpush1.bf16.msra.mxu0 %v3120
        %4408 = vmatprep.subr.bf16.mxu0 %v3130
        %4409 = vmatpush1.bf16.msra.mxu0 %v3129
        %4410 = vmatprep.subr.bf16.mxu0 %v3139
        %4411 = vmatpush1.bf16.msra.mxu0 %v3138
        %4412 = vmatprep.subr.bf16.mxu0 %v3148
        %4413 = vmatpush1.bf16.msra.mxu0 %v3147
        %4414 = vmatprep.mubr.bf16.mxu0 %v901
        %4415 = vmatmul.mubr.bf16.gmra.mrb[0].mxu0 %v900
        %v4416 = vpop.f32.mrb[0].mxu0
        %v4417 = vadd.f32 %v4366, %v4416
        %v4418 = vpop.f32.mrb[0].mxu0
        %v4419 = vadd.f32 %v4368, %v4418
        %v4420 = vpop.f32.mrb[0].mxu0
        %v4421 = vadd.f32 %v4370, %v4420
        %v4422 = vpop.f32.mrb[0].mxu0
        %v4423 = vadd.f32 %v4372, %v4422
        %4424 = vmatprep.mubr.bf16.mxu0 %v909
        %4425 = vmatmul.mubr.bf16.gmra.mrb[0].mxu0 %v908
        %v4426 = vpop.f32.mrb[0].mxu0
        %v4427 = vadd.f32 %v4376, %v4426
        %v4428 = vpop.f32.mrb[0].mxu0
        %v4429 = vadd.f32 %v4378, %v4428
        %v4430 = vpop.f32.mrb[0].mxu0
        %v4431 = vpop.f32.mrb[0].mxu0
        %4432 = vdwg.mxu0
        %4433 = vmatprep.subr.bf16.mxu0 %v3157
        %4434 = vmatpush1.bf16.msra.mxu0 %v3156
        %4435 = vmatprep.subr.bf16.mxu0 %v3166
        %4436 = vmatpush1.bf16.msra.mxu0 %v3165
        %4437 = vmatprep.subr.bf16.mxu0 %v3175
        %4438 = vmatpush1.bf16.msra.mxu0 %v3174
        %4439 = vmatprep.subr.bf16.mxu0 %v3184
        %4440 = vmatpush1.bf16.msra.mxu0 %v3183
        %4441 = vmatprep.subr.bf16.mxu0 %v3193
        %4442 = vmatpush1.bf16.msra.mxu0 %v3192
        %4443 = vmatprep.subr.bf16.mxu0 %v3202
        %4444 = vmatpush1.bf16.msra.mxu0 %v3201
        %4445 = vmatprep.subr.bf16.mxu0 %v3211
        %4446 = vmatpush1.bf16.msra.mxu0 %v3210
        %4447 = vmatprep.subr.bf16.mxu0 %v3220
        %4448 = vmatpush1.bf16.msra.mxu0 %v3219
        %4449 = vmatprep.subr.bf16.mxu0 %v3229
        %4450 = vmatpush1.bf16.msra.mxu0 %v3228
        %4451 = vmatprep.subr.bf16.mxu0 %v3238
        %4452 = vmatpush1.bf16.msra.mxu0 %v3237
        %4453 = vmatprep.subr.bf16.mxu0 %v3247
        %4454 = vmatpush1.bf16.msra.mxu0 %v3246
        %4455 = vmatprep.subr.bf16.mxu0 %v3256
        %4456 = vmatpush1.bf16.msra.mxu0 %v3255
        %4457 = vmatprep.subr.bf16.mxu0 %v3265
        %4458 = vmatpush1.bf16.msra.mxu0 %v3264
        %4459 = vmatprep.subr.bf16.mxu0 %v3274
        %4460 = vmatpush1.bf16.msra.mxu0 %v3273
        %4461 = vmatprep.subr.bf16.mxu0 %v3283
        %4462 = vmatpush1.bf16.msra.mxu0 %v3282
        %4463 = vmatprep.subr.bf16.mxu0 %v3292
        %4464 = vmatpush1.bf16.msra.mxu0 %v3291
        %4465 = vmatprep.mubr.bf16.mxu0 %v903
        %4466 = vmatmul.mubr.bf16.gmra.mrb[0].mxu0 %v902
        %v4467 = vpop.f32.mrb[0].mxu0
        %v4468 = vadd.f32 %v4417, %v4467
        %v4469 = vpop.f32.mrb[0].mxu0
        %v4470 = vadd.f32 %v4419, %v4469
        %v4471 = vpop.f32.mrb[0].mxu0
        %v4472 = vadd.f32 %v4421, %v4471
        %v4473 = vpop.f32.mrb[0].mxu0
        %v4474 = vadd.f32 %v4423, %v4473
        %4475 = vmatprep.mubr.bf16.mxu0 %v911
        %4476 = vmatmul.mubr.bf16.gmra.mrb[0].mxu0 %v910
        %v4477 = vpop.f32.mrb[0].mxu0
        %v4478 = vadd.f32 %v4427, %v4477
        %v4479 = vpop.f32.mrb[0].mxu0
        %v4480 = vadd.f32 %v4429, %v4479
        %v4481 = vpop.f32.mrb[0].mxu0
        %v4482 = vpop.f32.mrb[0].mxu0
        %4483 = vdwg.mxu0
        %4484 = vmatprep.subr.bf16.mxu0 %v2727
        %4485 = vmatpush1.bf16.msra.mxu0 %v2726
        %4486 = vmatprep.subr.bf16.mxu0 %v2736
        %4487 = vmatpush1.bf16.msra.mxu0 %v2735
        %4488 = vmatprep.subr.bf16.mxu0 %v2745
        %4489 = vmatpush1.bf16.msra.mxu0 %v2744
        %4490 = vmatprep.subr.bf16.mxu0 %v2754
        %4491 = vmatpush1.bf16.msra.mxu0 %v2753
        %4492 = vmatprep.subr.bf16.mxu0 %v2763
        %4493 = vmatpush1.bf16.msra.mxu0 %v2762
        %4494 = vmatprep.subr.bf16.mxu0 %v2772
        %4495 = vmatpush1.bf16.msra.mxu0 %v2771
        %4496 = vmatprep.subr.bf16.mxu0 %v2781
        %4497 = vmatpush1.bf16.msra.mxu0 %v2780
        %4498 = vmatprep.subr.bf16.mxu0 %v2790
        %4499 = vmatpush1.bf16.msra.mxu0 %v2789
        %4500 = vmatprep.subr.bf16.mxu0 %v2799
        %4501 = vmatpush1.bf16.msra.mxu0 %v2798
        %4502 = vmatprep.subr.bf16.mxu0 %v2808
        %4503 = vmatpush1.bf16.msra.mxu0 %v2807
        %4504 = vmatprep.subr.bf16.mxu0 %v2817
        %4505 = vmatpush1.bf16.msra.mxu0 %v2816
        %4506 = vmatprep.subr.bf16.mxu0 %v2826
        %4507 = vmatpush1.bf16.msra.mxu0 %v2825
        %4508 = vmatprep.subr.bf16.mxu0 %v2835
        %4509 = vmatpush1.bf16.msra.mxu0 %v2834
        %4510 = vmatprep.subr.bf16.mxu0 %v2844
        %4511 = vmatpush1.bf16.msra.mxu0 %v2843
        %4512 = vmatprep.subr.bf16.mxu0 %v2853
        %4513 = vmatpush1.bf16.msra.mxu0 %v2852
        %4514 = vmatprep.subr.bf16.mxu0 %v2862
        %4515 = vmatpush1.bf16.msra.mxu0 %v2861
        %4516 = vmatprep.mubr.bf16.mxu0 %v897
        %4517 = vmatmul.mubr.bf16.gmra.mrb[0].mxu0 %v896
        %v4518 = vpop.f32.mrb[0].mxu0
        %v4519 = vadd.f32 0.0, %v4518
        %v4520 = vpop.f32.mrb[0].mxu0
        %v4521 = vadd.f32 0.0, %v4520
        %v4522 = vpop.f32.mrb[0].mxu0
        %v4523 = vadd.f32 0.0, %v4522
        %v4524 = vpop.f32.mrb[0].mxu0
        %v4525 = vadd.f32 0.0, %v4524
        %4526 = vmatprep.mubr.bf16.mxu0 %v905
        %4527 = vmatmul.mubr.bf16.gmra.mrb[0].mxu0 %v904
        %v4528 = vpop.f32.mrb[0].mxu0
        %v4529 = vadd.f32 0.0, %v4528
        %v4530 = vpop.f32.mrb[0].mxu0
        %v4531 = vadd.f32 0.0, %v4530
        %v4532 = vpop.f32.mrb[0].mxu0
        %v4533 = vpop.f32.mrb[0].mxu0
        %4534 = vdwg.mxu0
        %4535 = vmatprep.subr.bf16.mxu0 %v2871
        %4536 = vmatpush1.bf16.msra.mxu0 %v2870
        %4537 = vmatprep.subr.bf16.mxu0 %v2880
        %4538 = vmatpush1.bf16.msra.mxu0 %v2879
        %4539 = vmatprep.subr.bf16.mxu0 %v2889
        %4540 = vmatpush1.bf16.msra.mxu0 %v2888
        %4541 = vmatprep.subr.bf16.mxu0 %v2898
        %4542 = vmatpush1.bf16.msra.mxu0 %v2897
        %4543 = vmatprep.subr.bf16.mxu0 %v2907
        %4544 = vmatpush1.bf16.msra.mxu0 %v2906
        %4545 = vmatprep.subr.bf16.mxu0 %v2916
        %4546 = vmatpush1.bf16.msra.mxu0 %v2915
        %4547 = vmatprep.subr.bf16.mxu0 %v2925
        %4548 = vmatpush1.bf16.msra.mxu0 %v2924
        %4549 = vmatprep.subr.bf16.mxu0 %v2934
        %4550 = vmatpush1.bf16.msra.mxu0 %v2933
        %4551 = vmatprep.subr.bf16.mxu0 %v2943
        %4552 = vmatpush1.bf16.msra.mxu0 %v2942
        %4553 = vmatprep.subr.bf16.mxu0 %v2952
        %4554 = vmatpush1.bf16.msra.mxu0 %v2951
        %4555 = vmatprep.subr.bf16.mxu0 %v2961
        %4556 = vmatpush1.bf16.msra.mxu0 %v2960
        %4557 = vmatprep.subr.bf16.mxu0 %v2970
        %4558 = vmatpush1.bf16.msra.mxu0 %v2969
        %4559 = vmatprep.subr.bf16.mxu0 %v2979
        %4560 = vmatpush1.bf16.msra.mxu0 %v2978
        %4561 = vmatprep.subr.bf16.mxu0 %v2988
        %4562 = vmatpush1.bf16.msra.mxu0 %v2987
        %4563 = vmatprep.subr.bf16.mxu0 %v2997
        %4564 = vmatpush1.bf16.msra.mxu0 %v2996
        %4565 = vmatprep.subr.bf16.mxu0 %v3006
        %4566 = vmatpush1.bf16.msra.mxu0 %v3005
        %4567 = vmatprep.mubr.bf16.mxu0 %v899
        %4568 = vmatmul.mubr.bf16.gmra.mrb[0].mxu0 %v898
        %v4569 = vpop.f32.mrb[0].mxu0
        %v4570 = vadd.f32 %v4519, %v4569
        %v4571 = vpop.f32.mrb[0].mxu0
        %v4572 = vadd.f32 %v4521, %v4571
        %v4573 = vpop.f32.mrb[0].mxu0
        %v4574 = vadd.f32 %v4523, %v4573
        %v4575 = vpop.f32.mrb[0].mxu0
        %v4576 = vadd.f32 %v4525, %v4575
        %4577 = vmatprep.mubr.bf16.mxu0 %v907
        %4578 = vmatmul.mubr.bf16.gmra.mrb[0].mxu0 %v906
        %v4579 = vpop.f32.mrb[0].mxu0
        %v4580 = vadd.f32 %v4529, %v4579
        %v4581 = vpop.f32.mrb[0].mxu0
        %v4582 = vadd.f32 %v4531, %v4581
        %v4583 = vpop.f32.mrb[0].mxu0
        %v4584 = vpop.f32.mrb[0].mxu0
        %4585 = vdwg.mxu0
        %4586 = vmatprep.subr.bf16.mxu0 %v3015
        %4587 = vmatpush1.bf16.msra.mxu0 %v3014
        %4588 = vmatprep.subr.bf16.mxu0 %v3024
        %4589 = vmatpush1.bf16.msra.mxu0 %v3023
        %4590 = vmatprep.subr.bf16.mxu0 %v3033
        %4591 = vmatpush1.bf16.msra.mxu0 %v3032
        %4592 = vmatprep.subr.bf16.mxu0 %v3042
        %4593 = vmatpush1.bf16.msra.mxu0 %v3041
        %4594 = vmatprep.subr.bf16.mxu0 %v3051
        %4595 = vmatpush1.bf16.msra.mxu0 %v3050
        %4596 = vmatprep.subr.bf16.mxu0 %v3060
        %4597 = vmatpush1.bf16.msra.mxu0 %v3059
        %4598 = vmatprep.subr.bf16.mxu0 %v3069
        %4599 = vmatpush1.bf16.msra.mxu0 %v3068
        %4600 = vmatprep.subr.bf16.mxu0 %v3078
        %4601 = vmatpush1.bf16.msra.mxu0 %v3077
        %4602 = vmatprep.subr.bf16.mxu0 %v3087
        %4603 = vmatpush1.bf16.msra.mxu0 %v3086
        %4604 = vmatprep.subr.bf16.mxu0 %v3096
        %4605 = vmatpush1.bf16.msra.mxu0 %v3095
        %4606 = vmatprep.subr.bf16.mxu0 %v3105
        %4607 = vmatpush1.bf16.msra.mxu0 %v3104
        %4608 = vmatprep.subr.bf16.mxu0 %v3114
        %4609 = vmatpush1.bf16.msra.mxu0 %v3113
        %4610 = vmatprep.subr.bf16.mxu0 %v3123
        %4611 = vmatpush1.bf16.msra.mxu0 %v3122
        %4612 = vmatprep.subr.bf16.mxu0 %v3132
        %4613 = vmatpush1.bf16.msra.mxu0 %v3131
        %4614 = vmatprep.subr.bf16.mxu0 %v3141
        %4615 = vmatpush1.bf16.msra.mxu0 %v3140
        %4616 = vmatprep.subr.bf16.mxu0 %v3150
        %4617 = vmatpush1.bf16.msra.mxu0 %v3149
        %4618 = vmatprep.mubr.bf16.mxu0 %v901
        %4619 = vmatmul.mubr.bf16.gmra.mrb[0].mxu0 %v900
        %v4620 = vpop.f32.mrb[0].mxu0
        %v4621 = vadd.f32 %v4570, %v4620
        %v4622 = vpop.f32.mrb[0].mxu0
        %v4623 = vadd.f32 %v4572, %v4622
        %v4624 = vpop.f32.mrb[0].mxu0
        %v4625 = vadd.f32 %v4574, %v4624
        %v4626 = vpop.f32.mrb[0].mxu0
        %v4627 = vadd.f32 %v4576, %v4626
        %4628 = vmatprep.mubr.bf16.mxu0 %v909
        %4629 = vmatmul.mubr.bf16.gmra.mrb[0].mxu0 %v908
        %v4630 = vpop.f32.mrb[0].mxu0
        %v4631 = vadd.f32 %v4580, %v4630
        %v4632 = vpop.f32.mrb[0].mxu0
        %v4633 = vadd.f32 %v4582, %v4632
        %v4634 = vpop.f32.mrb[0].mxu0
        %v4635 = vpop.f32.mrb[0].mxu0
        %4636 = vdwg.mxu0
        %4637 = vmatprep.subr.bf16.mxu0 %v3159
        %4638 = vmatpush1.bf16.msra.mxu0 %v3158
        %4639 = vmatprep.subr.bf16.mxu0 %v3168
        %4640 = vmatpush1.bf16.msra.mxu0 %v3167
        %4641 = vmatprep.subr.bf16.mxu0 %v3177
        %4642 = vmatpush1.bf16.msra.mxu0 %v3176
        %4643 = vmatprep.subr.bf16.mxu0 %v3186
        %4644 = vmatpush1.bf16.msra.mxu0 %v3185
        %4645 = vmatprep.subr.bf16.mxu0 %v3195
        %4646 = vmatpush1.bf16.msra.mxu0 %v3194
        %4647 = vmatprep.subr.bf16.mxu0 %v3204
        %4648 = vmatpush1.bf16.msra.mxu0 %v3203
        %4649 = vmatprep.subr.bf16.mxu0 %v3213
        %4650 = vmatpush1.bf16.msra.mxu0 %v3212
        %4651 = vmatprep.subr.bf16.mxu0 %v3222
        %4652 = vmatpush1.bf16.msra.mxu0 %v3221
        %4653 = vmatprep.subr.bf16.mxu0 %v3231
        %4654 = vmatpush1.bf16.msra.mxu0 %v3230
        %4655 = vmatprep.subr.bf16.mxu0 %v3240
        %4656 = vmatpush1.bf16.msra.mxu0 %v3239
        %4657 = vmatprep.subr.bf16.mxu0 %v3249
        %4658 = vmatpush1.bf16.msra.mxu0 %v3248
        %4659 = vmatprep.subr.bf16.mxu0 %v3258
        %4660 = vmatpush1.bf16.msra.mxu0 %v3257
        %4661 = vmatprep.subr.bf16.mxu0 %v3267
        %4662 = vmatpush1.bf16.msra.mxu0 %v3266
        %4663 = vmatprep.subr.bf16.mxu0 %v3276
        %4664 = vmatpush1.bf16.msra.mxu0 %v3275
        %4665 = vmatprep.subr.bf16.mxu0 %v3285
        %4666 = vmatpush1.bf16.msra.mxu0 %v3284
        %4667 = vmatprep.subr.bf16.mxu0 %v3294
        %4668 = vmatpush1.bf16.msra.mxu0 %v3293
        %4669 = vmatprep.mubr.bf16.mxu0 %v903
        %4670 = vmatmul.mubr.bf16.gmra.mrb[0].mxu0 %v902
        %v4671 = vpop.f32.mrb[0].mxu0
        %v4672 = vadd.f32 %v4621, %v4671
        %v4673 = vpop.f32.mrb[0].mxu0
        %v4674 = vadd.f32 %v4623, %v4673
        %v4675 = vpop.f32.mrb[0].mxu0
        %v4676 = vadd.f32 %v4625, %v4675
        %v4677 = vpop.f32.mrb[0].mxu0
        %v4678 = vadd.f32 %v4627, %v4677
        %4679 = vmatprep.mubr.bf16.mxu0 %v911
        %4680 = vmatmul.mubr.bf16.gmra.mrb[0].mxu0 %v910
        %v4681 = vpop.f32.mrb[0].mxu0
        %v4682 = vadd.f32 %v4631, %v4681
        %v4683 = vpop.f32.mrb[0].mxu0
        %v4684 = vadd.f32 %v4633, %v4683
        %v4685 = vpop.f32.mrb[0].mxu0
        %v4686 = vpop.f32.mrb[0].mxu0
        %4687 = vdwg.mxu0
        %4688 = vmatprep.subr.bf16.mxu0 0
        %4689 = vmatpush1.bf16.msra.mxu0 %v2728
        %4690 = vmatprep.subr.bf16.mxu0 0
        %4691 = vmatpush1.bf16.msra.mxu0 %v2737
        %4692 = vmatprep.subr.bf16.mxu0 0
        %4693 = vmatpush1.bf16.msra.mxu0 %v2746
        %4694 = vmatprep.subr.bf16.mxu0 0
        %4695 = vmatpush1.bf16.msra.mxu0 %v2755
        %4696 = vmatprep.subr.bf16.mxu0 0
        %4697 = vmatpush1.bf16.msra.mxu0 %v2764
        %4698 = vmatprep.subr.bf16.mxu0 0
        %4699 = vmatpush1.bf16.msra.mxu0 %v2773
        %4700 = vmatprep.subr.bf16.mxu0 0
        %4701 = vmatpush1.bf16.msra.mxu0 %v2782
        %4702 = vmatprep.subr.bf16.mxu0 0
        %4703 = vmatpush1.bf16.msra.mxu0 %v2791
        %4704 = vmatprep.subr.bf16.mxu0 0
        %4705 = vmatpush1.bf16.msra.mxu0 %v2800
        %4706 = vmatprep.subr.bf16.mxu0 0
        %4707 = vmatpush1.bf16.msra.mxu0 %v2809
        %4708 = vmatprep.subr.bf16.mxu0 0
        %4709 = vmatpush1.bf16.msra.mxu0 %v2818
        %4710 = vmatprep.subr.bf16.mxu0 0
        %4711 = vmatpush1.bf16.msra.mxu0 %v2827
        %4712 = vmatprep.subr.bf16.mxu0 0
        %4713 = vmatpush1.bf16.msra.mxu0 %v2836
        %4714 = vmatprep.subr.bf16.mxu0 0
        %4715 = vmatpush1.bf16.msra.mxu0 %v2845
        %4716 = vmatprep.subr.bf16.mxu0 0
        %4717 = vmatpush1.bf16.msra.mxu0 %v2854
        %4718 = vmatprep.subr.bf16.mxu0 0
        %4719 = vmatpush1.bf16.msra.mxu0 %v2863
        %4720 = vmatprep.mubr.bf16.mxu0 %v897
        %4721 = vmatmul.mubr.bf16.gmra.mrb[0].mxu0 %v896
        %v4722 = vpop.f32.mrb[0].mxu0
        %v4723 = vadd.f32 0.0, %v4722
        %v4724 = vpop.f32.mrb[0].mxu0
        %v4725 = vpop.f32.mrb[0].mxu0
        %v4726 = vadd.f32 0.0, %v4725
        %v4727 = vpop.f32.mrb[0].mxu0
        %4728 = vmatprep.mubr.bf16.mxu0 %v905
        %4729 = vmatmul.mubr.bf16.gmra.mrb[0].mxu0 %v904
        %v4730 = vpop.f32.mrb[0].mxu0
        %v4731 = vadd.f32 0.0, %v4730
        %v4732 = vpop.f32.mrb[0].mxu0
        %v4733 = vpop.f32.mrb[0].mxu0
        %v4734 = vpop.f32.mrb[0].mxu0
        %4735 = vdwg.mxu0
        %4736 = vmatprep.subr.bf16.mxu0 0
        %4737 = vmatpush1.bf16.msra.mxu0 %v2872
        %4738 = vmatprep.subr.bf16.mxu0 0
        %4739 = vmatpush1.bf16.msra.mxu0 %v2881
        %4740 = vmatprep.subr.bf16.mxu0 0
        %4741 = vmatpush1.bf16.msra.mxu0 %v2890
        %4742 = vmatprep.subr.bf16.mxu0 0
        %4743 = vmatpush1.bf16.msra.mxu0 %v2899
        %4744 = vmatprep.subr.bf16.mxu0 0
        %4745 = vmatpush1.bf16.msra.mxu0 %v2908
        %4746 = vmatprep.subr.bf16.mxu0 0
        %4747 = vmatpush1.bf16.msra.mxu0 %v2917
        %4748 = vmatprep.subr.bf16.mxu0 0
        %4749 = vmatpush1.bf16.msra.mxu0 %v2926
        %4750 = vmatprep.subr.bf16.mxu0 0
        %4751 = vmatpush1.bf16.msra.mxu0 %v2935
        %4752 = vmatprep.subr.bf16.mxu0 0
        %4753 = vmatpush1.bf16.msra.mxu0 %v2944
        %4754 = vmatprep.subr.bf16.mxu0 0
        %4755 = vmatpush1.bf16.msra.mxu0 %v2953
        %4756 = vmatprep.subr.bf16.mxu0 0
        %4757 = vmatpush1.bf16.msra.mxu0 %v2962
        %4758 = vmatprep.subr.bf16.mxu0 0
        %4759 = vmatpush1.bf16.msra.mxu0 %v2971
        %4760 = vmatprep.subr.bf16.mxu0 0
        %4761 = vmatpush1.bf16.msra.mxu0 %v2980
        %4762 = vmatprep.subr.bf16.mxu0 0
        %4763 = vmatpush1.bf16.msra.mxu0 %v2989
        %4764 = vmatprep.subr.bf16.mxu0 0
        %4765 = vmatpush1.bf16.msra.mxu0 %v2998
        %4766 = vmatprep.subr.bf16.mxu0 0
        %4767 = vmatpush1.bf16.msra.mxu0 %v3007
        %4768 = vmatprep.mubr.bf16.mxu0 %v899
        %4769 = vmatmul.mubr.bf16.gmra.mrb[0].mxu0 %v898
        %v4770 = vpop.f32.mrb[0].mxu0
        %v4771 = vadd.f32 %v4723, %v4770
        %v4772 = vpop.f32.mrb[0].mxu0
        %v4773 = vpop.f32.mrb[0].mxu0
        %v4774 = vadd.f32 %v4726, %v4773
        %v4775 = vpop.f32.mrb[0].mxu0
        %4776 = vmatprep.mubr.bf16.mxu0 %v907
        %4777 = vmatmul.mubr.bf16.gmra.mrb[0].mxu0 %v906
        %v4778 = vpop.f32.mrb[0].mxu0
        %v4779 = vadd.f32 %v4731, %v4778
        %v4780 = vpop.f32.mrb[0].mxu0
        %v4781 = vpop.f32.mrb[0].mxu0
        %v4782 = vpop.f32.mrb[0].mxu0
        %4783 = vdwg.mxu0
        %4784 = vmatprep.subr.bf16.mxu0 0
        %4785 = vmatpush1.bf16.msra.mxu0 %v3016
        %4786 = vmatprep.subr.bf16.mxu0 0
        %4787 = vmatpush1.bf16.msra.mxu0 %v3025
        %4788 = vmatprep.subr.bf16.mxu0 0
        %4789 = vmatpush1.bf16.msra.mxu0 %v3034
        %4790 = vmatprep.subr.bf16.mxu0 0
        %4791 = vmatpush1.bf16.msra.mxu0 %v3043
        %4792 = vmatprep.subr.bf16.mxu0 0
        %4793 = vmatpush1.bf16.msra.mxu0 %v3052
        %4794 = vmatprep.subr.bf16.mxu0 0
        %4795 = vmatpush1.bf16.msra.mxu0 %v3061
        %4796 = vmatprep.subr.bf16.mxu0 0
        %4797 = vmatpush1.bf16.msra.mxu0 %v3070
        %4798 = vmatprep.subr.bf16.mxu0 0
        %4799 = vmatpush1.bf16.msra.mxu0 %v3079
        %4800 = vmatprep.subr.bf16.mxu0 0
        %4801 = vmatpush1.bf16.msra.mxu0 %v3088
        %4802 = vmatprep.subr.bf16.mxu0 0
        %4803 = vmatpush1.bf16.msra.mxu0 %v3097
        %4804 = vmatprep.subr.bf16.mxu0 0
        %4805 = vmatpush1.bf16.msra.mxu0 %v3106
        %4806 = vmatprep.subr.bf16.mxu0 0
        %4807 = vmatpush1.bf16.msra.mxu0 %v3115
        %4808 = vmatprep.subr.bf16.mxu0 0
        %4809 = vmatpush1.bf16.msra.mxu0 %v3124
        %4810 = vmatprep.subr.bf16.mxu0 0
        %4811 = vmatpush1.bf16.msra.mxu0 %v3133
        %4812 = vmatprep.subr.bf16.mxu0 0
        %4813 = vmatpush1.bf16.msra.mxu0 %v3142
        %4814 = vmatprep.subr.bf16.mxu0 0
        %4815 = vmatpush1.bf16.msra.mxu0 %v3151
        %4816 = vmatprep.mubr.bf16.mxu0 %v901
        %4817 = vmatmul.mubr.bf16.gmra.mrb[0].mxu0 %v900
        %v4818 = vpop.f32.mrb[0].mxu0
        %v4819 = vadd.f32 %v4771, %v4818
        %v4820 = vpop.f32.mrb[0].mxu0
        %v4821 = vpop.f32.mrb[0].mxu0
        %v4822 = vadd.f32 %v4774, %v4821
        %v4823 = vpop.f32.mrb[0].mxu0
        %4824 = vmatprep.mubr.bf16.mxu0 %v909
        %4825 = vmatmul.mubr.bf16.gmra.mrb[0].mxu0 %v908
        %v4826 = vpop.f32.mrb[0].mxu0
        %v4827 = vadd.f32 %v4779, %v4826
        %v4828 = vpop.f32.mrb[0].mxu0
        %v4829 = vpop.f32.mrb[0].mxu0
        %v4830 = vpop.f32.mrb[0].mxu0
        %4831 = vdwg.mxu0
        %4832 = vmatprep.subr.bf16.mxu0 0
        %4833 = vmatpush1.bf16.msra.mxu0 %v3160
        %4834 = vmatprep.subr.bf16.mxu0 0
        %4835 = vmatpush1.bf16.msra.mxu0 %v3169
        %4836 = vmatprep.subr.bf16.mxu0 0
        %4837 = vmatpush1.bf16.msra.mxu0 %v3178
        %4838 = vmatprep.subr.bf16.mxu0 0
        %4839 = vmatpush1.bf16.msra.mxu0 %v3187
        %4840 = vmatprep.subr.bf16.mxu0 0
        %4841 = vmatpush1.bf16.msra.mxu0 %v3196
        %4842 = vmatprep.subr.bf16.mxu0 0
        %4843 = vmatpush1.bf16.msra.mxu0 %v3205
        %4844 = vmatprep.subr.bf16.mxu0 0
        %4845 = vmatpush1.bf16.msra.mxu0 %v3214
        %4846 = vmatprep.subr.bf16.mxu0 0
        %4847 = vmatpush1.bf16.msra.mxu0 %v3223
        %4848 = vmatprep.subr.bf16.mxu0 0
        %4849 = vmatpush1.bf16.msra.mxu0 %v3232
        %4850 = vmatprep.subr.bf16.mxu0 0
        %4851 = vmatpush1.bf16.msra.mxu0 %v3241
        %4852 = vmatprep.subr.bf16.mxu0 0
        %4853 = vmatpush1.bf16.msra.mxu0 %v3250
        %4854 = vmatprep.subr.bf16.mxu0 0
        %4855 = vmatpush1.bf16.msra.mxu0 %v3259
        %4856 = vmatprep.subr.bf16.mxu0 0
        %4857 = vmatpush1.bf16.msra.mxu0 %v3268
        %4858 = vmatprep.subr.bf16.mxu0 0
        %4859 = vmatpush1.bf16.msra.mxu0 %v3277
        %4860 = vmatprep.subr.bf16.mxu0 0
        %4861 = vmatpush1.bf16.msra.mxu0 %v3286
        %4862 = vmatprep.subr.bf16.mxu0 0
        %4863 = vmatpush1.bf16.msra.mxu0 %v3295
        %4864 = vmatprep.mubr.bf16.mxu0 %v903
        %4865 = vmatmul.mubr.bf16.gmra.mrb[0].mxu0 %v902
        %v4866 = vpop.f32.mrb[0].mxu0
        %v4867 = vadd.f32 %v4819, %v4866
        %v4868 = vpop.f32.mrb[0].mxu0
        %v4869 = vpop.f32.mrb[0].mxu0
        %v4870 = vadd.f32 %v4822, %v4869
        %v4871 = vpop.f32.mrb[0].mxu0
        %4872 = vmatprep.mubr.bf16.mxu0 %v911
        %4873 = vmatmul.mubr.bf16.gmra.mrb[0].mxu0 %v910
        %v4874 = vpop.f32.mrb[0].mxu0
        %v4875 = vadd.f32 %v4827, %v4874
        %v4876 = vpop.f32.mrb[0].mxu0
        %v4877 = vpop.f32.mrb[0].mxu0
        %v4878 = vpop.f32.mrb[0].mxu0
        %4879 = vdwg.mxu0
        %v4880 = vmul.f32 %v4060, %v4060
        %v4881 = vmul.f32 %v4062, %v4062
        %v4882 = vmul.f32 %v4264, %v4264
        %v4883 = vmul.f32 %v4266, %v4266
        %v4884 = vmul.f32 %v4468, %v4468
        %v4885 = vmul.f32 %v4064, %v4064
        %v4886 = vmul.f32 %v4066, %v4066
        %v4887 = vmul.f32 %v4268, %v4268
        %v4888 = vmul.f32 %v4270, %v4270
        %v4889 = vmul.f32 %v4472, %v4472
        %v4890 = vmul.f32 %v4070, %v4070
        %v4891 = vmul.f32 %v4072, %v4072
        %v4892 = vmul.f32 %v4274, %v4274
        %v4893 = vmul.f32 %v4276, %v4276
        %v4894 = vmul.f32 %v4478, %v4478
        %v4895 = vmul.f32 %v4470, %v4470
        %v4896 = vmul.f32 %v4672, %v4672
        %v4897 = vmul.f32 %v4674, %v4674
        %v4898 = vmul.f32 %v4867, %v4867
        %v4899 = vmul.f32 %v4474, %v4474
        %v4900 = vmul.f32 %v4676, %v4676
        %v4901 = vmul.f32 %v4678, %v4678
        %v4902 = vmul.f32 %v4870, %v4870
        %v4903 = vmul.f32 %v4480, %v4480
        %v4904 = vmul.f32 %v4682, %v4682
        %v4905 = vmul.f32 %v4684, %v4684
        %v4906 = vmul.f32 %v4875, %v4875
        %v4907 = vadd.f32 %v4880, %v4895
        %v4908 = vadd.f32 %v4881, %v4896
        %v4909 = vadd.f32 %v4882, %v4897
        %v4910 = vadd.f32 %v4883, %v4898
        %v4911 = vadd.f32 %v4885, %v4899
        %v4912 = vadd.f32 %v4886, %v4900
        %v4913 = vadd.f32 %v4887, %v4901
        %v4914 = vadd.f32 %v4888, %v4902
        %v4915 = vadd.f32 %v4890, %v4903
        %v4916 = vadd.f32 %v4891, %v4904
        %v4917 = vadd.f32 %v4892, %v4905
        %v4918 = vadd.f32 %v4893, %v4906
        %v4919 = vpack.c.bf16 %v4911, %v4907
        %v4920 = vpack.c.bf16 %v4912, %v4908
        %v4921 = vpack.c.bf16 %v4913, %v4909
        %v4922 = vpack.c.bf16 %v4914, %v4910
        %v4923 = vpack.c.bf16 %v4889, %v4884
        %v4924 = vpack.c.bf16 %v4915, %v4915
        %v4925 = vpack.c.bf16 %v4916, %v4916
        %v4926 = vpack.c.bf16 %v4917, %v4917
        %v4927 = vpack.c.bf16 %v4918, %v4918
        %v4928 = vpack.c.bf16 %v4894, %v4894
        %v4929 = vld [vmem:[#allocation4] sm:$0xf]
        %v4930 = vld [vmem:[#allocation4 + $0x4] sm:$0xf]
        %v4931 = vld [vmem:[#allocation4 + $0x8] sm:$0xf]
        %v4932 = vld [vmem:[#allocation4 + $0xc] sm:$0xf]
        %v4933 = vld [vmem:[#allocation4 + $0x10] sm:$0xf]
        %v4934 = vld [vmem:[#allocation4 + $0x14] sm:$0xf]
        %v4935 = vld [vmem:[#allocation4 + $0x18] sm:$0xf]
        %v4936 = vld [vmem:[#allocation4 + $0x1c] sm:$0xf]
        %v4937 = vld [vmem:[#allocation4 + $0x20] sm:$0xf]
        %v4938 = vld [vmem:[#allocation4 + $0x24] sm:$0xf]
        %v4939 = vld [vmem:[#allocation4 + $0x28] sm:$0xf]
        %v4940 = vld [vmem:[#allocation4 + $0x2c] sm:$0xf]
        %v4941 = vld [vmem:[#allocation4 + $0x30] sm:$0xf]
        %v4942 = vld [vmem:[#allocation4 + $0x34] sm:$0xf]
        %v4943 = vld [vmem:[#allocation4 + $0x38] sm:$0xf]
        %v4944 = vld [vmem:[#allocation4 + $0x3c] sm:$0xf]
        %v4945 = vld [vmem:[#allocation4 + $0x40] sm:$0xf]
        %v4946 = vld [vmem:[#allocation4 + $0x44] sm:$0xf]
        %v4947 = vld [vmem:[#allocation4 + $0x48] sm:$0xf]
        %v4948 = vld [vmem:[#allocation4 + $0x4c] sm:$0xf]
        %v4949 = vld [vmem:[#allocation4 + $0x50] sm:$0xf]
        %v4950 = vld [vmem:[#allocation4 + $0x54] sm:$0xf]
        %v4951 = vld [vmem:[#allocation4 + $0x58] sm:$0xf]
        %v4952 = vld [vmem:[#allocation4 + $0x5c] sm:$0xf]
        %v4953 = vld [vmem:[#allocation4 + $0x60] sm:$0xf]
        %v4954 = vld [vmem:[#allocation4 + $0x64] sm:$0xf]
        %v4955 = vld [vmem:[#allocation4 + $0x68] sm:$0xf]
        %v4956 = vld [vmem:[#allocation4 + $0x6c] sm:$0xf]
        %v4957 = vld [vmem:[#allocation4 + $0x70] sm:$0xf]
        %v4958 = vld [vmem:[#allocation4 + $0x74] sm:$0xf]
        %v4959 = vld [vmem:[#allocation4 + $0x78] sm:$0xf]
        %v4960 = vld [vmem:[#allocation4 + $0x7c] sm:$0xf]
        %v4961 = vld [vmem:[#allocation4 + $0x80] sm:$0xf]
        %v4962 = vld [vmem:[#allocation4 + $0x84] sm:$0xf]
        %v4963 = vld [vmem:[#allocation4 + $0x88] sm:$0xf]
        %v4964 = vld [vmem:[#allocation4 + $0x8c] sm:$0xf]
        %v4965 = vld [vmem:[#allocation4 + $0x90] sm:$0xf]
        %v4966 = vld [vmem:[#allocation4 + $0x94] sm:$0xf]
        %v4967 = vld [vmem:[#allocation4 + $0x98] sm:$0xf]
        %v4968 = vld [vmem:[#allocation4 + $0x9c] sm:$0xf]
        %v4969 = vld [vmem:[#allocation4 + $0xa0] sm:$0xf]
        %v4970 = vld [vmem:[#allocation4 + $0xa4] sm:$0xf]
        %v4971 = vld [vmem:[#allocation4 + $0xa8] sm:$0xf]
        %v4972 = vld [vmem:[#allocation4 + $0xac] sm:$0xf]
        %v4973 = vld [vmem:[#allocation4 + $0xb0] sm:$0xf]
        %v4974 = vld [vmem:[#allocation4 + $0xb4] sm:$0xf]
        %v4975 = vld [vmem:[#allocation4 + $0xb8] sm:$0xf]
        %v4976 = vld [vmem:[#allocation4 + $0xbc] sm:$0xf]
        %v4977 = vld [vmem:[#allocation4 + $0xc0] sm:$0xf]
        %v4978 = vld [vmem:[#allocation4 + $0xc4] sm:$0xf]
        %v4979 = vld [vmem:[#allocation4 + $0xc8] sm:$0xf]
        %v4980 = vld [vmem:[#allocation4 + $0xcc] sm:$0xf]
        %v4981 = vld [vmem:[#allocation4 + $0xd0] sm:$0xf]
        %v4982 = vld [vmem:[#allocation4 + $0xd4] sm:$0xf]
        %v4983 = vld [vmem:[#allocation4 + $0xd8] sm:$0xf]
        %v4984 = vld [vmem:[#allocation4 + $0xdc] sm:$0xf]
        %v4985 = vld [vmem:[#allocation4 + $0xe0] sm:$0xf]
        %v4986 = vld [vmem:[#allocation4 + $0xe4] sm:$0xf]
        %v4987 = vld [vmem:[#allocation4 + $0xe8] sm:$0xf]
        %v4988 = vld [vmem:[#allocation4 + $0xec] sm:$0xf]
        %v4989 = vld [vmem:[#allocation4 + $0xf0] sm:$0xf]
        %v4990 = vld [vmem:[#allocation4 + $0xf4] sm:$0xf]
        %v4991 = vld [vmem:[#allocation4 + $0xf8] sm:$0xf]
        %v4992 = vld [vmem:[#allocation4 + $0xfc] sm:$0xf]
        %v4993 = vld [vmem:[#allocation4 + $0x100] sm:$0xf]
        %v4994 = vld [vmem:[#allocation4 + $0x104] sm:$0xf]
        %v4995 = vld [vmem:[#allocation4 + $0x108] sm:$0xf]
        %v4996 = vld [vmem:[#allocation4 + $0x10c] sm:$0xf]
        %v4997 = vld [vmem:[#allocation4 + $0x110] sm:$0xf]
        %v4998 = vld [vmem:[#allocation4 + $0x114] sm:$0xf]
        %v4999 = vld [vmem:[#allocation4 + $0x118] sm:$0xf]
        %v5000 = vld [vmem:[#allocation4 + $0x11c] sm:$0xf]
        %v5001 = vld [vmem:[#allocation4 + $0x120] sm:$0xf]
        %v5002 = vld [vmem:[#allocation4 + $0x124] sm:$0xf]
        %v5003 = vld [vmem:[#allocation4 + $0x128] sm:$0xf]
        %v5004 = vld [vmem:[#allocation4 + $0x12c] sm:$0xf]
        %v5005 = vld [vmem:[#allocation4 + $0x130] sm:$0xf]
        %v5006 = vld [vmem:[#allocation4 + $0x134] sm:$0xf]
        %v5007 = vld [vmem:[#allocation4 + $0x138] sm:$0xf]
        %v5008 = vld [vmem:[#allocation4 + $0x13c] sm:$0xf]
        %v5089 = vunpack.c.l.b16 %v4929
        %v5090 = vunpack.c.l.b16 %v4930
        %v5091 = vunpack.c.l.b16 %v4931
        %v5092 = vunpack.c.l.b16 %v4932
        %v5093 = vunpack.c.l.b16 %v4933
        %v5094 = vunpack.c.l.b16 %v4934
        %v5095 = vunpack.c.l.b16 %v4935
        %v5096 = vunpack.c.l.b16 %v4936
        %v5097 = vunpack.c.l.b16 %v4937
        %v5098 = vunpack.c.l.b16 %v4938
        %v5099 = vunpack.c.l.b16 %v4939
        %v5100 = vunpack.c.l.b16 %v4940
        %v5101 = vunpack.c.l.b16 %v4941
        %v5102 = vunpack.c.l.b16 %v4942
        %v5103 = vunpack.c.l.b16 %v4943
        %v5104 = vunpack.c.l.b16 %v4944
        %v5105 = vunpack.c.l.b16 %v4945
        %v5106 = vunpack.c.l.b16 %v4946
        %v5107 = vunpack.c.l.b16 %v4947
        %v5108 = vunpack.c.l.b16 %v4948
        %v5109 = vunpack.c.l.b16 %v4949
        %v5110 = vunpack.c.l.b16 %v4950
        %v5111 = vunpack.c.l.b16 %v4951
        %v5112 = vunpack.c.l.b16 %v4952
        %v5113 = vunpack.c.l.b16 %v4953
        %v5114 = vunpack.c.l.b16 %v4954
        %v5115 = vunpack.c.l.b16 %v4955
        %v5116 = vunpack.c.l.b16 %v4956
        %v5117 = vunpack.c.l.b16 %v4957
        %v5118 = vunpack.c.l.b16 %v4958
        %v5119 = vunpack.c.l.b16 %v4959
        %v5120 = vunpack.c.l.b16 %v4960
        %v5121 = vunpack.c.l.b16 %v4961
        %v5122 = vunpack.c.l.b16 %v4962
        %v5123 = vunpack.c.l.b16 %v4963
        %v5124 = vunpack.c.l.b16 %v4964
        %v5125 = vunpack.c.l.b16 %v4965
        %v5126 = vunpack.c.l.b16 %v4966
        %v5127 = vunpack.c.l.b16 %v4967
        %v5128 = vunpack.c.l.b16 %v4968
        %v5129 = vunpack.c.l.b16 %v4969
        %v5130 = vunpack.c.l.b16 %v4970
        %v5131 = vunpack.c.l.b16 %v4971
        %v5132 = vunpack.c.l.b16 %v4972
        %v5133 = vunpack.c.l.b16 %v4973
        %v5134 = vunpack.c.l.b16 %v4974
        %v5135 = vunpack.c.l.b16 %v4975
        %v5136 = vunpack.c.l.b16 %v4976
        %v5137 = vunpack.c.l.b16 %v4977
        %v5138 = vunpack.c.l.b16 %v4978
        %v5139 = vunpack.c.l.b16 %v4979
        %v5140 = vunpack.c.l.b16 %v4980
        %v5141 = vunpack.c.l.b16 %v4981
        %v5142 = vunpack.c.l.b16 %v4982
        %v5143 = vunpack.c.l.b16 %v4983
        %v5144 = vunpack.c.l.b16 %v4984
        %v5145 = vunpack.c.l.b16 %v4985
        %v5146 = vunpack.c.l.b16 %v4986
        %v5147 = vunpack.c.l.b16 %v4987
        %v5148 = vunpack.c.l.b16 %v4988
        %v5149 = vunpack.c.l.b16 %v4989
        %v5150 = vunpack.c.l.b16 %v4990
        %v5151 = vunpack.c.l.b16 %v4991
        %v5152 = vunpack.c.l.b16 %v4992
        %v5153 = vunpack.c.l.b16 %v4993
        %v5154 = vunpack.c.l.b16 %v4994
        %v5155 = vunpack.c.l.b16 %v4995
        %v5156 = vunpack.c.l.b16 %v4996
        %v5157 = vunpack.c.l.b16 %v4997
        %v5158 = vunpack.c.l.b16 %v4998
        %v5159 = vunpack.c.l.b16 %v4999
        %v5160 = vunpack.c.l.b16 %v5000
        %v5161 = vunpack.c.l.b16 %v5001
        %v5162 = vunpack.c.l.b16 %v5002
        %v5163 = vunpack.c.l.b16 %v5003
        %v5164 = vunpack.c.l.b16 %v5004
        %v5165 = vunpack.c.l.b16 %v5005
        %v5166 = vunpack.c.l.b16 %v5006
        %v5167 = vunpack.c.l.b16 %v5007
        %v5168 = vunpack.c.l.b16 %v5008
        %v5169 = vpack.c.b16 %v5090, %v5089
        %v5170 = vpack.c.b16 %v5092, %v5091
        %v5171 = vpack.c.b16 %v5094, %v5093
        %v5172 = vpack.c.b16 %v5096, %v5095
        %v5173 = vpack.c.b16 %v5098, %v5097
        %v5174 = vpack.c.b16 %v5100, %v5099
        %v5175 = vpack.c.b16 %v5102, %v5101
        %v5176 = vpack.c.b16 %v5104, %v5103
        %v5177 = vpack.c.b16 %v5106, %v5105
        %v5178 = vpack.c.b16 %v5108, %v5107
        %v5179 = vpack.c.b16 %v5110, %v5109
        %v5180 = vpack.c.b16 %v5112, %v5111
        %v5181 = vpack.c.b16 %v5114, %v5113
        %v5182 = vpack.c.b16 %v5116, %v5115
        %v5183 = vpack.c.b16 %v5118, %v5117
        %v5184 = vpack.c.b16 %v5120, %v5119
        %v5185 = vpack.c.b16 %v5122, %v5121
        %v5186 = vpack.c.b16 %v5124, %v5123
        %v5187 = vpack.c.b16 %v5126, %v5125
        %v5188 = vpack.c.b16 %v5128, %v5127
        %v5189 = vpack.c.b16 %v5130, %v5129
        %v5190 = vpack.c.b16 %v5132, %v5131
        %v5191 = vpack.c.b16 %v5134, %v5133
        %v5192 = vpack.c.b16 %v5136, %v5135
        %v5193 = vpack.c.b16 %v5138, %v5137
        %v5194 = vpack.c.b16 %v5140, %v5139
        %v5195 = vpack.c.b16 %v5142, %v5141
        %v5196 = vpack.c.b16 %v5144, %v5143
        %v5197 = vpack.c.b16 %v5146, %v5145
        %v5198 = vpack.c.b16 %v5148, %v5147
        %v5199 = vpack.c.b16 %v5150, %v5149
        %v5200 = vpack.c.b16 %v5152, %v5151
        %v5201 = vpack.c.b16 %v5154, %v5153
        %v5202 = vpack.c.b16 %v5156, %v5155
        %v5203 = vpack.c.b16 %v5158, %v5157
        %v5204 = vpack.c.b16 %v5160, %v5159
        %v5205 = vpack.c.b16 %v5162, %v5161
        %v5206 = vpack.c.b16 %v5164, %v5163
        %v5207 = vpack.c.b16 %v5166, %v5165
        %v5208 = vpack.c.b16 %v5168, %v5167
        %5249 = vmatprep.subr.bf16.mxu0 0
        %5250 = vmatpush1.bf16.msra.mxu0 %v5169
        %5251 = vmatprep.subr.bf16.mxu0 0
        %5252 = vmatpush1.bf16.msra.mxu0 %v5170
        %5253 = vmatprep.subr.bf16.mxu0 0
        %5254 = vmatpush1.bf16.msra.mxu0 %v5171
        %5255 = vmatprep.subr.bf16.mxu0 0
        %5256 = vmatpush1.bf16.msra.mxu0 %v5172
        %5257 = vmatprep.subr.bf16.mxu0 0
        %5258 = vmatpush1.bf16.msra.mxu0 %v5173
        %5259 = vmatprep.subr.bf16.mxu0 0
        %5260 = vmatpush1.bf16.msra.mxu0 %v5174
        %5261 = vmatprep.subr.bf16.mxu0 0
        %5262 = vmatpush1.bf16.msra.mxu0 %v5175
        %5263 = vmatprep.subr.bf16.mxu0 0
        %5264 = vmatpush1.bf16.msra.mxu0 %v5176
        %5265 = vmatprep.subr.bf16.mxu0 0
        %5266 = vmatpush1.bf16.msra.mxu0 %v5177
        %5267 = vmatprep.subr.bf16.mxu0 0
        %5268 = vmatpush1.bf16.msra.mxu0 %v5178
        %5269 = vmatprep.subr.bf16.mxu0 0
        %5270 = vmatpush1.bf16.msra.mxu0 %v5179
        %5271 = vmatprep.subr.bf16.mxu0 0
        %5272 = vmatpush1.bf16.msra.mxu0 %v5180
        %5273 = vmatprep.subr.bf16.mxu0 0
        %5274 = vmatpush1.bf16.msra.mxu0 %v5181
        %5275 = vmatprep.subr.bf16.mxu0 0
        %5276 = vmatpush1.bf16.msra.mxu0 %v5182
        %5277 = vmatprep.subr.bf16.mxu0 0
        %5278 = vmatpush1.bf16.msra.mxu0 %v5183
        %5279 = vmatprep.subr.bf16.mxu0 0
        %5280 = vmatpush1.bf16.msra.mxu0 %v5184
        %5281 = vmatprep.mubr.bf16.mxu0 %v4920
        %5282 = vmatmul.mubr.bf16.gmra.mrb[0].mxu0 %v4919
        %v5283 = vpop.f32.mrb[0].mxu0
        %v5284 = vadd.f32 0.0, %v5283
        %v5285 = vpop.f32.mrb[0].mxu0
        %v5286 = vpop.f32.mrb[0].mxu0
        %v5287 = vadd.f32 0.0, %v5286
        %v5288 = vpop.f32.mrb[0].mxu0
        %5289 = vmatprep.mubr.bf16.mxu0 %v4925
        %5290 = vmatmul.mubr.bf16.gmra.mrb[0].mxu0 %v4924
        %v5291 = vpop.f32.mrb[0].mxu0
        %v5292 = vadd.f32 0.0, %v5291
        %v5293 = vpop.f32.mrb[0].mxu0
        %v5294 = vpop.f32.mrb[0].mxu0
        %v5295 = vpop.f32.mrb[0].mxu0
        %5296 = vdwg.mxu0
        %5297 = vmatprep.subr.bf16.mxu0 0
        %5298 = vmatpush1.bf16.msra.mxu0 %v5185
        %5299 = vmatprep.subr.bf16.mxu0 0
        %5300 = vmatpush1.bf16.msra.mxu0 %v5186
        %5301 = vmatprep.subr.bf16.mxu0 0
        %5302 = vmatpush1.bf16.msra.mxu0 %v5187
        %5303 = vmatprep.subr.bf16.mxu0 0
        %5304 = vmatpush1.bf16.msra.mxu0 %v5188
        %5305 = vmatprep.subr.bf16.mxu0 0
        %5306 = vmatpush1.bf16.msra.mxu0 %v5189
        %5307 = vmatprep.subr.bf16.mxu0 0
        %5308 = vmatpush1.bf16.msra.mxu0 %v5190
        %5309 = vmatprep.subr.bf16.mxu0 0
        %5310 = vmatpush1.bf16.msra.mxu0 %v5191
        %5311 = vmatprep.subr.bf16.mxu0 0
        %5312 = vmatpush1.bf16.msra.mxu0 %v5192
        %5313 = vmatprep.subr.bf16.mxu0 0
        %5314 = vmatpush1.bf16.msra.mxu0 %v5193
        %5315 = vmatprep.subr.bf16.mxu0 0
        %5316 = vmatpush1.bf16.msra.mxu0 %v5194
        %5317 = vmatprep.subr.bf16.mxu0 0
        %5318 = vmatpush1.bf16.msra.mxu0 %v5195
        %5319 = vmatprep.subr.bf16.mxu0 0
        %5320 = vmatpush1.bf16.msra.mxu0 %v5196
        %5321 = vmatprep.subr.bf16.mxu0 0
        %5322 = vmatpush1.bf16.msra.mxu0 %v5197
        %5323 = vmatprep.subr.bf16.mxu0 0
        %5324 = vmatpush1.bf16.msra.mxu0 %v5198
        %5325 = vmatprep.subr.bf16.mxu0 0
        %5326 = vmatpush1.bf16.msra.mxu0 %v5199
        %5327 = vmatprep.subr.bf16.mxu0 0
        %5328 = vmatpush1.bf16.msra.mxu0 %v5200
        %5329 = vmatprep.mubr.bf16.mxu0 %v4922
        %5330 = vmatmul.mubr.bf16.gmra.mrb[0].mxu0 %v4921
        %v5331 = vpop.f32.mrb[0].mxu0
        %v5332 = vadd.f32 %v5284, %v5331
        %v5333 = vpop.f32.mrb[0].mxu0
        %v5334 = vpop.f32.mrb[0].mxu0
        %v5335 = vadd.f32 %v5287, %v5334
        %v5336 = vpop.f32.mrb[0].mxu0
        %5337 = vmatprep.mubr.bf16.mxu0 %v4927
        %5338 = vmatmul.mubr.bf16.gmra.mrb[0].mxu0 %v4926
        %v5339 = vpop.f32.mrb[0].mxu0
        %v5340 = vadd.f32 %v5292, %v5339
        %v5341 = vpop.f32.mrb[0].mxu0
        %v5342 = vpop.f32.mrb[0].mxu0
        %v5343 = vpop.f32.mrb[0].mxu0
        %5344 = vdwg.mxu0
        %5345 = vmatprep.subr.bf16.mxu0 0
        %5346 = vmatpush1.bf16.msra.mxu0 %v5201
        %5347 = vmatprep.subr.bf16.mxu0 0
        %5348 = vmatpush1.bf16.msra.mxu0 %v5202
        %5349 = vmatprep.subr.bf16.mxu0 0
        %5350 = vmatpush1.bf16.msra.mxu0 %v5203
        %5351 = vmatprep.subr.bf16.mxu0 0
        %5352 = vmatpush1.bf16.msra.mxu0 %v5204
        %5353 = vmatprep.subr.bf16.mxu0 0
        %5354 = vmatpush1.bf16.msra.mxu0 %v5205
        %5355 = vmatprep.subr.bf16.mxu0 0
        %5356 = vmatpush1.bf16.msra.mxu0 %v5206
        %5357 = vmatprep.subr.bf16.mxu0 0
        %5358 = vmatpush1.bf16.msra.mxu0 %v5207
        %5359 = vmatprep.subr.bf16.mxu0 0
        %5360 = vmatpush1.bf16.msra.mxu0 %v5208
        %5361 = vmatprep.subr.bf16.mxu0 0
        %5362 = vmatpush1.bf16.msra.mxu0 0
        %5363 = vmatprep.subr.bf16.mxu0 0
        %5364 = vmatpush1.bf16.msra.mxu0 0
        %5365 = vmatprep.subr.bf16.mxu0 0
        %5366 = vmatpush1.bf16.msra.mxu0 0
        %5367 = vmatprep.subr.bf16.mxu0 0
        %5368 = vmatpush1.bf16.msra.mxu0 0
        %5369 = vmatprep.subr.bf16.mxu0 0
        %5370 = vmatpush1.bf16.msra.mxu0 0
        %5371 = vmatprep.subr.bf16.mxu0 0
        %5372 = vmatpush1.bf16.msra.mxu0 0
        %5373 = vmatprep.subr.bf16.mxu0 0
        %5374 = vmatpush1.bf16.msra.mxu0 0
        %5375 = vmatprep.subr.bf16.mxu0 0
        %5376 = vmatpush1.bf16.msra.mxu0 0
        %5377 = vmatprep.mubr.bf16.mxu0 0
        %5378 = vmatmul.mubr.bf16.gmra.mrb[0].mxu0 %v4923
        %v5379 = vpop.f32.mrb[0].mxu0
        %v5380 = vadd.f32 %v5332, %v5379
        %v5381 = vpop.f32.mrb[0].mxu0
        %v5382 = vpop.f32.mrb[0].mxu0
        %v5383 = vadd.f32 %v5335, %v5382
        %v5384 = vpop.f32.mrb[0].mxu0
        %5385 = vmatprep.mubr.bf16.mxu0 0
        %5386 = vmatmul.mubr.bf16.gmra.mrb[0].mxu0 %v4928
        %v5387 = vpop.f32.mrb[0].mxu0
        %v5388 = vadd.f32 %v5340, %v5387
        %v5389 = vpop.f32.mrb[0].mxu0
        %v5390 = vpop.f32.mrb[0].mxu0
        %v5391 = vpop.f32.mrb[0].mxu0
        %5392 = vdwg.mxu0
        %5393 = vst [vmem:[%s205] sm:$0xff] %v5380
        %5394 = vst [vmem:[%s205 + $0x8] sm:$0xff] %v5383
        %5395 = vst [vmem:[%s205 + $0x10] sm:$0xff] %v5388
        %s5396 = smul.u32 3, %s16
        %p5397 = scmp.lt.s32.totalorder %s5396, 5
        %s5398 = scalar_select %p5397, %s5396, 5
        %s5399 = smul.addr %s5398, 8
        %s5400 = scalar_lea.vmem %s3, %s5399
        // Predicated region
        $region41: #{cnn_classifier_forward.2} parent=31 // pred_check
          %p5401 = pneg %p102
        $region42: #{cnn_classifier_forward.2} parent=31 // pred_check_branch
          %5403 = sbr.rel (%p5401) target = $region44
        $region43: #{cnn_classifier_forward.2} parent=31 // pred_region
          %s5404 = smul.u32 3, %s16
        $region44: #{cnn_classifier_forward.2} parent=31 // pred_fallthru
          _
      $region32: #{cnn_classifier_forward.2} parent=5 // pred_fallthru
        _
      %p5405 = scmp.le.s32.totalorder 2, %s11
      // Predicated region
      $region45: #{cnn_classifier_forward.2} parent=5 // pred_check
        %p5406 = pneg %p5405
      $region46: #{cnn_classifier_forward.2} parent=5 // pred_check_branch
        %5408 = sbr.rel (%p5406) target = $region48
      $region47: #{cnn_classifier_forward.2} parent=5 // pred_region
        %s5409 = ssub.s32 %s11, 2
        // Predicated region
        $region49: #{cnn_classifier_forward.2} parent=47 // pred_check
          %p5410 = pneg %p108
        $region50: #{cnn_classifier_forward.2} parent=47 // pred_check_branch
          %5412 = sbr.rel (%p5410) target = $region52
        $region51: #{cnn_classifier_forward.2} parent=47 // pred_region
          %s5413 = smul.u32 3, %s17
          %p5414 = scmp.lt.s32.totalorder %s5413, 5
          %s5415 = scalar_select %p5414, %s5413, 5
          %s5416 = smul.addr %s5415, 8
          %s5417 = scalar_lea.vmem %s3, %s5416
        $region52: #{cnn_classifier_forward.2} parent=47 // pred_fallthru
          _
      $region48: #{cnn_classifier_forward.2} parent=5 // pred_fallthru
        _
    $region6: #{cnn_classifier_forward.2} parent=1 // loop_footer
      %s15 = sadd.s32 1, %s11
    $region7: #{cnn_classifier_forward.2} parent=1 // loop_footer_branch
      %10 = sbr.rel target = $region3
    $region8: #{cnn_classifier_forward.2} parent=1 // loop_exit
      _
    %5418 = vsyncpa [#allocation3], 1
    %s5419 = scalar_lea.sflag [#allocation3], 1
    %5420 = vsyncpa %s5419, 1
    %5421 = vsyncpa [#allocation5], 1

// kernel: cnn_classifier_forward.3
$region0: #{cnn_classifier_forward.3}
  #allocation0 [shape = 'u32[]', space=smem, size = 0x4, offset = 0x4, fixed_abs, tag = 'smem constant byte address 0x4 - core index']
  #allocation1 [shape = 'u32[144,128]{1,0:T(1,128)}', space=vmem, size = 0x12000, scoped, tag = 'internal scratch']
  %s0 = inlined_call_operand.vmem [shape: bf16[25,16,128], index: 0, kind: input, shape index: {}]
  %s1 = inlined_call_operand.vmem [shape: f32[8,28], index: 1, kind: input, shape index: {}]
  %s2 = inlined_call_operand.vmem [shape: f32[8,128], index: 2, kind: output, shape index: {}]
  %s3 = sld [smem:[#allocation0]]
  $region22: #{cnn_classifier_forward.3} parent=0
    _
  %s5 = ssub.s32 1, %s3
  %s6 = scalar_select 0, %s5, %s3
  $region1: #{cnn_classifier_forward.3} parent=0
    #allocation2 [shape = 'u8[4096]{0}', space=smem, size = 0x1000, scoped, tag = 'input window, operand 1, single buffered']
    #allocation3 [shape = 's32[1]{0}', space=sflag, size = 0x4, scoped, tag = 'scoped memory for cnn_classifier_forward.3']
    %7 = vsyncpa [#allocation3], 0
    // Predicated region
    $region2: #{cnn_classifier_forward.3} parent=1 // pred_check
      _
    $region3: #{cnn_classifier_forward.3} parent=1 // pred_check_branch
      %9 = sbr.rel (0) target = $region5
    $region4: #{cnn_classifier_forward.3} parent=1 // pred_region
      _
    $region5: #{cnn_classifier_forward.3} parent=1 // pred_fallthru
      _
    // Predicated region
    $region6: #{cnn_classifier_forward.3} parent=1 // pred_check
      _
    $region7: #{cnn_classifier_forward.3} parent=1 // pred_check_branch
      %11 = sbr.rel (0) target = $region9
    $region8: #{cnn_classifier_forward.3} parent=1 // pred_region
      %s13 = ssub.s32 128, 128
      %14 = vsyncadd [#allocation3], %s13
      %s16 = sshll.u32 %s1, 4
      %s17 = int_to_ptr.vmem [resolvable:$true] %s16
      %19 = dma.vmem_to_smem %s17, 128, [#allocation2], [#allocation3]
    $region9: #{cnn_classifier_forward.3} parent=1 // pred_fallthru
      _
    // Predicated region
    $region10: #{cnn_classifier_forward.3} parent=1 // pred_check
      _
    $region11: #{cnn_classifier_forward.3} parent=1 // pred_check_branch
      %21 = sbr.rel (0) target = $region13
    $region12: #{cnn_classifier_forward.3} parent=1 // pred_region
      %22 = dma.done [#allocation3], 128
    $region13: #{cnn_classifier_forward.3} parent=1 // pred_fallthru
      _
    %23 = sfence
    %v24 = vld [vmem:[%s0] sm:$0xf]
    %v25 = vld [vmem:[%s0 + $0x4] sm:$0xf]
    %v26 = vunpack.c.l.bf16 %v24
    %v27 = vunpack.c.l.bf16 %v25
    %s28 = sld [smem:[#allocation2]]
    %v29 = vstv %s28
    %v30 = vmul.f32 %v29, %v26
    %v31 = vmul.f32 %v29, %v27
    %s32 = sld [smem:[#allocation2 + $0x80]]
    %v33 = vstv %s32
    %v34 = vmul.f32 %v33, %v26
    %v35 = vmul.f32 %v33, %v27
    %s36 = sld [smem:[#allocation2 + $0x100]]
    %v37 = vstv %s36
    %v38 = vmul.f32 %v37, %v26
    %v39 = vmul.f32 %v37, %v27
    %s40 = sld [smem:[#allocation2 + $0x180]]
    %v41 = vstv %s40
    %v42 = vmul.f32 %v41, %v26
    %v43 = vmul.f32 %v41, %v27
    %s44 = sld [smem:[#allocation2 + $0x200]]
    %v45 = vstv %s44
    %v46 = vmul.f32 %v45, %v26
    %v47 = vmul.f32 %v45, %v27
    %s48 = sld [smem:[#allocation2 + $0x280]]
    %v49 = vstv %s48
    %v50 = vmul.f32 %v49, %v26
    %v51 = vmul.f32 %v49, %v27
    %s52 = sld [smem:[#allocation2 + $0x300]]
    %v53 = vstv %s52
    %v54 = vmul.f32 %v53, %v26
    %v55 = vmul.f32 %v53, %v27
    %s56 = sld [smem:[#allocation2 + $0x380]]
    %v57 = vstv %s56
    %v58 = vmul.f32 %v57, %v26
    %v59 = vmul.f32 %v57, %v27
    %s60 = scalar_lea.vmem %s0, 8
    %v61 = vld [vmem:[%s60] sm:$0xf]
    %v62 = vld [vmem:[%s60 + $0x4] sm:$0xf]
    %v63 = vunpack.c.l.bf16 %v61
    %v64 = vunpack.c.l.bf16 %v62
    %s65 = sld [smem:[#allocation2 + $0x1]]
    %v66 = vstv %s65
    %v67 = vmul.f32 %v66, %v63
    %v68 = vmul.f32 %v66, %v64
    %v69 = vadd.f32 %v30, %v67
    %v70 = vadd.f32 %v31, %v68
    %s71 = sld [smem:[#allocation2 + $0x81]]
    %v72 = vstv %s71
    %v73 = vmul.f32 %v72, %v63
    %v74 = vmul.f32 %v72, %v64
    %v75 = vadd.f32 %v34, %v73
    %v76 = vadd.f32 %v35, %v74
    %s77 = sld [smem:[#allocation2 + $0x101]]
    %v78 = vstv %s77
    %v79 = vmul.f32 %v78, %v63
    %v80 = vmul.f32 %v78, %v64
    %v81 = vadd.f32 %v38, %v79
    %v82 = vadd.f32 %v39, %v80
    %s83 = sld [smem:[#allocation2 + $0x181]]
    %v84 = vstv %s83
    %v85 = vmul.f32 %v84, %v63
    %v86 = vmul.f32 %v84, %v64
    %v87 = vadd.f32 %v42, %v85
    %v88 = vadd.f32 %v43, %v86
    %s89 = sld [smem:[#allocation2 + $0x201]]
    %v90 = vstv %s89
    %v91 = vmul.f32 %v90, %v63
    %v92 = vmul.f32 %v90, %v64
    %v93 = vadd.f32 %v46, %v91
    %v94 = vadd.f32 %v47, %v92
    %s95 = sld [smem:[#allocation2 + $0x281]]
    %v96 = vstv %s95
    %v97 = vmul.f32 %v96, %v63
    %v98 = vmul.f32 %v96, %v64
    %v99 = vadd.f32 %v50, %v97
    %v100 = vadd.f32 %v51, %v98
    %s101 = sld [smem:[#allocation2 + $0x301]]
    %v102 = vstv %s101
    %v103 = vmul.f32 %v102, %v63
    %v104 = vmul.f32 %v102, %v64
    %v105 = vadd.f32 %v54, %v103
    %v106 = vadd.f32 %v55, %v104
    %s107 = sld [smem:[#allocation2 + $0x381]]
    %v108 = vstv %s107
    %v109 = vmul.f32 %v108, %v63
    %v110 = vmul.f32 %v108, %v64
    %v111 = vadd.f32 %v58, %v109
    %v112 = vadd.f32 %v59, %v110
    %s113 = scalar_lea.vmem %s0, 16
    %v114 = vld [vmem:[%s113] sm:$0xf]
    %v115 = vld [vmem:[%s113 + $0x4] sm:$0xf]
    %v116 = vunpack.c.l.bf16 %v114
    %v117 = vunpack.c.l.bf16 %v115
    %s118 = sld [smem:[#allocation2 + $0x2]]
    %v119 = vstv %s118
    %v120 = vmul.f32 %v119, %v116
    %v121 = vmul.f32 %v119, %v117
    %v122 = vadd.f32 %v69, %v120
    %v123 = vadd.f32 %v70, %v121
    %s124 = sld [smem:[#allocation2 + $0x82]]
    %v125 = vstv %s124
    %v126 = vmul.f32 %v125, %v116
    %v127 = vmul.f32 %v125, %v117
    %v128 = vadd.f32 %v75, %v126
    %v129 = vadd.f32 %v76, %v127
    %s130 = sld [smem:[#allocation2 + $0x102]]
    %v131 = vstv %s130
    %v132 = vmul.f32 %v131, %v116
    %v133 = vmul.f32 %v131, %v117
    %v134 = vadd.f32 %v81, %v132
    %v135 = vadd.f32 %v82, %v133
    %s136 = sld [smem:[#allocation2 + $0x182]]
    %v137 = vstv %s136
    %v138 = vmul.f32 %v137, %v116
    %v139 = vmul.f32 %v137, %v117
    %v140 = vadd.f32 %v87, %v138
    %v141 = vadd.f32 %v88, %v139
    %s142 = sld [smem:[#allocation2 + $0x202]]
    %v143 = vstv %s142
    %v144 = vmul.f32 %v143, %v116
    %v145 = vmul.f32 %v143, %v117
    %v146 = vadd.f32 %v93, %v144
    %v147 = vadd.f32 %v94, %v145
    %s148 = sld [smem:[#allocation2 + $0x282]]
    %v149 = vstv %s148
    %v150 = vmul.f32 %v149, %v116
    %v151 = vmul.f32 %v149, %v117
    %v152 = vadd.f32 %v99, %v150
    %v153 = vadd.f32 %v100, %v151
    %s154 = sld [smem:[#allocation2 + $0x302]]
    %v155 = vstv %s154
    %v156 = vmul.f32 %v155, %v116
    %v157 = vmul.f32 %v155, %v117
    %v158 = vadd.f32 %v105, %v156
    %v159 = vadd.f32 %v106, %v157
    %s160 = sld [smem:[#allocation2 + $0x382]]
    %v161 = vstv %s160
    %v162 = vmul.f32 %v161, %v116
    %v163 = vmul.f32 %v161, %v117
    %v164 = vadd.f32 %v111, %v162
    %v165 = vadd.f32 %v112, %v163
    %s166 = scalar_lea.vmem %s0, 24
    %v167 = vld [vmem:[%s166] sm:$0xf]
    %v168 = vld [vmem:[%s166 + $0x4] sm:$0xf]
    %v169 = vunpack.c.l.bf16 %v167
    %v170 = vunpack.c.l.bf16 %v168
    %s171 = sld [smem:[#allocation2 + $0x3]]
    %v172 = vstv %s171
    %v173 = vmul.f32 %v172, %v169
    %v174 = vmul.f32 %v172, %v170
    %v175 = vadd.f32 %v122, %v173
    %v176 = vadd.f32 %v123, %v174
    %s177 = sld [smem:[#allocation2 + $0x83]]
    %v178 = vstv %s177
    %v179 = vmul.f32 %v178, %v169
    %v180 = vmul.f32 %v178, %v170
    %v181 = vadd.f32 %v128, %v179
    %v182 = vadd.f32 %v129, %v180
    %s183 = sld [smem:[#allocation2 + $0x103]]
    %v184 = vstv %s183
    %v185 = vmul.f32 %v184, %v169
    %v186 = vmul.f32 %v184, %v170
    %v187 = vadd.f32 %v134, %v185
    %v188 = vadd.f32 %v135, %v186
    %s189 = sld [smem:[#allocation2 + $0x183]]
    %v190 = vstv %s189
    %v191 = vmul.f32 %v190, %v169
    %v192 = vmul.f32 %v190, %v170
    %v193 = vadd.f32 %v140, %v191
    %v194 = vadd.f32 %v141, %v192
    %s195 = sld [smem:[#allocation2 + $0x203]]
    %v196 = vstv %s195
    %v197 = vmul.f32 %v196, %v169
    %v198 = vmul.f32 %v196, %v170
    %v199 = vadd.f32 %v146, %v197
    %v200 = vadd.f32 %v147, %v198
    %s201 = sld [smem:[#allocation2 + $0x283]]
    %v202 = vstv %s201
    %v203 = vmul.f32 %v202, %v169
    %v204 = vmul.f32 %v202, %v170
    %v205 = vadd.f32 %v152, %v203
    %v206 = vadd.f32 %v153, %v204
    %s207 = sld [smem:[#allocation2 + $0x303]]
    %v208 = vstv %s207
    %v209 = vmul.f32 %v208, %v169
    %v210 = vmul.f32 %v208, %v170
    %v211 = vadd.f32 %v158, %v209
    %v212 = vadd.f32 %v159, %v210
    %s213 = sld [smem:[#allocation2 + $0x383]]
    %v214 = vstv %s213
    %v215 = vmul.f32 %v214, %v169
    %v216 = vmul.f32 %v214, %v170
    %v217 = vadd.f32 %v164, %v215
    %v218 = vadd.f32 %v165, %v216
    %s219 = scalar_lea.vmem %s0, 32
    %v220 = vld [vmem:[%s219] sm:$0xf]
    %v221 = vld [vmem:[%s219 + $0x4] sm:$0xf]
    %v222 = vunpack.c.l.bf16 %v220
    %v223 = vunpack.c.l.bf16 %v221
    %s224 = sld [smem:[#allocation2 + $0x4]]
    %v225 = vstv %s224
    %v226 = vmul.f32 %v225, %v222
    %v227 = vmul.f32 %v225, %v223
    %v228 = vadd.f32 %v175, %v226
    %v229 = vadd.f32 %v176, %v227
    %s230 = sld [smem:[#allocation2 + $0x84]]
    %v231 = vstv %s230
    %v232 = vmul.f32 %v231, %v222
    %v233 = vmul.f32 %v231, %v223
    %v234 = vadd.f32 %v181, %v232
    %v235 = vadd.f32 %v182, %v233
    %s236 = sld [smem:[#allocation2 + $0x104]]
    %v237 = vstv %s236
    %v238 = vmul.f32 %v237, %v222
    %v239 = vmul.f32 %v237, %v223
    %v240 = vadd.f32 %v187, %v238
    %v241 = vadd.f32 %v188, %v239
    %s242 = sld [smem:[#allocation2 + $0x184]]
    %v243 = vstv %s242
    %v244 = vmul.f32 %v243, %v222
    %v245 = vmul.f32 %v243, %v223
    %v246 = vadd.f32 %v193, %v244
    %v247 = vadd.f32 %v194, %v245
    %s248 = sld [smem:[#allocation2 + $0x204]]
    %v249 = vstv %s248
    %v250 = vmul.f32 %v249, %v222
    %v251 = vmul.f32 %v249, %v223
    %v252 = vadd.f32 %v199, %v250
    %v253 = vadd.f32 %v200, %v251
    %s254 = sld [smem:[#allocation2 + $0x284]]
    %v255 = vstv %s254
    %v256 = vmul.f32 %v255, %v222
    %v257 = vmul.f32 %v255, %v223
    %v258 = vadd.f32 %v205, %v256
    %v259 = vadd.f32 %v206, %v257
    %s260 = sld [smem:[#allocation2 + $0x304]]
    %v261 = vstv %s260
    %v262 = vmul.f32 %v261, %v222
    %v263 = vmul.f32 %v261, %v223
    %v264 = vadd.f32 %v211, %v262
    %v265 = vadd.f32 %v212, %v263
    %s266 = sld [smem:[#allocation2 + $0x384]]
    %v267 = vstv %s266
    %v268 = vmul.f32 %v267, %v222
    %v269 = vmul.f32 %v267, %v223
    %v270 = vadd.f32 %v217, %v268
    %v271 = vadd.f32 %v218, %v269
    %s272 = scalar_lea.vmem %s0, 40
    %v273 = vld [vmem:[%s272] sm:$0xf]
    %v274 = vld [vmem:[%s272 + $0x4] sm:$0xf]
    %v275 = vunpack.c.l.bf16 %v273
    %v276 = vunpack.c.l.bf16 %v274
    %s277 = sld [smem:[#allocation2 + $0x5]]
    %v278 = vstv %s277
    %v279 = vmul.f32 %v278, %v275
    %v280 = vmul.f32 %v278, %v276
    %v281 = vadd.f32 %v228, %v279
    %v282 = vadd.f32 %v229, %v280
    %s283 = sld [smem:[#allocation2 + $0x85]]
    %v284 = vstv %s283
    %v285 = vmul.f32 %v284, %v275
    %v286 = vmul.f32 %v284, %v276
    %v287 = vadd.f32 %v234, %v285
    %v288 = vadd.f32 %v235, %v286
    %s289 = sld [smem:[#allocation2 + $0x105]]
    %v290 = vstv %s289
    %v291 = vmul.f32 %v290, %v275
    %v292 = vmul.f32 %v290, %v276
    %v293 = vadd.f32 %v240, %v291
    %v294 = vadd.f32 %v241, %v292
    %s295 = sld [smem:[#allocation2 + $0x185]]
    %v296 = vstv %s295
    %v297 = vmul.f32 %v296, %v275
    %v298 = vmul.f32 %v296, %v276
    %v299 = vadd.f32 %v246, %v297
    %v300 = vadd.f32 %v247, %v298
    %s301 = sld [smem:[#allocation2 + $0x205]]
    %v302 = vstv %s301
    %v303 = vmul.f32 %v302, %v275
    %v304 = vmul.f32 %v302, %v276
    %v305 = vadd.f32 %v252, %v303
    %v306 = vadd.f32 %v253, %v304
    %s307 = sld [smem:[#allocation2 + $0x285]]
    %v308 = vstv %s307
    %v309 = vmul.f32 %v308, %v275
    %v310 = vmul.f32 %v308, %v276
    %v311 = vadd.f32 %v258, %v309
    %v312 = vadd.f32 %v259, %v310
    %s313 = sld [smem:[#allocation2 + $0x305]]
    %v314 = vstv %s313
    %v315 = vmul.f32 %v314, %v275
    %v316 = vmul.f32 %v314, %v276
    %v317 = vadd.f32 %v264, %v315
    %v318 = vadd.f32 %v265, %v316
    %s319 = sld [smem:[#allocation2 + $0x385]]
    %v320 = vstv %s319
    %v321 = vmul.f32 %v320, %v275
    %v322 = vmul.f32 %v320, %v276
    %v323 = vadd.f32 %v270, %v321
    %v324 = vadd.f32 %v271, %v322
    %s325 = scalar_lea.vmem %s0, 48
    %v326 = vld [vmem:[%s325] sm:$0xf]
    %v327 = vld [vmem:[%s325 + $0x4] sm:$0xf]
    %v328 = vunpack.c.l.bf16 %v326
    %v329 = vunpack.c.l.bf16 %v327
    %s330 = sld [smem:[#allocation2 + $0x6]]
    %v331 = vstv %s330
    %v332 = vmul.f32 %v331, %v328
    %v333 = vmul.f32 %v331, %v329
    %v334 = vadd.f32 %v281, %v332
    %v335 = vadd.f32 %v282, %v333
    %s336 = sld [smem:[#allocation2 + $0x86]]
    %v337 = vstv %s336
    %v338 = vmul.f32 %v337, %v328
    %v339 = vmul.f32 %v337, %v329
    %v340 = vadd.f32 %v287, %v338
    %v341 = vadd.f32 %v288, %v339
    %s342 = sld [smem:[#allocation2 + $0x106]]
    %v343 = vstv %s342
    %v344 = vmul.f32 %v343, %v328
    %v345 = vmul.f32 %v343, %v329
    %v346 = vadd.f32 %v293, %v344
    %v347 = vadd.f32 %v294, %v345
    %s348 = sld [smem:[#allocation2 + $0x186]]
    %v349 = vstv %s348
    %v350 = vmul.f32 %v349, %v328
    %v351 = vmul.f32 %v349, %v329
    %v352 = vadd.f32 %v299, %v350
    %v353 = vadd.f32 %v300, %v351
    %s354 = sld [smem:[#allocation2 + $0x206]]
    %v355 = vstv %s354
    %v356 = vmul.f32 %v355, %v328
    %v357 = vmul.f32 %v355, %v329
    %v358 = vadd.f32 %v305, %v356
    %v359 = vadd.f32 %v306, %v357
    %s360 = sld [smem:[#allocation2 + $0x286]]
    %v361 = vstv %s360
    %v362 = vmul.f32 %v361, %v328
    %v363 = vmul.f32 %v361, %v329
    %v364 = vadd.f32 %v311, %v362
    %v365 = vadd.f32 %v312, %v363
    %s366 = sld [smem:[#allocation2 + $0x306]]
    %v367 = vstv %s366
    %v368 = vmul.f32 %v367, %v328
    %v369 = vmul.f32 %v367, %v329
    %v370 = vadd.f32 %v317, %v368
    %v371 = vadd.f32 %v318, %v369
    %s372 = sld [smem:[#allocation2 + $0x386]]
    %v373 = vstv %s372
    %v374 = vmul.f32 %v373, %v328
    %v375 = vmul.f32 %v373, %v329
    %v376 = vadd.f32 %v323, %v374
    %v377 = vadd.f32 %v324, %v375
    %s378 = scalar_lea.vmem %s0, 56
    %v379 = vld [vmem:[%s378] sm:$0xf]
    %v380 = vld [vmem:[%s378 + $0x4] sm:$0xf]
    %v381 = vunpack.c.l.bf16 %v379
    %v382 = vunpack.c.l.bf16 %v380
    %s383 = sld [smem:[#allocation2 + $0x7]]
    %v384 = vstv %s383
    %v385 = vmul.f32 %v384, %v381
    %v386 = vmul.f32 %v384, %v382
    %v387 = vadd.f32 %v334, %v385
    %v388 = vadd.f32 %v335, %v386
    %s389 = sld [smem:[#allocation2 + $0x87]]
    %v390 = vstv %s389
    %v391 = vmul.f32 %v390, %v381
    %v392 = vmul.f32 %v390, %v382
    %v393 = vadd.f32 %v340, %v391
    %v394 = vadd.f32 %v341, %v392
    %s395 = sld [smem:[#allocation2 + $0x107]]
    %v396 = vstv %s395
    %v397 = vmul.f32 %v396, %v381
    %v398 = vmul.f32 %v396, %v382
    %v399 = vadd.f32 %v346, %v397
    %v400 = vadd.f32 %v347, %v398
    %s401 = sld [smem:[#allocation2 + $0x187]]
    %v402 = vstv %s401
    %v403 = vmul.f32 %v402, %v381
    %v404 = vmul.f32 %v402, %v382
    %v405 = vadd.f32 %v352, %v403
    %v406 = vadd.f32 %v353, %v404
    %s407 = sld [smem:[#allocation2 + $0x207]]
    %v408 = vstv %s407
    %v409 = vmul.f32 %v408, %v381
    %v410 = vmul.f32 %v408, %v382
    %v411 = vadd.f32 %v358, %v409
    %v412 = vadd.f32 %v359, %v410
    %s413 = sld [smem:[#allocation2 + $0x287]]
    %v414 = vstv %s413
    %v415 = vmul.f32 %v414, %v381
    %v416 = vmul.f32 %v414, %v382
    %v417 = vadd.f32 %v364, %v415
    %v418 = vadd.f32 %v365, %v416
    %s419 = sld [smem:[#allocation2 + $0x307]]
    %v420 = vstv %s419
    %v421 = vmul.f32 %v420, %v381
    %v422 = vmul.f32 %v420, %v382
    %v423 = vadd.f32 %v370, %v421
    %v424 = vadd.f32 %v371, %v422
    %s425 = sld [smem:[#allocation2 + $0x387]]
    %v426 = vstv %s425
    %v427 = vmul.f32 %v426, %v381
    %v428 = vmul.f32 %v426, %v382
    %v429 = vadd.f32 %v376, %v427
    %v430 = vadd.f32 %v377, %v428
    %s431 = scalar_lea.vmem %s0, 64
    %v432 = vld [vmem:[%s431] sm:$0xf]
    %v433 = vld [vmem:[%s431 + $0x4] sm:$0xf]
    %v434 = vunpack.c.l.bf16 %v432
    %v435 = vunpack.c.l.bf16 %v433
    %s436 = sld [smem:[#allocation2 + $0x8]]
    %v437 = vstv %s436
    %v438 = vmul.f32 %v437, %v434
    %v439 = vmul.f32 %v437, %v435
    %v440 = vadd.f32 %v387, %v438
    %v441 = vadd.f32 %v388, %v439
    %s442 = sld [smem:[#allocation2 + $0x88]]
    %v443 = vstv %s442
    %v444 = vmul.f32 %v443, %v434
    %v445 = vmul.f32 %v443, %v435
    %v446 = vadd.f32 %v393, %v444
    %v447 = vadd.f32 %v394, %v445
    %s448 = sld [smem:[#allocation2 + $0x108]]
    %v449 = vstv %s448
    %v450 = vmul.f32 %v449, %v434
    %v451 = vmul.f32 %v449, %v435
    %v452 = vadd.f32 %v399, %v450
    %v453 = vadd.f32 %v400, %v451
    %s454 = sld [smem:[#allocation2 + $0x188]]
    %v455 = vstv %s454
    %v456 = vmul.f32 %v455, %v434
    %v457 = vmul.f32 %v455, %v435
    %v458 = vadd.f32 %v405, %v456
    %v459 = vadd.f32 %v406, %v457
    %s460 = sld [smem:[#allocation2 + $0x208]]
    %v461 = vstv %s460
    %v462 = vmul.f32 %v461, %v434
    %v463 = vmul.f32 %v461, %v435
    %v464 = vadd.f32 %v411, %v462
    %v465 = vadd.f32 %v412, %v463
    %s466 = sld [smem:[#allocation2 + $0x288]]
    %v467 = vstv %s466
    %v468 = vmul.f32 %v467, %v434
    %v469 = vmul.f32 %v467, %v435
    %v470 = vadd.f32 %v417, %v468
    %v471 = vadd.f32 %v418, %v469
    %s472 = sld [smem:[#allocation2 + $0x308]]
    %v473 = vstv %s472
    %v474 = vmul.f32 %v473, %v434
    %v475 = vmul.f32 %v473, %v435
    %v476 = vadd.f32 %v423, %v474
    %v477 = vadd.f32 %v424, %v475
    %s478 = sld [smem:[#allocation2 + $0x388]]
    %v479 = vstv %s478
    %v480 = vmul.f32 %v479, %v434
    %v481 = vmul.f32 %v479, %v435
    %v482 = vadd.f32 %v429, %v480
    %v483 = vadd.f32 %v430, %v481
    %s484 = scalar_lea.vmem %s0, 72
    %v485 = vld [vmem:[%s484] sm:$0xf]
    %v486 = vld [vmem:[%s484 + $0x4] sm:$0xf]
    %v487 = vunpack.c.l.bf16 %v485
    %v488 = vunpack.c.l.bf16 %v486
    %s489 = sld [smem:[#allocation2 + $0x9]]
    %v490 = vstv %s489
    %v491 = vmul.f32 %v490, %v487
    %v492 = vmul.f32 %v490, %v488
    %v493 = vadd.f32 %v440, %v491
    %v494 = vadd.f32 %v441, %v492
    %s495 = sld [smem:[#allocation2 + $0x89]]
    %v496 = vstv %s495
    %v497 = vmul.f32 %v496, %v487
    %v498 = vmul.f32 %v496, %v488
    %v499 = vadd.f32 %v446, %v497
    %v500 = vadd.f32 %v447, %v498
    %s501 = sld [smem:[#allocation2 + $0x109]]
    %v502 = vstv %s501
    %v503 = vmul.f32 %v502, %v487
    %v504 = vmul.f32 %v502, %v488
    %v505 = vadd.f32 %v452, %v503
    %v506 = vadd.f32 %v453, %v504
    %s507 = sld [smem:[#allocation2 + $0x189]]
    %v508 = vstv %s507
    %v509 = vmul.f32 %v508, %v487
    %v510 = vmul.f32 %v508, %v488
    %v511 = vadd.f32 %v458, %v509
    %v512 = vadd.f32 %v459, %v510
    %s513 = sld [smem:[#allocation2 + $0x209]]
    %v514 = vstv %s513
    %v515 = vmul.f32 %v514, %v487
    %v516 = vmul.f32 %v514, %v488
    %v517 = vadd.f32 %v464, %v515
    %v518 = vadd.f32 %v465, %v516
    %s519 = sld [smem:[#allocation2 + $0x289]]
    %v520 = vstv %s519
    %v521 = vmul.f32 %v520, %v487
    %v522 = vmul.f32 %v520, %v488
    %v523 = vadd.f32 %v470, %v521
    %v524 = vadd.f32 %v471, %v522
    %s525 = sld [smem:[#allocation2 + $0x309]]
    %v526 = vstv %s525
    %v527 = vmul.f32 %v526, %v487
    %v528 = vmul.f32 %v526, %v488
    %v529 = vadd.f32 %v476, %v527
    %v530 = vadd.f32 %v477, %v528
    %s531 = sld [smem:[#allocation2 + $0x389]]
    %v532 = vstv %s531
    %v533 = vmul.f32 %v532, %v487
    %v534 = vmul.f32 %v532, %v488
    %v535 = vadd.f32 %v482, %v533
    %v536 = vadd.f32 %v483, %v534
    %s537 = scalar_lea.vmem %s0, 80
    %v538 = vld [vmem:[%s537] sm:$0xf]
    %v539 = vld [vmem:[%s537 + $0x4] sm:$0xf]
    %v540 = vunpack.c.l.bf16 %v538
    %v541 = vunpack.c.l.bf16 %v539
    %s542 = sld [smem:[#allocation2 + $0xa]]
    %v543 = vstv %s542
    %v544 = vmul.f32 %v543, %v540
    %v545 = vmul.f32 %v543, %v541
    %v546 = vadd.f32 %v493, %v544
    %v547 = vadd.f32 %v494, %v545
    %s548 = sld [smem:[#allocation2 + $0x8a]]
    %v549 = vstv %s548
    %v550 = vmul.f32 %v549, %v540
    %v551 = vmul.f32 %v549, %v541
    %v552 = vadd.f32 %v499, %v550
    %v553 = vadd.f32 %v500, %v551
    %s554 = sld [smem:[#allocation2 + $0x10a]]
    %v555 = vstv %s554
    %v556 = vmul.f32 %v555, %v540
    %v557 = vmul.f32 %v555, %v541
    %v558 = vadd.f32 %v505, %v556
    %v559 = vadd.f32 %v506, %v557
    %s560 = sld [smem:[#allocation2 + $0x18a]]
    %v561 = vstv %s560
    %v562 = vmul.f32 %v561, %v540
    %v563 = vmul.f32 %v561, %v541
    %v564 = vadd.f32 %v511, %v562
    %v565 = vadd.f32 %v512, %v563
    %s566 = sld [smem:[#allocation2 + $0x20a]]
    %v567 = vstv %s566
    %v568 = vmul.f32 %v567, %v540
    %v569 = vmul.f32 %v567, %v541
    %v570 = vadd.f32 %v517, %v568
    %v571 = vadd.f32 %v518, %v569
    %s572 = sld [smem:[#allocation2 + $0x28a]]
    %v573 = vstv %s572
    %v574 = vmul.f32 %v573, %v540
    %v575 = vmul.f32 %v573, %v541
    %v576 = vadd.f32 %v523, %v574
    %v577 = vadd.f32 %v524, %v575
    %s578 = sld [smem:[#allocation2 + $0x30a]]
    %v579 = vstv %s578
    %v580 = vmul.f32 %v579, %v540
    %v581 = vmul.f32 %v579, %v541
    %v582 = vadd.f32 %v529, %v580
    %v583 = vadd.f32 %v530, %v581
    %s584 = sld [smem:[#allocation2 + $0x38a]]
    %v585 = vstv %s584
    %v586 = vmul.f32 %v585, %v540
    %v587 = vmul.f32 %v585, %v541
    %v588 = vadd.f32 %v535, %v586
    %v589 = vadd.f32 %v536, %v587
    %s590 = scalar_lea.vmem %s0, 88
    %v591 = vld [vmem:[%s590] sm:$0xf]
    %v592 = vld [vmem:[%s590 + $0x4] sm:$0xf]
    %v593 = vunpack.c.l.bf16 %v591
    %v594 = vunpack.c.l.bf16 %v592
    %s595 = sld [smem:[#allocation2 + $0xb]]
    %v596 = vstv %s595
    %v597 = vmul.f32 %v596, %v593
    %v598 = vmul.f32 %v596, %v594
    %v599 = vadd.f32 %v546, %v597
    %v600 = vadd.f32 %v547, %v598
    %s601 = sld [smem:[#allocation2 + $0x8b]]
    %v602 = vstv %s601
    %v603 = vmul.f32 %v602, %v593
    %v604 = vmul.f32 %v602, %v594
    %v605 = vadd.f32 %v552, %v603
    %v606 = vadd.f32 %v553, %v604
    %s607 = sld [smem:[#allocation2 + $0x10b]]
    %v608 = vstv %s607
    %v609 = vmul.f32 %v608, %v593
    %v610 = vmul.f32 %v608, %v594
    %v611 = vadd.f32 %v558, %v609
    %v612 = vadd.f32 %v559, %v610
    %s613 = sld [smem:[#allocation2 + $0x18b]]
    %v614 = vstv %s613
    %v615 = vmul.f32 %v614, %v593
    %v616 = vmul.f32 %v614, %v594
    %v617 = vadd.f32 %v564, %v615
    %v618 = vadd.f32 %v565, %v616
    %s619 = sld [smem:[#allocation2 + $0x20b]]
    %v620 = vstv %s619
    %v621 = vmul.f32 %v620, %v593
    %v622 = vmul.f32 %v620, %v594
    %v623 = vadd.f32 %v570, %v621
    %v624 = vadd.f32 %v571, %v622
    %s625 = sld [smem:[#allocation2 + $0x28b]]
    %v626 = vstv %s625
    %v627 = vmul.f32 %v626, %v593
    %v628 = vmul.f32 %v626, %v594
    %v629 = vadd.f32 %v576, %v627
    %v630 = vadd.f32 %v577, %v628
    %s631 = sld [smem:[#allocation2 + $0x30b]]
    %v632 = vstv %s631
    %v633 = vmul.f32 %v632, %v593
    %v634 = vmul.f32 %v632, %v594
    %v635 = vadd.f32 %v582, %v633
    %v636 = vadd.f32 %v583, %v634
    %s637 = sld [smem:[#allocation2 + $0x38b]]
    %v638 = vstv %s637
    %v639 = vmul.f32 %v638, %v593
    %v640 = vmul.f32 %v638, %v594
    %v641 = vadd.f32 %v588, %v639
    %v642 = vadd.f32 %v589, %v640
    %s643 = scalar_lea.vmem %s0, 96
    %v644 = vld [vmem:[%s643] sm:$0xf]
    %v645 = vld [vmem:[%s643 + $0x4] sm:$0xf]
    %v646 = vunpack.c.l.bf16 %v644
    %v647 = vunpack.c.l.bf16 %v645
    %s648 = sld [smem:[#allocation2 + $0xc]]
    %v649 = vstv %s648
    %v650 = vmul.f32 %v649, %v646
    %v651 = vmul.f32 %v649, %v647
    %v652 = vadd.f32 %v599, %v650
    %v653 = vadd.f32 %v600, %v651
    %s654 = sld [smem:[#allocation2 + $0x8c]]
    %v655 = vstv %s654
    %v656 = vmul.f32 %v655, %v646
    %v657 = vmul.f32 %v655, %v647
    %v658 = vadd.f32 %v605, %v656
    %v659 = vadd.f32 %v606, %v657
    %s660 = sld [smem:[#allocation2 + $0x10c]]
    %v661 = vstv %s660
    %v662 = vmul.f32 %v661, %v646
    %v663 = vmul.f32 %v661, %v647
    %v664 = vadd.f32 %v611, %v662
    %v665 = vadd.f32 %v612, %v663
    %s666 = sld [smem:[#allocation2 + $0x18c]]
    %v667 = vstv %s666
    %v668 = vmul.f32 %v667, %v646
    %v669 = vmul.f32 %v667, %v647
    %v670 = vadd.f32 %v617, %v668
    %v671 = vadd.f32 %v618, %v669
    %s672 = sld [smem:[#allocation2 + $0x20c]]
    %v673 = vstv %s672
    %v674 = vmul.f32 %v673, %v646
    %v675 = vmul.f32 %v673, %v647
    %v676 = vadd.f32 %v623, %v674
    %v677 = vadd.f32 %v624, %v675
    %s678 = sld [smem:[#allocation2 + $0x28c]]
    %v679 = vstv %s678
    %v680 = vmul.f32 %v679, %v646
    %v681 = vmul.f32 %v679, %v647
    %v682 = vadd.f32 %v629, %v680
    %v683 = vadd.f32 %v630, %v681
    %s684 = sld [smem:[#allocation2 + $0x30c]]
    %v685 = vstv %s684
    %v686 = vmul.f32 %v685, %v646
    %v687 = vmul.f32 %v685, %v647
    %v688 = vadd.f32 %v635, %v686
    %v689 = vadd.f32 %v636, %v687
    %s690 = sld [smem:[#allocation2 + $0x38c]]
    %v691 = vstv %s690
    %v692 = vmul.f32 %v691, %v646
    %v693 = vmul.f32 %v691, %v647
    %v694 = vadd.f32 %v641, %v692
    %v695 = vadd.f32 %v642, %v693
    %s696 = scalar_lea.vmem %s0, 104
    %v697 = vld [vmem:[%s696] sm:$0xf]
    %v698 = vld [vmem:[%s696 + $0x4] sm:$0xf]
    %v699 = vunpack.c.l.bf16 %v697
    %v700 = vunpack.c.l.bf16 %v698
    %s701 = sld [smem:[#allocation2 + $0xd]]
    %v702 = vstv %s701
    %v703 = vmul.f32 %v702, %v699
    %v704 = vmul.f32 %v702, %v700
    %v705 = vadd.f32 %v652, %v703
    %v706 = vadd.f32 %v653, %v704
    %s707 = sld [smem:[#allocation2 + $0x8d]]
    %v708 = vstv %s707
    %v709 = vmul.f32 %v708, %v699
    %v710 = vmul.f32 %v708, %v700
    %v711 = vadd.f32 %v658, %v709
    %v712 = vadd.f32 %v659, %v710
    %s713 = sld [smem:[#allocation2 + $0x10d]]
    %v714 = vstv %s713
    %v715 = vmul.f32 %v714, %v699
    %v716 = vmul.f32 %v714, %v700
    %v717 = vadd.f32 %v664, %v715
    %v718 = vadd.f32 %v665, %v716
    %s719 = sld [smem:[#allocation2 + $0x18d]]
    %v720 = vstv %s719
    %v721 = vmul.f32 %v720, %v699
    %v722 = vmul.f32 %v720, %v700
    %v723 = vadd.f32 %v670, %v721
    %v724 = vadd.f32 %v671, %v722
    %s725 = sld [smem:[#allocation2 + $0x20d]]
    %v726 = vstv %s725
    %v727 = vmul.f32 %v726, %v699
    %v728 = vmul.f32 %v726, %v700
    %v729 = vadd.f32 %v676, %v727
    %v730 = vadd.f32 %v677, %v728
    %s731 = sld [smem:[#allocation2 + $0x28d]]
    %v732 = vstv %s731
    %v733 = vmul.f32 %v732, %v699
    %v734 = vmul.f32 %v732, %v700
    %v735 = vadd.f32 %v682, %v733
    %v736 = vadd.f32 %v683, %v734
    %s737 = sld [smem:[#allocation2 + $0x30d]]
    %v738 = vstv %s737
    %v739 = vmul.f32 %v738, %v699
    %v740 = vmul.f32 %v738, %v700
    %v741 = vadd.f32 %v688, %v739
    %v742 = vadd.f32 %v689, %v740
    %s743 = sld [smem:[#allocation2 + $0x38d]]
    %v744 = vstv %s743
    %v745 = vmul.f32 %v744, %v699
    %v746 = vmul.f32 %v744, %v700
    %v747 = vadd.f32 %v694, %v745
    %v748 = vadd.f32 %v695, %v746
    %s749 = scalar_lea.vmem %s0, 112
    %v750 = vld [vmem:[%s749] sm:$0xf]
    %v751 = vld [vmem:[%s749 + $0x4] sm:$0xf]
    %v752 = vunpack.c.l.bf16 %v750
    %v753 = vunpack.c.l.bf16 %v751
    %s754 = sld [smem:[#allocation2 + $0xe]]
    %v755 = vstv %s754
    %v756 = vmul.f32 %v755, %v752
    %v757 = vmul.f32 %v755, %v753
    %v758 = vadd.f32 %v705, %v756
    %v759 = vadd.f32 %v706, %v757
    %s760 = sld [smem:[#allocation2 + $0x8e]]
    %v761 = vstv %s760
    %v762 = vmul.f32 %v761, %v752
    %v763 = vmul.f32 %v761, %v753
    %v764 = vadd.f32 %v711, %v762
    %v765 = vadd.f32 %v712, %v763
    %s766 = sld [smem:[#allocation2 + $0x10e]]
    %v767 = vstv %s766
    %v768 = vmul.f32 %v767, %v752
    %v769 = vmul.f32 %v767, %v753
    %v770 = vadd.f32 %v717, %v768
    %v771 = vadd.f32 %v718, %v769
    %s772 = sld [smem:[#allocation2 + $0x18e]]
    %v773 = vstv %s772
    %v774 = vmul.f32 %v773, %v752
    %v775 = vmul.f32 %v773, %v753
    %v776 = vadd.f32 %v723, %v774
    %v777 = vadd.f32 %v724, %v775
    %s778 = sld [smem:[#allocation2 + $0x20e]]
    %v779 = vstv %s778
    %v780 = vmul.f32 %v779, %v752
    %v781 = vmul.f32 %v779, %v753
    %v782 = vadd.f32 %v729, %v780
    %v783 = vadd.f32 %v730, %v781
    %s784 = sld [smem:[#allocation2 + $0x28e]]
    %v785 = vstv %s784
    %v786 = vmul.f32 %v785, %v752
    %v787 = vmul.f32 %v785, %v753
    %v788 = vadd.f32 %v735, %v786
    %v789 = vadd.f32 %v736, %v787
    %s790 = sld [smem:[#allocation2 + $0x30e]]
    %v791 = vstv %s790
    %v792 = vmul.f32 %v791, %v752
    %v793 = vmul.f32 %v791, %v753
    %v794 = vadd.f32 %v741, %v792
    %v795 = vadd.f32 %v742, %v793
    %s796 = sld [smem:[#allocation2 + $0x38e]]
    %v797 = vstv %s796
    %v798 = vmul.f32 %v797, %v752
    %v799 = vmul.f32 %v797, %v753
    %v800 = vadd.f32 %v747, %v798
    %v801 = vadd.f32 %v748, %v799
    %s802 = scalar_lea.vmem %s0, 120
    %v803 = vld [vmem:[%s802] sm:$0xf]
    %v804 = vld [vmem:[%s802 + $0x4] sm:$0xf]
    %v805 = vunpack.c.l.bf16 %v803
    %v806 = vunpack.c.l.bf16 %v804
    %s807 = sld [smem:[#allocation2 + $0xf]]
    %v808 = vstv %s807
    %v809 = vmul.f32 %v808, %v805
    %v810 = vmul.f32 %v808, %v806
    %v811 = vadd.f32 %v758, %v809
    %v812 = vadd.f32 %v759, %v810
    %s813 = sld [smem:[#allocation2 + $0x8f]]
    %v814 = vstv %s813
    %v815 = vmul.f32 %v814, %v805
    %v816 = vmul.f32 %v814, %v806
    %v817 = vadd.f32 %v764, %v815
    %v818 = vadd.f32 %v765, %v816
    %s819 = sld [smem:[#allocation2 + $0x10f]]
    %v820 = vstv %s819
    %v821 = vmul.f32 %v820, %v805
    %v822 = vmul.f32 %v820, %v806
    %v823 = vadd.f32 %v770, %v821
    %v824 = vadd.f32 %v771, %v822
    %s825 = sld [smem:[#allocation2 + $0x18f]]
    %v826 = vstv %s825
    %v827 = vmul.f32 %v826, %v805
    %v828 = vmul.f32 %v826, %v806
    %v829 = vadd.f32 %v776, %v827
    %v830 = vadd.f32 %v777, %v828
    %s831 = sld [smem:[#allocation2 + $0x20f]]
    %v832 = vstv %s831
    %v833 = vmul.f32 %v832, %v805
    %v834 = vmul.f32 %v832, %v806
    %v835 = vadd.f32 %v782, %v833
    %v836 = vadd.f32 %v783, %v834
    %s837 = sld [smem:[#allocation2 + $0x28f]]
    %v838 = vstv %s837
    %v839 = vmul.f32 %v838, %v805
    %v840 = vmul.f32 %v838, %v806
    %v841 = vadd.f32 %v788, %v839
    %v842 = vadd.f32 %v789, %v840
    %s843 = sld [smem:[#allocation2 + $0x30f]]
    %v844 = vstv %s843
    %v845 = vmul.f32 %v844, %v805
    %v846 = vmul.f32 %v844, %v806
    %v847 = vadd.f32 %v794, %v845
    %v848 = vadd.f32 %v795, %v846
    %s849 = sld [smem:[#allocation2 + $0x38f]]
    %v850 = vstv %s849
    %v851 = vmul.f32 %v850, %v805
    %v852 = vmul.f32 %v850, %v806
    %v853 = vadd.f32 %v800, %v851
    %v854 = vadd.f32 %v801, %v852
    %s855 = scalar_lea.vmem %s0, 128
    %v856 = vld [vmem:[%s855] sm:$0xf]
    %v857 = vld [vmem:[%s855 + $0x4] sm:$0xf]
    %v858 = vunpack.c.l.bf16 %v856
    %v859 = vunpack.c.l.bf16 %v857
    %s860 = sld [smem:[#allocation2 + $0x10]]
    %v861 = vstv %s860
    %v862 = vmul.f32 %v861, %v858
    %v863 = vmul.f32 %v861, %v859
    %v864 = vadd.f32 %v811, %v862
    %v865 = vadd.f32 %v812, %v863
    %s866 = sld [smem:[#allocation2 + $0x90]]
    %v867 = vstv %s866
    %v868 = vmul.f32 %v867, %v858
    %v869 = vmul.f32 %v867, %v859
    %v870 = vadd.f32 %v817, %v868
    %v871 = vadd.f32 %v818, %v869
    %s872 = sld [smem:[#allocation2 + $0x110]]
    %v873 = vstv %s872
    %v874 = vmul.f32 %v873, %v858
    %v875 = vmul.f32 %v873, %v859
    %v876 = vadd.f32 %v823, %v874
    %v877 = vadd.f32 %v824, %v875
    %s878 = sld [smem:[#allocation2 + $0x190]]
    %v879 = vstv %s878
    %v880 = vmul.f32 %v879, %v858
    %v881 = vmul.f32 %v879, %v859
    %v882 = vadd.f32 %v829, %v880
    %v883 = vadd.f32 %v830, %v881
    %s884 = sld [smem:[#allocation2 + $0x210]]
    %v885 = vstv %s884
    %v886 = vmul.f32 %v885, %v858
    %v887 = vmul.f32 %v885, %v859
    %v888 = vadd.f32 %v835, %v886
    %v889 = vadd.f32 %v836, %v887
    %s890 = sld [smem:[#allocation2 + $0x290]]
    %v891 = vstv %s890
    %v892 = vmul.f32 %v891, %v858
    %v893 = vmul.f32 %v891, %v859
    %v894 = vadd.f32 %v841, %v892
    %v895 = vadd.f32 %v842, %v893
    %s896 = sld [smem:[#allocation2 + $0x310]]
    %v897 = vstv %s896
    %v898 = vmul.f32 %v897, %v858
    %v899 = vmul.f32 %v897, %v859
    %v900 = vadd.f32 %v847, %v898
    %v901 = vadd.f32 %v848, %v899
    %s902 = sld [smem:[#allocation2 + $0x390]]
    %v903 = vstv %s902
    %v904 = vmul.f32 %v903, %v858
    %v905 = vmul.f32 %v903, %v859
    %v906 = vadd.f32 %v853, %v904
    %v907 = vadd.f32 %v854, %v905
    %s908 = scalar_lea.vmem %s0, 136
    %v909 = vld [vmem:[%s908] sm:$0xf]
    %v910 = vld [vmem:[%s908 + $0x4] sm:$0xf]
    %v911 = vunpack.c.l.bf16 %v909
    %v912 = vunpack.c.l.bf16 %v910
    %s913 = sld [smem:[#allocation2 + $0x11]]
    %v914 = vstv %s913
    %v915 = vmul.f32 %v914, %v911
    %v916 = vmul.f32 %v914, %v912
    %v917 = vadd.f32 %v864, %v915
    %v918 = vadd.f32 %v865, %v916
    %s919 = sld [smem:[#allocation2 + $0x91]]
    %v920 = vstv %s919
    %v921 = vmul.f32 %v920, %v911
    %v922 = vmul.f32 %v920, %v912
    %v923 = vadd.f32 %v870, %v921
    %v924 = vadd.f32 %v871, %v922
    %s925 = sld [smem:[#allocation2 + $0x111]]
    %v926 = vstv %s925
    %v927 = vmul.f32 %v926, %v911
    %v928 = vmul.f32 %v926, %v912
    %v929 = vadd.f32 %v876, %v927
    %v930 = vadd.f32 %v877, %v928
    %s931 = sld [smem:[#allocation2 + $0x191]]
    %v932 = vstv %s931
    %v933 = vmul.f32 %v932, %v911
    %v934 = vmul.f32 %v932, %v912
    %v935 = vadd.f32 %v882, %v933
    %v936 = vadd.f32 %v883, %v934
    %s937 = sld [smem:[#allocation2 + $0x211]]
    %v938 = vstv %s937
    %v939 = vmul.f32 %v938, %v911
    %v940 = vmul.f32 %v938, %v912
    %v941 = vadd.f32 %v888, %v939
    %v942 = vadd.f32 %v889, %v940
    %s943 = sld [smem:[#allocation2 + $0x291]]
    %v944 = vstv %s943
    %v945 = vmul.f32 %v944, %v911
    %v946 = vmul.f32 %v944, %v912
    %v947 = vadd.f32 %v894, %v945
    %v948 = vadd.f32 %v895, %v946
    %s949 = sld [smem:[#allocation2 + $0x311]]
    %v950 = vstv %s949
    %v951 = vmul.f32 %v950, %v911
    %v952 = vmul.f32 %v950, %v912
    %v953 = vadd.f32 %v900, %v951
    %v954 = vadd.f32 %v901, %v952
    %s955 = sld [smem:[#allocation2 + $0x391]]
    %v956 = vstv %s955
    %v957 = vmul.f32 %v956, %v911
    %v958 = vmul.f32 %v956, %v912
    %v959 = vadd.f32 %v906, %v957
    %v960 = vadd.f32 %v907, %v958
    %s961 = scalar_lea.vmem %s0, 144
    %v962 = vld [vmem:[%s961] sm:$0xf]
    %v963 = vld [vmem:[%s961 + $0x4] sm:$0xf]
    %v964 = vunpack.c.l.bf16 %v962
    %v965 = vunpack.c.l.bf16 %v963
    %s966 = sld [smem:[#allocation2 + $0x12]]
    %v967 = vstv %s966
    %v968 = vmul.f32 %v967, %v964
    %v969 = vmul.f32 %v967, %v965
    %v970 = vadd.f32 %v917, %v968
    %v971 = vadd.f32 %v918, %v969
    %s972 = sld [smem:[#allocation2 + $0x92]]
    %v973 = vstv %s972
    %v974 = vmul.f32 %v973, %v964
    %v975 = vmul.f32 %v973, %v965
    %v976 = vadd.f32 %v923, %v974
    %v977 = vadd.f32 %v924, %v975
    %s978 = sld [smem:[#allocation2 + $0x112]]
    %v979 = vstv %s978
    %v980 = vmul.f32 %v979, %v964
    %v981 = vmul.f32 %v979, %v965
    %v982 = vadd.f32 %v929, %v980
    %v983 = vadd.f32 %v930, %v981
    %s984 = sld [smem:[#allocation2 + $0x192]]
    %v985 = vstv %s984
    %v986 = vmul.f32 %v985, %v964
    %v987 = vmul.f32 %v985, %v965
    %v988 = vadd.f32 %v935, %v986
    %v989 = vadd.f32 %v936, %v987
    %s990 = sld [smem:[#allocation2 + $0x212]]
    %v991 = vstv %s990
    %v992 = vmul.f32 %v991, %v964
    %v993 = vmul.f32 %v991, %v965
    %v994 = vadd.f32 %v941, %v992
    %v995 = vadd.f32 %v942, %v993
    %s996 = sld [smem:[#allocation2 + $0x292]]
    %v997 = vstv %s996
    %v998 = vmul.f32 %v997, %v964
    %v999 = vmul.f32 %v997, %v965
    %v1000 = vadd.f32 %v947, %v998
    %v1001 = vadd.f32 %v948, %v999
    %s1002 = sld [smem:[#allocation2 + $0x312]]
    %v1003 = vstv %s1002
    %v1004 = vmul.f32 %v1003, %v964
    %v1005 = vmul.f32 %v1003, %v965
    %v1006 = vadd.f32 %v953, %v1004
    %v1007 = vadd.f32 %v954, %v1005
    %s1008 = sld [smem:[#allocation2 + $0x392]]
    %v1009 = vstv %s1008
    %v1010 = vmul.f32 %v1009, %v964
    %v1011 = vmul.f32 %v1009, %v965
    %v1012 = vadd.f32 %v959, %v1010
    %v1013 = vadd.f32 %v960, %v1011
    %s1014 = scalar_lea.vmem %s0, 152
    %v1015 = vld [vmem:[%s1014] sm:$0xf]
    %v1016 = vld [vmem:[%s1014 + $0x4] sm:$0xf]
    %v1017 = vunpack.c.l.bf16 %v1015
    %v1018 = vunpack.c.l.bf16 %v1016
    %s1019 = sld [smem:[#allocation2 + $0x13]]
    %v1020 = vstv %s1019
    %v1021 = vmul.f32 %v1020, %v1017
    %v1022 = vmul.f32 %v1020, %v1018
    %v1023 = vadd.f32 %v970, %v1021
    %v1024 = vadd.f32 %v971, %v1022
    %s1025 = sld [smem:[#allocation2 + $0x93]]
    %v1026 = vstv %s1025
    %v1027 = vmul.f32 %v1026, %v1017
    %v1028 = vmul.f32 %v1026, %v1018
    %v1029 = vadd.f32 %v976, %v1027
    %v1030 = vadd.f32 %v977, %v1028
    %s1031 = sld [smem:[#allocation2 + $0x113]]
    %v1032 = vstv %s1031
    %v1033 = vmul.f32 %v1032, %v1017
    %v1034 = vmul.f32 %v1032, %v1018
    %v1035 = vadd.f32 %v982, %v1033
    %v1036 = vadd.f32 %v983, %v1034
    %s1037 = sld [smem:[#allocation2 + $0x193]]
    %v1038 = vstv %s1037
    %v1039 = vmul.f32 %v1038, %v1017
    %v1040 = vmul.f32 %v1038, %v1018
    %v1041 = vadd.f32 %v988, %v1039
    %v1042 = vadd.f32 %v989, %v1040
    %s1043 = sld [smem:[#allocation2 + $0x213]]
    %v1044 = vstv %s1043
    %v1045 = vmul.f32 %v1044, %v1017
    %v1046 = vmul.f32 %v1044, %v1018
    %v1047 = vadd.f32 %v994, %v1045
    %v1048 = vadd.f32 %v995, %v1046
    %s1049 = sld [smem:[#allocation2 + $0x293]]
    %v1050 = vstv %s1049
    %v1051 = vmul.f32 %v1050, %v1017
    %v1052 = vmul.f32 %v1050, %v1018
    %v1053 = vadd.f32 %v1000, %v1051
    %v1054 = vadd.f32 %v1001, %v1052
    %s1055 = sld [smem:[#allocation2 + $0x313]]
    %v1056 = vstv %s1055
    %v1057 = vmul.f32 %v1056, %v1017
    %v1058 = vmul.f32 %v1056, %v1018
    %v1059 = vadd.f32 %v1006, %v1057
    %v1060 = vadd.f32 %v1007, %v1058
    %s1061 = sld [smem:[#allocation2 + $0x393]]
    %v1062 = vstv %s1061
    %v1063 = vmul.f32 %v1062, %v1017
    %v1064 = vmul.f32 %v1062, %v1018
    %v1065 = vadd.f32 %v1012, %v1063
    %v1066 = vadd.f32 %v1013, %v1064
    %s1067 = scalar_lea.vmem %s0, 160
    %v1068 = vld [vmem:[%s1067] sm:$0xf]
    %v1069 = vld [vmem:[%s1067 + $0x4] sm:$0xf]
    %v1070 = vunpack.c.l.bf16 %v1068
    %v1071 = vunpack.c.l.bf16 %v1069
    %s1072 = sld [smem:[#allocation2 + $0x14]]
    %v1073 = vstv %s1072
    %v1074 = vmul.f32 %v1073, %v1070
    %v1075 = vmul.f32 %v1073, %v1071
    %v1076 = vadd.f32 %v1023, %v1074
    %v1077 = vadd.f32 %v1024, %v1075
    %s1078 = sld [smem:[#allocation2 + $0x94]]
    %v1079 = vstv %s1078
    %v1080 = vmul.f32 %v1079, %v1070
    %v1081 = vmul.f32 %v1079, %v1071
    %v1082 = vadd.f32 %v1029, %v1080
    %v1083 = vadd.f32 %v1030, %v1081
    %s1084 = sld [smem:[#allocation2 + $0x114]]
    %v1085 = vstv %s1084
    %v1086 = vmul.f32 %v1085, %v1070
    %v1087 = vmul.f32 %v1085, %v1071
    %v1088 = vadd.f32 %v1035, %v1086
    %v1089 = vadd.f32 %v1036, %v1087
    %s1090 = sld [smem:[#allocation2 + $0x194]]
    %v1091 = vstv %s1090
    %v1092 = vmul.f32 %v1091, %v1070
    %v1093 = vmul.f32 %v1091, %v1071
    %v1094 = vadd.f32 %v1041, %v1092
    %v1095 = vadd.f32 %v1042, %v1093
    %s1096 = sld [smem:[#allocation2 + $0x214]]
    %v1097 = vstv %s1096
    %v1098 = vmul.f32 %v1097, %v1070
    %v1099 = vmul.f32 %v1097, %v1071
    %v1100 = vadd.f32 %v1047, %v1098
    %v1101 = vadd.f32 %v1048, %v1099
    %s1102 = sld [smem:[#allocation2 + $0x294]]
    %v1103 = vstv %s1102
    %v1104 = vmul.f32 %v1103, %v1070
    %v1105 = vmul.f32 %v1103, %v1071
    %v1106 = vadd.f32 %v1053, %v1104
    %v1107 = vadd.f32 %v1054, %v1105
    %s1108 = sld [smem:[#allocation2 + $0x314]]
    %v1109 = vstv %s1108
    %v1110 = vmul.f32 %v1109, %v1070
    %v1111 = vmul.f32 %v1109, %v1071
    %v1112 = vadd.f32 %v1059, %v1110
    %v1113 = vadd.f32 %v1060, %v1111
    %s1114 = sld [smem:[#allocation2 + $0x394]]
    %v1115 = vstv %s1114
    %v1116 = vmul.f32 %v1115, %v1070
    %v1117 = vmul.f32 %v1115, %v1071
    %v1118 = vadd.f32 %v1065, %v1116
    %v1119 = vadd.f32 %v1066, %v1117
    %s1120 = scalar_lea.vmem %s0, 168
    %v1121 = vld [vmem:[%s1120] sm:$0xf]
    %v1122 = vld [vmem:[%s1120 + $0x4] sm:$0xf]
    %v1123 = vunpack.c.l.bf16 %v1121
    %v1124 = vunpack.c.l.bf16 %v1122
    %s1125 = sld [smem:[#allocation2 + $0x15]]
    %v1126 = vstv %s1125
    %v1127 = vmul.f32 %v1126, %v1123
    %v1128 = vmul.f32 %v1126, %v1124
    %v1129 = vadd.f32 %v1076, %v1127
    %v1130 = vadd.f32 %v1077, %v1128
    %s1131 = sld [smem:[#allocation2 + $0x95]]
    %v1132 = vstv %s1131
    %v1133 = vmul.f32 %v1132, %v1123
    %v1134 = vmul.f32 %v1132, %v1124
    %v1135 = vadd.f32 %v1082, %v1133
    %v1136 = vadd.f32 %v1083, %v1134
    %s1137 = sld [smem:[#allocation2 + $0x115]]
    %v1138 = vstv %s1137
    %v1139 = vmul.f32 %v1138, %v1123
    %v1140 = vmul.f32 %v1138, %v1124
    %v1141 = vadd.f32 %v1088, %v1139
    %v1142 = vadd.f32 %v1089, %v1140
    %s1143 = sld [smem:[#allocation2 + $0x195]]
    %v1144 = vstv %s1143
    %v1145 = vmul.f32 %v1144, %v1123
    %v1146 = vmul.f32 %v1144, %v1124
    %v1147 = vadd.f32 %v1094, %v1145
    %v1148 = vadd.f32 %v1095, %v1146
    %s1149 = sld [smem:[#allocation2 + $0x215]]
    %v1150 = vstv %s1149
    %v1151 = vmul.f32 %v1150, %v1123
    %v1152 = vmul.f32 %v1150, %v1124
    %v1153 = vadd.f32 %v1100, %v1151
    %v1154 = vadd.f32 %v1101, %v1152
    %s1155 = sld [smem:[#allocation2 + $0x295]]
    %v1156 = vstv %s1155
    %v1157 = vmul.f32 %v1156, %v1123
    %v1158 = vmul.f32 %v1156, %v1124
    %v1159 = vadd.f32 %v1106, %v1157
    %v1160 = vadd.f32 %v1107, %v1158
    %s1161 = sld [smem:[#allocation2 + $0x315]]
    %v1162 = vstv %s1161
    %v1163 = vmul.f32 %v1162, %v1123
    %v1164 = vmul.f32 %v1162, %v1124
    %v1165 = vadd.f32 %v1112, %v1163
    %v1166 = vadd.f32 %v1113, %v1164
    %s1167 = sld [smem:[#allocation2 + $0x395]]
    %v1168 = vstv %s1167
    %v1169 = vmul.f32 %v1168, %v1123
    %v1170 = vmul.f32 %v1168, %v1124
    %v1171 = vadd.f32 %v1118, %v1169
    %v1172 = vadd.f32 %v1119, %v1170
    %s1173 = scalar_lea.vmem %s0, 176
    %v1174 = vld [vmem:[%s1173] sm:$0xf]
    %v1175 = vld [vmem:[%s1173 + $0x4] sm:$0xf]
    %v1176 = vunpack.c.l.bf16 %v1174
    %v1177 = vunpack.c.l.bf16 %v1175
    %s1178 = sld [smem:[#allocation2 + $0x16]]
    %v1179 = vstv %s1178
    %v1180 = vmul.f32 %v1179, %v1176
    %v1181 = vmul.f32 %v1179, %v1177
    %v1182 = vadd.f32 %v1129, %v1180
    %v1183 = vadd.f32 %v1130, %v1181
    %s1184 = sld [smem:[#allocation2 + $0x96]]
    %v1185 = vstv %s1184
    %v1186 = vmul.f32 %v1185, %v1176
    %v1187 = vmul.f32 %v1185, %v1177
    %v1188 = vadd.f32 %v1135, %v1186
    %v1189 = vadd.f32 %v1136, %v1187
    %s1190 = sld [smem:[#allocation2 + $0x116]]
    %v1191 = vstv %s1190
    %v1192 = vmul.f32 %v1191, %v1176
    %v1193 = vmul.f32 %v1191, %v1177
    %v1194 = vadd.f32 %v1141, %v1192
    %v1195 = vadd.f32 %v1142, %v1193
    %s1196 = sld [smem:[#allocation2 + $0x196]]
    %v1197 = vstv %s1196
    %v1198 = vmul.f32 %v1197, %v1176
    %v1199 = vmul.f32 %v1197, %v1177
    %v1200 = vadd.f32 %v1147, %v1198
    %v1201 = vadd.f32 %v1148, %v1199
    %s1202 = sld [smem:[#allocation2 + $0x216]]
    %v1203 = vstv %s1202
    %v1204 = vmul.f32 %v1203, %v1176
    %v1205 = vmul.f32 %v1203, %v1177
    %v1206 = vadd.f32 %v1153, %v1204
    %v1207 = vadd.f32 %v1154, %v1205
    %s1208 = sld [smem:[#allocation2 + $0x296]]
    %v1209 = vstv %s1208
    %v1210 = vmul.f32 %v1209, %v1176
    %v1211 = vmul.f32 %v1209, %v1177
    %v1212 = vadd.f32 %v1159, %v1210
    %v1213 = vadd.f32 %v1160, %v1211
    %s1214 = sld [smem:[#allocation2 + $0x316]]
    %v1215 = vstv %s1214
    %v1216 = vmul.f32 %v1215, %v1176
    %v1217 = vmul.f32 %v1215, %v1177
    %v1218 = vadd.f32 %v1165, %v1216
    %v1219 = vadd.f32 %v1166, %v1217
    %s1220 = sld [smem:[#allocation2 + $0x396]]
    %v1221 = vstv %s1220
    %v1222 = vmul.f32 %v1221, %v1176
    %v1223 = vmul.f32 %v1221, %v1177
    %v1224 = vadd.f32 %v1171, %v1222
    %v1225 = vadd.f32 %v1172, %v1223
    %s1226 = scalar_lea.vmem %s0, 184
    %v1227 = vld [vmem:[%s1226] sm:$0xf]
    %v1228 = vld [vmem:[%s1226 + $0x4] sm:$0xf]
    %v1229 = vunpack.c.l.bf16 %v1227
    %v1230 = vunpack.c.l.bf16 %v1228
    %s1231 = sld [smem:[#allocation2 + $0x17]]
    %v1232 = vstv %s1231
    %v1233 = vmul.f32 %v1232, %v1229
    %v1234 = vmul.f32 %v1232, %v1230
    %v1235 = vadd.f32 %v1182, %v1233
    %v1236 = vadd.f32 %v1183, %v1234
    %s1237 = sld [smem:[#allocation2 + $0x97]]
    %v1238 = vstv %s1237
    %v1239 = vmul.f32 %v1238, %v1229
    %v1240 = vmul.f32 %v1238, %v1230
    %v1241 = vadd.f32 %v1188, %v1239
    %v1242 = vadd.f32 %v1189, %v1240
    %s1243 = sld [smem:[#allocation2 + $0x117]]
    %v1244 = vstv %s1243
    %v1245 = vmul.f32 %v1244, %v1229
    %v1246 = vmul.f32 %v1244, %v1230
    %v1247 = vadd.f32 %v1194, %v1245
    %v1248 = vadd.f32 %v1195, %v1246
    %s1249 = sld [smem:[#allocation2 + $0x197]]
    %v1250 = vstv %s1249
    %v1251 = vmul.f32 %v1250, %v1229
    %v1252 = vmul.f32 %v1250, %v1230
    %v1253 = vadd.f32 %v1200, %v1251
    %v1254 = vadd.f32 %v1201, %v1252
    %s1255 = sld [smem:[#allocation2 + $0x217]]
    %v1256 = vstv %s1255
    %v1257 = vmul.f32 %v1256, %v1229
    %v1258 = vmul.f32 %v1256, %v1230
    %v1259 = vadd.f32 %v1206, %v1257
    %v1260 = vadd.f32 %v1207, %v1258
    %s1261 = sld [smem:[#allocation2 + $0x297]]
    %v1262 = vstv %s1261
    %v1263 = vmul.f32 %v1262, %v1229
    %v1264 = vmul.f32 %v1262, %v1230
    %v1265 = vadd.f32 %v1212, %v1263
    %v1266 = vadd.f32 %v1213, %v1264
    %s1267 = sld [smem:[#allocation2 + $0x317]]
    %v1268 = vstv %s1267
    %v1269 = vmul.f32 %v1268, %v1229
    %v1270 = vmul.f32 %v1268, %v1230
    %v1271 = vadd.f32 %v1218, %v1269
    %v1272 = vadd.f32 %v1219, %v1270
    %s1273 = sld [smem:[#allocation2 + $0x397]]
    %v1274 = vstv %s1273
    %v1275 = vmul.f32 %v1274, %v1229
    %v1276 = vmul.f32 %v1274, %v1230
    %v1277 = vadd.f32 %v1224, %v1275
    %v1278 = vadd.f32 %v1225, %v1276
    %s1279 = scalar_lea.vmem %s0, 192
    %v1280 = vld [vmem:[%s1279] sm:$0xf]
    %v1281 = vld [vmem:[%s1279 + $0x4] sm:$0xf]
    %v1282 = vunpack.c.l.bf16 %v1280
    %v1283 = vunpack.c.l.bf16 %v1281
    %s1284 = sld [smem:[#allocation2 + $0x18]]
    %v1285 = vstv %s1284
    %v1286 = vmul.f32 %v1285, %v1282
    %v1287 = vmul.f32 %v1285, %v1283
    %v1288 = vadd.f32 %v1235, %v1286
    %v1289 = vadd.f32 %v1236, %v1287
    %s1290 = sld [smem:[#allocation2 + $0x98]]
    %v1291 = vstv %s1290
    %v1292 = vmul.f32 %v1291, %v1282
    %v1293 = vmul.f32 %v1291, %v1283
    %v1294 = vadd.f32 %v1241, %v1292
    %v1295 = vadd.f32 %v1242, %v1293
    %s1296 = sld [smem:[#allocation2 + $0x118]]
    %v1297 = vstv %s1296
    %v1298 = vmul.f32 %v1297, %v1282
    %v1299 = vmul.f32 %v1297, %v1283
    %v1300 = vadd.f32 %v1247, %v1298
    %v1301 = vadd.f32 %v1248, %v1299
    %s1302 = sld [smem:[#allocation2 + $0x198]]
    %v1303 = vstv %s1302
    %v1304 = vmul.f32 %v1303, %v1282
    %v1305 = vmul.f32 %v1303, %v1283
    %v1306 = vadd.f32 %v1253, %v1304
    %v1307 = vadd.f32 %v1254, %v1305
    %s1308 = sld [smem:[#allocation2 + $0x218]]
    %v1309 = vstv %s1308
    %v1310 = vmul.f32 %v1309, %v1282
    %v1311 = vmul.f32 %v1309, %v1283
    %v1312 = vadd.f32 %v1259, %v1310
    %v1313 = vadd.f32 %v1260, %v1311
    %s1314 = sld [smem:[#allocation2 + $0x298]]
    %v1315 = vstv %s1314
    %v1316 = vmul.f32 %v1315, %v1282
    %v1317 = vmul.f32 %v1315, %v1283
    %v1318 = vadd.f32 %v1265, %v1316
    %v1319 = vadd.f32 %v1266, %v1317
    %s1320 = sld [smem:[#allocation2 + $0x318]]
    %v1321 = vstv %s1320
    %v1322 = vmul.f32 %v1321, %v1282
    %v1323 = vmul.f32 %v1321, %v1283
    %v1324 = vadd.f32 %v1271, %v1322
    %v1325 = vadd.f32 %v1272, %v1323
    %s1326 = sld [smem:[#allocation2 + $0x398]]
    %v1327 = vstv %s1326
    %v1328 = vmul.f32 %v1327, %v1282
    %v1329 = vmul.f32 %v1327, %v1283
    %v1330 = vadd.f32 %v1277, %v1328
    %v1331 = vadd.f32 %v1278, %v1329
    %s1332 = sld [smem:[#allocation2 + $0x19]]
    %v1333 = vstv %s1332
    %v1334 = vadd.f32 %v1288, %v1333
    %v1335 = vadd.f32 %v1289, %v1333
    %v1336 = vmax.f32 %v1334, 0.0
    %v1337 = vmax.f32 %v1335, 0.0
    %s1338 = sld [smem:[#allocation2 + $0x1a]]
    %v1339 = vstv %s1338
    %v1340 = vmul.f32 %v1336, %v1339
    %v1341 = vmul.f32 %v1337, %v1339
    %s1342 = sld [smem:[#allocation2 + $0x1b]]
    %v1343 = vstv %s1342
    %v1344 = vadd.f32 %v1340, %v1343
    %v1345 = vadd.f32 %v1341, %v1343
    %v1346 = vmax.f32 %v1344, %v1345
    %v1347 = vrot.slane %v1346, 4
    %v1348 = vmax.f32 %v1346, %v1347
    %v1349 = vrot.slane %v1348, 2
    %v1350 = vmax.f32 %v1348, %v1349
    %v1351 = vrot.slane %v1350, 1
    %v1352 = vmax.f32 %v1350, %v1351
    %s1353 = sld [smem:[#allocation2 + $0x99]]
    %v1354 = vstv %s1353
    %v1355 = vadd.f32 %v1294, %v1354
    %v1356 = vadd.f32 %v1295, %v1354
    %v1357 = vmax.f32 %v1355, 0.0
    %v1358 = vmax.f32 %v1356, 0.0
    %s1359 = sld [smem:[#allocation2 + $0x9a]]
    %v1360 = vstv %s1359
    %v1361 = vmul.f32 %v1357, %v1360
    %v1362 = vmul.f32 %v1358, %v1360
    %s1363 = sld [smem:[#allocation2 + $0x9b]]
    %v1364 = vstv %s1363
    %v1365 = vadd.f32 %v1361, %v1364
    %v1366 = vadd.f32 %v1362, %v1364
    %v1367 = vmax.f32 %v1365, %v1366
    %v1368 = vrot.slane %v1367, 4
    %v1369 = vmax.f32 %v1367, %v1368
    %v1370 = vrot.slane %v1369, 2
    %v1371 = vmax.f32 %v1369, %v1370
    %v1372 = vrot.slane %v1371, 1
    %v1373 = vmax.f32 %v1371, %v1372
    %s1374 = sld [smem:[#allocation2 + $0x119]]
    %v1375 = vstv %s1374
    %v1376 = vadd.f32 %v1300, %v1375
    %v1377 = vadd.f32 %v1301, %v1375
    %v1378 = vmax.f32 %v1376, 0.0
    %v1379 = vmax.f32 %v1377, 0.0
    %s1380 = sld [smem:[#allocation2 + $0x11a]]
    %v1381 = vstv %s1380
    %v1382 = vmul.f32 %v1378, %v1381
    %v1383 = vmul.f32 %v1379, %v1381
    %s1384 = sld [smem:[#allocation2 + $0x11b]]
    %v1385 = vstv %s1384
    %v1386 = vadd.f32 %v1382, %v1385
    %v1387 = vadd.f32 %v1383, %v1385
    %v1388 = vmax.f32 %v1386, %v1387
    %v1389 = vrot.slane %v1388, 4
    %v1390 = vmax.f32 %v1388, %v1389
    %v1391 = vrot.slane %v1390, 2
    %v1392 = vmax.f32 %v1390, %v1391
    %v1393 = vrot.slane %v1392, 1
    %v1394 = vmax.f32 %v1392, %v1393
    %s1395 = sld [smem:[#allocation2 + $0x199]]
    %v1396 = vstv %s1395
    %v1397 = vadd.f32 %v1306, %v1396
    %v1398 = vadd.f32 %v1307, %v1396
    %v1399 = vmax.f32 %v1397, 0.0
    %v1400 = vmax.f32 %v1398, 0.0
    %s1401 = sld [smem:[#allocation2 + $0x19a]]
    %v1402 = vstv %s1401
    %v1403 = vmul.f32 %v1399, %v1402
    %v1404 = vmul.f32 %v1400, %v1402
    %s1405 = sld [smem:[#allocation2 + $0x19b]]
    %v1406 = vstv %s1405
    %v1407 = vadd.f32 %v1403, %v1406
    %v1408 = vadd.f32 %v1404, %v1406
    %v1409 = vmax.f32 %v1407, %v1408
    %v1410 = vrot.slane %v1409, 4
    %v1411 = vmax.f32 %v1409, %v1410
    %v1412 = vrot.slane %v1411, 2
    %v1413 = vmax.f32 %v1411, %v1412
    %v1414 = vrot.slane %v1413, 1
    %v1415 = vmax.f32 %v1413, %v1414
    %s1416 = sld [smem:[#allocation2 + $0x219]]
    %v1417 = vstv %s1416
    %v1418 = vadd.f32 %v1312, %v1417
    %v1419 = vadd.f32 %v1313, %v1417
    %v1420 = vmax.f32 %v1418, 0.0
    %v1421 = vmax.f32 %v1419, 0.0
    %s1422 = sld [smem:[#allocation2 + $0x21a]]
    %v1423 = vstv %s1422
    %v1424 = vmul.f32 %v1420, %v1423
    %v1425 = vmul.f32 %v1421, %v1423
    %s1426 = sld [smem:[#allocation2 + $0x21b]]
    %v1427 = vstv %s1426
    %v1428 = vadd.f32 %v1424, %v1427
    %v1429 = vadd.f32 %v1425, %v1427
    %v1430 = vmax.f32 %v1428, %v1429
    %v1431 = vrot.slane %v1430, 4
    %v1432 = vmax.f32 %v1430, %v1431
    %v1433 = vrot.slane %v1432, 2
    %v1434 = vmax.f32 %v1432, %v1433
    %v1435 = vrot.slane %v1434, 1
    %v1436 = vmax.f32 %v1434, %v1435
    %s1437 = sld [smem:[#allocation2 + $0x299]]
    %v1438 = vstv %s1437
    %v1439 = vadd.f32 %v1318, %v1438
    %v1440 = vadd.f32 %v1319, %v1438
    %v1441 = vmax.f32 %v1439, 0.0
    %v1442 = vmax.f32 %v1440, 0.0
    %s1443 = sld [smem:[#allocation2 + $0x29a]]
    %v1444 = vstv %s1443
    %v1445 = vmul.f32 %v1441, %v1444
    %v1446 = vmul.f32 %v1442, %v1444
    %s1447 = sld [smem:[#allocation2 + $0x29b]]
    %v1448 = vstv %s1447
    %v1449 = vadd.f32 %v1445, %v1448
    %v1450 = vadd.f32 %v1446, %v1448
    %v1451 = vmax.f32 %v1449, %v1450
    %v1452 = vrot.slane %v1451, 4
    %v1453 = vmax.f32 %v1451, %v1452
    %v1454 = vrot.slane %v1453, 2
    %v1455 = vmax.f32 %v1453, %v1454
    %v1456 = vrot.slane %v1455, 1
    %v1457 = vmax.f32 %v1455, %v1456
    %s1458 = sld [smem:[#allocation2 + $0x319]]
    %v1459 = vstv %s1458
    %v1460 = vadd.f32 %v1324, %v1459
    %v1461 = vadd.f32 %v1325, %v1459
    %v1462 = vmax.f32 %v1460, 0.0
    %v1463 = vmax.f32 %v1461, 0.0
    %s1464 = sld [smem:[#allocation2 + $0x31a]]
    %v1465 = vstv %s1464
    %v1466 = vmul.f32 %v1462, %v1465
    %v1467 = vmul.f32 %v1463, %v1465
    %s1468 = sld [smem:[#allocation2 + $0x31b]]
    %v1469 = vstv %s1468
    %v1470 = vadd.f32 %v1466, %v1469
    %v1471 = vadd.f32 %v1467, %v1469
    %v1472 = vmax.f32 %v1470, %v1471
    %v1473 = vrot.slane %v1472, 4
    %v1474 = vmax.f32 %v1472, %v1473
    %v1475 = vrot.slane %v1474, 2
    %v1476 = vmax.f32 %v1474, %v1475
    %v1477 = vrot.slane %v1476, 1
    %v1478 = vmax.f32 %v1476, %v1477
    %s1479 = sld [smem:[#allocation2 + $0x399]]
    %v1480 = vstv %s1479
    %v1481 = vadd.f32 %v1330, %v1480
    %v1482 = vadd.f32 %v1331, %v1480
    %v1483 = vmax.f32 %v1481, 0.0
    %v1484 = vmax.f32 %v1482, 0.0
    %s1485 = sld [smem:[#allocation2 + $0x39a]]
    %v1486 = vstv %s1485
    %v1487 = vmul.f32 %v1483, %v1486
    %v1488 = vmul.f32 %v1484, %v1486
    %s1489 = sld [smem:[#allocation2 + $0x39b]]
    %v1490 = vstv %s1489
    %v1491 = vadd.f32 %v1487, %v1490
    %v1492 = vadd.f32 %v1488, %v1490
    %v1493 = vmax.f32 %v1491, %v1492
    %v1494 = vrot.slane %v1493, 4
    %v1495 = vmax.f32 %v1493, %v1494
    %v1496 = vrot.slane %v1495, 2
    %v1497 = vmax.f32 %v1495, %v1496
    %v1498 = vrot.slane %v1497, 1
    %v1499 = vmax.f32 %v1497, %v1498
    %vm1500 = vcmask 1040384
    %v1501 = vsel %vm1500, %v1352, %v1373
    %vm1502 = vcmask 1041408
    %v1503 = vsel %vm1502, %v1501, %v1394
    %vm1504 = vcmask 1042432
    %v1505 = vsel %vm1504, %v1503, %v1415
    %vm1506 = vcmask 1043456
    %v1507 = vsel %vm1506, %v1505, %v1436
    %vm1508 = vcmask 1044480
    %v1509 = vsel %vm1508, %v1507, %v1457
    %vm1510 = vcmask 1045504
    %v1511 = vsel %vm1510, %v1509, %v1478
    %vm1512 = vcmask 1046528
    %v1513 = vsel %vm1512, %v1511, %v1499
    %1514 = vst [vmem:[%s2] sm:$0xff] %v1513
    // Predicated region
    $region14: #{cnn_classifier_forward.3} parent=1 // pred_check
      _
    $region15: #{cnn_classifier_forward.3} parent=1 // pred_check_branch
      %1516 = sbr.rel (0) target = $region17
    $region16: #{cnn_classifier_forward.3} parent=1 // pred_region
      _
    $region17: #{cnn_classifier_forward.3} parent=1 // pred_fallthru
      _
    // Predicated region
    $region18: #{cnn_classifier_forward.3} parent=1 // pred_check
      _
    $region19: #{cnn_classifier_forward.3} parent=1 // pred_check_branch
      %1518 = sbr.rel (0) target = $region21
    $region20: #{cnn_classifier_forward.3} parent=1 // pred_region
      _
    $region21: #{cnn_classifier_forward.3} parent=1 // pred_fallthru
      _
    %1519 = vsyncpa [#allocation3], 1

</llo_original>
